<compile_context>
chip_gen: v7x
topology: tpu7x:2x2x1
jax: 0.10.0
libtpu: 0.0.40
codegen_flags: <defaults>
</compile_context>

<pallas_src>
import functools

import jax
import jax.numpy as jnp
from jax.experimental import pallas as pl
from jax.experimental.pallas import tpu as pltpu

NEG_BIG = -1e30      # finite "-inf": 0 * NEG_BIG == 0 inside contractions
DENOM_FLOOR = 1e-20  # keeps degree-0 (padding) edges finite; real denoms >= 1

PARAM_KEYS = (
    "enc_w1", "enc_b1", "enc_w2", "enc_b2", "enc_w3", "enc_b3",
    "nw1_agg", "nw1_h", "nb1", "nw2", "nb2", "nw3", "nb3",
    "ew1_e", "ew1_src", "ew1_dst", "eb1", "ew2", "eb2", "ew3", "eb3",
    "dw1", "db1", "dw2", "db2", "dw3", "db3",
)


# ----------------------------------------------------------------------------
# shared math (used both inside the Pallas kernel and as the pure-JAX ref)
# ----------------------------------------------------------------------------
def _forward(node_x, e_feat, dist, S, D, P, recip):
    f32 = jnp.float32

    def dot(a, b):
        return jnp.dot(a, b, preferred_element_type=f32)

    def scatter_sum(M, x):      # M:(E,N), x:(E,F) -> (N,F)   (M^T @ x on MXU)
        return jax.lax.dot_general(M, x, (((0,), (0,)), ((), ())),
                                   preferred_element_type=f32)

    def gather_rowvec(row):     # D:(E,N), row:(1,N) -> (E,1)  (D @ row^T on MXU)
        return jax.lax.dot_general(D, row, (((1,), (1,)), ((), ())),
                                   preferred_element_type=f32)

    def relu(x):
        return jnp.maximum(x, 0.0)

    def edge_softmax_agg(h):
        # DGL: w = edge_softmax(g, dist) (normalized over incoming edges of
        # each dst); sum_m[v] = sum_{e: dst(e)=v} w_e * h[src(e)].
        masked = jnp.where(D > 0.0, dist, NEG_BIG)               # (E,N) VPU
        max_node = jnp.max(masked, axis=0, keepdims=True)        # (1,N)
        max_edge = gather_rowvec(max_node)                       # (E,1) MXU
        ex = jnp.exp(dist - max_edge)                            # (E,1) EUP
        sum_node = scatter_sum(D, ex)                            # (N,1) MXU
        denom = jnp.maximum(dot(D, sum_node), DENOM_FLOOR)       # (E,1) MXU
        w = ex * recip(denom)                                    # (E,1)
        wh = w * dot(S, h)                                       # (E,F)
        return scatter_sum(D, wh)                                # (N,F)

    # encoder: (N, 8pad) -> (N, 8)
    h = relu(dot(node_x, P["enc_w1"]) + P["enc_b1"])
    h = relu(dot(h, P["enc_w2"]) + P["enc_b2"])
    h = relu(dot(h, P["enc_w3"]) + P["enc_b3"])
    h = edge_softmax_agg(h)                                      # (N, 8)
    e_h = e_feat                                                 # (E, 1)

    for _ in range(2):
        h_src = dot(S, h)                                        # (E, 8)
        h_dst = dot(D, h)                                        # (E, 8)
        # edge update MLP on cat([e_h, h_src, h_dst]) (dim 17); the 1-wide
        # e_h block is a VPU rank-1 broadcast (no K=1 MXU pass), the 8-wide
        # blocks use pre-split sublane-aligned weights.
        x = relu(e_h * P["ew1_e"] + dot(h_src, P["ew1_src"])
                 + dot(h_dst, P["ew1_dst"]) + P["eb1"])          # (E, 64)
        x = relu(dot(x, P["ew2"]) + P["eb2"])
        e_h = relu(dot(x, P["ew3"]) + P["eb3"])                  # (E, 1)

        agg = scatter_sum(D, e_h)                                # (N, 1)
        # node update MLP on cat([agg, h]) (dim 9); rank-1 VPU update for agg.
        x = relu(agg * P["nw1_agg"] + dot(h, P["nw1_h"]) + P["nb1"])  # (N, 64)
        x = relu(dot(x, P["nw2"]) + P["nb2"])
        h = relu(dot(x, P["nw3"]) + P["nb3"])                    # (N, 8)

    h = edge_softmax_agg(h)                                      # (N, 8)
    # decoder: (N, 8) -> (N, 1)
    h = relu(dot(h, P["dw1"]) + P["db1"])
    h = relu(dot(h, P["dw2"]) + P["db2"])
    return relu(dot(h, P["dw3"]) + P["db3"])


# ----------------------------------------------------------------------------
# parameter splitting / packing (all layout work hoisted out of the kernel)
# ----------------------------------------------------------------------------
def _split_params(params):
    """params = (enc, nup, eup, dec), each (w1,b1,w2,b2,w3,b3) with torch
    Linear semantics y = x @ W + b (W stored as (in, out)).  First layers are
    pre-split / pre-padded so no unaligned slice happens inside the kernel."""
    enc, nup, eup, dec = params
    cw1, cb1, cw2, cb2, cw3, cb3 = enc
    nw1, nb1, nw2, nb2, nw3, nb3 = nup
    ew1, eb1, ew2, eb2, ew3, eb3 = eup
    dw1, db1, dw2, db2, dw3, db3 = dec
    enc_w1 = jnp.zeros((8, 64), jnp.float32).at[:3, :].set(cw1)  # pad 3 -> 8 rows
    return {
        "enc_w1": enc_w1, "enc_b1": cb1, "enc_w2": cw2, "enc_b2": cb2,
        "enc_w3": cw3, "enc_b3": cb3,
        "nw1_agg": nw1[0:1, :], "nw1_h": nw1[1:9, :], "nb1": nb1,
        "nw2": nw2, "nb2": nb2, "nw3": nw3, "nb3": nb3,
        "ew1_e": ew1[0:1, :], "ew1_src": ew1[1:9, :], "ew1_dst": ew1[9:17, :],
        "eb1": eb1, "ew2": ew2, "eb2": eb2, "ew3": ew3, "eb3": eb3,
        "dw1": dw1, "db1": db1, "dw2": dw2, "db2": db2, "dw3": dw3, "db3": db3,
    }


def _pack_params(P):
    """Pack all parameters (PARAM_KEYS order) into one (R, 64) f32 slab; every
    block starts at a sublane-aligned (multiple-of-8) row offset.  Returns
    (slab, metas) with metas[i] = (row_offset, rows, cols) (static ints)."""
    blocks, metas, off = [], [], 0
    for key in PARAM_KEYS:
        a = jnp.asarray(P[key], jnp.float32)
        r, c = a.shape
        rp = -(-r // 8) * 8
        blk = jnp.zeros((rp, 64), jnp.float32).at[:r, :c].set(a)
        blocks.append(blk)
        metas.append((off, r, c))
        off += rp
    return jnp.concatenate(blocks, axis=0), tuple(metas)


# ----------------------------------------------------------------------------
# Pallas kernel + wrapper
# ----------------------------------------------------------------------------
def _gen_kernel(metas, node_ref, edge_ref, dist_ref, S_ref, D_ref, p_ref,
                out_ref):
    # Static, sublane-aligned slices of the single parameter slab.
    P = {key: p_ref[off:off + r, 0:c]
         for key, (off, r, c) in zip(PARAM_KEYS, metas)}
    out_ref[...] = _forward(node_ref[...], edge_ref[...], dist_ref[...],
                            S_ref[...], D_ref[...], P,
                            recip=lambda x: pl.reciprocal(x, approx=True))


def _round_up(x, m):
    return -(-x // m) * m


def gen_forward_pallas(node_feat, edge_feat, dist, src, dst, params):
    N, E = node_feat.shape[0], edge_feat.shape[0]
    N_pad, E_pad = _round_up(N, 128), _round_up(E, 128)

    # Pad graph operands so MXU contractions are >= 128 wide; padded nodes /
    # edges have all-zero incidence rows/cols and cannot affect real outputs
    # (DENOM_FLOOR keeps their softmax weights finite).
    node_x = jnp.zeros((N_pad, 8), jnp.float32).at[:N, :3].set(node_feat)
    e_feat = jnp.zeros((E_pad, 1), jnp.float32).at[:E, :].set(edge_feat)
    dist_p = jnp.zeros((E_pad, 1), jnp.float32).at[:E, :].set(dist)
    S = jnp.zeros((E_pad, N_pad), jnp.float32).at[jnp.arange(E), src].set(1.0)
    D = jnp.zeros((E_pad, N_pad), jnp.float32).at[jnp.arange(E), dst].set(1.0)

    P = _split_params(params)
    slab, metas = _pack_params(P)

    vmem = pl.BlockSpec(memory_space=pltpu.MemorySpace.VMEM)
    out = pl.pallas_call(
        functools.partial(_gen_kernel, metas),
        out_shape=jax.ShapeDtypeStruct((N_pad, 1), jnp.float32),
        in_specs=[vmem] * 6,
        out_specs=vmem,
    )(node_x, e_feat, dist_p, S, D, slab)
    return out[:N]


# pure-JAX reference of identical math (exact reciprocal) for correctness
def gen_forward_ref(node_feat, edge_feat, dist, src, dst, params):
    N = node_feat.shape[0]
    S = jax.nn.one_hot(src, N, dtype=jnp.float32)
    D = jax.nn.one_hot(dst, N, dtype=jnp.float32)
    node_x = jnp.pad(node_feat, ((0, 0), (0, 5)))  # 3 -> 8 cols (zeros)
    P = _split_params(params)
    return _forward(node_x, edge_feat, dist, S, D, P, recip=lambda x: 1.0 / x)


# ----------------------------------------------------------------------------
# deterministic parameter init (xavier_normal weights, zero bias)
# ----------------------------------------------------------------------------
def _xavier(key, fan_in, fan_out):
    std = (2.0 / (fan_in + fan_out)) ** 0.5
    return std * jax.random.normal(key, (fan_in, fan_out), dtype=jnp.float32)


def _make_mlp(key, dims):
    keys = jax.random.split(key, 3)
    out = []
    for i in range(3):
        out.append(_xavier(keys[i], dims[i], dims[i + 1]))
        out.append(jnp.zeros((1, dims[i + 1]), jnp.float32))
    return tuple(out)


if __name__ == "__main__":
    key = jax.random.PRNGKey(0)
    k_enc, k_nup, k_eup, k_dec, k_nf, k_ef, k_d, k_src = jax.random.split(key, 8)

    # Parameters (weights stored as (in, out); y = x @ W + b, matching
    # torch.nn.Linear with xavier_normal_ init and zero bias).
    enc = _make_mlp(k_enc, [3, 64, 64, 8])
    nup = _make_mlp(k_nup, [9, 64, 64, 8])
    eup = _make_mlp(k_eup, [17, 64, 64, 1])
    dec = _make_mlp(k_dec, [8, 64, 64, 1])
    params = (enc, nup, eup, dec)

    # Small synthetic graph: N nodes, E directed edges; every node has at
    # least one incoming edge.
    N, E = 8, 16
    dst_ring = jnp.arange(N, dtype=jnp.int32)
    src_ring = (dst_ring + 1) % N
    src_rand = jax.random.randint(k_src, (E - N,), 0, N, dtype=jnp.int32)
    dst_rand = (src_rand + 3) % N
    src = jnp.concatenate([src_ring, src_rand])
    dst = jnp.concatenate([dst_ring, dst_rand])

    node_feat = jax.random.normal(k_nf, (N, 3), dtype=jnp.float32)  # g.ndata['feat']
    edge_feat = jax.random.normal(k_ef, (E, 1), dtype=jnp.float32)  # g.edata['feat']
    edge_dist = jax.random.normal(k_d, (E, 1), dtype=jnp.float32)   # g.edata['dist']

    out = jax.block_until_ready(
        gen_forward_pallas(node_feat, edge_feat, edge_dist, src, dst, params))
    ref = jax.block_until_ready(
        gen_forward_ref(node_feat, edge_feat, edge_dist, src, dst, params))

    assert out.shape == (N, 1) and out.dtype == jnp.float32
    # Tolerance is looser than f32 eps because the kernel uses the approximate
    # EUP reciprocal for the edge-softmax denominator; wiring errors would be
    # O(1), far outside this band.
    assert jnp.allclose(out, ref, rtol=2e-2, atol=2e-2), (out, ref)
    print("KERNEL_OK")
</pallas_src>

<mosaic_0001>
module attributes {stable_mosaic.version = 11 : i64} {
  func.func @_gen_kernel(%arg0: memref<128x8xf32, #tpu.memory_space<vmem>>, %arg1: memref<128x1xf32, #tpu.memory_space<vmem>>, %arg2: memref<128x1xf32, #tpu.memory_space<vmem>>, %arg3: memref<128x128xf32, #tpu.memory_space<vmem>>, %arg4: memref<128x128xf32, #tpu.memory_space<vmem>>, %arg5: memref<664x64xf32, #tpu.memory_space<vmem>>, %arg6: memref<128x1xf32, #tpu.memory_space<vmem>>) attributes {dimension_semantics = [], scalar_prefetch = 0 : i64, scratch_operands = 0 : i64, tpu.core_type = #tpu.core_type<tc>} {
    %c0 = arith.constant 0 : index
    %c0_0 = arith.constant 0 : index
    %0 = vector.load %arg5[%c0, %c0_0] : memref<664x64xf32, #tpu.memory_space<vmem>>, vector<8x64xf32>
    %c8 = arith.constant 8 : index
    %c0_1 = arith.constant 0 : index
    %1 = vector.load %arg5[%c8, %c0_1] : memref<664x64xf32, #tpu.memory_space<vmem>>, vector<1x64xf32>
    %c16 = arith.constant 16 : index
    %c0_2 = arith.constant 0 : index
    %2 = vector.load %arg5[%c16, %c0_2] : memref<664x64xf32, #tpu.memory_space<vmem>>, vector<64x64xf32>
    %c80 = arith.constant 80 : index
    %c0_3 = arith.constant 0 : index
    %3 = vector.load %arg5[%c80, %c0_3] : memref<664x64xf32, #tpu.memory_space<vmem>>, vector<1x64xf32>
    %c88 = arith.constant 88 : index
    %c0_4 = arith.constant 0 : index
    %4 = vector.load %arg5[%c88, %c0_4] : memref<664x64xf32, #tpu.memory_space<vmem>>, vector<64x8xf32>
    %c152 = arith.constant 152 : index
    %c0_5 = arith.constant 0 : index
    %5 = vector.load %arg5[%c152, %c0_5] : memref<664x64xf32, #tpu.memory_space<vmem>>, vector<1x8xf32>
    %c160 = arith.constant 160 : index
    %c0_6 = arith.constant 0 : index
    %6 = vector.load %arg5[%c160, %c0_6] : memref<664x64xf32, #tpu.memory_space<vmem>>, vector<1x64xf32>
    %c168 = arith.constant 168 : index
    %c0_7 = arith.constant 0 : index
    %7 = vector.load %arg5[%c168, %c0_7] : memref<664x64xf32, #tpu.memory_space<vmem>>, vector<8x64xf32>
    %c176 = arith.constant 176 : index
    %c0_8 = arith.constant 0 : index
    %8 = vector.load %arg5[%c176, %c0_8] : memref<664x64xf32, #tpu.memory_space<vmem>>, vector<1x64xf32>
    %c184 = arith.constant 184 : index
    %c0_9 = arith.constant 0 : index
    %9 = vector.load %arg5[%c184, %c0_9] : memref<664x64xf32, #tpu.memory_space<vmem>>, vector<64x64xf32>
    %c248 = arith.constant 248 : index
    %c0_10 = arith.constant 0 : index
    %10 = vector.load %arg5[%c248, %c0_10] : memref<664x64xf32, #tpu.memory_space<vmem>>, vector<1x64xf32>
    %c256 = arith.constant 256 : index
    %c0_11 = arith.constant 0 : index
    %11 = vector.load %arg5[%c256, %c0_11] : memref<664x64xf32, #tpu.memory_space<vmem>>, vector<64x8xf32>
    %c320 = arith.constant 320 : index
    %c0_12 = arith.constant 0 : index
    %12 = vector.load %arg5[%c320, %c0_12] : memref<664x64xf32, #tpu.memory_space<vmem>>, vector<1x8xf32>
    %c328 = arith.constant 328 : index
    %c0_13 = arith.constant 0 : index
    %13 = vector.load %arg5[%c328, %c0_13] : memref<664x64xf32, #tpu.memory_space<vmem>>, vector<1x64xf32>
    %c336 = arith.constant 336 : index
    %c0_14 = arith.constant 0 : index
    %14 = vector.load %arg5[%c336, %c0_14] : memref<664x64xf32, #tpu.memory_space<vmem>>, vector<8x64xf32>
    %c344 = arith.constant 344 : index
    %c0_15 = arith.constant 0 : index
    %15 = vector.load %arg5[%c344, %c0_15] : memref<664x64xf32, #tpu.memory_space<vmem>>, vector<8x64xf32>
    %c352 = arith.constant 352 : index
    %c0_16 = arith.constant 0 : index
    %16 = vector.load %arg5[%c352, %c0_16] : memref<664x64xf32, #tpu.memory_space<vmem>>, vector<1x64xf32>
    %c360 = arith.constant 360 : index
    %c0_17 = arith.constant 0 : index
    %17 = vector.load %arg5[%c360, %c0_17] : memref<664x64xf32, #tpu.memory_space<vmem>>, vector<64x64xf32>
    %c424 = arith.constant 424 : index
    %c0_18 = arith.constant 0 : index
    %18 = vector.load %arg5[%c424, %c0_18] : memref<664x64xf32, #tpu.memory_space<vmem>>, vector<1x64xf32>
    %c432 = arith.constant 432 : index
    %c0_19 = arith.constant 0 : index
    %19 = vector.load %arg5[%c432, %c0_19] : memref<664x64xf32, #tpu.memory_space<vmem>>, vector<64x1xf32>
    %c496 = arith.constant 496 : index
    %c0_20 = arith.constant 0 : index
    %20 = vector.load %arg5[%c496, %c0_20] : memref<664x64xf32, #tpu.memory_space<vmem>>, vector<1x1xf32>
    %c504 = arith.constant 504 : index
    %c0_21 = arith.constant 0 : index
    %21 = vector.load %arg5[%c504, %c0_21] : memref<664x64xf32, #tpu.memory_space<vmem>>, vector<8x64xf32>
    %c512 = arith.constant 512 : index
    %c0_22 = arith.constant 0 : index
    %22 = vector.load %arg5[%c512, %c0_22] : memref<664x64xf32, #tpu.memory_space<vmem>>, vector<1x64xf32>
    %c520 = arith.constant 520 : index
    %c0_23 = arith.constant 0 : index
    %23 = vector.load %arg5[%c520, %c0_23] : memref<664x64xf32, #tpu.memory_space<vmem>>, vector<64x64xf32>
    %c584 = arith.constant 584 : index
    %c0_24 = arith.constant 0 : index
    %24 = vector.load %arg5[%c584, %c0_24] : memref<664x64xf32, #tpu.memory_space<vmem>>, vector<1x64xf32>
    %c592 = arith.constant 592 : index
    %c0_25 = arith.constant 0 : index
    %25 = vector.load %arg5[%c592, %c0_25] : memref<664x64xf32, #tpu.memory_space<vmem>>, vector<64x1xf32>
    %c656 = arith.constant 656 : index
    %c0_26 = arith.constant 0 : index
    %26 = vector.load %arg5[%c656, %c0_26] : memref<664x64xf32, #tpu.memory_space<vmem>>, vector<1x1xf32>
    %c0_27 = arith.constant 0 : index
    %c0_28 = arith.constant 0 : index
    %27 = vector.load %arg0[%c0_27, %c0_28] : memref<128x8xf32, #tpu.memory_space<vmem>>, vector<128x8xf32>
    %c0_29 = arith.constant 0 : index
    %c0_30 = arith.constant 0 : index
    %28 = vector.load %arg1[%c0_29, %c0_30] : memref<128x1xf32, #tpu.memory_space<vmem>>, vector<128x1xf32>
    %c0_31 = arith.constant 0 : index
    %c0_32 = arith.constant 0 : index
    %29 = vector.load %arg2[%c0_31, %c0_32] : memref<128x1xf32, #tpu.memory_space<vmem>>, vector<128x1xf32>
    %c0_33 = arith.constant 0 : index
    %c0_34 = arith.constant 0 : index
    %30 = vector.load %arg3[%c0_33, %c0_34] : memref<128x128xf32, #tpu.memory_space<vmem>>, vector<128x128xf32>
    %c0_35 = arith.constant 0 : index
    %c0_36 = arith.constant 0 : index
    %31 = vector.load %arg4[%c0_35, %c0_36] : memref<128x128xf32, #tpu.memory_space<vmem>>, vector<128x128xf32>
    %cst = arith.constant dense<0.000000e+00> : vector<128x64xf32>
    %32 = tpu.matmul %27, %0, %cst {dimension_numbers = #tpu.dot_dimension_numbers<[1], [0], [0], [1], [0, 0, 1, 1], [], []>} : vector<128x8xf32>, vector<8x64xf32>, vector<128x64xf32> -> vector<128x64xf32>
    %33 = vector.broadcast %1 : vector<1x64xf32> to vector<128x64xf32>
    %34 = arith.addf %32, %33 : vector<128x64xf32>
    %cst_37 = arith.constant 0.000000e+00 : f32
    %35 = vector.broadcast %cst_37 : f32 to vector<128x64xf32>
    %36 = arith.maximumf %34, %35 : vector<128x64xf32>
    %cst_38 = arith.constant dense<0.000000e+00> : vector<128x64xf32>
    %37 = tpu.matmul %36, %2, %cst_38 {dimension_numbers = #tpu.dot_dimension_numbers<[1], [0], [0], [1], [0, 0, 1, 1], [], []>} : vector<128x64xf32>, vector<64x64xf32>, vector<128x64xf32> -> vector<128x64xf32>
    %38 = vector.broadcast %3 : vector<1x64xf32> to vector<128x64xf32>
    %39 = arith.addf %37, %38 : vector<128x64xf32>
    %cst_39 = arith.constant 0.000000e+00 : f32
    %40 = vector.broadcast %cst_39 : f32 to vector<128x64xf32>
    %41 = arith.maximumf %39, %40 : vector<128x64xf32>
    %cst_40 = arith.constant dense<0.000000e+00> : vector<128x8xf32>
    %42 = tpu.matmul %41, %4, %cst_40 {dimension_numbers = #tpu.dot_dimension_numbers<[1], [0], [0], [1], [0, 0, 1, 1], [], []>} : vector<128x64xf32>, vector<64x8xf32>, vector<128x8xf32> -> vector<128x8xf32>
    %43 = vector.broadcast %5 : vector<1x8xf32> to vector<128x8xf32>
    %44 = arith.addf %42, %43 : vector<128x8xf32>
    %cst_41 = arith.constant 0.000000e+00 : f32
    %45 = vector.broadcast %cst_41 : f32 to vector<128x8xf32>
    %46 = arith.maximumf %44, %45 : vector<128x8xf32>
    %cst_42 = arith.constant 0.000000e+00 : f32
    %47 = vector.broadcast %cst_42 : f32 to vector<128x128xf32>
    %48 = arith.cmpf ogt, %31, %47 : vector<128x128xf32>
    %cst_43 = arith.constant -1.000000e+30 : f32
    %49 = vector.shape_cast %29 : vector<128x1xf32> to vector<128x1xf32>
    %50 = vector.broadcast %49 : vector<128x1xf32> to vector<128x128xf32>
    %51 = vector.broadcast %cst_43 : f32 to vector<128x128xf32>
    %52 = arith.select %48, %50, %51 : vector<128x128xi1>, vector<128x128xf32>
    %cst_44 = arith.constant dense<0xFF800000> : vector<128xf32>
    %53 = vector.multi_reduction <maximumf>, %52, %cst_44 [0] : vector<128x128xf32> to vector<128xf32>
    %54 = vector.shape_cast %53 : vector<128xf32> to vector<1x128xf32>
    %cst_45 = arith.constant dense<0.000000e+00> : vector<128x1xf32>
    %55 = tpu.matmul %31, %54, %cst_45 {dimension_numbers = #tpu.dot_dimension_numbers<[1], [1], [0], [0], [0, 0, 1, 0], [], []>} : vector<128x128xf32>, vector<1x128xf32>, vector<128x1xf32> -> vector<128x1xf32>
    %56 = arith.subf %29, %55 : vector<128x1xf32>
    %57 = math.exp %56 : vector<128x1xf32>
    %cst_46 = arith.constant dense<0.000000e+00> : vector<128x1xf32>
    %58 = tpu.matmul %31, %57, %cst_46 {dimension_numbers = #tpu.dot_dimension_numbers<[0], [0], [1], [1], [0, 1, 1, 1], [], []>} : vector<128x128xf32>, vector<128x1xf32>, vector<128x1xf32> -> vector<128x1xf32>
    %cst_47 = arith.constant dense<0.000000e+00> : vector<128x1xf32>
    %59 = tpu.matmul %31, %58, %cst_47 {dimension_numbers = #tpu.dot_dimension_numbers<[1], [0], [0], [1], [0, 0, 1, 1], [], []>} : vector<128x128xf32>, vector<128x1xf32>, vector<128x1xf32> -> vector<128x1xf32>
    %cst_48 = arith.constant 9.99999968E-21 : f32
    %60 = vector.broadcast %cst_48 : f32 to vector<128x1xf32>
    %61 = arith.maximumf %59, %60 : vector<128x1xf32>
    %62 = tpu.reciprocal %61 {approx = true} : vector<128x1xf32> -> vector<128x1xf32>
    %63 = arith.mulf %57, %62 : vector<128x1xf32>
    %cst_49 = arith.constant dense<0.000000e+00> : vector<128x8xf32>
    %64 = tpu.matmul %30, %46, %cst_49 {dimension_numbers = #tpu.dot_dimension_numbers<[1], [0], [0], [1], [0, 0, 1, 1], [], []>} : vector<128x128xf32>, vector<128x8xf32>, vector<128x8xf32> -> vector<128x8xf32>
    %65 = vector.broadcast %63 : vector<128x1xf32> to vector<128x8xf32>
    %66 = arith.mulf %65, %64 : vector<128x8xf32>
    %cst_50 = arith.constant dense<0.000000e+00> : vector<128x8xf32>
    %67 = tpu.matmul %31, %66, %cst_50 {dimension_numbers = #tpu.dot_dimension_numbers<[0], [0], [1], [1], [0, 1, 1, 1], [], []>} : vector<128x128xf32>, vector<128x8xf32>, vector<128x8xf32> -> vector<128x8xf32>
    %cst_51 = arith.constant dense<0.000000e+00> : vector<128x8xf32>
    %68 = tpu.matmul %30, %67, %cst_51 {dimension_numbers = #tpu.dot_dimension_numbers<[1], [0], [0], [1], [0, 0, 1, 1], [], []>} : vector<128x128xf32>, vector<128x8xf32>, vector<128x8xf32> -> vector<128x8xf32>
    %cst_52 = arith.constant dense<0.000000e+00> : vector<128x8xf32>
    %69 = tpu.matmul %31, %67, %cst_52 {dimension_numbers = #tpu.dot_dimension_numbers<[1], [0], [0], [1], [0, 0, 1, 1], [], []>} : vector<128x128xf32>, vector<128x8xf32>, vector<128x8xf32> -> vector<128x8xf32>
    %70 = vector.broadcast %28 : vector<128x1xf32> to vector<128x64xf32>
    %71 = vector.broadcast %13 : vector<1x64xf32> to vector<128x64xf32>
    %72 = arith.mulf %70, %71 : vector<128x64xf32>
    %cst_53 = arith.constant dense<0.000000e+00> : vector<128x64xf32>
    %73 = tpu.matmul %68, %14, %cst_53 {dimension_numbers = #tpu.dot_dimension_numbers<[1], [0], [0], [1], [0, 0, 1, 1], [], []>} : vector<128x8xf32>, vector<8x64xf32>, vector<128x64xf32> -> vector<128x64xf32>
    %74 = arith.addf %72, %73 : vector<128x64xf32>
    %cst_54 = arith.constant dense<0.000000e+00> : vector<128x64xf32>
    %75 = tpu.matmul %69, %15, %cst_54 {dimension_numbers = #tpu.dot_dimension_numbers<[1], [0], [0], [1], [0, 0, 1, 1], [], []>} : vector<128x8xf32>, vector<8x64xf32>, vector<128x64xf32> -> vector<128x64xf32>
    %76 = arith.addf %74, %75 : vector<128x64xf32>
    %77 = vector.broadcast %16 : vector<1x64xf32> to vector<128x64xf32>
    %78 = arith.addf %76, %77 : vector<128x64xf32>
    %cst_55 = arith.constant 0.000000e+00 : f32
    %79 = vector.broadcast %cst_55 : f32 to vector<128x64xf32>
    %80 = arith.maximumf %78, %79 : vector<128x64xf32>
    %cst_56 = arith.constant dense<0.000000e+00> : vector<128x64xf32>
    %81 = tpu.matmul %80, %17, %cst_56 {dimension_numbers = #tpu.dot_dimension_numbers<[1], [0], [0], [1], [0, 0, 1, 1], [], []>} : vector<128x64xf32>, vector<64x64xf32>, vector<128x64xf32> -> vector<128x64xf32>
    %82 = vector.broadcast %18 : vector<1x64xf32> to vector<128x64xf32>
    %83 = arith.addf %81, %82 : vector<128x64xf32>
    %cst_57 = arith.constant 0.000000e+00 : f32
    %84 = vector.broadcast %cst_57 : f32 to vector<128x64xf32>
    %85 = arith.maximumf %83, %84 : vector<128x64xf32>
    %cst_58 = arith.constant dense<0.000000e+00> : vector<128x1xf32>
    %86 = tpu.matmul %85, %19, %cst_58 {dimension_numbers = #tpu.dot_dimension_numbers<[1], [0], [0], [1], [0, 0, 1, 1], [], []>} : vector<128x64xf32>, vector<64x1xf32>, vector<128x1xf32> -> vector<128x1xf32>
    %87 = vector.broadcast %20 : vector<1x1xf32> to vector<128x1xf32>
    %88 = arith.addf %86, %87 : vector<128x1xf32>
    %cst_59 = arith.constant 0.000000e+00 : f32
    %89 = vector.broadcast %cst_59 : f32 to vector<128x1xf32>
    %90 = arith.maximumf %88, %89 : vector<128x1xf32>
    %cst_60 = arith.constant dense<0.000000e+00> : vector<128x1xf32>
    %91 = tpu.matmul %31, %90, %cst_60 {dimension_numbers = #tpu.dot_dimension_numbers<[0], [0], [1], [1], [0, 1, 1, 1], [], []>} : vector<128x128xf32>, vector<128x1xf32>, vector<128x1xf32> -> vector<128x1xf32>
    %92 = vector.broadcast %91 : vector<128x1xf32> to vector<128x64xf32>
    %93 = vector.broadcast %6 : vector<1x64xf32> to vector<128x64xf32>
    %94 = arith.mulf %92, %93 : vector<128x64xf32>
    %cst_61 = arith.constant dense<0.000000e+00> : vector<128x64xf32>
    %95 = tpu.matmul %67, %7, %cst_61 {dimension_numbers = #tpu.dot_dimension_numbers<[1], [0], [0], [1], [0, 0, 1, 1], [], []>} : vector<128x8xf32>, vector<8x64xf32>, vector<128x64xf32> -> vector<128x64xf32>
    %96 = arith.addf %94, %95 : vector<128x64xf32>
    %97 = vector.broadcast %8 : vector<1x64xf32> to vector<128x64xf32>
    %98 = arith.addf %96, %97 : vector<128x64xf32>
    %cst_62 = arith.constant 0.000000e+00 : f32
    %99 = vector.broadcast %cst_62 : f32 to vector<128x64xf32>
    %100 = arith.maximumf %98, %99 : vector<128x64xf32>
    %cst_63 = arith.constant dense<0.000000e+00> : vector<128x64xf32>
    %101 = tpu.matmul %100, %9, %cst_63 {dimension_numbers = #tpu.dot_dimension_numbers<[1], [0], [0], [1], [0, 0, 1, 1], [], []>} : vector<128x64xf32>, vector<64x64xf32>, vector<128x64xf32> -> vector<128x64xf32>
    %102 = vector.broadcast %10 : vector<1x64xf32> to vector<128x64xf32>
    %103 = arith.addf %101, %102 : vector<128x64xf32>
    %cst_64 = arith.constant 0.000000e+00 : f32
    %104 = vector.broadcast %cst_64 : f32 to vector<128x64xf32>
    %105 = arith.maximumf %103, %104 : vector<128x64xf32>
    %cst_65 = arith.constant dense<0.000000e+00> : vector<128x8xf32>
    %106 = tpu.matmul %105, %11, %cst_65 {dimension_numbers = #tpu.dot_dimension_numbers<[1], [0], [0], [1], [0, 0, 1, 1], [], []>} : vector<128x64xf32>, vector<64x8xf32>, vector<128x8xf32> -> vector<128x8xf32>
    %107 = vector.broadcast %12 : vector<1x8xf32> to vector<128x8xf32>
    %108 = arith.addf %106, %107 : vector<128x8xf32>
    %cst_66 = arith.constant 0.000000e+00 : f32
    %109 = vector.broadcast %cst_66 : f32 to vector<128x8xf32>
    %110 = arith.maximumf %108, %109 : vector<128x8xf32>
    %cst_67 = arith.constant dense<0.000000e+00> : vector<128x8xf32>
    %111 = tpu.matmul %30, %110, %cst_67 {dimension_numbers = #tpu.dot_dimension_numbers<[1], [0], [0], [1], [0, 0, 1, 1], [], []>} : vector<128x128xf32>, vector<128x8xf32>, vector<128x8xf32> -> vector<128x8xf32>
    %cst_68 = arith.constant dense<0.000000e+00> : vector<128x8xf32>
    %112 = tpu.matmul %31, %110, %cst_68 {dimension_numbers = #tpu.dot_dimension_numbers<[1], [0], [0], [1], [0, 0, 1, 1], [], []>} : vector<128x128xf32>, vector<128x8xf32>, vector<128x8xf32> -> vector<128x8xf32>
    %113 = vector.broadcast %90 : vector<128x1xf32> to vector<128x64xf32>
    %114 = vector.broadcast %13 : vector<1x64xf32> to vector<128x64xf32>
    %115 = arith.mulf %113, %114 : vector<128x64xf32>
    %cst_69 = arith.constant dense<0.000000e+00> : vector<128x64xf32>
    %116 = tpu.matmul %111, %14, %cst_69 {dimension_numbers = #tpu.dot_dimension_numbers<[1], [0], [0], [1], [0, 0, 1, 1], [], []>} : vector<128x8xf32>, vector<8x64xf32>, vector<128x64xf32> -> vector<128x64xf32>
    %117 = arith.addf %115, %116 : vector<128x64xf32>
    %cst_70 = arith.constant dense<0.000000e+00> : vector<128x64xf32>
    %118 = tpu.matmul %112, %15, %cst_70 {dimension_numbers = #tpu.dot_dimension_numbers<[1], [0], [0], [1], [0, 0, 1, 1], [], []>} : vector<128x8xf32>, vector<8x64xf32>, vector<128x64xf32> -> vector<128x64xf32>
    %119 = arith.addf %117, %118 : vector<128x64xf32>
    %120 = vector.broadcast %16 : vector<1x64xf32> to vector<128x64xf32>
    %121 = arith.addf %119, %120 : vector<128x64xf32>
    %cst_71 = arith.constant 0.000000e+00 : f32
    %122 = vector.broadcast %cst_71 : f32 to vector<128x64xf32>
    %123 = arith.maximumf %121, %122 : vector<128x64xf32>
    %cst_72 = arith.constant dense<0.000000e+00> : vector<128x64xf32>
    %124 = tpu.matmul %123, %17, %cst_72 {dimension_numbers = #tpu.dot_dimension_numbers<[1], [0], [0], [1], [0, 0, 1, 1], [], []>} : vector<128x64xf32>, vector<64x64xf32>, vector<128x64xf32> -> vector<128x64xf32>
    %125 = vector.broadcast %18 : vector<1x64xf32> to vector<128x64xf32>
    %126 = arith.addf %124, %125 : vector<128x64xf32>
    %cst_73 = arith.constant 0.000000e+00 : f32
    %127 = vector.broadcast %cst_73 : f32 to vector<128x64xf32>
    %128 = arith.maximumf %126, %127 : vector<128x64xf32>
    %cst_74 = arith.constant dense<0.000000e+00> : vector<128x1xf32>
    %129 = tpu.matmul %128, %19, %cst_74 {dimension_numbers = #tpu.dot_dimension_numbers<[1], [0], [0], [1], [0, 0, 1, 1], [], []>} : vector<128x64xf32>, vector<64x1xf32>, vector<128x1xf32> -> vector<128x1xf32>
    %130 = vector.broadcast %20 : vector<1x1xf32> to vector<128x1xf32>
    %131 = arith.addf %129, %130 : vector<128x1xf32>
    %cst_75 = arith.constant 0.000000e+00 : f32
    %132 = vector.broadcast %cst_75 : f32 to vector<128x1xf32>
    %133 = arith.maximumf %131, %132 : vector<128x1xf32>
    %cst_76 = arith.constant dense<0.000000e+00> : vector<128x1xf32>
    %134 = tpu.matmul %31, %133, %cst_76 {dimension_numbers = #tpu.dot_dimension_numbers<[0], [0], [1], [1], [0, 1, 1, 1], [], []>} : vector<128x128xf32>, vector<128x1xf32>, vector<128x1xf32> -> vector<128x1xf32>
    %135 = vector.broadcast %134 : vector<128x1xf32> to vector<128x64xf32>
    %136 = vector.broadcast %6 : vector<1x64xf32> to vector<128x64xf32>
    %137 = arith.mulf %135, %136 : vector<128x64xf32>
    %cst_77 = arith.constant dense<0.000000e+00> : vector<128x64xf32>
    %138 = tpu.matmul %110, %7, %cst_77 {dimension_numbers = #tpu.dot_dimension_numbers<[1], [0], [0], [1], [0, 0, 1, 1], [], []>} : vector<128x8xf32>, vector<8x64xf32>, vector<128x64xf32> -> vector<128x64xf32>
    %139 = arith.addf %137, %138 : vector<128x64xf32>
    %140 = vector.broadcast %8 : vector<1x64xf32> to vector<128x64xf32>
    %141 = arith.addf %139, %140 : vector<128x64xf32>
    %cst_78 = arith.constant 0.000000e+00 : f32
    %142 = vector.broadcast %cst_78 : f32 to vector<128x64xf32>
    %143 = arith.maximumf %141, %142 : vector<128x64xf32>
    %cst_79 = arith.constant dense<0.000000e+00> : vector<128x64xf32>
    %144 = tpu.matmul %143, %9, %cst_79 {dimension_numbers = #tpu.dot_dimension_numbers<[1], [0], [0], [1], [0, 0, 1, 1], [], []>} : vector<128x64xf32>, vector<64x64xf32>, vector<128x64xf32> -> vector<128x64xf32>
    %145 = vector.broadcast %10 : vector<1x64xf32> to vector<128x64xf32>
    %146 = arith.addf %144, %145 : vector<128x64xf32>
    %cst_80 = arith.constant 0.000000e+00 : f32
    %147 = vector.broadcast %cst_80 : f32 to vector<128x64xf32>
    %148 = arith.maximumf %146, %147 : vector<128x64xf32>
    %cst_81 = arith.constant dense<0.000000e+00> : vector<128x8xf32>
    %149 = tpu.matmul %148, %11, %cst_81 {dimension_numbers = #tpu.dot_dimension_numbers<[1], [0], [0], [1], [0, 0, 1, 1], [], []>} : vector<128x64xf32>, vector<64x8xf32>, vector<128x8xf32> -> vector<128x8xf32>
    %150 = vector.broadcast %12 : vector<1x8xf32> to vector<128x8xf32>
    %151 = arith.addf %149, %150 : vector<128x8xf32>
    %cst_82 = arith.constant 0.000000e+00 : f32
    %152 = vector.broadcast %cst_82 : f32 to vector<128x8xf32>
    %153 = arith.maximumf %151, %152 : vector<128x8xf32>
    %cst_83 = arith.constant 0.000000e+00 : f32
    %154 = vector.broadcast %cst_83 : f32 to vector<128x128xf32>
    %155 = arith.cmpf ogt, %31, %154 : vector<128x128xf32>
    %cst_84 = arith.constant -1.000000e+30 : f32
    %156 = vector.shape_cast %29 : vector<128x1xf32> to vector<128x1xf32>
    %157 = vector.broadcast %156 : vector<128x1xf32> to vector<128x128xf32>
    %158 = vector.broadcast %cst_84 : f32 to vector<128x128xf32>
    %159 = arith.select %155, %157, %158 : vector<128x128xi1>, vector<128x128xf32>
    %cst_85 = arith.constant dense<0xFF800000> : vector<128xf32>
    %160 = vector.multi_reduction <maximumf>, %159, %cst_85 [0] : vector<128x128xf32> to vector<128xf32>
    %161 = vector.shape_cast %160 : vector<128xf32> to vector<1x128xf32>
    %cst_86 = arith.constant dense<0.000000e+00> : vector<128x1xf32>
    %162 = tpu.matmul %31, %161, %cst_86 {dimension_numbers = #tpu.dot_dimension_numbers<[1], [1], [0], [0], [0, 0, 1, 0], [], []>} : vector<128x128xf32>, vector<1x128xf32>, vector<128x1xf32> -> vector<128x1xf32>
    %163 = arith.subf %29, %162 : vector<128x1xf32>
    %164 = math.exp %163 : vector<128x1xf32>
    %cst_87 = arith.constant dense<0.000000e+00> : vector<128x1xf32>
    %165 = tpu.matmul %31, %164, %cst_87 {dimension_numbers = #tpu.dot_dimension_numbers<[0], [0], [1], [1], [0, 1, 1, 1], [], []>} : vector<128x128xf32>, vector<128x1xf32>, vector<128x1xf32> -> vector<128x1xf32>
    %cst_88 = arith.constant dense<0.000000e+00> : vector<128x1xf32>
    %166 = tpu.matmul %31, %165, %cst_88 {dimension_numbers = #tpu.dot_dimension_numbers<[1], [0], [0], [1], [0, 0, 1, 1], [], []>} : vector<128x128xf32>, vector<128x1xf32>, vector<128x1xf32> -> vector<128x1xf32>
    %cst_89 = arith.constant 9.99999968E-21 : f32
    %167 = vector.broadcast %cst_89 : f32 to vector<128x1xf32>
    %168 = arith.maximumf %166, %167 : vector<128x1xf32>
    %169 = tpu.reciprocal %168 {approx = true} : vector<128x1xf32> -> vector<128x1xf32>
    %170 = arith.mulf %164, %169 : vector<128x1xf32>
    %cst_90 = arith.constant dense<0.000000e+00> : vector<128x8xf32>
    %171 = tpu.matmul %30, %153, %cst_90 {dimension_numbers = #tpu.dot_dimension_numbers<[1], [0], [0], [1], [0, 0, 1, 1], [], []>} : vector<128x128xf32>, vector<128x8xf32>, vector<128x8xf32> -> vector<128x8xf32>
    %172 = vector.broadcast %170 : vector<128x1xf32> to vector<128x8xf32>
    %173 = arith.mulf %172, %171 : vector<128x8xf32>
    %cst_91 = arith.constant dense<0.000000e+00> : vector<128x8xf32>
    %174 = tpu.matmul %31, %173, %cst_91 {dimension_numbers = #tpu.dot_dimension_numbers<[0], [0], [1], [1], [0, 1, 1, 1], [], []>} : vector<128x128xf32>, vector<128x8xf32>, vector<128x8xf32> -> vector<128x8xf32>
    %cst_92 = arith.constant dense<0.000000e+00> : vector<128x64xf32>
    %175 = tpu.matmul %174, %21, %cst_92 {dimension_numbers = #tpu.dot_dimension_numbers<[1], [0], [0], [1], [0, 0, 1, 1], [], []>} : vector<128x8xf32>, vector<8x64xf32>, vector<128x64xf32> -> vector<128x64xf32>
    %176 = vector.broadcast %22 : vector<1x64xf32> to vector<128x64xf32>
    %177 = arith.addf %175, %176 : vector<128x64xf32>
    %cst_93 = arith.constant 0.000000e+00 : f32
    %178 = vector.broadcast %cst_93 : f32 to vector<128x64xf32>
    %179 = arith.maximumf %177, %178 : vector<128x64xf32>
    %cst_94 = arith.constant dense<0.000000e+00> : vector<128x64xf32>
    %180 = tpu.matmul %179, %23, %cst_94 {dimension_numbers = #tpu.dot_dimension_numbers<[1], [0], [0], [1], [0, 0, 1, 1], [], []>} : vector<128x64xf32>, vector<64x64xf32>, vector<128x64xf32> -> vector<128x64xf32>
    %181 = vector.broadcast %24 : vector<1x64xf32> to vector<128x64xf32>
    %182 = arith.addf %180, %181 : vector<128x64xf32>
    %cst_95 = arith.constant 0.000000e+00 : f32
    %183 = vector.broadcast %cst_95 : f32 to vector<128x64xf32>
    %184 = arith.maximumf %182, %183 : vector<128x64xf32>
    %cst_96 = arith.constant dense<0.000000e+00> : vector<128x1xf32>
    %185 = tpu.matmul %184, %25, %cst_96 {dimension_numbers = #tpu.dot_dimension_numbers<[1], [0], [0], [1], [0, 0, 1, 1], [], []>} : vector<128x64xf32>, vector<64x1xf32>, vector<128x1xf32> -> vector<128x1xf32>
    %186 = vector.broadcast %26 : vector<1x1xf32> to vector<128x1xf32>
    %187 = arith.addf %185, %186 : vector<128x1xf32>
    %cst_97 = arith.constant 0.000000e+00 : f32
    %188 = vector.broadcast %cst_97 : f32 to vector<128x1xf32>
    %189 = arith.maximumf %187, %188 : vector<128x1xf32>
    %c0_98 = arith.constant 0 : index
    %c0_99 = arith.constant 0 : index
    %190 = vector.load %arg6[%c0_98, %c0_99] : memref<128x1xf32, #tpu.memory_space<vmem>>, vector<128x1xf32>
    tpu.vector_store %arg6[%c0_98, %c0_99], %189 {strides = array<i32>} : memref<128x1xf32, #tpu.memory_space<vmem>>, vector<128x1xf32>,
    return
  }
}

</mosaic_0001>

<llo_original>
// kernel: tpu_custom_call.1
$region0: #{tpu_custom_call.1}
  #allocation0 [shape = 'u32[]', space=smem, size = 0x4, offset = 0x4, fixed_abs, tag = 'smem constant byte address 0x4 - core index']
  #allocation1 [shape = 'u32[144,128]{1,0:T(1,128)}', space=vmem, size = 0x12000, scoped, tag = 'internal scratch']
  %s0 = inlined_call_operand.vmem [shape: f32[128,8], index: 0, kind: input, shape index: {}]
  %s1 = inlined_call_operand.vmem [shape: f32[128,1], index: 1, kind: input, shape index: {}]
  %s2 = inlined_call_operand.vmem [shape: f32[128,1], index: 2, kind: input, shape index: {}]
  %s3 = inlined_call_operand.vmem [shape: f32[128,128], index: 3, kind: input, shape index: {}]
  %s4 = inlined_call_operand.vmem [shape: f32[128,128], index: 4, kind: input, shape index: {}]
  %s5 = inlined_call_operand.vmem [shape: f32[664,64], index: 5, kind: input, shape index: {}]
  %s6 = inlined_call_operand.vmem [shape: f32[128,1], index: 6, kind: output, shape index: {}]
  %s7 = sld [smem:[#allocation0]]
  $region34: #{tpu_custom_call.1} parent=0
    _
  %s9 = ssub.s32 1, %s7
  %s10 = scalar_select 0, %s9, %s7
  // Predicated region
  $region2: #{tpu_custom_call.1} parent=0 // pred_check
    _
  $region3: #{tpu_custom_call.1} parent=0 // pred_check_branch
    %12 = sbr.rel (0) target = $region5
  $region4: #{tpu_custom_call.1} parent=0 // pred_region
    _
  $region5: #{tpu_custom_call.1} parent=0 // pred_fallthru
    _
  // Predicated region
  $region6: #{tpu_custom_call.1} parent=0 // pred_check
    _
  $region7: #{tpu_custom_call.1} parent=0 // pred_check_branch
    %14 = sbr.rel (0) target = $region9
  $region8: #{tpu_custom_call.1} parent=0 // pred_region
    _
  $region9: #{tpu_custom_call.1} parent=0 // pred_fallthru
    _
  // Predicated region
  $region10: #{tpu_custom_call.1} parent=0 // pred_check
    _
  $region11: #{tpu_custom_call.1} parent=0 // pred_check_branch
    %16 = sbr.rel (0) target = $region13
  $region12: #{tpu_custom_call.1} parent=0 // pred_region
    _
  $region13: #{tpu_custom_call.1} parent=0 // pred_fallthru
    _
  // Predicated region
  $region14: #{tpu_custom_call.1} parent=0 // pred_check
    _
  $region15: #{tpu_custom_call.1} parent=0 // pred_check_branch
    %18 = sbr.rel (0) target = $region17
  $region16: #{tpu_custom_call.1} parent=0 // pred_region
    _
  $region17: #{tpu_custom_call.1} parent=0 // pred_fallthru
    _
  // Predicated region
  $region18: #{tpu_custom_call.1} parent=0 // pred_check
    _
  $region19: #{tpu_custom_call.1} parent=0 // pred_check_branch
    %20 = sbr.rel (0) target = $region21
  $region20: #{tpu_custom_call.1} parent=0 // pred_region
    _
  $region21: #{tpu_custom_call.1} parent=0 // pred_fallthru
    _
  // Predicated region
  $region22: #{tpu_custom_call.1} parent=0 // pred_check
    _
  $region23: #{tpu_custom_call.1} parent=0 // pred_check_branch
    %22 = sbr.rel (0) target = $region25
  $region24: #{tpu_custom_call.1} parent=0 // pred_region
    _
  $region25: #{tpu_custom_call.1} parent=0 // pred_fallthru
    _
  %v23 = vld [vmem:[%s5] sm:$0xff]
  %v24 = vld [vmem:[%s5 + $0x8] sm:$0x1]
  %v25 = vld [vmem:[%s5 + $0x10] sm:$0xff]
  %v26 = vld [vmem:[%s5 + $0x18] sm:$0xff]
  %v27 = vld [vmem:[%s5 + $0x20] sm:$0xff]
  %v28 = vld [vmem:[%s5 + $0x28] sm:$0xff]
  %v29 = vld [vmem:[%s5 + $0x30] sm:$0xff]
  %v30 = vld [vmem:[%s5 + $0x38] sm:$0xff]
  %v31 = vld [vmem:[%s5 + $0x40] sm:$0xff]
  %v32 = vld [vmem:[%s5 + $0x48] sm:$0xff]
  %v33 = vld [vmem:[%s5 + $0x50] sm:$0x1]
  %v34 = vld [vmem:[%s5 + $0x58] sm:$0xff]
  %v35 = vld [vmem:[%s5 + $0x60] sm:$0xff]
  %v36 = vld [vmem:[%s5 + $0x68] sm:$0xff]
  %v37 = vld [vmem:[%s5 + $0x70] sm:$0xff]
  %v38 = vld [vmem:[%s5 + $0x78] sm:$0xff]
  %v39 = vld [vmem:[%s5 + $0x80] sm:$0xff]
  %v40 = vld [vmem:[%s5 + $0x88] sm:$0xff]
  %v41 = vld [vmem:[%s5 + $0x90] sm:$0xff]
  %v42 = vld [vmem:[%s5 + $0x98] sm:$0x1]
  %v43 = vld [vmem:[%s5 + $0xa0] sm:$0x1]
  %v44 = vld [vmem:[%s5 + $0xa8] sm:$0xff]
  %v45 = vld [vmem:[%s5 + $0xb0] sm:$0x1]
  %v46 = vld [vmem:[%s5 + $0xb8] sm:$0xff]
  %v47 = vld [vmem:[%s5 + $0xc0] sm:$0xff]
  %v48 = vld [vmem:[%s5 + $0xc8] sm:$0xff]
  %v49 = vld [vmem:[%s5 + $0xd0] sm:$0xff]
  %v50 = vld [vmem:[%s5 + $0xd8] sm:$0xff]
  %v51 = vld [vmem:[%s5 + $0xe0] sm:$0xff]
  %v52 = vld [vmem:[%s5 + $0xe8] sm:$0xff]
  %v53 = vld [vmem:[%s5 + $0xf0] sm:$0xff]
  %v54 = vld [vmem:[%s5 + $0xf8] sm:$0x1]
  %v55 = vld [vmem:[%s5 + $0x100] sm:$0xff]
  %v56 = vld [vmem:[%s5 + $0x108] sm:$0xff]
  %v57 = vld [vmem:[%s5 + $0x110] sm:$0xff]
  %v58 = vld [vmem:[%s5 + $0x118] sm:$0xff]
  %v59 = vld [vmem:[%s5 + $0x120] sm:$0xff]
  %v60 = vld [vmem:[%s5 + $0x128] sm:$0xff]
  %v61 = vld [vmem:[%s5 + $0x130] sm:$0xff]
  %v62 = vld [vmem:[%s5 + $0x138] sm:$0xff]
  %v63 = vld [vmem:[%s5 + $0x140] sm:$0x1]
  %v64 = vld [vmem:[%s5 + $0x148] sm:$0x1]
  %v65 = vld [vmem:[%s5 + $0x150] sm:$0xff]
  %v66 = vld [vmem:[%s5 + $0x158] sm:$0xff]
  %v67 = vld [vmem:[%s5 + $0x160] sm:$0x1]
  %v68 = vld [vmem:[%s5 + $0x168] sm:$0xff]
  %v69 = vld [vmem:[%s5 + $0x170] sm:$0xff]
  %v70 = vld [vmem:[%s5 + $0x178] sm:$0xff]
  %v71 = vld [vmem:[%s5 + $0x180] sm:$0xff]
  %v72 = vld [vmem:[%s5 + $0x188] sm:$0xff]
  %v73 = vld [vmem:[%s5 + $0x190] sm:$0xff]
  %v74 = vld [vmem:[%s5 + $0x198] sm:$0xff]
  %v75 = vld [vmem:[%s5 + $0x1a0] sm:$0xff]
  %v76 = vld [vmem:[%s5 + $0x1a8] sm:$0x1]
  %v77 = vld [vmem:[%s5 + $0x1b0] sm:$0xff]
  %v78 = vld [vmem:[%s5 + $0x1b8] sm:$0xff]
  %v79 = vld [vmem:[%s5 + $0x1c0] sm:$0xff]
  %v80 = vld [vmem:[%s5 + $0x1c8] sm:$0xff]
  %v81 = vld [vmem:[%s5 + $0x1d0] sm:$0xff]
  %v82 = vld [vmem:[%s5 + $0x1d8] sm:$0xff]
  %v83 = vld [vmem:[%s5 + $0x1e0] sm:$0xff]
  %v84 = vld [vmem:[%s5 + $0x1e8] sm:$0xff]
  %v85 = vld [vmem:[%s5 + $0x1f0] sm:$0x1]
  %v86 = vld [vmem:[%s5 + $0x1f8] sm:$0xff]
  %v87 = vld [vmem:[%s5 + $0x200] sm:$0x1]
  %v88 = vld [vmem:[%s5 + $0x208] sm:$0xff]
  %v89 = vld [vmem:[%s5 + $0x210] sm:$0xff]
  %v90 = vld [vmem:[%s5 + $0x218] sm:$0xff]
  %v91 = vld [vmem:[%s5 + $0x220] sm:$0xff]
  %v92 = vld [vmem:[%s5 + $0x228] sm:$0xff]
  %v93 = vld [vmem:[%s5 + $0x230] sm:$0xff]
  %v94 = vld [vmem:[%s5 + $0x238] sm:$0xff]
  %v95 = vld [vmem:[%s5 + $0x240] sm:$0xff]
  %v96 = vld [vmem:[%s5 + $0x248] sm:$0x1]
  %v97 = vld [vmem:[%s5 + $0x250] sm:$0xff]
  %v98 = vld [vmem:[%s5 + $0x258] sm:$0xff]
  %v99 = vld [vmem:[%s5 + $0x260] sm:$0xff]
  %v100 = vld [vmem:[%s5 + $0x268] sm:$0xff]
  %v101 = vld [vmem:[%s5 + $0x270] sm:$0xff]
  %v102 = vld [vmem:[%s5 + $0x278] sm:$0xff]
  %v103 = vld [vmem:[%s5 + $0x280] sm:$0xff]
  %v104 = vld [vmem:[%s5 + $0x288] sm:$0xff]
  %v105 = vld [vmem:[%s5 + $0x290] sm:$0x1]
  %v106 = vld [vmem:[%s0] sm:$0xff]
  %v107 = vld [vmem:[%s0 + $0x8] sm:$0xff]
  %v108 = vld [vmem:[%s0 + $0x10] sm:$0xff]
  %v109 = vld [vmem:[%s0 + $0x18] sm:$0xff]
  %v110 = vld [vmem:[%s0 + $0x20] sm:$0xff]
  %v111 = vld [vmem:[%s0 + $0x28] sm:$0xff]
  %v112 = vld [vmem:[%s0 + $0x30] sm:$0xff]
  %v113 = vld [vmem:[%s0 + $0x38] sm:$0xff]
  %v114 = vld [vmem:[%s0 + $0x40] sm:$0xff]
  %v115 = vld [vmem:[%s0 + $0x48] sm:$0xff]
  %v116 = vld [vmem:[%s0 + $0x50] sm:$0xff]
  %v117 = vld [vmem:[%s0 + $0x58] sm:$0xff]
  %v118 = vld [vmem:[%s0 + $0x60] sm:$0xff]
  %v119 = vld [vmem:[%s0 + $0x68] sm:$0xff]
  %v120 = vld [vmem:[%s0 + $0x70] sm:$0xff]
  %v121 = vld [vmem:[%s0 + $0x78] sm:$0xff]
  %v122 = vld [vmem:[%s1] sm:$0xff]
  %v123 = vld [vmem:[%s1 + $0x8] sm:$0xff]
  %v124 = vld [vmem:[%s1 + $0x10] sm:$0xff]
  %v125 = vld [vmem:[%s1 + $0x18] sm:$0xff]
  %v126 = vld [vmem:[%s1 + $0x20] sm:$0xff]
  %v127 = vld [vmem:[%s1 + $0x28] sm:$0xff]
  %v128 = vld [vmem:[%s1 + $0x30] sm:$0xff]
  %v129 = vld [vmem:[%s1 + $0x38] sm:$0xff]
  %v130 = vld [vmem:[%s1 + $0x40] sm:$0xff]
  %v131 = vld [vmem:[%s1 + $0x48] sm:$0xff]
  %v132 = vld [vmem:[%s1 + $0x50] sm:$0xff]
  %v133 = vld [vmem:[%s1 + $0x58] sm:$0xff]
  %v134 = vld [vmem:[%s1 + $0x60] sm:$0xff]
  %v135 = vld [vmem:[%s1 + $0x68] sm:$0xff]
  %v136 = vld [vmem:[%s1 + $0x70] sm:$0xff]
  %v137 = vld [vmem:[%s1 + $0x78] sm:$0xff]
  %v138 = vld [vmem:[%s2] sm:$0xff]
  %v139 = vld [vmem:[%s2 + $0x8] sm:$0xff]
  %v140 = vld [vmem:[%s2 + $0x10] sm:$0xff]
  %v141 = vld [vmem:[%s2 + $0x18] sm:$0xff]
  %v142 = vld [vmem:[%s2 + $0x20] sm:$0xff]
  %v143 = vld [vmem:[%s2 + $0x28] sm:$0xff]
  %v144 = vld [vmem:[%s2 + $0x30] sm:$0xff]
  %v145 = vld [vmem:[%s2 + $0x38] sm:$0xff]
  %v146 = vld [vmem:[%s2 + $0x40] sm:$0xff]
  %v147 = vld [vmem:[%s2 + $0x48] sm:$0xff]
  %v148 = vld [vmem:[%s2 + $0x50] sm:$0xff]
  %v149 = vld [vmem:[%s2 + $0x58] sm:$0xff]
  %v150 = vld [vmem:[%s2 + $0x60] sm:$0xff]
  %v151 = vld [vmem:[%s2 + $0x68] sm:$0xff]
  %v152 = vld [vmem:[%s2 + $0x70] sm:$0xff]
  %v153 = vld [vmem:[%s2 + $0x78] sm:$0xff]
  %v154 = vld [vmem:[%s3] sm:$0xff]
  %v155 = vld [vmem:[%s3 + $0x8] sm:$0xff]
  %v156 = vld [vmem:[%s3 + $0x10] sm:$0xff]
  %v157 = vld [vmem:[%s3 + $0x18] sm:$0xff]
  %v158 = vld [vmem:[%s3 + $0x20] sm:$0xff]
  %v159 = vld [vmem:[%s3 + $0x28] sm:$0xff]
  %v160 = vld [vmem:[%s3 + $0x30] sm:$0xff]
  %v161 = vld [vmem:[%s3 + $0x38] sm:$0xff]
  %v162 = vld [vmem:[%s3 + $0x40] sm:$0xff]
  %v163 = vld [vmem:[%s3 + $0x48] sm:$0xff]
  %v164 = vld [vmem:[%s3 + $0x50] sm:$0xff]
  %v165 = vld [vmem:[%s3 + $0x58] sm:$0xff]
  %v166 = vld [vmem:[%s3 + $0x60] sm:$0xff]
  %v167 = vld [vmem:[%s3 + $0x68] sm:$0xff]
  %v168 = vld [vmem:[%s3 + $0x70] sm:$0xff]
  %v169 = vld [vmem:[%s3 + $0x78] sm:$0xff]
  %v170 = vld [vmem:[%s4] sm:$0xff]
  %v171 = vld [vmem:[%s4 + $0x8] sm:$0xff]
  %v172 = vld [vmem:[%s4 + $0x10] sm:$0xff]
  %v173 = vld [vmem:[%s4 + $0x18] sm:$0xff]
  %v174 = vld [vmem:[%s4 + $0x20] sm:$0xff]
  %v175 = vld [vmem:[%s4 + $0x28] sm:$0xff]
  %v176 = vld [vmem:[%s4 + $0x30] sm:$0xff]
  %v177 = vld [vmem:[%s4 + $0x38] sm:$0xff]
  %v178 = vld [vmem:[%s4 + $0x40] sm:$0xff]
  %v179 = vld [vmem:[%s4 + $0x48] sm:$0xff]
  %v180 = vld [vmem:[%s4 + $0x50] sm:$0xff]
  %v181 = vld [vmem:[%s4 + $0x58] sm:$0xff]
  %v182 = vld [vmem:[%s4 + $0x60] sm:$0xff]
  %v183 = vld [vmem:[%s4 + $0x68] sm:$0xff]
  %v184 = vld [vmem:[%s4 + $0x70] sm:$0xff]
  %v185 = vld [vmem:[%s4 + $0x78] sm:$0xff]
  %v186 = vlaneseq
  %v187 = vshrl.u32 %v186, 7
  %v188 = vsub.s32 0, %v187
  %v189 = vrot.slane %v24, %v188
  %vm190 = vcmask 64512
  %v192 = vsel %vm190, %v106, 0
  %v195 = vsel %vm190, %v107, 0
  %v198 = vsel %vm190, %v108, 0
  %v201 = vsel %vm190, %v109, 0
  %v204 = vsel %vm190, %v110, 0
  %v207 = vsel %vm190, %v111, 0
  %v210 = vsel %vm190, %v112, 0
  %v213 = vsel %vm190, %v113, 0
  %v216 = vsel %vm190, %v114, 0
  %v219 = vsel %vm190, %v115, 0
  %v222 = vsel %vm190, %v116, 0
  %v225 = vsel %vm190, %v117, 0
  %v228 = vsel %vm190, %v118, 0
  %v231 = vsel %vm190, %v119, 0
  %v234 = vsel %vm190, %v120, 0
  %v237 = vsel %vm190, %v121, 0
  %239 = vmatprep.subr.mxu0 0.0
  %240 = vmatpush1.msra.mxu0 %v23
  %241 = vmatprep.subr.mxu0 0.0
  %242 = vmatpush1.msra.mxu0 0.0
  %243 = vmatprep.subr.mxu0 0.0
  %244 = vmatpush1.msra.mxu0 0.0
  %245 = vmatprep.subr.mxu0 0.0
  %246 = vmatpush1.msra.mxu0 0.0
  %247 = vmatprep.subr.mxu0 0.0
  %248 = vmatpush1.msra.mxu0 0.0
  %249 = vmatprep.subr.mxu0 0.0
  %250 = vmatpush1.msra.mxu0 0.0
  %251 = vmatprep.subr.mxu0 0.0
  %252 = vmatpush1.msra.mxu0 0.0
  %253 = vmatprep.subr.mxu0 0.0
  %254 = vmatpush1.msra.mxu0 0.0
  %255 = vmatprep.subr.mxu0 0.0
  %256 = vmatpush1.msra.mxu0 0.0
  %257 = vmatprep.subr.mxu0 0.0
  %258 = vmatpush1.msra.mxu0 0.0
  %259 = vmatprep.subr.mxu0 0.0
  %260 = vmatpush1.msra.mxu0 0.0
  %261 = vmatprep.subr.mxu0 0.0
  %262 = vmatpush1.msra.mxu0 0.0
  %263 = vmatprep.subr.mxu0 0.0
  %264 = vmatpush1.msra.mxu0 0.0
  %265 = vmatprep.subr.mxu0 0.0
  %266 = vmatpush1.msra.mxu0 0.0
  %267 = vmatprep.subr.mxu0 0.0
  %268 = vmatpush1.msra.mxu0 0.0
  %269 = vmatprep.subr.mxu0 0.0
  %270 = vmatpush1.msra.mxu0 0.0
  %271 = vmatprep.subr.mxu0 0.0
  %272 = vmatpush1.msra.mxu0 0.0
  %273 = vmatprep.subr.mxu0 0.0
  %274 = vmatpush1.msra.mxu0 0.0
  %275 = vmatprep.subr.mxu0 0.0
  %276 = vmatpush1.msra.mxu0 0.0
  %277 = vmatprep.subr.mxu0 0.0
  %278 = vmatpush1.msra.mxu0 0.0
  %279 = vmatprep.subr.mxu0 0.0
  %280 = vmatpush1.msra.mxu0 0.0
  %281 = vmatprep.subr.mxu0 0.0
  %282 = vmatpush1.msra.mxu0 0.0
  %283 = vmatprep.subr.mxu0 0.0
  %284 = vmatpush1.msra.mxu0 0.0
  %285 = vmatprep.subr.mxu0 0.0
  %286 = vmatpush1.msra.mxu0 0.0
  %287 = vmatprep.subr.mxu0 0.0
  %288 = vmatpush1.msra.mxu0 0.0
  %289 = vmatprep.subr.mxu0 0.0
  %290 = vmatpush1.msra.mxu0 0.0
  %291 = vmatprep.subr.mxu0 0.0
  %292 = vmatpush1.msra.mxu0 0.0
  %293 = vmatprep.subr.mxu0 0.0
  %294 = vmatpush1.msra.mxu0 0.0
  %295 = vmatprep.subr.mxu0 0.0
  %296 = vmatpush1.msra.mxu0 0.0
  %297 = vmatprep.subr.mxu0 0.0
  %298 = vmatpush1.msra.mxu0 0.0
  %299 = vmatprep.subr.mxu0 0.0
  %300 = vmatpush1.msra.mxu0 0.0
  %301 = vmatprep.subr.mxu0 0.0
  %302 = vmatpush1.msra.mxu0 0.0
  %303 = vmatprep.mubr.f32.mxu0 0.0
  %304 = vmatmul.mubr.f32.gmra.mrb[0].mxu0 %v192
  %v305 = vpop.f32.mrb[0].mxu0
  %v306 = vadd.f32 %v189, %v305
  %v307 = vpop.f32.mrb[0].mxu0
  %308 = vmatprep.mubr.f32.mxu0 0.0
  %309 = vmatmul.mubr.f32.gmra.mrb[0].mxu0 %v195
  %v310 = vpop.f32.mrb[0].mxu0
  %v311 = vadd.f32 %v189, %v310
  %v312 = vpop.f32.mrb[0].mxu0
  %313 = vmatprep.mubr.f32.mxu0 0.0
  %314 = vmatmul.mubr.f32.gmra.mrb[0].mxu0 %v198
  %v315 = vpop.f32.mrb[0].mxu0
  %v316 = vadd.f32 %v189, %v315
  %v317 = vpop.f32.mrb[0].mxu0
  %318 = vmatprep.mubr.f32.mxu0 0.0
  %319 = vmatmul.mubr.f32.gmra.mrb[0].mxu0 %v201
  %v320 = vpop.f32.mrb[0].mxu0
  %v321 = vadd.f32 %v189, %v320
  %v322 = vpop.f32.mrb[0].mxu0
  %323 = vmatprep.mubr.f32.mxu0 0.0
  %324 = vmatmul.mubr.f32.gmra.mrb[0].mxu0 %v204
  %v325 = vpop.f32.mrb[0].mxu0
  %v326 = vadd.f32 %v189, %v325
  %v327 = vpop.f32.mrb[0].mxu0
  %328 = vmatprep.mubr.f32.mxu0 0.0
  %329 = vmatmul.mubr.f32.gmra.mrb[0].mxu0 %v207
  %v330 = vpop.f32.mrb[0].mxu0
  %v331 = vadd.f32 %v189, %v330
  %v332 = vpop.f32.mrb[0].mxu0
  %333 = vmatprep.mubr.f32.mxu0 0.0
  %334 = vmatmul.mubr.f32.gmra.mrb[0].mxu0 %v210
  %v335 = vpop.f32.mrb[0].mxu0
  %v336 = vadd.f32 %v189, %v335
  %v337 = vpop.f32.mrb[0].mxu0
  %338 = vmatprep.mubr.f32.mxu0 0.0
  %339 = vmatmul.mubr.f32.gmra.mrb[0].mxu0 %v213
  %v340 = vpop.f32.mrb[0].mxu0
  %v341 = vadd.f32 %v189, %v340
  %v342 = vpop.f32.mrb[0].mxu0
  %343 = vmatprep.mubr.f32.mxu0 0.0
  %344 = vmatmul.mubr.f32.gmra.mrb[0].mxu0 %v216
  %v345 = vpop.f32.mrb[0].mxu0
  %v346 = vadd.f32 %v189, %v345
  %v347 = vpop.f32.mrb[0].mxu0
  %348 = vmatprep.mubr.f32.mxu0 0.0
  %349 = vmatmul.mubr.f32.gmra.mrb[0].mxu0 %v219
  %v350 = vpop.f32.mrb[0].mxu0
  %v351 = vadd.f32 %v189, %v350
  %v352 = vpop.f32.mrb[0].mxu0
  %353 = vmatprep.mubr.f32.mxu0 0.0
  %354 = vmatmul.mubr.f32.gmra.mrb[0].mxu0 %v222
  %v355 = vpop.f32.mrb[0].mxu0
  %v356 = vadd.f32 %v189, %v355
  %v357 = vpop.f32.mrb[0].mxu0
  %358 = vmatprep.mubr.f32.mxu0 0.0
  %359 = vmatmul.mubr.f32.gmra.mrb[0].mxu0 %v225
  %v360 = vpop.f32.mrb[0].mxu0
  %v361 = vadd.f32 %v189, %v360
  %v362 = vpop.f32.mrb[0].mxu0
  %363 = vmatprep.mubr.f32.mxu0 0.0
  %364 = vmatmul.mubr.f32.gmra.mrb[0].mxu0 %v228
  %v365 = vpop.f32.mrb[0].mxu0
  %v366 = vadd.f32 %v189, %v365
  %v367 = vpop.f32.mrb[0].mxu0
  %368 = vmatprep.mubr.f32.mxu0 0.0
  %369 = vmatmul.mubr.f32.gmra.mrb[0].mxu0 %v231
  %v370 = vpop.f32.mrb[0].mxu0
  %v371 = vadd.f32 %v189, %v370
  %v372 = vpop.f32.mrb[0].mxu0
  %373 = vmatprep.mubr.f32.mxu0 0.0
  %374 = vmatmul.mubr.f32.gmra.mrb[0].mxu0 %v234
  %v375 = vpop.f32.mrb[0].mxu0
  %v376 = vadd.f32 %v189, %v375
  %v377 = vpop.f32.mrb[0].mxu0
  %378 = vmatprep.mubr.f32.mxu0 0.0
  %379 = vmatmul.mubr.f32.gmra.mrb[0].mxu0 %v237
  %v380 = vpop.f32.mrb[0].mxu0
  %v381 = vadd.f32 %v189, %v380
  %v382 = vpop.f32.mrb[0].mxu0
  %383 = vdwg.mxu0
  %v384 = vmax.f32 %v306, 0.0
  %v385 = vmax.f32 %v311, 0.0
  %v386 = vmax.f32 %v316, 0.0
  %v387 = vmax.f32 %v321, 0.0
  %v388 = vmax.f32 %v326, 0.0
  %v389 = vmax.f32 %v331, 0.0
  %v390 = vmax.f32 %v336, 0.0
  %v391 = vmax.f32 %v341, 0.0
  %v392 = vmax.f32 %v346, 0.0
  %v393 = vmax.f32 %v351, 0.0
  %v394 = vmax.f32 %v356, 0.0
  %v395 = vmax.f32 %v361, 0.0
  %v396 = vmax.f32 %v366, 0.0
  %v397 = vmax.f32 %v371, 0.0
  %v398 = vmax.f32 %v376, 0.0
  %v399 = vmax.f32 %v381, 0.0
  %v400 = vlaneseq
  %v401 = vshrl.u32 %v400, 7
  %v402 = vsub.s32 0, %v401
  %v403 = vrot.slane %v33, %v402
  %vm404 = vcmask 523264
  %v406 = vsel %vm404, %v384, 0
  %v409 = vsel %vm404, %v385, 0
  %v412 = vsel %vm404, %v386, 0
  %v415 = vsel %vm404, %v387, 0
  %v418 = vsel %vm404, %v388, 0
  %v421 = vsel %vm404, %v389, 0
  %v424 = vsel %vm404, %v390, 0
  %v427 = vsel %vm404, %v391, 0
  %v430 = vsel %vm404, %v392, 0
  %v433 = vsel %vm404, %v393, 0
  %v436 = vsel %vm404, %v394, 0
  %v439 = vsel %vm404, %v395, 0
  %v442 = vsel %vm404, %v396, 0
  %v445 = vsel %vm404, %v397, 0
  %v448 = vsel %vm404, %v398, 0
  %v451 = vsel %vm404, %v399, 0
  %453 = vmatprep.subr.mxu0 0.0
  %454 = vmatpush1.msra.mxu0 %v25
  %455 = vmatprep.subr.mxu0 0.0
  %456 = vmatpush1.msra.mxu0 %v26
  %457 = vmatprep.subr.mxu0 0.0
  %458 = vmatpush1.msra.mxu0 %v27
  %459 = vmatprep.subr.mxu0 0.0
  %460 = vmatpush1.msra.mxu0 %v28
  %461 = vmatprep.subr.mxu0 0.0
  %462 = vmatpush1.msra.mxu0 %v29
  %463 = vmatprep.subr.mxu0 0.0
  %464 = vmatpush1.msra.mxu0 %v30
  %465 = vmatprep.subr.mxu0 0.0
  %466 = vmatpush1.msra.mxu0 %v31
  %467 = vmatprep.subr.mxu0 0.0
  %468 = vmatpush1.msra.mxu0 %v32
  %469 = vmatprep.subr.mxu0 0.0
  %470 = vmatpush1.msra.mxu0 0.0
  %471 = vmatprep.subr.mxu0 0.0
  %472 = vmatpush1.msra.mxu0 0.0
  %473 = vmatprep.subr.mxu0 0.0
  %474 = vmatpush1.msra.mxu0 0.0
  %475 = vmatprep.subr.mxu0 0.0
  %476 = vmatpush1.msra.mxu0 0.0
  %477 = vmatprep.subr.mxu0 0.0
  %478 = vmatpush1.msra.mxu0 0.0
  %479 = vmatprep.subr.mxu0 0.0
  %480 = vmatpush1.msra.mxu0 0.0
  %481 = vmatprep.subr.mxu0 0.0
  %482 = vmatpush1.msra.mxu0 0.0
  %483 = vmatprep.subr.mxu0 0.0
  %484 = vmatpush1.msra.mxu0 0.0
  %485 = vmatprep.subr.mxu0 0.0
  %486 = vmatpush1.msra.mxu0 0.0
  %487 = vmatprep.subr.mxu0 0.0
  %488 = vmatpush1.msra.mxu0 0.0
  %489 = vmatprep.subr.mxu0 0.0
  %490 = vmatpush1.msra.mxu0 0.0
  %491 = vmatprep.subr.mxu0 0.0
  %492 = vmatpush1.msra.mxu0 0.0
  %493 = vmatprep.subr.mxu0 0.0
  %494 = vmatpush1.msra.mxu0 0.0
  %495 = vmatprep.subr.mxu0 0.0
  %496 = vmatpush1.msra.mxu0 0.0
  %497 = vmatprep.subr.mxu0 0.0
  %498 = vmatpush1.msra.mxu0 0.0
  %499 = vmatprep.subr.mxu0 0.0
  %500 = vmatpush1.msra.mxu0 0.0
  %501 = vmatprep.subr.mxu0 0.0
  %502 = vmatpush1.msra.mxu0 0.0
  %503 = vmatprep.subr.mxu0 0.0
  %504 = vmatpush1.msra.mxu0 0.0
  %505 = vmatprep.subr.mxu0 0.0
  %506 = vmatpush1.msra.mxu0 0.0
  %507 = vmatprep.subr.mxu0 0.0
  %508 = vmatpush1.msra.mxu0 0.0
  %509 = vmatprep.subr.mxu0 0.0
  %510 = vmatpush1.msra.mxu0 0.0
  %511 = vmatprep.subr.mxu0 0.0
  %512 = vmatpush1.msra.mxu0 0.0
  %513 = vmatprep.subr.mxu0 0.0
  %514 = vmatpush1.msra.mxu0 0.0
  %515 = vmatprep.subr.mxu0 0.0
  %516 = vmatpush1.msra.mxu0 0.0
  %517 = vmatprep.mubr.f32.mxu0 0.0
  %518 = vmatmul.mubr.f32.gmra.mrb[0].mxu0 %v406
  %v519 = vpop.f32.mrb[0].mxu0
  %v520 = vadd.f32 %v403, %v519
  %v521 = vpop.f32.mrb[0].mxu0
  %522 = vmatprep.mubr.f32.mxu0 0.0
  %523 = vmatmul.mubr.f32.gmra.mrb[0].mxu0 %v409
  %v524 = vpop.f32.mrb[0].mxu0
  %v525 = vadd.f32 %v403, %v524
  %v526 = vpop.f32.mrb[0].mxu0
  %527 = vmatprep.mubr.f32.mxu0 0.0
  %528 = vmatmul.mubr.f32.gmra.mrb[0].mxu0 %v412
  %v529 = vpop.f32.mrb[0].mxu0
  %v530 = vadd.f32 %v403, %v529
  %v531 = vpop.f32.mrb[0].mxu0
  %532 = vmatprep.mubr.f32.mxu0 0.0
  %533 = vmatmul.mubr.f32.gmra.mrb[0].mxu0 %v415
  %v534 = vpop.f32.mrb[0].mxu0
  %v535 = vadd.f32 %v403, %v534
  %v536 = vpop.f32.mrb[0].mxu0
  %537 = vmatprep.mubr.f32.mxu0 0.0
  %538 = vmatmul.mubr.f32.gmra.mrb[0].mxu0 %v418
  %v539 = vpop.f32.mrb[0].mxu0
  %v540 = vadd.f32 %v403, %v539
  %v541 = vpop.f32.mrb[0].mxu0
  %542 = vmatprep.mubr.f32.mxu0 0.0
  %543 = vmatmul.mubr.f32.gmra.mrb[0].mxu0 %v421
  %v544 = vpop.f32.mrb[0].mxu0
  %v545 = vadd.f32 %v403, %v544
  %v546 = vpop.f32.mrb[0].mxu0
  %547 = vmatprep.mubr.f32.mxu0 0.0
  %548 = vmatmul.mubr.f32.gmra.mrb[0].mxu0 %v424
  %v549 = vpop.f32.mrb[0].mxu0
  %v550 = vadd.f32 %v403, %v549
  %v551 = vpop.f32.mrb[0].mxu0
  %552 = vmatprep.mubr.f32.mxu0 0.0
  %553 = vmatmul.mubr.f32.gmra.mrb[0].mxu0 %v427
  %v554 = vpop.f32.mrb[0].mxu0
  %v555 = vadd.f32 %v403, %v554
  %v556 = vpop.f32.mrb[0].mxu0
  %557 = vmatprep.mubr.f32.mxu0 0.0
  %558 = vmatmul.mubr.f32.gmra.mrb[0].mxu0 %v430
  %v559 = vpop.f32.mrb[0].mxu0
  %v560 = vadd.f32 %v403, %v559
  %v561 = vpop.f32.mrb[0].mxu0
  %562 = vmatprep.mubr.f32.mxu0 0.0
  %563 = vmatmul.mubr.f32.gmra.mrb[0].mxu0 %v433
  %v564 = vpop.f32.mrb[0].mxu0
  %v565 = vadd.f32 %v403, %v564
  %v566 = vpop.f32.mrb[0].mxu0
  %567 = vmatprep.mubr.f32.mxu0 0.0
  %568 = vmatmul.mubr.f32.gmra.mrb[0].mxu0 %v436
  %v569 = vpop.f32.mrb[0].mxu0
  %v570 = vadd.f32 %v403, %v569
  %v571 = vpop.f32.mrb[0].mxu0
  %572 = vmatprep.mubr.f32.mxu0 0.0
  %573 = vmatmul.mubr.f32.gmra.mrb[0].mxu0 %v439
  %v574 = vpop.f32.mrb[0].mxu0
  %v575 = vadd.f32 %v403, %v574
  %v576 = vpop.f32.mrb[0].mxu0
  %577 = vmatprep.mubr.f32.mxu0 0.0
  %578 = vmatmul.mubr.f32.gmra.mrb[0].mxu0 %v442
  %v579 = vpop.f32.mrb[0].mxu0
  %v580 = vadd.f32 %v403, %v579
  %v581 = vpop.f32.mrb[0].mxu0
  %582 = vmatprep.mubr.f32.mxu0 0.0
  %583 = vmatmul.mubr.f32.gmra.mrb[0].mxu0 %v445
  %v584 = vpop.f32.mrb[0].mxu0
  %v585 = vadd.f32 %v403, %v584
  %v586 = vpop.f32.mrb[0].mxu0
  %587 = vmatprep.mubr.f32.mxu0 0.0
  %588 = vmatmul.mubr.f32.gmra.mrb[0].mxu0 %v448
  %v589 = vpop.f32.mrb[0].mxu0
  %v590 = vadd.f32 %v403, %v589
  %v591 = vpop.f32.mrb[0].mxu0
  %592 = vmatprep.mubr.f32.mxu0 0.0
  %593 = vmatmul.mubr.f32.gmra.mrb[0].mxu0 %v451
  %v594 = vpop.f32.mrb[0].mxu0
  %v595 = vadd.f32 %v403, %v594
  %v596 = vpop.f32.mrb[0].mxu0
  %597 = vdwg.mxu0
  %v598 = vmax.f32 %v520, 0.0
  %v599 = vmax.f32 %v525, 0.0
  %v600 = vmax.f32 %v530, 0.0
  %v601 = vmax.f32 %v535, 0.0
  %v602 = vmax.f32 %v540, 0.0
  %v603 = vmax.f32 %v545, 0.0
  %v604 = vmax.f32 %v550, 0.0
  %v605 = vmax.f32 %v555, 0.0
  %v606 = vmax.f32 %v560, 0.0
  %v607 = vmax.f32 %v565, 0.0
  %v608 = vmax.f32 %v570, 0.0
  %v609 = vmax.f32 %v575, 0.0
  %v610 = vmax.f32 %v580, 0.0
  %v611 = vmax.f32 %v585, 0.0
  %v612 = vmax.f32 %v590, 0.0
  %v613 = vmax.f32 %v595, 0.0
  %v614 = vlaneseq
  %v615 = vshrl.u32 %v614, 7
  %v616 = vsub.s32 0, %v615
  %v617 = vrot.slane %v42, %v616
  %v619 = vsel %vm404, %v598, 0
  %v622 = vsel %vm404, %v599, 0
  %v625 = vsel %vm404, %v600, 0
  %v628 = vsel %vm404, %v601, 0
  %v631 = vsel %vm404, %v602, 0
  %v634 = vsel %vm404, %v603, 0
  %v637 = vsel %vm404, %v604, 0
  %v640 = vsel %vm404, %v605, 0
  %v643 = vsel %vm404, %v606, 0
  %v646 = vsel %vm404, %v607, 0
  %v649 = vsel %vm404, %v608, 0
  %v652 = vsel %vm404, %v609, 0
  %v655 = vsel %vm404, %v610, 0
  %v658 = vsel %vm404, %v611, 0
  %v661 = vsel %vm404, %v612, 0
  %v664 = vsel %vm404, %v613, 0
  %666 = vmatprep.subr.mxu0 0.0
  %667 = vmatpush1.msra.mxu0 %v34
  %668 = vmatprep.subr.mxu0 0.0
  %669 = vmatpush1.msra.mxu0 %v35
  %670 = vmatprep.subr.mxu0 0.0
  %671 = vmatpush1.msra.mxu0 %v36
  %672 = vmatprep.subr.mxu0 0.0
  %673 = vmatpush1.msra.mxu0 %v37
  %674 = vmatprep.subr.mxu0 0.0
  %675 = vmatpush1.msra.mxu0 %v38
  %676 = vmatprep.subr.mxu0 0.0
  %677 = vmatpush1.msra.mxu0 %v39
  %678 = vmatprep.subr.mxu0 0.0
  %679 = vmatpush1.msra.mxu0 %v40
  %680 = vmatprep.subr.mxu0 0.0
  %681 = vmatpush1.msra.mxu0 %v41
  %682 = vmatprep.subr.mxu0 0.0
  %683 = vmatpush1.msra.mxu0 0.0
  %684 = vmatprep.subr.mxu0 0.0
  %685 = vmatpush1.msra.mxu0 0.0
  %686 = vmatprep.subr.mxu0 0.0
  %687 = vmatpush1.msra.mxu0 0.0
  %688 = vmatprep.subr.mxu0 0.0
  %689 = vmatpush1.msra.mxu0 0.0
  %690 = vmatprep.subr.mxu0 0.0
  %691 = vmatpush1.msra.mxu0 0.0
  %692 = vmatprep.subr.mxu0 0.0
  %693 = vmatpush1.msra.mxu0 0.0
  %694 = vmatprep.subr.mxu0 0.0
  %695 = vmatpush1.msra.mxu0 0.0
  %696 = vmatprep.subr.mxu0 0.0
  %697 = vmatpush1.msra.mxu0 0.0
  %698 = vmatprep.subr.mxu0 0.0
  %699 = vmatpush1.msra.mxu0 0.0
  %700 = vmatprep.subr.mxu0 0.0
  %701 = vmatpush1.msra.mxu0 0.0
  %702 = vmatprep.subr.mxu0 0.0
  %703 = vmatpush1.msra.mxu0 0.0
  %704 = vmatprep.subr.mxu0 0.0
  %705 = vmatpush1.msra.mxu0 0.0
  %706 = vmatprep.subr.mxu0 0.0
  %707 = vmatpush1.msra.mxu0 0.0
  %708 = vmatprep.subr.mxu0 0.0
  %709 = vmatpush1.msra.mxu0 0.0
  %710 = vmatprep.subr.mxu0 0.0
  %711 = vmatpush1.msra.mxu0 0.0
  %712 = vmatprep.subr.mxu0 0.0
  %713 = vmatpush1.msra.mxu0 0.0
  %714 = vmatprep.subr.mxu0 0.0
  %715 = vmatpush1.msra.mxu0 0.0
  %716 = vmatprep.subr.mxu0 0.0
  %717 = vmatpush1.msra.mxu0 0.0
  %718 = vmatprep.subr.mxu0 0.0
  %719 = vmatpush1.msra.mxu0 0.0
  %720 = vmatprep.subr.mxu0 0.0
  %721 = vmatpush1.msra.mxu0 0.0
  %722 = vmatprep.subr.mxu0 0.0
  %723 = vmatpush1.msra.mxu0 0.0
  %724 = vmatprep.subr.mxu0 0.0
  %725 = vmatpush1.msra.mxu0 0.0
  %726 = vmatprep.subr.mxu0 0.0
  %727 = vmatpush1.msra.mxu0 0.0
  %728 = vmatprep.subr.mxu0 0.0
  %729 = vmatpush1.msra.mxu0 0.0
  %730 = vmatprep.mubr.f32.mxu0 0.0
  %731 = vmatmul.mubr.f32.gmra.mrb[0].mxu0 %v619
  %v732 = vpop.f32.mrb[0].mxu0
  %v733 = vadd.f32 %v617, %v732
  %v734 = vpop.f32.mrb[0].mxu0
  %735 = vmatprep.mubr.f32.mxu0 0.0
  %736 = vmatmul.mubr.f32.gmra.mrb[0].mxu0 %v622
  %v737 = vpop.f32.mrb[0].mxu0
  %v738 = vadd.f32 %v617, %v737
  %v739 = vpop.f32.mrb[0].mxu0
  %740 = vmatprep.mubr.f32.mxu0 0.0
  %741 = vmatmul.mubr.f32.gmra.mrb[0].mxu0 %v625
  %v742 = vpop.f32.mrb[0].mxu0
  %v743 = vadd.f32 %v617, %v742
  %v744 = vpop.f32.mrb[0].mxu0
  %745 = vmatprep.mubr.f32.mxu0 0.0
  %746 = vmatmul.mubr.f32.gmra.mrb[0].mxu0 %v628
  %v747 = vpop.f32.mrb[0].mxu0
  %v748 = vadd.f32 %v617, %v747
  %v749 = vpop.f32.mrb[0].mxu0
  %750 = vmatprep.mubr.f32.mxu0 0.0
  %751 = vmatmul.mubr.f32.gmra.mrb[0].mxu0 %v631
  %v752 = vpop.f32.mrb[0].mxu0
  %v753 = vadd.f32 %v617, %v752
  %v754 = vpop.f32.mrb[0].mxu0
  %755 = vmatprep.mubr.f32.mxu0 0.0
  %756 = vmatmul.mubr.f32.gmra.mrb[0].mxu0 %v634
  %v757 = vpop.f32.mrb[0].mxu0
  %v758 = vadd.f32 %v617, %v757
  %v759 = vpop.f32.mrb[0].mxu0
  %760 = vmatprep.mubr.f32.mxu0 0.0
  %761 = vmatmul.mubr.f32.gmra.mrb[0].mxu0 %v637
  %v762 = vpop.f32.mrb[0].mxu0
  %v763 = vadd.f32 %v617, %v762
  %v764 = vpop.f32.mrb[0].mxu0
  %765 = vmatprep.mubr.f32.mxu0 0.0
  %766 = vmatmul.mubr.f32.gmra.mrb[0].mxu0 %v640
  %v767 = vpop.f32.mrb[0].mxu0
  %v768 = vadd.f32 %v617, %v767
  %v769 = vpop.f32.mrb[0].mxu0
  %770 = vmatprep.mubr.f32.mxu0 0.0
  %771 = vmatmul.mubr.f32.gmra.mrb[0].mxu0 %v643
  %v772 = vpop.f32.mrb[0].mxu0
  %v773 = vadd.f32 %v617, %v772
  %v774 = vpop.f32.mrb[0].mxu0
  %775 = vmatprep.mubr.f32.mxu0 0.0
  %776 = vmatmul.mubr.f32.gmra.mrb[0].mxu0 %v646
  %v777 = vpop.f32.mrb[0].mxu0
  %v778 = vadd.f32 %v617, %v777
  %v779 = vpop.f32.mrb[0].mxu0
  %780 = vmatprep.mubr.f32.mxu0 0.0
  %781 = vmatmul.mubr.f32.gmra.mrb[0].mxu0 %v649
  %v782 = vpop.f32.mrb[0].mxu0
  %v783 = vadd.f32 %v617, %v782
  %v784 = vpop.f32.mrb[0].mxu0
  %785 = vmatprep.mubr.f32.mxu0 0.0
  %786 = vmatmul.mubr.f32.gmra.mrb[0].mxu0 %v652
  %v787 = vpop.f32.mrb[0].mxu0
  %v788 = vadd.f32 %v617, %v787
  %v789 = vpop.f32.mrb[0].mxu0
  %790 = vmatprep.mubr.f32.mxu0 0.0
  %791 = vmatmul.mubr.f32.gmra.mrb[0].mxu0 %v655
  %v792 = vpop.f32.mrb[0].mxu0
  %v793 = vadd.f32 %v617, %v792
  %v794 = vpop.f32.mrb[0].mxu0
  %795 = vmatprep.mubr.f32.mxu0 0.0
  %796 = vmatmul.mubr.f32.gmra.mrb[0].mxu0 %v658
  %v797 = vpop.f32.mrb[0].mxu0
  %v798 = vadd.f32 %v617, %v797
  %v799 = vpop.f32.mrb[0].mxu0
  %800 = vmatprep.mubr.f32.mxu0 0.0
  %801 = vmatmul.mubr.f32.gmra.mrb[0].mxu0 %v661
  %v802 = vpop.f32.mrb[0].mxu0
  %v803 = vadd.f32 %v617, %v802
  %v804 = vpop.f32.mrb[0].mxu0
  %805 = vmatprep.mubr.f32.mxu0 0.0
  %806 = vmatmul.mubr.f32.gmra.mrb[0].mxu0 %v664
  %v807 = vpop.f32.mrb[0].mxu0
  %v808 = vadd.f32 %v617, %v807
  %v809 = vpop.f32.mrb[0].mxu0
  %810 = vdwg.mxu0
  %v811 = vmax.f32 %v733, 0.0
  %v812 = vmax.f32 %v738, 0.0
  %v813 = vmax.f32 %v743, 0.0
  %v814 = vmax.f32 %v748, 0.0
  %v815 = vmax.f32 %v753, 0.0
  %v816 = vmax.f32 %v758, 0.0
  %v817 = vmax.f32 %v763, 0.0
  %v818 = vmax.f32 %v768, 0.0
  %v819 = vmax.f32 %v773, 0.0
  %v820 = vmax.f32 %v778, 0.0
  %v821 = vmax.f32 %v783, 0.0
  %v822 = vmax.f32 %v788, 0.0
  %v823 = vmax.f32 %v793, 0.0
  %v824 = vmax.f32 %v798, 0.0
  %v825 = vmax.f32 %v803, 0.0
  %v826 = vmax.f32 %v808, 0.0
  %vm827 = vcmp.gt.f32.partialorder %v170, 0.0
  %vm828 = vcmp.gt.f32.partialorder %v171, 0.0
  %vm829 = vcmp.gt.f32.partialorder %v172, 0.0
  %vm830 = vcmp.gt.f32.partialorder %v173, 0.0
  %vm831 = vcmp.gt.f32.partialorder %v174, 0.0
  %vm832 = vcmp.gt.f32.partialorder %v175, 0.0
  %vm833 = vcmp.gt.f32.partialorder %v176, 0.0
  %vm834 = vcmp.gt.f32.partialorder %v177, 0.0
  %vm835 = vcmp.gt.f32.partialorder %v178, 0.0
  %vm836 = vcmp.gt.f32.partialorder %v179, 0.0
  %vm837 = vcmp.gt.f32.partialorder %v180, 0.0
  %vm838 = vcmp.gt.f32.partialorder %v181, 0.0
  %vm839 = vcmp.gt.f32.partialorder %v182, 0.0
  %vm840 = vcmp.gt.f32.partialorder %v183, 0.0
  %vm841 = vcmp.gt.f32.partialorder %v184, 0.0
  %vm842 = vcmp.gt.f32.partialorder %v185, 0.0
  %844 = vset.pattern.permute.xlu0 0
  %845 = vperm.xlu0 %844, %v138
  %v846 = vpop.permute.xlu0 %845
  %849 = vset.pattern.permute.xlu0 0
  %850 = vperm.xlu0 %849, %v139
  %v851 = vpop.permute.xlu0 %850
  %854 = vset.pattern.permute.xlu0 0
  %855 = vperm.xlu0 %854, %v140
  %v856 = vpop.permute.xlu0 %855
  %859 = vset.pattern.permute.xlu0 0
  %860 = vperm.xlu0 %859, %v141
  %v861 = vpop.permute.xlu0 %860
  %864 = vset.pattern.permute.xlu0 0
  %865 = vperm.xlu0 %864, %v142
  %v866 = vpop.permute.xlu0 %865
  %869 = vset.pattern.permute.xlu0 0
  %870 = vperm.xlu0 %869, %v143
  %v871 = vpop.permute.xlu0 %870
  %874 = vset.pattern.permute.xlu0 0
  %875 = vperm.xlu0 %874, %v144
  %v876 = vpop.permute.xlu0 %875
  %879 = vset.pattern.permute.xlu0 0
  %880 = vperm.xlu0 %879, %v145
  %v881 = vpop.permute.xlu0 %880
  %884 = vset.pattern.permute.xlu0 0
  %885 = vperm.xlu0 %884, %v146
  %v886 = vpop.permute.xlu0 %885
  %889 = vset.pattern.permute.xlu0 0
  %890 = vperm.xlu0 %889, %v147
  %v891 = vpop.permute.xlu0 %890
  %894 = vset.pattern.permute.xlu0 0
  %895 = vperm.xlu0 %894, %v148
  %v896 = vpop.permute.xlu0 %895
  %899 = vset.pattern.permute.xlu0 0
  %900 = vperm.xlu0 %899, %v149
  %v901 = vpop.permute.xlu0 %900
  %904 = vset.pattern.permute.xlu0 0
  %905 = vperm.xlu0 %904, %v150
  %v906 = vpop.permute.xlu0 %905
  %909 = vset.pattern.permute.xlu0 0
  %910 = vperm.xlu0 %909, %v151
  %v911 = vpop.permute.xlu0 %910
  %914 = vset.pattern.permute.xlu0 0
  %915 = vperm.xlu0 %914, %v152
  %v916 = vpop.permute.xlu0 %915
  %919 = vset.pattern.permute.xlu0 0
  %920 = vperm.xlu0 %919, %v153
  %v921 = vpop.permute.xlu0 %920
  %v923 = vsel %vm827, %v846, -1e+30
  %v924 = vsel %vm828, %v851, -1e+30
  %v925 = vsel %vm829, %v856, -1e+30
  %v926 = vsel %vm830, %v861, -1e+30
  %v927 = vsel %vm831, %v866, -1e+30
  %v928 = vsel %vm832, %v871, -1e+30
  %v929 = vsel %vm833, %v876, -1e+30
  %v930 = vsel %vm834, %v881, -1e+30
  %v931 = vsel %vm835, %v886, -1e+30
  %v932 = vsel %vm836, %v891, -1e+30
  %v933 = vsel %vm837, %v896, -1e+30
  %v934 = vsel %vm838, %v901, -1e+30
  %v935 = vsel %vm839, %v906, -1e+30
  %v936 = vsel %vm840, %v911, -1e+30
  %v937 = vsel %vm841, %v916, -1e+30
  %v938 = vsel %vm842, %v921, -1e+30
  %v939 = vmax.f32 %v923, %v927
  %v940 = vmax.f32 %v924, %v928
  %v941 = vmax.f32 %v925, %v929
  %v942 = vmax.f32 %v926, %v930
  %v943 = vmax.f32 %v939, %v931
  %v944 = vmax.f32 %v940, %v932
  %v945 = vmax.f32 %v941, %v933
  %v946 = vmax.f32 %v942, %v934
  %v947 = vmax.f32 %v943, %v935
  %v948 = vmax.f32 %v944, %v936
  %v949 = vmax.f32 %v945, %v937
  %v950 = vmax.f32 %v946, %v938
  %v951 = vmax.f32 %v947, %v948
  %v952 = vmax.f32 %v949, %v950
  %v953 = vmax.f32 %v951, %v952
  %v954 = vrot.slane %v953, 4
  %v955 = vmax.f32 %v953, %v954
  %v956 = vrot.slane %v955, 2
  %v957 = vmax.f32 %v955, %v956
  %v958 = vrot.slane %v957, 1
  %v959 = vmax.f32 %v957, %v958
  %v960 = vmul.f32 %v170, %v959
  %v961 = vmul.f32 %v171, %v959
  %v962 = vmul.f32 %v172, %v959
  %v963 = vmul.f32 %v173, %v959
  %v964 = vmul.f32 %v174, %v959
  %v965 = vmul.f32 %v175, %v959
  %v966 = vmul.f32 %v176, %v959
  %v967 = vmul.f32 %v177, %v959
  %v968 = vmul.f32 %v178, %v959
  %v969 = vmul.f32 %v179, %v959
  %v970 = vmul.f32 %v180, %v959
  %v971 = vmul.f32 %v181, %v959
  %v972 = vmul.f32 %v182, %v959
  %v973 = vmul.f32 %v183, %v959
  %v974 = vmul.f32 %v184, %v959
  %v975 = vmul.f32 %v185, %v959
  %976 = vadd.xlane.f32.xlu0 %v960
  %v977 = vpop.xlane.xlu0 %976
  %978 = vadd.xlane.f32.xlu0 %v961
  %v979 = vpop.xlane.xlu0 %978
  %980 = vadd.xlane.f32.xlu0 %v962
  %v981 = vpop.xlane.xlu0 %980
  %982 = vadd.xlane.f32.xlu0 %v963
  %v983 = vpop.xlane.xlu0 %982
  %984 = vadd.xlane.f32.xlu0 %v964
  %v985 = vpop.xlane.xlu0 %984
  %986 = vadd.xlane.f32.xlu0 %v965
  %v987 = vpop.xlane.xlu0 %986
  %988 = vadd.xlane.f32.xlu0 %v966
  %v989 = vpop.xlane.xlu0 %988
  %990 = vadd.xlane.f32.xlu0 %v967
  %v991 = vpop.xlane.xlu0 %990
  %992 = vadd.xlane.f32.xlu0 %v968
  %v993 = vpop.xlane.xlu0 %992
  %994 = vadd.xlane.f32.xlu0 %v969
  %v995 = vpop.xlane.xlu0 %994
  %996 = vadd.xlane.f32.xlu0 %v970
  %v997 = vpop.xlane.xlu0 %996
  %998 = vadd.xlane.f32.xlu0 %v971
  %v999 = vpop.xlane.xlu0 %998
  %1000 = vadd.xlane.f32.xlu0 %v972
  %v1001 = vpop.xlane.xlu0 %1000
  %1002 = vadd.xlane.f32.xlu0 %v973
  %v1003 = vpop.xlane.xlu0 %1002
  %1004 = vadd.xlane.f32.xlu0 %v974
  %v1005 = vpop.xlane.xlu0 %1004
  %1006 = vadd.xlane.f32.xlu0 %v975
  %v1007 = vpop.xlane.xlu0 %1006
  %v1008 = vsub.f32 %v138, %v977
  %v1009 = vsub.f32 %v139, %v979
  %v1010 = vsub.f32 %v140, %v981
  %v1011 = vsub.f32 %v141, %v983
  %v1012 = vsub.f32 %v142, %v985
  %v1013 = vsub.f32 %v143, %v987
  %v1014 = vsub.f32 %v144, %v989
  %v1015 = vsub.f32 %v145, %v991
  %v1016 = vsub.f32 %v146, %v993
  %v1017 = vsub.f32 %v147, %v995
  %v1018 = vsub.f32 %v148, %v997
  %v1019 = vsub.f32 %v149, %v999
  %v1020 = vsub.f32 %v150, %v1001
  %v1021 = vsub.f32 %v151, %v1003
  %v1022 = vsub.f32 %v152, %v1005
  %v1023 = vsub.f32 %v153, %v1007
  %v1024 = vmul.f32 %v1008, 1.442695
  %v1025 = vpow.pop %v1024
  %v1026 = vmul.f32 %v1009, 1.442695
  %v1027 = vpow.pop %v1026
  %v1028 = vmul.f32 %v1010, 1.442695
  %v1029 = vpow.pop %v1028
  %v1030 = vmul.f32 %v1011, 1.442695
  %v1031 = vpow.pop %v1030
  %v1032 = vmul.f32 %v1012, 1.442695
  %v1033 = vpow.pop %v1032
  %v1034 = vmul.f32 %v1013, 1.442695
  %v1035 = vpow.pop %v1034
  %v1036 = vmul.f32 %v1014, 1.442695
  %v1037 = vpow.pop %v1036
  %v1038 = vmul.f32 %v1015, 1.442695
  %v1039 = vpow.pop %v1038
  %v1040 = vmul.f32 %v1016, 1.442695
  %v1041 = vpow.pop %v1040
  %v1042 = vmul.f32 %v1017, 1.442695
  %v1043 = vpow.pop %v1042
  %v1044 = vmul.f32 %v1018, 1.442695
  %v1045 = vpow.pop %v1044
  %v1046 = vmul.f32 %v1019, 1.442695
  %v1047 = vpow.pop %v1046
  %v1048 = vmul.f32 %v1020, 1.442695
  %v1049 = vpow.pop %v1048
  %v1050 = vmul.f32 %v1021, 1.442695
  %v1051 = vpow.pop %v1050
  %v1052 = vmul.f32 %v1022, 1.442695
  %v1053 = vpow.pop %v1052
  %v1054 = vmul.f32 %v1023, 1.442695
  %v1055 = vpow.pop %v1054
  %1056 = vxpose.xlu0.b32.start [1/16] %v170, 128
  %1057 = vxpose.xlu0.b32.cont [2/16] %v171, 128
  %1058 = vxpose.xlu0.b32.cont [3/16] %v172, 128
  %1059 = vxpose.xlu0.b32.cont [4/16] %v173, 128
  %1060 = vxpose.xlu0.b32.cont [5/16] %v174, 128
  %1061 = vxpose.xlu0.b32.cont [6/16] %v175, 128
  %1062 = vxpose.xlu0.b32.cont [7/16] %v176, 128
  %1063 = vxpose.xlu0.b32.cont [8/16] %v177, 128
  %1064 = vxpose.xlu0.b32.cont [9/16] %v178, 128
  %1065 = vxpose.xlu0.b32.cont [10/16] %v179, 128
  %1066 = vxpose.xlu0.b32.cont [11/16] %v180, 128
  %1067 = vxpose.xlu0.b32.cont [12/16] %v181, 128
  %1068 = vxpose.xlu0.b32.cont [13/16] %v182, 128
  %1069 = vxpose.xlu0.b32.cont [14/16] %v183, 128
  %1070 = vxpose.xlu0.b32.cont [15/16] %v184, 128
  %1071 = vxpose.xlu0.b32.end [16/16] %v185, 128
  %v1072 = vpop.trf.xlu0
  %v1073 = vpop.trf.xlu0
  %v1074 = vpop.trf.xlu0
  %v1075 = vpop.trf.xlu0
  %v1076 = vpop.trf.xlu0
  %v1077 = vpop.trf.xlu0
  %v1078 = vpop.trf.xlu0
  %v1079 = vpop.trf.xlu0
  %v1080 = vpop.trf.xlu0
  %v1081 = vpop.trf.xlu0
  %v1082 = vpop.trf.xlu0
  %v1083 = vpop.trf.xlu0
  %v1084 = vpop.trf.xlu0
  %v1085 = vpop.trf.xlu0
  %v1086 = vpop.trf.xlu0
  %v1087 = vpop.trf.xlu0
  %1088 = vmatprep.subr.mxu0 0.0
  %1089 = vmatpush1.msra.mxu0 %v1025
  %1090 = vmatprep.subr.mxu0 0.0
  %1091 = vmatpush1.msra.mxu0 %v1027
  %1092 = vmatprep.subr.mxu0 0.0
  %1093 = vmatpush1.msra.mxu0 %v1029
  %1094 = vmatprep.subr.mxu0 0.0
  %1095 = vmatpush1.msra.mxu0 %v1031
  %1096 = vmatprep.subr.mxu0 0.0
  %1097 = vmatpush1.msra.mxu0 %v1033
  %1098 = vmatprep.subr.mxu0 0.0
  %1099 = vmatpush1.msra.mxu0 %v1035
  %1100 = vmatprep.subr.mxu0 0.0
  %1101 = vmatpush1.msra.mxu0 %v1037
  %1102 = vmatprep.subr.mxu0 0.0
  %1103 = vmatpush1.msra.mxu0 %v1039
  %1104 = vmatprep.subr.mxu0 0.0
  %1105 = vmatpush1.msra.mxu0 %v1041
  %1106 = vmatprep.subr.mxu0 0.0
  %1107 = vmatpush1.msra.mxu0 %v1043
  %1108 = vmatprep.subr.mxu0 0.0
  %1109 = vmatpush1.msra.mxu0 %v1045
  %1110 = vmatprep.subr.mxu0 0.0
  %1111 = vmatpush1.msra.mxu0 %v1047
  %1112 = vmatprep.subr.mxu0 0.0
  %1113 = vmatpush1.msra.mxu0 %v1049
  %1114 = vmatprep.subr.mxu0 0.0
  %1115 = vmatpush1.msra.mxu0 %v1051
  %1116 = vmatprep.subr.mxu0 0.0
  %1117 = vmatpush1.msra.mxu0 %v1053
  %1118 = vmatprep.subr.mxu0 0.0
  %1119 = vmatpush1.msra.mxu0 %v1055
  %1120 = vmatprep.subr.mxu0 0.0
  %1121 = vmatpush1.msra.mxu0 0.0
  %1122 = vmatprep.subr.mxu0 0.0
  %1123 = vmatpush1.msra.mxu0 0.0
  %1124 = vmatprep.subr.mxu0 0.0
  %1125 = vmatpush1.msra.mxu0 0.0
  %1126 = vmatprep.subr.mxu0 0.0
  %1127 = vmatpush1.msra.mxu0 0.0
  %1128 = vmatprep.subr.mxu0 0.0
  %1129 = vmatpush1.msra.mxu0 0.0
  %1130 = vmatprep.subr.mxu0 0.0
  %1131 = vmatpush1.msra.mxu0 0.0
  %1132 = vmatprep.subr.mxu0 0.0
  %1133 = vmatpush1.msra.mxu0 0.0
  %1134 = vmatprep.subr.mxu0 0.0
  %1135 = vmatpush1.msra.mxu0 0.0
  %1136 = vmatprep.subr.mxu0 0.0
  %1137 = vmatpush1.msra.mxu0 0.0
  %1138 = vmatprep.subr.mxu0 0.0
  %1139 = vmatpush1.msra.mxu0 0.0
  %1140 = vmatprep.subr.mxu0 0.0
  %1141 = vmatpush1.msra.mxu0 0.0
  %1142 = vmatprep.subr.mxu0 0.0
  %1143 = vmatpush1.msra.mxu0 0.0
  %1144 = vmatprep.subr.mxu0 0.0
  %1145 = vmatpush1.msra.mxu0 0.0
  %1146 = vmatprep.subr.mxu0 0.0
  %1147 = vmatpush1.msra.mxu0 0.0
  %1148 = vmatprep.subr.mxu0 0.0
  %1149 = vmatpush1.msra.mxu0 0.0
  %1150 = vmatprep.subr.mxu0 0.0
  %1151 = vmatpush1.msra.mxu0 0.0
  %1152 = vmatprep.mubr.f32.mxu0 0.0
  %1153 = vmatmul.mubr.f32.gmra.mrb[0].mxu0 %v1072
  %v1154 = vpop.f32.mrb[0].mxu0
  %v1155 = vadd.f32 0.0, %v1154
  %v1156 = vpop.f32.mrb[0].mxu0
  %1157 = vmatprep.mubr.f32.mxu0 0.0
  %1158 = vmatmul.mubr.f32.gmra.mrb[0].mxu0 %v1073
  %v1159 = vpop.f32.mrb[0].mxu0
  %v1160 = vadd.f32 0.0, %v1159
  %v1161 = vpop.f32.mrb[0].mxu0
  %1162 = vmatprep.mubr.f32.mxu0 0.0
  %1163 = vmatmul.mubr.f32.gmra.mrb[0].mxu0 %v1074
  %v1164 = vpop.f32.mrb[0].mxu0
  %v1165 = vadd.f32 0.0, %v1164
  %v1166 = vpop.f32.mrb[0].mxu0
  %1167 = vmatprep.mubr.f32.mxu0 0.0
  %1168 = vmatmul.mubr.f32.gmra.mrb[0].mxu0 %v1075
  %v1169 = vpop.f32.mrb[0].mxu0
  %v1170 = vadd.f32 0.0, %v1169
  %v1171 = vpop.f32.mrb[0].mxu0
  %1172 = vmatprep.mubr.f32.mxu0 0.0
  %1173 = vmatmul.mubr.f32.gmra.mrb[0].mxu0 %v1076
  %v1174 = vpop.f32.mrb[0].mxu0
  %v1175 = vadd.f32 0.0, %v1174
  %v1176 = vpop.f32.mrb[0].mxu0
  %1177 = vmatprep.mubr.f32.mxu0 0.0
  %1178 = vmatmul.mubr.f32.gmra.mrb[0].mxu0 %v1077
  %v1179 = vpop.f32.mrb[0].mxu0
  %v1180 = vadd.f32 0.0, %v1179
  %v1181 = vpop.f32.mrb[0].mxu0
  %1182 = vmatprep.mubr.f32.mxu0 0.0
  %1183 = vmatmul.mubr.f32.gmra.mrb[0].mxu0 %v1078
  %v1184 = vpop.f32.mrb[0].mxu0
  %v1185 = vadd.f32 0.0, %v1184
  %v1186 = vpop.f32.mrb[0].mxu0
  %1187 = vmatprep.mubr.f32.mxu0 0.0
  %1188 = vmatmul.mubr.f32.gmra.mrb[0].mxu0 %v1079
  %v1189 = vpop.f32.mrb[0].mxu0
  %v1190 = vadd.f32 0.0, %v1189
  %v1191 = vpop.f32.mrb[0].mxu0
  %1192 = vmatprep.mubr.f32.mxu0 0.0
  %1193 = vmatmul.mubr.f32.gmra.mrb[0].mxu0 %v1080
  %v1194 = vpop.f32.mrb[0].mxu0
  %v1195 = vadd.f32 0.0, %v1194
  %v1196 = vpop.f32.mrb[0].mxu0
  %1197 = vmatprep.mubr.f32.mxu0 0.0
  %1198 = vmatmul.mubr.f32.gmra.mrb[0].mxu0 %v1081
  %v1199 = vpop.f32.mrb[0].mxu0
  %v1200 = vadd.f32 0.0, %v1199
  %v1201 = vpop.f32.mrb[0].mxu0
  %1202 = vmatprep.mubr.f32.mxu0 0.0
  %1203 = vmatmul.mubr.f32.gmra.mrb[0].mxu0 %v1082
  %v1204 = vpop.f32.mrb[0].mxu0
  %v1205 = vadd.f32 0.0, %v1204
  %v1206 = vpop.f32.mrb[0].mxu0
  %1207 = vmatprep.mubr.f32.mxu0 0.0
  %1208 = vmatmul.mubr.f32.gmra.mrb[0].mxu0 %v1083
  %v1209 = vpop.f32.mrb[0].mxu0
  %v1210 = vadd.f32 0.0, %v1209
  %v1211 = vpop.f32.mrb[0].mxu0
  %1212 = vmatprep.mubr.f32.mxu0 0.0
  %1213 = vmatmul.mubr.f32.gmra.mrb[0].mxu0 %v1084
  %v1214 = vpop.f32.mrb[0].mxu0
  %v1215 = vadd.f32 0.0, %v1214
  %v1216 = vpop.f32.mrb[0].mxu0
  %1217 = vmatprep.mubr.f32.mxu0 0.0
  %1218 = vmatmul.mubr.f32.gmra.mrb[0].mxu0 %v1085
  %v1219 = vpop.f32.mrb[0].mxu0
  %v1220 = vadd.f32 0.0, %v1219
  %v1221 = vpop.f32.mrb[0].mxu0
  %1222 = vmatprep.mubr.f32.mxu0 0.0
  %1223 = vmatmul.mubr.f32.gmra.mrb[0].mxu0 %v1086
  %v1224 = vpop.f32.mrb[0].mxu0
  %v1225 = vadd.f32 0.0, %v1224
  %v1226 = vpop.f32.mrb[0].mxu0
  %1227 = vmatprep.mubr.f32.mxu0 0.0
  %1228 = vmatmul.mubr.f32.gmra.mrb[0].mxu0 %v1087
  %v1229 = vpop.f32.mrb[0].mxu0
  %v1230 = vadd.f32 0.0, %v1229
  %v1231 = vpop.f32.mrb[0].mxu0
  %1232 = vdwg.mxu0
  %1233 = vmatprep.subr.mxu0 0.0
  %1234 = vmatpush1.msra.mxu0 %v1155
  %1235 = vmatprep.subr.mxu0 0.0
  %1236 = vmatpush1.msra.mxu0 %v1160
  %1237 = vmatprep.subr.mxu0 0.0
  %1238 = vmatpush1.msra.mxu0 %v1165
  %1239 = vmatprep.subr.mxu0 0.0
  %1240 = vmatpush1.msra.mxu0 %v1170
  %1241 = vmatprep.subr.mxu0 0.0
  %1242 = vmatpush1.msra.mxu0 %v1175
  %1243 = vmatprep.subr.mxu0 0.0
  %1244 = vmatpush1.msra.mxu0 %v1180
  %1245 = vmatprep.subr.mxu0 0.0
  %1246 = vmatpush1.msra.mxu0 %v1185
  %1247 = vmatprep.subr.mxu0 0.0
  %1248 = vmatpush1.msra.mxu0 %v1190
  %1249 = vmatprep.subr.mxu0 0.0
  %1250 = vmatpush1.msra.mxu0 %v1195
  %1251 = vmatprep.subr.mxu0 0.0
  %1252 = vmatpush1.msra.mxu0 %v1200
  %1253 = vmatprep.subr.mxu0 0.0
  %1254 = vmatpush1.msra.mxu0 %v1205
  %1255 = vmatprep.subr.mxu0 0.0
  %1256 = vmatpush1.msra.mxu0 %v1210
  %1257 = vmatprep.subr.mxu0 0.0
  %1258 = vmatpush1.msra.mxu0 %v1215
  %1259 = vmatprep.subr.mxu0 0.0
  %1260 = vmatpush1.msra.mxu0 %v1220
  %1261 = vmatprep.subr.mxu0 0.0
  %1262 = vmatpush1.msra.mxu0 %v1225
  %1263 = vmatprep.subr.mxu0 0.0
  %1264 = vmatpush1.msra.mxu0 %v1230
  %1265 = vmatprep.subr.mxu0 0.0
  %1266 = vmatpush1.msra.mxu0 0.0
  %1267 = vmatprep.subr.mxu0 0.0
  %1268 = vmatpush1.msra.mxu0 0.0
  %1269 = vmatprep.subr.mxu0 0.0
  %1270 = vmatpush1.msra.mxu0 0.0
  %1271 = vmatprep.subr.mxu0 0.0
  %1272 = vmatpush1.msra.mxu0 0.0
  %1273 = vmatprep.subr.mxu0 0.0
  %1274 = vmatpush1.msra.mxu0 0.0
  %1275 = vmatprep.subr.mxu0 0.0
  %1276 = vmatpush1.msra.mxu0 0.0
  %1277 = vmatprep.subr.mxu0 0.0
  %1278 = vmatpush1.msra.mxu0 0.0
  %1279 = vmatprep.subr.mxu0 0.0
  %1280 = vmatpush1.msra.mxu0 0.0
  %1281 = vmatprep.subr.mxu0 0.0
  %1282 = vmatpush1.msra.mxu0 0.0
  %1283 = vmatprep.subr.mxu0 0.0
  %1284 = vmatpush1.msra.mxu0 0.0
  %1285 = vmatprep.subr.mxu0 0.0
  %1286 = vmatpush1.msra.mxu0 0.0
  %1287 = vmatprep.subr.mxu0 0.0
  %1288 = vmatpush1.msra.mxu0 0.0
  %1289 = vmatprep.subr.mxu0 0.0
  %1290 = vmatpush1.msra.mxu0 0.0
  %1291 = vmatprep.subr.mxu0 0.0
  %1292 = vmatpush1.msra.mxu0 0.0
  %1293 = vmatprep.subr.mxu0 0.0
  %1294 = vmatpush1.msra.mxu0 0.0
  %1295 = vmatprep.subr.mxu0 0.0
  %1296 = vmatpush1.msra.mxu0 0.0
  %1297 = vmatprep.mubr.f32.mxu0 0.0
  %1298 = vmatmul.mubr.f32.gmra.mrb[0].mxu0 %v170
  %v1299 = vpop.f32.mrb[0].mxu0
  %v1300 = vadd.f32 0.0, %v1299
  %v1301 = vpop.f32.mrb[0].mxu0
  %1302 = vmatprep.mubr.f32.mxu0 0.0
  %1303 = vmatmul.mubr.f32.gmra.mrb[0].mxu0 %v171
  %v1304 = vpop.f32.mrb[0].mxu0
  %v1305 = vadd.f32 0.0, %v1304
  %v1306 = vpop.f32.mrb[0].mxu0
  %1307 = vmatprep.mubr.f32.mxu0 0.0
  %1308 = vmatmul.mubr.f32.gmra.mrb[0].mxu0 %v172
  %v1309 = vpop.f32.mrb[0].mxu0
  %v1310 = vadd.f32 0.0, %v1309
  %v1311 = vpop.f32.mrb[0].mxu0
  %1312 = vmatprep.mubr.f32.mxu0 0.0
  %1313 = vmatmul.mubr.f32.gmra.mrb[0].mxu0 %v173
  %v1314 = vpop.f32.mrb[0].mxu0
  %v1315 = vadd.f32 0.0, %v1314
  %v1316 = vpop.f32.mrb[0].mxu0
  %1317 = vmatprep.mubr.f32.mxu0 0.0
  %1318 = vmatmul.mubr.f32.gmra.mrb[0].mxu0 %v174
  %v1319 = vpop.f32.mrb[0].mxu0
  %v1320 = vadd.f32 0.0, %v1319
  %v1321 = vpop.f32.mrb[0].mxu0
  %1322 = vmatprep.mubr.f32.mxu0 0.0
  %1323 = vmatmul.mubr.f32.gmra.mrb[0].mxu0 %v175
  %v1324 = vpop.f32.mrb[0].mxu0
  %v1325 = vadd.f32 0.0, %v1324
  %v1326 = vpop.f32.mrb[0].mxu0
  %1327 = vmatprep.mubr.f32.mxu0 0.0
  %1328 = vmatmul.mubr.f32.gmra.mrb[0].mxu0 %v176
  %v1329 = vpop.f32.mrb[0].mxu0
  %v1330 = vadd.f32 0.0, %v1329
  %v1331 = vpop.f32.mrb[0].mxu0
  %1332 = vmatprep.mubr.f32.mxu0 0.0
  %1333 = vmatmul.mubr.f32.gmra.mrb[0].mxu0 %v177
  %v1334 = vpop.f32.mrb[0].mxu0
  %v1335 = vadd.f32 0.0, %v1334
  %v1336 = vpop.f32.mrb[0].mxu0
  %1337 = vmatprep.mubr.f32.mxu0 0.0
  %1338 = vmatmul.mubr.f32.gmra.mrb[0].mxu0 %v178
  %v1339 = vpop.f32.mrb[0].mxu0
  %v1340 = vadd.f32 0.0, %v1339
  %v1341 = vpop.f32.mrb[0].mxu0
  %1342 = vmatprep.mubr.f32.mxu0 0.0
  %1343 = vmatmul.mubr.f32.gmra.mrb[0].mxu0 %v179
  %v1344 = vpop.f32.mrb[0].mxu0
  %v1345 = vadd.f32 0.0, %v1344
  %v1346 = vpop.f32.mrb[0].mxu0
  %1347 = vmatprep.mubr.f32.mxu0 0.0
  %1348 = vmatmul.mubr.f32.gmra.mrb[0].mxu0 %v180
  %v1349 = vpop.f32.mrb[0].mxu0
  %v1350 = vadd.f32 0.0, %v1349
  %v1351 = vpop.f32.mrb[0].mxu0
  %1352 = vmatprep.mubr.f32.mxu0 0.0
  %1353 = vmatmul.mubr.f32.gmra.mrb[0].mxu0 %v181
  %v1354 = vpop.f32.mrb[0].mxu0
  %v1355 = vadd.f32 0.0, %v1354
  %v1356 = vpop.f32.mrb[0].mxu0
  %1357 = vmatprep.mubr.f32.mxu0 0.0
  %1358 = vmatmul.mubr.f32.gmra.mrb[0].mxu0 %v182
  %v1359 = vpop.f32.mrb[0].mxu0
  %v1360 = vadd.f32 0.0, %v1359
  %v1361 = vpop.f32.mrb[0].mxu0
  %1362 = vmatprep.mubr.f32.mxu0 0.0
  %1363 = vmatmul.mubr.f32.gmra.mrb[0].mxu0 %v183
  %v1364 = vpop.f32.mrb[0].mxu0
  %v1365 = vadd.f32 0.0, %v1364
  %v1366 = vpop.f32.mrb[0].mxu0
  %1367 = vmatprep.mubr.f32.mxu0 0.0
  %1368 = vmatmul.mubr.f32.gmra.mrb[0].mxu0 %v184
  %v1369 = vpop.f32.mrb[0].mxu0
  %v1370 = vadd.f32 0.0, %v1369
  %v1371 = vpop.f32.mrb[0].mxu0
  %1372 = vmatprep.mubr.f32.mxu0 0.0
  %1373 = vmatmul.mubr.f32.gmra.mrb[0].mxu0 %v185
  %v1374 = vpop.f32.mrb[0].mxu0
  %v1375 = vadd.f32 0.0, %v1374
  %v1376 = vpop.f32.mrb[0].mxu0
  %1377 = vdwg.mxu0
  %v1378 = vmax.f32 %v1300, 1e-20
  %v1379 = vmax.f32 %v1305, 1e-20
  %v1380 = vmax.f32 %v1310, 1e-20
  %v1381 = vmax.f32 %v1315, 1e-20
  %v1382 = vmax.f32 %v1320, 1e-20
  %v1383 = vmax.f32 %v1325, 1e-20
  %v1384 = vmax.f32 %v1330, 1e-20
  %v1385 = vmax.f32 %v1335, 1e-20
  %v1386 = vmax.f32 %v1340, 1e-20
  %v1387 = vmax.f32 %v1345, 1e-20
  %v1388 = vmax.f32 %v1350, 1e-20
  %v1389 = vmax.f32 %v1355, 1e-20
  %v1390 = vmax.f32 %v1360, 1e-20
  %v1391 = vmax.f32 %v1365, 1e-20
  %v1392 = vmax.f32 %v1370, 1e-20
  %v1393 = vmax.f32 %v1375, 1e-20
  %v1394 = vrcp.pop %v1378
  %v1395 = vrcp.pop %v1379
  %v1396 = vrcp.pop %v1380
  %v1397 = vrcp.pop %v1381
  %v1398 = vrcp.pop %v1382
  %v1399 = vrcp.pop %v1383
  %v1400 = vrcp.pop %v1384
  %v1401 = vrcp.pop %v1385
  %v1402 = vrcp.pop %v1386
  %v1403 = vrcp.pop %v1387
  %v1404 = vrcp.pop %v1388
  %v1405 = vrcp.pop %v1389
  %v1406 = vrcp.pop %v1390
  %v1407 = vrcp.pop %v1391
  %v1408 = vrcp.pop %v1392
  %v1409 = vrcp.pop %v1393
  %v1410 = vmul.f32 %v1025, %v1394
  %v1411 = vmul.f32 %v1027, %v1395
  %v1412 = vmul.f32 %v1029, %v1396
  %v1413 = vmul.f32 %v1031, %v1397
  %v1414 = vmul.f32 %v1033, %v1398
  %v1415 = vmul.f32 %v1035, %v1399
  %v1416 = vmul.f32 %v1037, %v1400
  %v1417 = vmul.f32 %v1039, %v1401
  %v1418 = vmul.f32 %v1041, %v1402
  %v1419 = vmul.f32 %v1043, %v1403
  %v1420 = vmul.f32 %v1045, %v1404
  %v1421 = vmul.f32 %v1047, %v1405
  %v1422 = vmul.f32 %v1049, %v1406
  %v1423 = vmul.f32 %v1051, %v1407
  %v1424 = vmul.f32 %v1053, %v1408
  %v1425 = vmul.f32 %v1055, %v1409
  %1426 = vmatprep.subr.mxu0 0.0
  %1427 = vmatpush1.msra.mxu0 %v811
  %1428 = vmatprep.subr.mxu0 0.0
  %1429 = vmatpush1.msra.mxu0 %v812
  %1430 = vmatprep.subr.mxu0 0.0
  %1431 = vmatpush1.msra.mxu0 %v813
  %1432 = vmatprep.subr.mxu0 0.0
  %1433 = vmatpush1.msra.mxu0 %v814
  %1434 = vmatprep.subr.mxu0 0.0
  %1435 = vmatpush1.msra.mxu0 %v815
  %1436 = vmatprep.subr.mxu0 0.0
  %1437 = vmatpush1.msra.mxu0 %v816
  %1438 = vmatprep.subr.mxu0 0.0
  %1439 = vmatpush1.msra.mxu0 %v817
  %1440 = vmatprep.subr.mxu0 0.0
  %1441 = vmatpush1.msra.mxu0 %v818
  %1442 = vmatprep.subr.mxu0 0.0
  %1443 = vmatpush1.msra.mxu0 %v819
  %1444 = vmatprep.subr.mxu0 0.0
  %1445 = vmatpush1.msra.mxu0 %v820
  %1446 = vmatprep.subr.mxu0 0.0
  %1447 = vmatpush1.msra.mxu0 %v821
  %1448 = vmatprep.subr.mxu0 0.0
  %1449 = vmatpush1.msra.mxu0 %v822
  %1450 = vmatprep.subr.mxu0 0.0
  %1451 = vmatpush1.msra.mxu0 %v823
  %1452 = vmatprep.subr.mxu0 0.0
  %1453 = vmatpush1.msra.mxu0 %v824
  %1454 = vmatprep.subr.mxu0 0.0
  %1455 = vmatpush1.msra.mxu0 %v825
  %1456 = vmatprep.subr.mxu0 0.0
  %1457 = vmatpush1.msra.mxu0 %v826
  %1458 = vmatprep.subr.mxu0 0.0
  %1459 = vmatpush1.msra.mxu0 0.0
  %1460 = vmatprep.subr.mxu0 0.0
  %1461 = vmatpush1.msra.mxu0 0.0
  %1462 = vmatprep.subr.mxu0 0.0
  %1463 = vmatpush1.msra.mxu0 0.0
  %1464 = vmatprep.subr.mxu0 0.0
  %1465 = vmatpush1.msra.mxu0 0.0
  %1466 = vmatprep.subr.mxu0 0.0
  %1467 = vmatpush1.msra.mxu0 0.0
  %1468 = vmatprep.subr.mxu0 0.0
  %1469 = vmatpush1.msra.mxu0 0.0
  %1470 = vmatprep.subr.mxu0 0.0
  %1471 = vmatpush1.msra.mxu0 0.0
  %1472 = vmatprep.subr.mxu0 0.0
  %1473 = vmatpush1.msra.mxu0 0.0
  %1474 = vmatprep.subr.mxu0 0.0
  %1475 = vmatpush1.msra.mxu0 0.0
  %1476 = vmatprep.subr.mxu0 0.0
  %1477 = vmatpush1.msra.mxu0 0.0
  %1478 = vmatprep.subr.mxu0 0.0
  %1479 = vmatpush1.msra.mxu0 0.0
  %1480 = vmatprep.subr.mxu0 0.0
  %1481 = vmatpush1.msra.mxu0 0.0
  %1482 = vmatprep.subr.mxu0 0.0
  %1483 = vmatpush1.msra.mxu0 0.0
  %1484 = vmatprep.subr.mxu0 0.0
  %1485 = vmatpush1.msra.mxu0 0.0
  %1486 = vmatprep.subr.mxu0 0.0
  %1487 = vmatpush1.msra.mxu0 0.0
  %1488 = vmatprep.subr.mxu0 0.0
  %1489 = vmatpush1.msra.mxu0 0.0
  %1490 = vmatprep.mubr.f32.mxu0 0.0
  %1491 = vmatmul.mubr.f32.gmra.mrb[0].mxu0 %v154
  %v1492 = vpop.f32.mrb[0].mxu0
  %v1493 = vadd.f32 0.0, %v1492
  %v1494 = vpop.f32.mrb[0].mxu0
  %1495 = vmatprep.mubr.f32.mxu0 0.0
  %1496 = vmatmul.mubr.f32.gmra.mrb[0].mxu0 %v155
  %v1497 = vpop.f32.mrb[0].mxu0
  %v1498 = vadd.f32 0.0, %v1497
  %v1499 = vpop.f32.mrb[0].mxu0
  %1500 = vmatprep.mubr.f32.mxu0 0.0
  %1501 = vmatmul.mubr.f32.gmra.mrb[0].mxu0 %v156
  %v1502 = vpop.f32.mrb[0].mxu0
  %v1503 = vadd.f32 0.0, %v1502
  %v1504 = vpop.f32.mrb[0].mxu0
  %1505 = vmatprep.mubr.f32.mxu0 0.0
  %1506 = vmatmul.mubr.f32.gmra.mrb[0].mxu0 %v157
  %v1507 = vpop.f32.mrb[0].mxu0
  %v1508 = vadd.f32 0.0, %v1507
  %v1509 = vpop.f32.mrb[0].mxu0
  %1510 = vmatprep.mubr.f32.mxu0 0.0
  %1511 = vmatmul.mubr.f32.gmra.mrb[0].mxu0 %v158
  %v1512 = vpop.f32.mrb[0].mxu0
  %v1513 = vadd.f32 0.0, %v1512
  %v1514 = vpop.f32.mrb[0].mxu0
  %1515 = vmatprep.mubr.f32.mxu0 0.0
  %1516 = vmatmul.mubr.f32.gmra.mrb[0].mxu0 %v159
  %v1517 = vpop.f32.mrb[0].mxu0
  %v1518 = vadd.f32 0.0, %v1517
  %v1519 = vpop.f32.mrb[0].mxu0
  %1520 = vmatprep.mubr.f32.mxu0 0.0
  %1521 = vmatmul.mubr.f32.gmra.mrb[0].mxu0 %v160
  %v1522 = vpop.f32.mrb[0].mxu0
  %v1523 = vadd.f32 0.0, %v1522
  %v1524 = vpop.f32.mrb[0].mxu0
  %1525 = vmatprep.mubr.f32.mxu0 0.0
  %1526 = vmatmul.mubr.f32.gmra.mrb[0].mxu0 %v161
  %v1527 = vpop.f32.mrb[0].mxu0
  %v1528 = vadd.f32 0.0, %v1527
  %v1529 = vpop.f32.mrb[0].mxu0
  %1530 = vmatprep.mubr.f32.mxu0 0.0
  %1531 = vmatmul.mubr.f32.gmra.mrb[0].mxu0 %v162
  %v1532 = vpop.f32.mrb[0].mxu0
  %v1533 = vadd.f32 0.0, %v1532
  %v1534 = vpop.f32.mrb[0].mxu0
  %1535 = vmatprep.mubr.f32.mxu0 0.0
  %1536 = vmatmul.mubr.f32.gmra.mrb[0].mxu0 %v163
  %v1537 = vpop.f32.mrb[0].mxu0
  %v1538 = vadd.f32 0.0, %v1537
  %v1539 = vpop.f32.mrb[0].mxu0
  %1540 = vmatprep.mubr.f32.mxu0 0.0
  %1541 = vmatmul.mubr.f32.gmra.mrb[0].mxu0 %v164
  %v1542 = vpop.f32.mrb[0].mxu0
  %v1543 = vadd.f32 0.0, %v1542
  %v1544 = vpop.f32.mrb[0].mxu0
  %1545 = vmatprep.mubr.f32.mxu0 0.0
  %1546 = vmatmul.mubr.f32.gmra.mrb[0].mxu0 %v165
  %v1547 = vpop.f32.mrb[0].mxu0
  %v1548 = vadd.f32 0.0, %v1547
  %v1549 = vpop.f32.mrb[0].mxu0
  %1550 = vmatprep.mubr.f32.mxu0 0.0
  %1551 = vmatmul.mubr.f32.gmra.mrb[0].mxu0 %v166
  %v1552 = vpop.f32.mrb[0].mxu0
  %v1553 = vadd.f32 0.0, %v1552
  %v1554 = vpop.f32.mrb[0].mxu0
  %1555 = vmatprep.mubr.f32.mxu0 0.0
  %1556 = vmatmul.mubr.f32.gmra.mrb[0].mxu0 %v167
  %v1557 = vpop.f32.mrb[0].mxu0
  %v1558 = vadd.f32 0.0, %v1557
  %v1559 = vpop.f32.mrb[0].mxu0
  %1560 = vmatprep.mubr.f32.mxu0 0.0
  %1561 = vmatmul.mubr.f32.gmra.mrb[0].mxu0 %v168
  %v1562 = vpop.f32.mrb[0].mxu0
  %v1563 = vadd.f32 0.0, %v1562
  %v1564 = vpop.f32.mrb[0].mxu0
  %1565 = vmatprep.mubr.f32.mxu0 0.0
  %1566 = vmatmul.mubr.f32.gmra.mrb[0].mxu0 %v169
  %v1567 = vpop.f32.mrb[0].mxu0
  %v1568 = vadd.f32 0.0, %v1567
  %v1569 = vpop.f32.mrb[0].mxu0
  %1570 = vdwg.mxu0
  %1572 = vset.pattern.permute.xlu0 0
  %1573 = vperm.xlu0 %1572, %v1410
  %v1574 = vpop.permute.xlu0 %1573
  %1577 = vset.pattern.permute.xlu0 0
  %1578 = vperm.xlu0 %1577, %v1411
  %v1579 = vpop.permute.xlu0 %1578
  %1582 = vset.pattern.permute.xlu0 0
  %1583 = vperm.xlu0 %1582, %v1412
  %v1584 = vpop.permute.xlu0 %1583
  %1587 = vset.pattern.permute.xlu0 0
  %1588 = vperm.xlu0 %1587, %v1413
  %v1589 = vpop.permute.xlu0 %1588
  %1592 = vset.pattern.permute.xlu0 0
  %1593 = vperm.xlu0 %1592, %v1414
  %v1594 = vpop.permute.xlu0 %1593
  %1597 = vset.pattern.permute.xlu0 0
  %1598 = vperm.xlu0 %1597, %v1415
  %v1599 = vpop.permute.xlu0 %1598
  %1602 = vset.pattern.permute.xlu0 0
  %1603 = vperm.xlu0 %1602, %v1416
  %v1604 = vpop.permute.xlu0 %1603
  %1607 = vset.pattern.permute.xlu0 0
  %1608 = vperm.xlu0 %1607, %v1417
  %v1609 = vpop.permute.xlu0 %1608
  %1612 = vset.pattern.permute.xlu0 0
  %1613 = vperm.xlu0 %1612, %v1418
  %v1614 = vpop.permute.xlu0 %1613
  %1617 = vset.pattern.permute.xlu0 0
  %1618 = vperm.xlu0 %1617, %v1419
  %v1619 = vpop.permute.xlu0 %1618
  %1622 = vset.pattern.permute.xlu0 0
  %1623 = vperm.xlu0 %1622, %v1420
  %v1624 = vpop.permute.xlu0 %1623
  %1627 = vset.pattern.permute.xlu0 0
  %1628 = vperm.xlu0 %1627, %v1421
  %v1629 = vpop.permute.xlu0 %1628
  %1632 = vset.pattern.permute.xlu0 0
  %1633 = vperm.xlu0 %1632, %v1422
  %v1634 = vpop.permute.xlu0 %1633
  %1637 = vset.pattern.permute.xlu0 0
  %1638 = vperm.xlu0 %1637, %v1423
  %v1639 = vpop.permute.xlu0 %1638
  %1642 = vset.pattern.permute.xlu0 0
  %1643 = vperm.xlu0 %1642, %v1424
  %v1644 = vpop.permute.xlu0 %1643
  %1647 = vset.pattern.permute.xlu0 0
  %1648 = vperm.xlu0 %1647, %v1425
  %v1649 = vpop.permute.xlu0 %1648
  %v1651 = vmul.f32 %v1574, %v1493
  %v1652 = vmul.f32 %v1579, %v1498
  %v1653 = vmul.f32 %v1584, %v1503
  %v1654 = vmul.f32 %v1589, %v1508
  %v1655 = vmul.f32 %v1594, %v1513
  %v1656 = vmul.f32 %v1599, %v1518
  %v1657 = vmul.f32 %v1604, %v1523
  %v1658 = vmul.f32 %v1609, %v1528
  %v1659 = vmul.f32 %v1614, %v1533
  %v1660 = vmul.f32 %v1619, %v1538
  %v1661 = vmul.f32 %v1624, %v1543
  %v1662 = vmul.f32 %v1629, %v1548
  %v1663 = vmul.f32 %v1634, %v1553
  %v1664 = vmul.f32 %v1639, %v1558
  %v1665 = vmul.f32 %v1644, %v1563
  %v1666 = vmul.f32 %v1649, %v1568
  %1667 = vmatprep.subr.mxu0 0.0
  %1668 = vmatpush1.msra.mxu0 %v1651
  %1669 = vmatprep.subr.mxu0 0.0
  %1670 = vmatpush1.msra.mxu0 %v1652
  %1671 = vmatprep.subr.mxu0 0.0
  %1672 = vmatpush1.msra.mxu0 %v1653
  %1673 = vmatprep.subr.mxu0 0.0
  %1674 = vmatpush1.msra.mxu0 %v1654
  %1675 = vmatprep.subr.mxu0 0.0
  %1676 = vmatpush1.msra.mxu0 %v1655
  %1677 = vmatprep.subr.mxu0 0.0
  %1678 = vmatpush1.msra.mxu0 %v1656
  %1679 = vmatprep.subr.mxu0 0.0
  %1680 = vmatpush1.msra.mxu0 %v1657
  %1681 = vmatprep.subr.mxu0 0.0
  %1682 = vmatpush1.msra.mxu0 %v1658
  %1683 = vmatprep.subr.mxu0 0.0
  %1684 = vmatpush1.msra.mxu0 %v1659
  %1685 = vmatprep.subr.mxu0 0.0
  %1686 = vmatpush1.msra.mxu0 %v1660
  %1687 = vmatprep.subr.mxu0 0.0
  %1688 = vmatpush1.msra.mxu0 %v1661
  %1689 = vmatprep.subr.mxu0 0.0
  %1690 = vmatpush1.msra.mxu0 %v1662
  %1691 = vmatprep.subr.mxu0 0.0
  %1692 = vmatpush1.msra.mxu0 %v1663
  %1693 = vmatprep.subr.mxu0 0.0
  %1694 = vmatpush1.msra.mxu0 %v1664
  %1695 = vmatprep.subr.mxu0 0.0
  %1696 = vmatpush1.msra.mxu0 %v1665
  %1697 = vmatprep.subr.mxu0 0.0
  %1698 = vmatpush1.msra.mxu0 %v1666
  %1699 = vmatprep.subr.mxu0 0.0
  %1700 = vmatpush1.msra.mxu0 0.0
  %1701 = vmatprep.subr.mxu0 0.0
  %1702 = vmatpush1.msra.mxu0 0.0
  %1703 = vmatprep.subr.mxu0 0.0
  %1704 = vmatpush1.msra.mxu0 0.0
  %1705 = vmatprep.subr.mxu0 0.0
  %1706 = vmatpush1.msra.mxu0 0.0
  %1707 = vmatprep.subr.mxu0 0.0
  %1708 = vmatpush1.msra.mxu0 0.0
  %1709 = vmatprep.subr.mxu0 0.0
  %1710 = vmatpush1.msra.mxu0 0.0
  %1711 = vmatprep.subr.mxu0 0.0
  %1712 = vmatpush1.msra.mxu0 0.0
  %1713 = vmatprep.subr.mxu0 0.0
  %1714 = vmatpush1.msra.mxu0 0.0
  %1715 = vmatprep.subr.mxu0 0.0
  %1716 = vmatpush1.msra.mxu0 0.0
  %1717 = vmatprep.subr.mxu0 0.0
  %1718 = vmatpush1.msra.mxu0 0.0
  %1719 = vmatprep.subr.mxu0 0.0
  %1720 = vmatpush1.msra.mxu0 0.0
  %1721 = vmatprep.subr.mxu0 0.0
  %1722 = vmatpush1.msra.mxu0 0.0
  %1723 = vmatprep.subr.mxu0 0.0
  %1724 = vmatpush1.msra.mxu0 0.0
  %1725 = vmatprep.subr.mxu0 0.0
  %1726 = vmatpush1.msra.mxu0 0.0
  %1727 = vmatprep.subr.mxu0 0.0
  %1728 = vmatpush1.msra.mxu0 0.0
  %1729 = vmatprep.subr.mxu0 0.0
  %1730 = vmatpush1.msra.mxu0 0.0
  %1731 = vmatprep.mubr.f32.mxu0 0.0
  %1732 = vmatmul.mubr.f32.gmra.mrb[0].mxu0 %v1072
  %v1733 = vpop.f32.mrb[0].mxu0
  %v1734 = vadd.f32 0.0, %v1733
  %v1735 = vpop.f32.mrb[0].mxu0
  %1736 = vmatprep.mubr.f32.mxu0 0.0
  %1737 = vmatmul.mubr.f32.gmra.mrb[0].mxu0 %v1073
  %v1738 = vpop.f32.mrb[0].mxu0
  %v1739 = vadd.f32 0.0, %v1738
  %v1740 = vpop.f32.mrb[0].mxu0
  %1741 = vmatprep.mubr.f32.mxu0 0.0
  %1742 = vmatmul.mubr.f32.gmra.mrb[0].mxu0 %v1074
  %v1743 = vpop.f32.mrb[0].mxu0
  %v1744 = vadd.f32 0.0, %v1743
  %v1745 = vpop.f32.mrb[0].mxu0
  %1746 = vmatprep.mubr.f32.mxu0 0.0
  %1747 = vmatmul.mubr.f32.gmra.mrb[0].mxu0 %v1075
  %v1748 = vpop.f32.mrb[0].mxu0
  %v1749 = vadd.f32 0.0, %v1748
  %v1750 = vpop.f32.mrb[0].mxu0
  %1751 = vmatprep.mubr.f32.mxu0 0.0
  %1752 = vmatmul.mubr.f32.gmra.mrb[0].mxu0 %v1076
  %v1753 = vpop.f32.mrb[0].mxu0
  %v1754 = vadd.f32 0.0, %v1753
  %v1755 = vpop.f32.mrb[0].mxu0
  %1756 = vmatprep.mubr.f32.mxu0 0.0
  %1757 = vmatmul.mubr.f32.gmra.mrb[0].mxu0 %v1077
  %v1758 = vpop.f32.mrb[0].mxu0
  %v1759 = vadd.f32 0.0, %v1758
  %v1760 = vpop.f32.mrb[0].mxu0
  %1761 = vmatprep.mubr.f32.mxu0 0.0
  %1762 = vmatmul.mubr.f32.gmra.mrb[0].mxu0 %v1078
  %v1763 = vpop.f32.mrb[0].mxu0
  %v1764 = vadd.f32 0.0, %v1763
  %v1765 = vpop.f32.mrb[0].mxu0
  %1766 = vmatprep.mubr.f32.mxu0 0.0
  %1767 = vmatmul.mubr.f32.gmra.mrb[0].mxu0 %v1079
  %v1768 = vpop.f32.mrb[0].mxu0
  %v1769 = vadd.f32 0.0, %v1768
  %v1770 = vpop.f32.mrb[0].mxu0
  %1771 = vmatprep.mubr.f32.mxu0 0.0
  %1772 = vmatmul.mubr.f32.gmra.mrb[0].mxu0 %v1080
  %v1773 = vpop.f32.mrb[0].mxu0
  %v1774 = vadd.f32 0.0, %v1773
  %v1775 = vpop.f32.mrb[0].mxu0
  %1776 = vmatprep.mubr.f32.mxu0 0.0
  %1777 = vmatmul.mubr.f32.gmra.mrb[0].mxu0 %v1081
  %v1778 = vpop.f32.mrb[0].mxu0
  %v1779 = vadd.f32 0.0, %v1778
  %v1780 = vpop.f32.mrb[0].mxu0
  %1781 = vmatprep.mubr.f32.mxu0 0.0
  %1782 = vmatmul.mubr.f32.gmra.mrb[0].mxu0 %v1082
  %v1783 = vpop.f32.mrb[0].mxu0
  %v1784 = vadd.f32 0.0, %v1783
  %v1785 = vpop.f32.mrb[0].mxu0
  %1786 = vmatprep.mubr.f32.mxu0 0.0
  %1787 = vmatmul.mubr.f32.gmra.mrb[0].mxu0 %v1083
  %v1788 = vpop.f32.mrb[0].mxu0
  %v1789 = vadd.f32 0.0, %v1788
  %v1790 = vpop.f32.mrb[0].mxu0
  %1791 = vmatprep.mubr.f32.mxu0 0.0
  %1792 = vmatmul.mubr.f32.gmra.mrb[0].mxu0 %v1084
  %v1793 = vpop.f32.mrb[0].mxu0
  %v1794 = vadd.f32 0.0, %v1793
  %v1795 = vpop.f32.mrb[0].mxu0
  %1796 = vmatprep.mubr.f32.mxu0 0.0
  %1797 = vmatmul.mubr.f32.gmra.mrb[0].mxu0 %v1085
  %v1798 = vpop.f32.mrb[0].mxu0
  %v1799 = vadd.f32 0.0, %v1798
  %v1800 = vpop.f32.mrb[0].mxu0
  %1801 = vmatprep.mubr.f32.mxu0 0.0
  %1802 = vmatmul.mubr.f32.gmra.mrb[0].mxu0 %v1086
  %v1803 = vpop.f32.mrb[0].mxu0
  %v1804 = vadd.f32 0.0, %v1803
  %v1805 = vpop.f32.mrb[0].mxu0
  %1806 = vmatprep.mubr.f32.mxu0 0.0
  %1807 = vmatmul.mubr.f32.gmra.mrb[0].mxu0 %v1087
  %v1808 = vpop.f32.mrb[0].mxu0
  %v1809 = vadd.f32 0.0, %v1808
  %v1810 = vpop.f32.mrb[0].mxu0
  %1811 = vdwg.mxu0
  %1812 = vmatprep.subr.mxu0 0.0
  %1813 = vmatpush1.msra.mxu0 %v1734
  %1814 = vmatprep.subr.mxu0 0.0
  %1815 = vmatpush1.msra.mxu0 %v1739
  %1816 = vmatprep.subr.mxu0 0.0
  %1817 = vmatpush1.msra.mxu0 %v1744
  %1818 = vmatprep.subr.mxu0 0.0
  %1819 = vmatpush1.msra.mxu0 %v1749
  %1820 = vmatprep.subr.mxu0 0.0
  %1821 = vmatpush1.msra.mxu0 %v1754
  %1822 = vmatprep.subr.mxu0 0.0
  %1823 = vmatpush1.msra.mxu0 %v1759
  %1824 = vmatprep.subr.mxu0 0.0
  %1825 = vmatpush1.msra.mxu0 %v1764
  %1826 = vmatprep.subr.mxu0 0.0
  %1827 = vmatpush1.msra.mxu0 %v1769
  %1828 = vmatprep.subr.mxu0 0.0
  %1829 = vmatpush1.msra.mxu0 %v1774
  %1830 = vmatprep.subr.mxu0 0.0
  %1831 = vmatpush1.msra.mxu0 %v1779
  %1832 = vmatprep.subr.mxu0 0.0
  %1833 = vmatpush1.msra.mxu0 %v1784
  %1834 = vmatprep.subr.mxu0 0.0
  %1835 = vmatpush1.msra.mxu0 %v1789
  %1836 = vmatprep.subr.mxu0 0.0
  %1837 = vmatpush1.msra.mxu0 %v1794
  %1838 = vmatprep.subr.mxu0 0.0
  %1839 = vmatpush1.msra.mxu0 %v1799
  %1840 = vmatprep.subr.mxu0 0.0
  %1841 = vmatpush1.msra.mxu0 %v1804
  %1842 = vmatprep.subr.mxu0 0.0
  %1843 = vmatpush1.msra.mxu0 %v1809
  %1844 = vmatprep.subr.mxu0 0.0
  %1845 = vmatpush1.msra.mxu0 0.0
  %1846 = vmatprep.subr.mxu0 0.0
  %1847 = vmatpush1.msra.mxu0 0.0
  %1848 = vmatprep.subr.mxu0 0.0
  %1849 = vmatpush1.msra.mxu0 0.0
  %1850 = vmatprep.subr.mxu0 0.0
  %1851 = vmatpush1.msra.mxu0 0.0
  %1852 = vmatprep.subr.mxu0 0.0
  %1853 = vmatpush1.msra.mxu0 0.0
  %1854 = vmatprep.subr.mxu0 0.0
  %1855 = vmatpush1.msra.mxu0 0.0
  %1856 = vmatprep.subr.mxu0 0.0
  %1857 = vmatpush1.msra.mxu0 0.0
  %1858 = vmatprep.subr.mxu0 0.0
  %1859 = vmatpush1.msra.mxu0 0.0
  %1860 = vmatprep.subr.mxu0 0.0
  %1861 = vmatpush1.msra.mxu0 0.0
  %1862 = vmatprep.subr.mxu0 0.0
  %1863 = vmatpush1.msra.mxu0 0.0
  %1864 = vmatprep.subr.mxu0 0.0
  %1865 = vmatpush1.msra.mxu0 0.0
  %1866 = vmatprep.subr.mxu0 0.0
  %1867 = vmatpush1.msra.mxu0 0.0
  %1868 = vmatprep.subr.mxu0 0.0
  %1869 = vmatpush1.msra.mxu0 0.0
  %1870 = vmatprep.subr.mxu0 0.0
  %1871 = vmatpush1.msra.mxu0 0.0
  %1872 = vmatprep.subr.mxu0 0.0
  %1873 = vmatpush1.msra.mxu0 0.0
  %1874 = vmatprep.subr.mxu0 0.0
  %1875 = vmatpush1.msra.mxu0 0.0
  %1876 = vmatprep.mubr.f32.mxu0 0.0
  %1877 = vmatmul.mubr.f32.gmra.mrb[0].mxu0 %v154
  %v1878 = vpop.f32.mrb[0].mxu0
  %v1879 = vadd.f32 0.0, %v1878
  %v1880 = vpop.f32.mrb[0].mxu0
  %1881 = vmatprep.mubr.f32.mxu0 0.0
  %1882 = vmatmul.mubr.f32.gmra.mrb[0].mxu0 %v155
  %v1883 = vpop.f32.mrb[0].mxu0
  %v1884 = vadd.f32 0.0, %v1883
  %v1885 = vpop.f32.mrb[0].mxu0
  %1886 = vmatprep.mubr.f32.mxu0 0.0
  %1887 = vmatmul.mubr.f32.gmra.mrb[0].mxu0 %v156
  %v1888 = vpop.f32.mrb[0].mxu0
  %v1889 = vadd.f32 0.0, %v1888
  %v1890 = vpop.f32.mrb[0].mxu0
  %1891 = vmatprep.mubr.f32.mxu0 0.0
  %1892 = vmatmul.mubr.f32.gmra.mrb[0].mxu0 %v157
  %v1893 = vpop.f32.mrb[0].mxu0
  %v1894 = vadd.f32 0.0, %v1893
  %v1895 = vpop.f32.mrb[0].mxu0
  %1896 = vmatprep.mubr.f32.mxu0 0.0
  %1897 = vmatmul.mubr.f32.gmra.mrb[0].mxu0 %v158
  %v1898 = vpop.f32.mrb[0].mxu0
  %v1899 = vadd.f32 0.0, %v1898
  %v1900 = vpop.f32.mrb[0].mxu0
  %1901 = vmatprep.mubr.f32.mxu0 0.0
  %1902 = vmatmul.mubr.f32.gmra.mrb[0].mxu0 %v159
  %v1903 = vpop.f32.mrb[0].mxu0
  %v1904 = vadd.f32 0.0, %v1903
  %v1905 = vpop.f32.mrb[0].mxu0
  %1906 = vmatprep.mubr.f32.mxu0 0.0
  %1907 = vmatmul.mubr.f32.gmra.mrb[0].mxu0 %v160
  %v1908 = vpop.f32.mrb[0].mxu0
  %v1909 = vadd.f32 0.0, %v1908
  %v1910 = vpop.f32.mrb[0].mxu0
  %1911 = vmatprep.mubr.f32.mxu0 0.0
  %1912 = vmatmul.mubr.f32.gmra.mrb[0].mxu0 %v161
  %v1913 = vpop.f32.mrb[0].mxu0
  %v1914 = vadd.f32 0.0, %v1913
  %v1915 = vpop.f32.mrb[0].mxu0
  %1916 = vmatprep.mubr.f32.mxu0 0.0
  %1917 = vmatmul.mubr.f32.gmra.mrb[0].mxu0 %v162
  %v1918 = vpop.f32.mrb[0].mxu0
  %v1919 = vadd.f32 0.0, %v1918
  %v1920 = vpop.f32.mrb[0].mxu0
  %1921 = vmatprep.mubr.f32.mxu0 0.0
  %1922 = vmatmul.mubr.f32.gmra.mrb[0].mxu0 %v163
  %v1923 = vpop.f32.mrb[0].mxu0
  %v1924 = vadd.f32 0.0, %v1923
  %v1925 = vpop.f32.mrb[0].mxu0
  %1926 = vmatprep.mubr.f32.mxu0 0.0
  %1927 = vmatmul.mubr.f32.gmra.mrb[0].mxu0 %v164
  %v1928 = vpop.f32.mrb[0].mxu0
  %v1929 = vadd.f32 0.0, %v1928
  %v1930 = vpop.f32.mrb[0].mxu0
  %1931 = vmatprep.mubr.f32.mxu0 0.0
  %1932 = vmatmul.mubr.f32.gmra.mrb[0].mxu0 %v165
  %v1933 = vpop.f32.mrb[0].mxu0
  %v1934 = vadd.f32 0.0, %v1933
  %v1935 = vpop.f32.mrb[0].mxu0
  %1936 = vmatprep.mubr.f32.mxu0 0.0
  %1937 = vmatmul.mubr.f32.gmra.mrb[0].mxu0 %v166
  %v1938 = vpop.f32.mrb[0].mxu0
  %v1939 = vadd.f32 0.0, %v1938
  %v1940 = vpop.f32.mrb[0].mxu0
  %1941 = vmatprep.mubr.f32.mxu0 0.0
  %1942 = vmatmul.mubr.f32.gmra.mrb[0].mxu0 %v167
  %v1943 = vpop.f32.mrb[0].mxu0
  %v1944 = vadd.f32 0.0, %v1943
  %v1945 = vpop.f32.mrb[0].mxu0
  %1946 = vmatprep.mubr.f32.mxu0 0.0
  %1947 = vmatmul.mubr.f32.gmra.mrb[0].mxu0 %v168
  %v1948 = vpop.f32.mrb[0].mxu0
  %v1949 = vadd.f32 0.0, %v1948
  %v1950 = vpop.f32.mrb[0].mxu0
  %1951 = vmatprep.mubr.f32.mxu0 0.0
  %1952 = vmatmul.mubr.f32.gmra.mrb[0].mxu0 %v169
  %v1953 = vpop.f32.mrb[0].mxu0
  %v1954 = vadd.f32 0.0, %v1953
  %v1955 = vpop.f32.mrb[0].mxu0
  %1956 = vdwg.mxu0
  %1957 = vmatprep.subr.mxu0 0.0
  %1958 = vmatpush1.msra.mxu0 %v1734
  %1959 = vmatprep.subr.mxu0 0.0
  %1960 = vmatpush1.msra.mxu0 %v1739
  %1961 = vmatprep.subr.mxu0 0.0
  %1962 = vmatpush1.msra.mxu0 %v1744
  %1963 = vmatprep.subr.mxu0 0.0
  %1964 = vmatpush1.msra.mxu0 %v1749
  %1965 = vmatprep.subr.mxu0 0.0
  %1966 = vmatpush1.msra.mxu0 %v1754
  %1967 = vmatprep.subr.mxu0 0.0
  %1968 = vmatpush1.msra.mxu0 %v1759
  %1969 = vmatprep.subr.mxu0 0.0
  %1970 = vmatpush1.msra.mxu0 %v1764
  %1971 = vmatprep.subr.mxu0 0.0
  %1972 = vmatpush1.msra.mxu0 %v1769
  %1973 = vmatprep.subr.mxu0 0.0
  %1974 = vmatpush1.msra.mxu0 %v1774
  %1975 = vmatprep.subr.mxu0 0.0
  %1976 = vmatpush1.msra.mxu0 %v1779
  %1977 = vmatprep.subr.mxu0 0.0
  %1978 = vmatpush1.msra.mxu0 %v1784
  %1979 = vmatprep.subr.mxu0 0.0
  %1980 = vmatpush1.msra.mxu0 %v1789
  %1981 = vmatprep.subr.mxu0 0.0
  %1982 = vmatpush1.msra.mxu0 %v1794
  %1983 = vmatprep.subr.mxu0 0.0
  %1984 = vmatpush1.msra.mxu0 %v1799
  %1985 = vmatprep.subr.mxu0 0.0
  %1986 = vmatpush1.msra.mxu0 %v1804
  %1987 = vmatprep.subr.mxu0 0.0
  %1988 = vmatpush1.msra.mxu0 %v1809
  %1989 = vmatprep.subr.mxu0 0.0
  %1990 = vmatpush1.msra.mxu0 0.0
  %1991 = vmatprep.subr.mxu0 0.0
  %1992 = vmatpush1.msra.mxu0 0.0
  %1993 = vmatprep.subr.mxu0 0.0
  %1994 = vmatpush1.msra.mxu0 0.0
  %1995 = vmatprep.subr.mxu0 0.0
  %1996 = vmatpush1.msra.mxu0 0.0
  %1997 = vmatprep.subr.mxu0 0.0
  %1998 = vmatpush1.msra.mxu0 0.0
  %1999 = vmatprep.subr.mxu0 0.0
  %2000 = vmatpush1.msra.mxu0 0.0
  %2001 = vmatprep.subr.mxu0 0.0
  %2002 = vmatpush1.msra.mxu0 0.0
  %2003 = vmatprep.subr.mxu0 0.0
  %2004 = vmatpush1.msra.mxu0 0.0
  %2005 = vmatprep.subr.mxu0 0.0
  %2006 = vmatpush1.msra.mxu0 0.0
  %2007 = vmatprep.subr.mxu0 0.0
  %2008 = vmatpush1.msra.mxu0 0.0
  %2009 = vmatprep.subr.mxu0 0.0
  %2010 = vmatpush1.msra.mxu0 0.0
  %2011 = vmatprep.subr.mxu0 0.0
  %2012 = vmatpush1.msra.mxu0 0.0
  %2013 = vmatprep.subr.mxu0 0.0
  %2014 = vmatpush1.msra.mxu0 0.0
  %2015 = vmatprep.subr.mxu0 0.0
  %2016 = vmatpush1.msra.mxu0 0.0
  %2017 = vmatprep.subr.mxu0 0.0
  %2018 = vmatpush1.msra.mxu0 0.0
  %2019 = vmatprep.subr.mxu0 0.0
  %2020 = vmatpush1.msra.mxu0 0.0
  %2021 = vmatprep.mubr.f32.mxu0 0.0
  %2022 = vmatmul.mubr.f32.gmra.mrb[0].mxu0 %v170
  %v2023 = vpop.f32.mrb[0].mxu0
  %v2024 = vadd.f32 0.0, %v2023
  %v2025 = vpop.f32.mrb[0].mxu0
  %2026 = vmatprep.mubr.f32.mxu0 0.0
  %2027 = vmatmul.mubr.f32.gmra.mrb[0].mxu0 %v171
  %v2028 = vpop.f32.mrb[0].mxu0
  %v2029 = vadd.f32 0.0, %v2028
  %v2030 = vpop.f32.mrb[0].mxu0
  %2031 = vmatprep.mubr.f32.mxu0 0.0
  %2032 = vmatmul.mubr.f32.gmra.mrb[0].mxu0 %v172
  %v2033 = vpop.f32.mrb[0].mxu0
  %v2034 = vadd.f32 0.0, %v2033
  %v2035 = vpop.f32.mrb[0].mxu0
  %2036 = vmatprep.mubr.f32.mxu0 0.0
  %2037 = vmatmul.mubr.f32.gmra.mrb[0].mxu0 %v173
  %v2038 = vpop.f32.mrb[0].mxu0
  %v2039 = vadd.f32 0.0, %v2038
  %v2040 = vpop.f32.mrb[0].mxu0
  %2041 = vmatprep.mubr.f32.mxu0 0.0
  %2042 = vmatmul.mubr.f32.gmra.mrb[0].mxu0 %v174
  %v2043 = vpop.f32.mrb[0].mxu0
  %v2044 = vadd.f32 0.0, %v2043
  %v2045 = vpop.f32.mrb[0].mxu0
  %2046 = vmatprep.mubr.f32.mxu0 0.0
  %2047 = vmatmul.mubr.f32.gmra.mrb[0].mxu0 %v175
  %v2048 = vpop.f32.mrb[0].mxu0
  %v2049 = vadd.f32 0.0, %v2048
  %v2050 = vpop.f32.mrb[0].mxu0
  %2051 = vmatprep.mubr.f32.mxu0 0.0
  %2052 = vmatmul.mubr.f32.gmra.mrb[0].mxu0 %v176
  %v2053 = vpop.f32.mrb[0].mxu0
  %v2054 = vadd.f32 0.0, %v2053
  %v2055 = vpop.f32.mrb[0].mxu0
  %2056 = vmatprep.mubr.f32.mxu0 0.0
  %2057 = vmatmul.mubr.f32.gmra.mrb[0].mxu0 %v177
  %v2058 = vpop.f32.mrb[0].mxu0
  %v2059 = vadd.f32 0.0, %v2058
  %v2060 = vpop.f32.mrb[0].mxu0
  %2061 = vmatprep.mubr.f32.mxu0 0.0
  %2062 = vmatmul.mubr.f32.gmra.mrb[0].mxu0 %v178
  %v2063 = vpop.f32.mrb[0].mxu0
  %v2064 = vadd.f32 0.0, %v2063
  %v2065 = vpop.f32.mrb[0].mxu0
  %2066 = vmatprep.mubr.f32.mxu0 0.0
  %2067 = vmatmul.mubr.f32.gmra.mrb[0].mxu0 %v179
  %v2068 = vpop.f32.mrb[0].mxu0
  %v2069 = vadd.f32 0.0, %v2068
  %v2070 = vpop.f32.mrb[0].mxu0
  %2071 = vmatprep.mubr.f32.mxu0 0.0
  %2072 = vmatmul.mubr.f32.gmra.mrb[0].mxu0 %v180
  %v2073 = vpop.f32.mrb[0].mxu0
  %v2074 = vadd.f32 0.0, %v2073
  %v2075 = vpop.f32.mrb[0].mxu0
  %2076 = vmatprep.mubr.f32.mxu0 0.0
  %2077 = vmatmul.mubr.f32.gmra.mrb[0].mxu0 %v181
  %v2078 = vpop.f32.mrb[0].mxu0
  %v2079 = vadd.f32 0.0, %v2078
  %v2080 = vpop.f32.mrb[0].mxu0
  %2081 = vmatprep.mubr.f32.mxu0 0.0
  %2082 = vmatmul.mubr.f32.gmra.mrb[0].mxu0 %v182
  %v2083 = vpop.f32.mrb[0].mxu0
  %v2084 = vadd.f32 0.0, %v2083
  %v2085 = vpop.f32.mrb[0].mxu0
  %2086 = vmatprep.mubr.f32.mxu0 0.0
  %2087 = vmatmul.mubr.f32.gmra.mrb[0].mxu0 %v183
  %v2088 = vpop.f32.mrb[0].mxu0
  %v2089 = vadd.f32 0.0, %v2088
  %v2090 = vpop.f32.mrb[0].mxu0
  %2091 = vmatprep.mubr.f32.mxu0 0.0
  %2092 = vmatmul.mubr.f32.gmra.mrb[0].mxu0 %v184
  %v2093 = vpop.f32.mrb[0].mxu0
  %v2094 = vadd.f32 0.0, %v2093
  %v2095 = vpop.f32.mrb[0].mxu0
  %2096 = vmatprep.mubr.f32.mxu0 0.0
  %2097 = vmatmul.mubr.f32.gmra.mrb[0].mxu0 %v185
  %v2098 = vpop.f32.mrb[0].mxu0
  %v2099 = vadd.f32 0.0, %v2098
  %v2100 = vpop.f32.mrb[0].mxu0
  %2101 = vdwg.mxu0
  %2103 = vset.pattern.permute.xlu0 0
  %2104 = vperm.xlu0 %2103, %v122
  %v2105 = vpop.permute.xlu0 %2104
  %2108 = vset.pattern.permute.xlu0 0
  %2109 = vperm.xlu0 %2108, %v123
  %v2110 = vpop.permute.xlu0 %2109
  %2113 = vset.pattern.permute.xlu0 0
  %2114 = vperm.xlu0 %2113, %v124
  %v2115 = vpop.permute.xlu0 %2114
  %2118 = vset.pattern.permute.xlu0 0
  %2119 = vperm.xlu0 %2118, %v125
  %v2120 = vpop.permute.xlu0 %2119
  %2123 = vset.pattern.permute.xlu0 0
  %2124 = vperm.xlu0 %2123, %v126
  %v2125 = vpop.permute.xlu0 %2124
  %2128 = vset.pattern.permute.xlu0 0
  %2129 = vperm.xlu0 %2128, %v127
  %v2130 = vpop.permute.xlu0 %2129
  %2133 = vset.pattern.permute.xlu0 0
  %2134 = vperm.xlu0 %2133, %v128
  %v2135 = vpop.permute.xlu0 %2134
  %2138 = vset.pattern.permute.xlu0 0
  %2139 = vperm.xlu0 %2138, %v129
  %v2140 = vpop.permute.xlu0 %2139
  %2143 = vset.pattern.permute.xlu0 0
  %2144 = vperm.xlu0 %2143, %v130
  %v2145 = vpop.permute.xlu0 %2144
  %2148 = vset.pattern.permute.xlu0 0
  %2149 = vperm.xlu0 %2148, %v131
  %v2150 = vpop.permute.xlu0 %2149
  %2153 = vset.pattern.permute.xlu0 0
  %2154 = vperm.xlu0 %2153, %v132
  %v2155 = vpop.permute.xlu0 %2154
  %2158 = vset.pattern.permute.xlu0 0
  %2159 = vperm.xlu0 %2158, %v133
  %v2160 = vpop.permute.xlu0 %2159
  %2163 = vset.pattern.permute.xlu0 0
  %2164 = vperm.xlu0 %2163, %v134
  %v2165 = vpop.permute.xlu0 %2164
  %2168 = vset.pattern.permute.xlu0 0
  %2169 = vperm.xlu0 %2168, %v135
  %v2170 = vpop.permute.xlu0 %2169
  %2173 = vset.pattern.permute.xlu0 0
  %2174 = vperm.xlu0 %2173, %v136
  %v2175 = vpop.permute.xlu0 %2174
  %2178 = vset.pattern.permute.xlu0 0
  %2179 = vperm.xlu0 %2178, %v137
  %v2180 = vpop.permute.xlu0 %2179
  %v2182 = vlaneseq
  %v2183 = vshrl.u32 %v2182, 7
  %v2184 = vsub.s32 0, %v2183
  %v2185 = vrot.slane %v64, %v2184
  %v2186 = vmul.f32 %v2105, %v2185
  %v2187 = vmul.f32 %v2110, %v2185
  %v2188 = vmul.f32 %v2115, %v2185
  %v2189 = vmul.f32 %v2120, %v2185
  %v2190 = vmul.f32 %v2125, %v2185
  %v2191 = vmul.f32 %v2130, %v2185
  %v2192 = vmul.f32 %v2135, %v2185
  %v2193 = vmul.f32 %v2140, %v2185
  %v2194 = vmul.f32 %v2145, %v2185
  %v2195 = vmul.f32 %v2150, %v2185
  %v2196 = vmul.f32 %v2155, %v2185
  %v2197 = vmul.f32 %v2160, %v2185
  %v2198 = vmul.f32 %v2165, %v2185
  %v2199 = vmul.f32 %v2170, %v2185
  %v2200 = vmul.f32 %v2175, %v2185
  %v2201 = vmul.f32 %v2180, %v2185
  %v2203 = vsel %vm190, %v1879, 0
  %v2206 = vsel %vm190, %v1884, 0
  %v2209 = vsel %vm190, %v1889, 0
  %v2212 = vsel %vm190, %v1894, 0
  %v2215 = vsel %vm190, %v1899, 0
  %v2218 = vsel %vm190, %v1904, 0
  %v2221 = vsel %vm190, %v1909, 0
  %v2224 = vsel %vm190, %v1914, 0
  %v2227 = vsel %vm190, %v1919, 0
  %v2230 = vsel %vm190, %v1924, 0
  %v2233 = vsel %vm190, %v1929, 0
  %v2236 = vsel %vm190, %v1934, 0
  %v2239 = vsel %vm190, %v1939, 0
  %v2242 = vsel %vm190, %v1944, 0
  %v2245 = vsel %vm190, %v1949, 0
  %v2248 = vsel %vm190, %v1954, 0
  %2250 = vmatprep.subr.mxu0 0.0
  %2251 = vmatpush1.msra.mxu0 %v65
  %2252 = vmatprep.subr.mxu0 0.0
  %2253 = vmatpush1.msra.mxu0 0.0
  %2254 = vmatprep.subr.mxu0 0.0
  %2255 = vmatpush1.msra.mxu0 0.0
  %2256 = vmatprep.subr.mxu0 0.0
  %2257 = vmatpush1.msra.mxu0 0.0
  %2258 = vmatprep.subr.mxu0 0.0
  %2259 = vmatpush1.msra.mxu0 0.0
  %2260 = vmatprep.subr.mxu0 0.0
  %2261 = vmatpush1.msra.mxu0 0.0
  %2262 = vmatprep.subr.mxu0 0.0
  %2263 = vmatpush1.msra.mxu0 0.0
  %2264 = vmatprep.subr.mxu0 0.0
  %2265 = vmatpush1.msra.mxu0 0.0
  %2266 = vmatprep.subr.mxu0 0.0
  %2267 = vmatpush1.msra.mxu0 0.0
  %2268 = vmatprep.subr.mxu0 0.0
  %2269 = vmatpush1.msra.mxu0 0.0
  %2270 = vmatprep.subr.mxu0 0.0
  %2271 = vmatpush1.msra.mxu0 0.0
  %2272 = vmatprep.subr.mxu0 0.0
  %2273 = vmatpush1.msra.mxu0 0.0
  %2274 = vmatprep.subr.mxu0 0.0
  %2275 = vmatpush1.msra.mxu0 0.0
  %2276 = vmatprep.subr.mxu0 0.0
  %2277 = vmatpush1.msra.mxu0 0.0
  %2278 = vmatprep.subr.mxu0 0.0
  %2279 = vmatpush1.msra.mxu0 0.0
  %2280 = vmatprep.subr.mxu0 0.0
  %2281 = vmatpush1.msra.mxu0 0.0
  %2282 = vmatprep.subr.mxu0 0.0
  %2283 = vmatpush1.msra.mxu0 0.0
  %2284 = vmatprep.subr.mxu0 0.0
  %2285 = vmatpush1.msra.mxu0 0.0
  %2286 = vmatprep.subr.mxu0 0.0
  %2287 = vmatpush1.msra.mxu0 0.0
  %2288 = vmatprep.subr.mxu0 0.0
  %2289 = vmatpush1.msra.mxu0 0.0
  %2290 = vmatprep.subr.mxu0 0.0
  %2291 = vmatpush1.msra.mxu0 0.0
  %2292 = vmatprep.subr.mxu0 0.0
  %2293 = vmatpush1.msra.mxu0 0.0
  %2294 = vmatprep.subr.mxu0 0.0
  %2295 = vmatpush1.msra.mxu0 0.0
  %2296 = vmatprep.subr.mxu0 0.0
  %2297 = vmatpush1.msra.mxu0 0.0
  %2298 = vmatprep.subr.mxu0 0.0
  %2299 = vmatpush1.msra.mxu0 0.0
  %2300 = vmatprep.subr.mxu0 0.0
  %2301 = vmatpush1.msra.mxu0 0.0
  %2302 = vmatprep.subr.mxu0 0.0
  %2303 = vmatpush1.msra.mxu0 0.0
  %2304 = vmatprep.subr.mxu0 0.0
  %2305 = vmatpush1.msra.mxu0 0.0
  %2306 = vmatprep.subr.mxu0 0.0
  %2307 = vmatpush1.msra.mxu0 0.0
  %2308 = vmatprep.subr.mxu0 0.0
  %2309 = vmatpush1.msra.mxu0 0.0
  %2310 = vmatprep.subr.mxu0 0.0
  %2311 = vmatpush1.msra.mxu0 0.0
  %2312 = vmatprep.subr.mxu0 0.0
  %2313 = vmatpush1.msra.mxu0 0.0
  %2314 = vmatprep.mubr.f32.mxu0 0.0
  %2315 = vmatmul.mubr.f32.gmra.mrb[0].mxu0 %v2203
  %v2316 = vpop.f32.mrb[0].mxu0
  %v2317 = vadd.f32 0.0, %v2316
  %v2318 = vpop.f32.mrb[0].mxu0
  %2319 = vmatprep.mubr.f32.mxu0 0.0
  %2320 = vmatmul.mubr.f32.gmra.mrb[0].mxu0 %v2206
  %v2321 = vpop.f32.mrb[0].mxu0
  %v2322 = vadd.f32 0.0, %v2321
  %v2323 = vpop.f32.mrb[0].mxu0
  %2324 = vmatprep.mubr.f32.mxu0 0.0
  %2325 = vmatmul.mubr.f32.gmra.mrb[0].mxu0 %v2209
  %v2326 = vpop.f32.mrb[0].mxu0
  %v2327 = vadd.f32 0.0, %v2326
  %v2328 = vpop.f32.mrb[0].mxu0
  %2329 = vmatprep.mubr.f32.mxu0 0.0
  %2330 = vmatmul.mubr.f32.gmra.mrb[0].mxu0 %v2212
  %v2331 = vpop.f32.mrb[0].mxu0
  %v2332 = vadd.f32 0.0, %v2331
  %v2333 = vpop.f32.mrb[0].mxu0
  %2334 = vmatprep.mubr.f32.mxu0 0.0
  %2335 = vmatmul.mubr.f32.gmra.mrb[0].mxu0 %v2215
  %v2336 = vpop.f32.mrb[0].mxu0
  %v2337 = vadd.f32 0.0, %v2336
  %v2338 = vpop.f32.mrb[0].mxu0
  %2339 = vmatprep.mubr.f32.mxu0 0.0
  %2340 = vmatmul.mubr.f32.gmra.mrb[0].mxu0 %v2218
  %v2341 = vpop.f32.mrb[0].mxu0
  %v2342 = vadd.f32 0.0, %v2341
  %v2343 = vpop.f32.mrb[0].mxu0
  %2344 = vmatprep.mubr.f32.mxu0 0.0
  %2345 = vmatmul.mubr.f32.gmra.mrb[0].mxu0 %v2221
  %v2346 = vpop.f32.mrb[0].mxu0
  %v2347 = vadd.f32 0.0, %v2346
  %v2348 = vpop.f32.mrb[0].mxu0
  %2349 = vmatprep.mubr.f32.mxu0 0.0
  %2350 = vmatmul.mubr.f32.gmra.mrb[0].mxu0 %v2224
  %v2351 = vpop.f32.mrb[0].mxu0
  %v2352 = vadd.f32 0.0, %v2351
  %v2353 = vpop.f32.mrb[0].mxu0
  %2354 = vmatprep.mubr.f32.mxu0 0.0
  %2355 = vmatmul.mubr.f32.gmra.mrb[0].mxu0 %v2227
  %v2356 = vpop.f32.mrb[0].mxu0
  %v2357 = vadd.f32 0.0, %v2356
  %v2358 = vpop.f32.mrb[0].mxu0
  %2359 = vmatprep.mubr.f32.mxu0 0.0
  %2360 = vmatmul.mubr.f32.gmra.mrb[0].mxu0 %v2230
  %v2361 = vpop.f32.mrb[0].mxu0
  %v2362 = vadd.f32 0.0, %v2361
  %v2363 = vpop.f32.mrb[0].mxu0
  %2364 = vmatprep.mubr.f32.mxu0 0.0
  %2365 = vmatmul.mubr.f32.gmra.mrb[0].mxu0 %v2233
  %v2366 = vpop.f32.mrb[0].mxu0
  %v2367 = vadd.f32 0.0, %v2366
  %v2368 = vpop.f32.mrb[0].mxu0
  %2369 = vmatprep.mubr.f32.mxu0 0.0
  %2370 = vmatmul.mubr.f32.gmra.mrb[0].mxu0 %v2236
  %v2371 = vpop.f32.mrb[0].mxu0
  %v2372 = vadd.f32 0.0, %v2371
  %v2373 = vpop.f32.mrb[0].mxu0
  %2374 = vmatprep.mubr.f32.mxu0 0.0
  %2375 = vmatmul.mubr.f32.gmra.mrb[0].mxu0 %v2239
  %v2376 = vpop.f32.mrb[0].mxu0
  %v2377 = vadd.f32 0.0, %v2376
  %v2378 = vpop.f32.mrb[0].mxu0
  %2379 = vmatprep.mubr.f32.mxu0 0.0
  %2380 = vmatmul.mubr.f32.gmra.mrb[0].mxu0 %v2242
  %v2381 = vpop.f32.mrb[0].mxu0
  %v2382 = vadd.f32 0.0, %v2381
  %v2383 = vpop.f32.mrb[0].mxu0
  %2384 = vmatprep.mubr.f32.mxu0 0.0
  %2385 = vmatmul.mubr.f32.gmra.mrb[0].mxu0 %v2245
  %v2386 = vpop.f32.mrb[0].mxu0
  %v2387 = vadd.f32 0.0, %v2386
  %v2388 = vpop.f32.mrb[0].mxu0
  %2389 = vmatprep.mubr.f32.mxu0 0.0
  %2390 = vmatmul.mubr.f32.gmra.mrb[0].mxu0 %v2248
  %v2391 = vpop.f32.mrb[0].mxu0
  %v2392 = vadd.f32 0.0, %v2391
  %v2393 = vpop.f32.mrb[0].mxu0
  %2394 = vdwg.mxu0
  %v2395 = vadd.f32 %v2186, %v2317
  %v2396 = vadd.f32 %v2187, %v2322
  %v2397 = vadd.f32 %v2188, %v2327
  %v2398 = vadd.f32 %v2189, %v2332
  %v2399 = vadd.f32 %v2190, %v2337
  %v2400 = vadd.f32 %v2191, %v2342
  %v2401 = vadd.f32 %v2192, %v2347
  %v2402 = vadd.f32 %v2193, %v2352
  %v2403 = vadd.f32 %v2194, %v2357
  %v2404 = vadd.f32 %v2195, %v2362
  %v2405 = vadd.f32 %v2196, %v2367
  %v2406 = vadd.f32 %v2197, %v2372
  %v2407 = vadd.f32 %v2198, %v2377
  %v2408 = vadd.f32 %v2199, %v2382
  %v2409 = vadd.f32 %v2200, %v2387
  %v2410 = vadd.f32 %v2201, %v2392
  %v2412 = vsel %vm190, %v2024, 0
  %v2415 = vsel %vm190, %v2029, 0
  %v2418 = vsel %vm190, %v2034, 0
  %v2421 = vsel %vm190, %v2039, 0
  %v2424 = vsel %vm190, %v2044, 0
  %v2427 = vsel %vm190, %v2049, 0
  %v2430 = vsel %vm190, %v2054, 0
  %v2433 = vsel %vm190, %v2059, 0
  %v2436 = vsel %vm190, %v2064, 0
  %v2439 = vsel %vm190, %v2069, 0
  %v2442 = vsel %vm190, %v2074, 0
  %v2445 = vsel %vm190, %v2079, 0
  %v2448 = vsel %vm190, %v2084, 0
  %v2451 = vsel %vm190, %v2089, 0
  %v2454 = vsel %vm190, %v2094, 0
  %v2457 = vsel %vm190, %v2099, 0
  %2459 = vmatprep.subr.mxu0 0.0
  %2460 = vmatpush1.msra.mxu0 %v66
  %2461 = vmatprep.subr.mxu0 0.0
  %2462 = vmatpush1.msra.mxu0 0.0
  %2463 = vmatprep.subr.mxu0 0.0
  %2464 = vmatpush1.msra.mxu0 0.0
  %2465 = vmatprep.subr.mxu0 0.0
  %2466 = vmatpush1.msra.mxu0 0.0
  %2467 = vmatprep.subr.mxu0 0.0
  %2468 = vmatpush1.msra.mxu0 0.0
  %2469 = vmatprep.subr.mxu0 0.0
  %2470 = vmatpush1.msra.mxu0 0.0
  %2471 = vmatprep.subr.mxu0 0.0
  %2472 = vmatpush1.msra.mxu0 0.0
  %2473 = vmatprep.subr.mxu0 0.0
  %2474 = vmatpush1.msra.mxu0 0.0
  %2475 = vmatprep.subr.mxu0 0.0
  %2476 = vmatpush1.msra.mxu0 0.0
  %2477 = vmatprep.subr.mxu0 0.0
  %2478 = vmatpush1.msra.mxu0 0.0
  %2479 = vmatprep.subr.mxu0 0.0
  %2480 = vmatpush1.msra.mxu0 0.0
  %2481 = vmatprep.subr.mxu0 0.0
  %2482 = vmatpush1.msra.mxu0 0.0
  %2483 = vmatprep.subr.mxu0 0.0
  %2484 = vmatpush1.msra.mxu0 0.0
  %2485 = vmatprep.subr.mxu0 0.0
  %2486 = vmatpush1.msra.mxu0 0.0
  %2487 = vmatprep.subr.mxu0 0.0
  %2488 = vmatpush1.msra.mxu0 0.0
  %2489 = vmatprep.subr.mxu0 0.0
  %2490 = vmatpush1.msra.mxu0 0.0
  %2491 = vmatprep.subr.mxu0 0.0
  %2492 = vmatpush1.msra.mxu0 0.0
  %2493 = vmatprep.subr.mxu0 0.0
  %2494 = vmatpush1.msra.mxu0 0.0
  %2495 = vmatprep.subr.mxu0 0.0
  %2496 = vmatpush1.msra.mxu0 0.0
  %2497 = vmatprep.subr.mxu0 0.0
  %2498 = vmatpush1.msra.mxu0 0.0
  %2499 = vmatprep.subr.mxu0 0.0
  %2500 = vmatpush1.msra.mxu0 0.0
  %2501 = vmatprep.subr.mxu0 0.0
  %2502 = vmatpush1.msra.mxu0 0.0
  %2503 = vmatprep.subr.mxu0 0.0
  %2504 = vmatpush1.msra.mxu0 0.0
  %2505 = vmatprep.subr.mxu0 0.0
  %2506 = vmatpush1.msra.mxu0 0.0
  %2507 = vmatprep.subr.mxu0 0.0
  %2508 = vmatpush1.msra.mxu0 0.0
  %2509 = vmatprep.subr.mxu0 0.0
  %2510 = vmatpush1.msra.mxu0 0.0
  %2511 = vmatprep.subr.mxu0 0.0
  %2512 = vmatpush1.msra.mxu0 0.0
  %2513 = vmatprep.subr.mxu0 0.0
  %2514 = vmatpush1.msra.mxu0 0.0
  %2515 = vmatprep.subr.mxu0 0.0
  %2516 = vmatpush1.msra.mxu0 0.0
  %2517 = vmatprep.subr.mxu0 0.0
  %2518 = vmatpush1.msra.mxu0 0.0
  %2519 = vmatprep.subr.mxu0 0.0
  %2520 = vmatpush1.msra.mxu0 0.0
  %2521 = vmatprep.subr.mxu0 0.0
  %2522 = vmatpush1.msra.mxu0 0.0
  %2523 = vmatprep.mubr.f32.mxu0 0.0
  %2524 = vmatmul.mubr.f32.gmra.mrb[0].mxu0 %v2412
  %v2525 = vpop.f32.mrb[0].mxu0
  %v2526 = vadd.f32 0.0, %v2525
  %v2527 = vpop.f32.mrb[0].mxu0
  %2528 = vmatprep.mubr.f32.mxu0 0.0
  %2529 = vmatmul.mubr.f32.gmra.mrb[0].mxu0 %v2415
  %v2530 = vpop.f32.mrb[0].mxu0
  %v2531 = vadd.f32 0.0, %v2530
  %v2532 = vpop.f32.mrb[0].mxu0
  %2533 = vmatprep.mubr.f32.mxu0 0.0
  %2534 = vmatmul.mubr.f32.gmra.mrb[0].mxu0 %v2418
  %v2535 = vpop.f32.mrb[0].mxu0
  %v2536 = vadd.f32 0.0, %v2535
  %v2537 = vpop.f32.mrb[0].mxu0
  %2538 = vmatprep.mubr.f32.mxu0 0.0
  %2539 = vmatmul.mubr.f32.gmra.mrb[0].mxu0 %v2421
  %v2540 = vpop.f32.mrb[0].mxu0
  %v2541 = vadd.f32 0.0, %v2540
  %v2542 = vpop.f32.mrb[0].mxu0
  %2543 = vmatprep.mubr.f32.mxu0 0.0
  %2544 = vmatmul.mubr.f32.gmra.mrb[0].mxu0 %v2424
  %v2545 = vpop.f32.mrb[0].mxu0
  %v2546 = vadd.f32 0.0, %v2545
  %v2547 = vpop.f32.mrb[0].mxu0
  %2548 = vmatprep.mubr.f32.mxu0 0.0
  %2549 = vmatmul.mubr.f32.gmra.mrb[0].mxu0 %v2427
  %v2550 = vpop.f32.mrb[0].mxu0
  %v2551 = vadd.f32 0.0, %v2550
  %v2552 = vpop.f32.mrb[0].mxu0
  %2553 = vmatprep.mubr.f32.mxu0 0.0
  %2554 = vmatmul.mubr.f32.gmra.mrb[0].mxu0 %v2430
  %v2555 = vpop.f32.mrb[0].mxu0
  %v2556 = vadd.f32 0.0, %v2555
  %v2557 = vpop.f32.mrb[0].mxu0
  %2558 = vmatprep.mubr.f32.mxu0 0.0
  %2559 = vmatmul.mubr.f32.gmra.mrb[0].mxu0 %v2433
  %v2560 = vpop.f32.mrb[0].mxu0
  %v2561 = vadd.f32 0.0, %v2560
  %v2562 = vpop.f32.mrb[0].mxu0
  %2563 = vmatprep.mubr.f32.mxu0 0.0
  %2564 = vmatmul.mubr.f32.gmra.mrb[0].mxu0 %v2436
  %v2565 = vpop.f32.mrb[0].mxu0
  %v2566 = vadd.f32 0.0, %v2565
  %v2567 = vpop.f32.mrb[0].mxu0
  %2568 = vmatprep.mubr.f32.mxu0 0.0
  %2569 = vmatmul.mubr.f32.gmra.mrb[0].mxu0 %v2439
  %v2570 = vpop.f32.mrb[0].mxu0
  %v2571 = vadd.f32 0.0, %v2570
  %v2572 = vpop.f32.mrb[0].mxu0
  %2573 = vmatprep.mubr.f32.mxu0 0.0
  %2574 = vmatmul.mubr.f32.gmra.mrb[0].mxu0 %v2442
  %v2575 = vpop.f32.mrb[0].mxu0
  %v2576 = vadd.f32 0.0, %v2575
  %v2577 = vpop.f32.mrb[0].mxu0
  %2578 = vmatprep.mubr.f32.mxu0 0.0
  %2579 = vmatmul.mubr.f32.gmra.mrb[0].mxu0 %v2445
  %v2580 = vpop.f32.mrb[0].mxu0
  %v2581 = vadd.f32 0.0, %v2580
  %v2582 = vpop.f32.mrb[0].mxu0
  %2583 = vmatprep.mubr.f32.mxu0 0.0
  %2584 = vmatmul.mubr.f32.gmra.mrb[0].mxu0 %v2448
  %v2585 = vpop.f32.mrb[0].mxu0
  %v2586 = vadd.f32 0.0, %v2585
  %v2587 = vpop.f32.mrb[0].mxu0
  %2588 = vmatprep.mubr.f32.mxu0 0.0
  %2589 = vmatmul.mubr.f32.gmra.mrb[0].mxu0 %v2451
  %v2590 = vpop.f32.mrb[0].mxu0
  %v2591 = vadd.f32 0.0, %v2590
  %v2592 = vpop.f32.mrb[0].mxu0
  %2593 = vmatprep.mubr.f32.mxu0 0.0
  %2594 = vmatmul.mubr.f32.gmra.mrb[0].mxu0 %v2454
  %v2595 = vpop.f32.mrb[0].mxu0
  %v2596 = vadd.f32 0.0, %v2595
  %v2597 = vpop.f32.mrb[0].mxu0
  %2598 = vmatprep.mubr.f32.mxu0 0.0
  %2599 = vmatmul.mubr.f32.gmra.mrb[0].mxu0 %v2457
  %v2600 = vpop.f32.mrb[0].mxu0
  %v2601 = vadd.f32 0.0, %v2600
  %v2602 = vpop.f32.mrb[0].mxu0
  %2603 = vdwg.mxu0
  %v2604 = vadd.f32 %v2395, %v2526
  %v2605 = vadd.f32 %v2396, %v2531
  %v2606 = vadd.f32 %v2397, %v2536
  %v2607 = vadd.f32 %v2398, %v2541
  %v2608 = vadd.f32 %v2399, %v2546
  %v2609 = vadd.f32 %v2400, %v2551
  %v2610 = vadd.f32 %v2401, %v2556
  %v2611 = vadd.f32 %v2402, %v2561
  %v2612 = vadd.f32 %v2403, %v2566
  %v2613 = vadd.f32 %v2404, %v2571
  %v2614 = vadd.f32 %v2405, %v2576
  %v2615 = vadd.f32 %v2406, %v2581
  %v2616 = vadd.f32 %v2407, %v2586
  %v2617 = vadd.f32 %v2408, %v2591
  %v2618 = vadd.f32 %v2409, %v2596
  %v2619 = vadd.f32 %v2410, %v2601
  %v2620 = vlaneseq
  %v2621 = vshrl.u32 %v2620, 7
  %v2622 = vsub.s32 0, %v2621
  %v2623 = vrot.slane %v67, %v2622
  %v2624 = vadd.f32 %v2604, %v2623
  %v2625 = vadd.f32 %v2605, %v2623
  %v2626 = vadd.f32 %v2606, %v2623
  %v2627 = vadd.f32 %v2607, %v2623
  %v2628 = vadd.f32 %v2608, %v2623
  %v2629 = vadd.f32 %v2609, %v2623
  %v2630 = vadd.f32 %v2610, %v2623
  %v2631 = vadd.f32 %v2611, %v2623
  %v2632 = vadd.f32 %v2612, %v2623
  %v2633 = vadd.f32 %v2613, %v2623
  %v2634 = vadd.f32 %v2614, %v2623
  %v2635 = vadd.f32 %v2615, %v2623
  %v2636 = vadd.f32 %v2616, %v2623
  %v2637 = vadd.f32 %v2617, %v2623
  %v2638 = vadd.f32 %v2618, %v2623
  %v2639 = vadd.f32 %v2619, %v2623
  %v2640 = vmax.f32 %v2624, 0.0
  %v2641 = vmax.f32 %v2625, 0.0
  %v2642 = vmax.f32 %v2626, 0.0
  %v2643 = vmax.f32 %v2627, 0.0
  %v2644 = vmax.f32 %v2628, 0.0
  %v2645 = vmax.f32 %v2629, 0.0
  %v2646 = vmax.f32 %v2630, 0.0
  %v2647 = vmax.f32 %v2631, 0.0
  %v2648 = vmax.f32 %v2632, 0.0
  %v2649 = vmax.f32 %v2633, 0.0
  %v2650 = vmax.f32 %v2634, 0.0
  %v2651 = vmax.f32 %v2635, 0.0
  %v2652 = vmax.f32 %v2636, 0.0
  %v2653 = vmax.f32 %v2637, 0.0
  %v2654 = vmax.f32 %v2638, 0.0
  %v2655 = vmax.f32 %v2639, 0.0
  %v2656 = vlaneseq
  %v2657 = vshrl.u32 %v2656, 7
  %v2658 = vsub.s32 0, %v2657
  %v2659 = vrot.slane %v76, %v2658
  %v2661 = vsel %vm404, %v2640, 0
  %v2664 = vsel %vm404, %v2641, 0
  %v2667 = vsel %vm404, %v2642, 0
  %v2670 = vsel %vm404, %v2643, 0
  %v2673 = vsel %vm404, %v2644, 0
  %v2676 = vsel %vm404, %v2645, 0
  %v2679 = vsel %vm404, %v2646, 0
  %v2682 = vsel %vm404, %v2647, 0
  %v2685 = vsel %vm404, %v2648, 0
  %v2688 = vsel %vm404, %v2649, 0
  %v2691 = vsel %vm404, %v2650, 0
  %v2694 = vsel %vm404, %v2651, 0
  %v2697 = vsel %vm404, %v2652, 0
  %v2700 = vsel %vm404, %v2653, 0
  %v2703 = vsel %vm404, %v2654, 0
  %v2706 = vsel %vm404, %v2655, 0
  %2708 = vmatprep.subr.mxu0 0.0
  %2709 = vmatpush1.msra.mxu0 %v68
  %2710 = vmatprep.subr.mxu0 0.0
  %2711 = vmatpush1.msra.mxu0 %v69
  %2712 = vmatprep.subr.mxu0 0.0
  %2713 = vmatpush1.msra.mxu0 %v70
  %2714 = vmatprep.subr.mxu0 0.0
  %2715 = vmatpush1.msra.mxu0 %v71
  %2716 = vmatprep.subr.mxu0 0.0
  %2717 = vmatpush1.msra.mxu0 %v72
  %2718 = vmatprep.subr.mxu0 0.0
  %2719 = vmatpush1.msra.mxu0 %v73
  %2720 = vmatprep.subr.mxu0 0.0
  %2721 = vmatpush1.msra.mxu0 %v74
  %2722 = vmatprep.subr.mxu0 0.0
  %2723 = vmatpush1.msra.mxu0 %v75
  %2724 = vmatprep.subr.mxu0 0.0
  %2725 = vmatpush1.msra.mxu0 0.0
  %2726 = vmatprep.subr.mxu0 0.0
  %2727 = vmatpush1.msra.mxu0 0.0
  %2728 = vmatprep.subr.mxu0 0.0
  %2729 = vmatpush1.msra.mxu0 0.0
  %2730 = vmatprep.subr.mxu0 0.0
  %2731 = vmatpush1.msra.mxu0 0.0
  %2732 = vmatprep.subr.mxu0 0.0
  %2733 = vmatpush1.msra.mxu0 0.0
  %2734 = vmatprep.subr.mxu0 0.0
  %2735 = vmatpush1.msra.mxu0 0.0
  %2736 = vmatprep.subr.mxu0 0.0
  %2737 = vmatpush1.msra.mxu0 0.0
  %2738 = vmatprep.subr.mxu0 0.0
  %2739 = vmatpush1.msra.mxu0 0.0
  %2740 = vmatprep.subr.mxu0 0.0
  %2741 = vmatpush1.msra.mxu0 0.0
  %2742 = vmatprep.subr.mxu0 0.0
  %2743 = vmatpush1.msra.mxu0 0.0
  %2744 = vmatprep.subr.mxu0 0.0
  %2745 = vmatpush1.msra.mxu0 0.0
  %2746 = vmatprep.subr.mxu0 0.0
  %2747 = vmatpush1.msra.mxu0 0.0
  %2748 = vmatprep.subr.mxu0 0.0
  %2749 = vmatpush1.msra.mxu0 0.0
  %2750 = vmatprep.subr.mxu0 0.0
  %2751 = vmatpush1.msra.mxu0 0.0
  %2752 = vmatprep.subr.mxu0 0.0
  %2753 = vmatpush1.msra.mxu0 0.0
  %2754 = vmatprep.subr.mxu0 0.0
  %2755 = vmatpush1.msra.mxu0 0.0
  %2756 = vmatprep.subr.mxu0 0.0
  %2757 = vmatpush1.msra.mxu0 0.0
  %2758 = vmatprep.subr.mxu0 0.0
  %2759 = vmatpush1.msra.mxu0 0.0
  %2760 = vmatprep.subr.mxu0 0.0
  %2761 = vmatpush1.msra.mxu0 0.0
  %2762 = vmatprep.subr.mxu0 0.0
  %2763 = vmatpush1.msra.mxu0 0.0
  %2764 = vmatprep.subr.mxu0 0.0
  %2765 = vmatpush1.msra.mxu0 0.0
  %2766 = vmatprep.subr.mxu0 0.0
  %2767 = vmatpush1.msra.mxu0 0.0
  %2768 = vmatprep.subr.mxu0 0.0
  %2769 = vmatpush1.msra.mxu0 0.0
  %2770 = vmatprep.subr.mxu0 0.0
  %2771 = vmatpush1.msra.mxu0 0.0
  %2772 = vmatprep.mubr.f32.mxu0 0.0
  %2773 = vmatmul.mubr.f32.gmra.mrb[0].mxu0 %v2661
  %v2774 = vpop.f32.mrb[0].mxu0
  %v2775 = vadd.f32 %v2659, %v2774
  %v2776 = vpop.f32.mrb[0].mxu0
  %2777 = vmatprep.mubr.f32.mxu0 0.0
  %2778 = vmatmul.mubr.f32.gmra.mrb[0].mxu0 %v2664
  %v2779 = vpop.f32.mrb[0].mxu0
  %v2780 = vadd.f32 %v2659, %v2779
  %v2781 = vpop.f32.mrb[0].mxu0
  %2782 = vmatprep.mubr.f32.mxu0 0.0
  %2783 = vmatmul.mubr.f32.gmra.mrb[0].mxu0 %v2667
  %v2784 = vpop.f32.mrb[0].mxu0
  %v2785 = vadd.f32 %v2659, %v2784
  %v2786 = vpop.f32.mrb[0].mxu0
  %2787 = vmatprep.mubr.f32.mxu0 0.0
  %2788 = vmatmul.mubr.f32.gmra.mrb[0].mxu0 %v2670
  %v2789 = vpop.f32.mrb[0].mxu0
  %v2790 = vadd.f32 %v2659, %v2789
  %v2791 = vpop.f32.mrb[0].mxu0
  %2792 = vmatprep.mubr.f32.mxu0 0.0
  %2793 = vmatmul.mubr.f32.gmra.mrb[0].mxu0 %v2673
  %v2794 = vpop.f32.mrb[0].mxu0
  %v2795 = vadd.f32 %v2659, %v2794
  %v2796 = vpop.f32.mrb[0].mxu0
  %2797 = vmatprep.mubr.f32.mxu0 0.0
  %2798 = vmatmul.mubr.f32.gmra.mrb[0].mxu0 %v2676
  %v2799 = vpop.f32.mrb[0].mxu0
  %v2800 = vadd.f32 %v2659, %v2799
  %v2801 = vpop.f32.mrb[0].mxu0
  %2802 = vmatprep.mubr.f32.mxu0 0.0
  %2803 = vmatmul.mubr.f32.gmra.mrb[0].mxu0 %v2679
  %v2804 = vpop.f32.mrb[0].mxu0
  %v2805 = vadd.f32 %v2659, %v2804
  %v2806 = vpop.f32.mrb[0].mxu0
  %2807 = vmatprep.mubr.f32.mxu0 0.0
  %2808 = vmatmul.mubr.f32.gmra.mrb[0].mxu0 %v2682
  %v2809 = vpop.f32.mrb[0].mxu0
  %v2810 = vadd.f32 %v2659, %v2809
  %v2811 = vpop.f32.mrb[0].mxu0
  %2812 = vmatprep.mubr.f32.mxu0 0.0
  %2813 = vmatmul.mubr.f32.gmra.mrb[0].mxu0 %v2685
  %v2814 = vpop.f32.mrb[0].mxu0
  %v2815 = vadd.f32 %v2659, %v2814
  %v2816 = vpop.f32.mrb[0].mxu0
  %2817 = vmatprep.mubr.f32.mxu0 0.0
  %2818 = vmatmul.mubr.f32.gmra.mrb[0].mxu0 %v2688
  %v2819 = vpop.f32.mrb[0].mxu0
  %v2820 = vadd.f32 %v2659, %v2819
  %v2821 = vpop.f32.mrb[0].mxu0
  %2822 = vmatprep.mubr.f32.mxu0 0.0
  %2823 = vmatmul.mubr.f32.gmra.mrb[0].mxu0 %v2691
  %v2824 = vpop.f32.mrb[0].mxu0
  %v2825 = vadd.f32 %v2659, %v2824
  %v2826 = vpop.f32.mrb[0].mxu0
  %2827 = vmatprep.mubr.f32.mxu0 0.0
  %2828 = vmatmul.mubr.f32.gmra.mrb[0].mxu0 %v2694
  %v2829 = vpop.f32.mrb[0].mxu0
  %v2830 = vadd.f32 %v2659, %v2829
  %v2831 = vpop.f32.mrb[0].mxu0
  %2832 = vmatprep.mubr.f32.mxu0 0.0
  %2833 = vmatmul.mubr.f32.gmra.mrb[0].mxu0 %v2697
  %v2834 = vpop.f32.mrb[0].mxu0
  %v2835 = vadd.f32 %v2659, %v2834
  %v2836 = vpop.f32.mrb[0].mxu0
  %2837 = vmatprep.mubr.f32.mxu0 0.0
  %2838 = vmatmul.mubr.f32.gmra.mrb[0].mxu0 %v2700
  %v2839 = vpop.f32.mrb[0].mxu0
  %v2840 = vadd.f32 %v2659, %v2839
  %v2841 = vpop.f32.mrb[0].mxu0
  %2842 = vmatprep.mubr.f32.mxu0 0.0
  %2843 = vmatmul.mubr.f32.gmra.mrb[0].mxu0 %v2703
  %v2844 = vpop.f32.mrb[0].mxu0
  %v2845 = vadd.f32 %v2659, %v2844
  %v2846 = vpop.f32.mrb[0].mxu0
  %2847 = vmatprep.mubr.f32.mxu0 0.0
  %2848 = vmatmul.mubr.f32.gmra.mrb[0].mxu0 %v2706
  %v2849 = vpop.f32.mrb[0].mxu0
  %v2850 = vadd.f32 %v2659, %v2849
  %v2851 = vpop.f32.mrb[0].mxu0
  %2852 = vdwg.mxu0
  %v2853 = vmax.f32 %v2775, 0.0
  %v2854 = vmax.f32 %v2780, 0.0
  %v2855 = vmax.f32 %v2785, 0.0
  %v2856 = vmax.f32 %v2790, 0.0
  %v2857 = vmax.f32 %v2795, 0.0
  %v2858 = vmax.f32 %v2800, 0.0
  %v2859 = vmax.f32 %v2805, 0.0
  %v2860 = vmax.f32 %v2810, 0.0
  %v2861 = vmax.f32 %v2815, 0.0
  %v2862 = vmax.f32 %v2820, 0.0
  %v2863 = vmax.f32 %v2825, 0.0
  %v2864 = vmax.f32 %v2830, 0.0
  %v2865 = vmax.f32 %v2835, 0.0
  %v2866 = vmax.f32 %v2840, 0.0
  %v2867 = vmax.f32 %v2845, 0.0
  %v2868 = vmax.f32 %v2850, 0.0
  %v2869 = vlaneseq
  %v2870 = vshrl.u32 %v2869, 7
  %v2871 = vsub.s32 0, %v2870
  %v2872 = vrot.slane %v85, %v2871
  %v2874 = vsel %vm404, %v2853, 0
  %v2877 = vsel %vm404, %v2854, 0
  %v2880 = vsel %vm404, %v2855, 0
  %v2883 = vsel %vm404, %v2856, 0
  %v2886 = vsel %vm404, %v2857, 0
  %v2889 = vsel %vm404, %v2858, 0
  %v2892 = vsel %vm404, %v2859, 0
  %v2895 = vsel %vm404, %v2860, 0
  %v2898 = vsel %vm404, %v2861, 0
  %v2901 = vsel %vm404, %v2862, 0
  %v2904 = vsel %vm404, %v2863, 0
  %v2907 = vsel %vm404, %v2864, 0
  %v2910 = vsel %vm404, %v2865, 0
  %v2913 = vsel %vm404, %v2866, 0
  %v2916 = vsel %vm404, %v2867, 0
  %v2919 = vsel %vm404, %v2868, 0
  %2921 = vmatprep.subr.mxu0 0.0
  %2922 = vmatpush1.msra.mxu0 %v77
  %2923 = vmatprep.subr.mxu0 0.0
  %2924 = vmatpush1.msra.mxu0 %v78
  %2925 = vmatprep.subr.mxu0 0.0
  %2926 = vmatpush1.msra.mxu0 %v79
  %2927 = vmatprep.subr.mxu0 0.0
  %2928 = vmatpush1.msra.mxu0 %v80
  %2929 = vmatprep.subr.mxu0 0.0
  %2930 = vmatpush1.msra.mxu0 %v81
  %2931 = vmatprep.subr.mxu0 0.0
  %2932 = vmatpush1.msra.mxu0 %v82
  %2933 = vmatprep.subr.mxu0 0.0
  %2934 = vmatpush1.msra.mxu0 %v83
  %2935 = vmatprep.subr.mxu0 0.0
  %2936 = vmatpush1.msra.mxu0 %v84
  %2937 = vmatprep.subr.mxu0 0.0
  %2938 = vmatpush1.msra.mxu0 0.0
  %2939 = vmatprep.subr.mxu0 0.0
  %2940 = vmatpush1.msra.mxu0 0.0
  %2941 = vmatprep.subr.mxu0 0.0
  %2942 = vmatpush1.msra.mxu0 0.0
  %2943 = vmatprep.subr.mxu0 0.0
  %2944 = vmatpush1.msra.mxu0 0.0
  %2945 = vmatprep.subr.mxu0 0.0
  %2946 = vmatpush1.msra.mxu0 0.0
  %2947 = vmatprep.subr.mxu0 0.0
  %2948 = vmatpush1.msra.mxu0 0.0
  %2949 = vmatprep.subr.mxu0 0.0
  %2950 = vmatpush1.msra.mxu0 0.0
  %2951 = vmatprep.subr.mxu0 0.0
  %2952 = vmatpush1.msra.mxu0 0.0
  %2953 = vmatprep.subr.mxu0 0.0
  %2954 = vmatpush1.msra.mxu0 0.0
  %2955 = vmatprep.subr.mxu0 0.0
  %2956 = vmatpush1.msra.mxu0 0.0
  %2957 = vmatprep.subr.mxu0 0.0
  %2958 = vmatpush1.msra.mxu0 0.0
  %2959 = vmatprep.subr.mxu0 0.0
  %2960 = vmatpush1.msra.mxu0 0.0
  %2961 = vmatprep.subr.mxu0 0.0
  %2962 = vmatpush1.msra.mxu0 0.0
  %2963 = vmatprep.subr.mxu0 0.0
  %2964 = vmatpush1.msra.mxu0 0.0
  %2965 = vmatprep.subr.mxu0 0.0
  %2966 = vmatpush1.msra.mxu0 0.0
  %2967 = vmatprep.subr.mxu0 0.0
  %2968 = vmatpush1.msra.mxu0 0.0
  %2969 = vmatprep.subr.mxu0 0.0
  %2970 = vmatpush1.msra.mxu0 0.0
  %2971 = vmatprep.subr.mxu0 0.0
  %2972 = vmatpush1.msra.mxu0 0.0
  %2973 = vmatprep.subr.mxu0 0.0
  %2974 = vmatpush1.msra.mxu0 0.0
  %2975 = vmatprep.subr.mxu0 0.0
  %2976 = vmatpush1.msra.mxu0 0.0
  %2977 = vmatprep.subr.mxu0 0.0
  %2978 = vmatpush1.msra.mxu0 0.0
  %2979 = vmatprep.subr.mxu0 0.0
  %2980 = vmatpush1.msra.mxu0 0.0
  %2981 = vmatprep.subr.mxu0 0.0
  %2982 = vmatpush1.msra.mxu0 0.0
  %2983 = vmatprep.subr.mxu0 0.0
  %2984 = vmatpush1.msra.mxu0 0.0
  %2985 = vmatprep.mubr.f32.mxu0 0.0
  %2986 = vmatmul.mubr.f32.gmra.mrb[0].mxu0 %v2874
  %v2987 = vpop.f32.mrb[0].mxu0
  %v2988 = vadd.f32 %v2872, %v2987
  %v2989 = vpop.f32.mrb[0].mxu0
  %2990 = vmatprep.mubr.f32.mxu0 0.0
  %2991 = vmatmul.mubr.f32.gmra.mrb[0].mxu0 %v2877
  %v2992 = vpop.f32.mrb[0].mxu0
  %v2993 = vadd.f32 %v2872, %v2992
  %v2994 = vpop.f32.mrb[0].mxu0
  %2995 = vmatprep.mubr.f32.mxu0 0.0
  %2996 = vmatmul.mubr.f32.gmra.mrb[0].mxu0 %v2880
  %v2997 = vpop.f32.mrb[0].mxu0
  %v2998 = vadd.f32 %v2872, %v2997
  %v2999 = vpop.f32.mrb[0].mxu0
  %3000 = vmatprep.mubr.f32.mxu0 0.0
  %3001 = vmatmul.mubr.f32.gmra.mrb[0].mxu0 %v2883
  %v3002 = vpop.f32.mrb[0].mxu0
  %v3003 = vadd.f32 %v2872, %v3002
  %v3004 = vpop.f32.mrb[0].mxu0
  %3005 = vmatprep.mubr.f32.mxu0 0.0
  %3006 = vmatmul.mubr.f32.gmra.mrb[0].mxu0 %v2886
  %v3007 = vpop.f32.mrb[0].mxu0
  %v3008 = vadd.f32 %v2872, %v3007
  %v3009 = vpop.f32.mrb[0].mxu0
  %3010 = vmatprep.mubr.f32.mxu0 0.0
  %3011 = vmatmul.mubr.f32.gmra.mrb[0].mxu0 %v2889
  %v3012 = vpop.f32.mrb[0].mxu0
  %v3013 = vadd.f32 %v2872, %v3012
  %v3014 = vpop.f32.mrb[0].mxu0
  %3015 = vmatprep.mubr.f32.mxu0 0.0
  %3016 = vmatmul.mubr.f32.gmra.mrb[0].mxu0 %v2892
  %v3017 = vpop.f32.mrb[0].mxu0
  %v3018 = vadd.f32 %v2872, %v3017
  %v3019 = vpop.f32.mrb[0].mxu0
  %3020 = vmatprep.mubr.f32.mxu0 0.0
  %3021 = vmatmul.mubr.f32.gmra.mrb[0].mxu0 %v2895
  %v3022 = vpop.f32.mrb[0].mxu0
  %v3023 = vadd.f32 %v2872, %v3022
  %v3024 = vpop.f32.mrb[0].mxu0
  %3025 = vmatprep.mubr.f32.mxu0 0.0
  %3026 = vmatmul.mubr.f32.gmra.mrb[0].mxu0 %v2898
  %v3027 = vpop.f32.mrb[0].mxu0
  %v3028 = vadd.f32 %v2872, %v3027
  %v3029 = vpop.f32.mrb[0].mxu0
  %3030 = vmatprep.mubr.f32.mxu0 0.0
  %3031 = vmatmul.mubr.f32.gmra.mrb[0].mxu0 %v2901
  %v3032 = vpop.f32.mrb[0].mxu0
  %v3033 = vadd.f32 %v2872, %v3032
  %v3034 = vpop.f32.mrb[0].mxu0
  %3035 = vmatprep.mubr.f32.mxu0 0.0
  %3036 = vmatmul.mubr.f32.gmra.mrb[0].mxu0 %v2904
  %v3037 = vpop.f32.mrb[0].mxu0
  %v3038 = vadd.f32 %v2872, %v3037
  %v3039 = vpop.f32.mrb[0].mxu0
  %3040 = vmatprep.mubr.f32.mxu0 0.0
  %3041 = vmatmul.mubr.f32.gmra.mrb[0].mxu0 %v2907
  %v3042 = vpop.f32.mrb[0].mxu0
  %v3043 = vadd.f32 %v2872, %v3042
  %v3044 = vpop.f32.mrb[0].mxu0
  %3045 = vmatprep.mubr.f32.mxu0 0.0
  %3046 = vmatmul.mubr.f32.gmra.mrb[0].mxu0 %v2910
  %v3047 = vpop.f32.mrb[0].mxu0
  %v3048 = vadd.f32 %v2872, %v3047
  %v3049 = vpop.f32.mrb[0].mxu0
  %3050 = vmatprep.mubr.f32.mxu0 0.0
  %3051 = vmatmul.mubr.f32.gmra.mrb[0].mxu0 %v2913
  %v3052 = vpop.f32.mrb[0].mxu0
  %v3053 = vadd.f32 %v2872, %v3052
  %v3054 = vpop.f32.mrb[0].mxu0
  %3055 = vmatprep.mubr.f32.mxu0 0.0
  %3056 = vmatmul.mubr.f32.gmra.mrb[0].mxu0 %v2916
  %v3057 = vpop.f32.mrb[0].mxu0
  %v3058 = vadd.f32 %v2872, %v3057
  %v3059 = vpop.f32.mrb[0].mxu0
  %3060 = vmatprep.mubr.f32.mxu0 0.0
  %3061 = vmatmul.mubr.f32.gmra.mrb[0].mxu0 %v2919
  %v3062 = vpop.f32.mrb[0].mxu0
  %v3063 = vadd.f32 %v2872, %v3062
  %v3064 = vpop.f32.mrb[0].mxu0
  %3065 = vdwg.mxu0
  %v3066 = vmax.f32 %v2988, 0.0
  %v3067 = vmax.f32 %v2993, 0.0
  %v3068 = vmax.f32 %v2998, 0.0
  %v3069 = vmax.f32 %v3003, 0.0
  %v3070 = vmax.f32 %v3008, 0.0
  %v3071 = vmax.f32 %v3013, 0.0
  %v3072 = vmax.f32 %v3018, 0.0
  %v3073 = vmax.f32 %v3023, 0.0
  %v3074 = vmax.f32 %v3028, 0.0
  %v3075 = vmax.f32 %v3033, 0.0
  %v3076 = vmax.f32 %v3038, 0.0
  %v3077 = vmax.f32 %v3043, 0.0
  %v3078 = vmax.f32 %v3048, 0.0
  %v3079 = vmax.f32 %v3053, 0.0
  %v3080 = vmax.f32 %v3058, 0.0
  %v3081 = vmax.f32 %v3063, 0.0
  %3082 = vmatprep.subr.mxu0 0.0
  %3083 = vmatpush1.msra.mxu0 %v3066
  %3084 = vmatprep.subr.mxu0 0.0
  %3085 = vmatpush1.msra.mxu0 %v3067
  %3086 = vmatprep.subr.mxu0 0.0
  %3087 = vmatpush1.msra.mxu0 %v3068
  %3088 = vmatprep.subr.mxu0 0.0
  %3089 = vmatpush1.msra.mxu0 %v3069
  %3090 = vmatprep.subr.mxu0 0.0
  %3091 = vmatpush1.msra.mxu0 %v3070
  %3092 = vmatprep.subr.mxu0 0.0
  %3093 = vmatpush1.msra.mxu0 %v3071
  %3094 = vmatprep.subr.mxu0 0.0
  %3095 = vmatpush1.msra.mxu0 %v3072
  %3096 = vmatprep.subr.mxu0 0.0
  %3097 = vmatpush1.msra.mxu0 %v3073
  %3098 = vmatprep.subr.mxu0 0.0
  %3099 = vmatpush1.msra.mxu0 %v3074
  %3100 = vmatprep.subr.mxu0 0.0
  %3101 = vmatpush1.msra.mxu0 %v3075
  %3102 = vmatprep.subr.mxu0 0.0
  %3103 = vmatpush1.msra.mxu0 %v3076
  %3104 = vmatprep.subr.mxu0 0.0
  %3105 = vmatpush1.msra.mxu0 %v3077
  %3106 = vmatprep.subr.mxu0 0.0
  %3107 = vmatpush1.msra.mxu0 %v3078
  %3108 = vmatprep.subr.mxu0 0.0
  %3109 = vmatpush1.msra.mxu0 %v3079
  %3110 = vmatprep.subr.mxu0 0.0
  %3111 = vmatpush1.msra.mxu0 %v3080
  %3112 = vmatprep.subr.mxu0 0.0
  %3113 = vmatpush1.msra.mxu0 %v3081
  %3114 = vmatprep.subr.mxu0 0.0
  %3115 = vmatpush1.msra.mxu0 0.0
  %3116 = vmatprep.subr.mxu0 0.0
  %3117 = vmatpush1.msra.mxu0 0.0
  %3118 = vmatprep.subr.mxu0 0.0
  %3119 = vmatpush1.msra.mxu0 0.0
  %3120 = vmatprep.subr.mxu0 0.0
  %3121 = vmatpush1.msra.mxu0 0.0
  %3122 = vmatprep.subr.mxu0 0.0
  %3123 = vmatpush1.msra.mxu0 0.0
  %3124 = vmatprep.subr.mxu0 0.0
  %3125 = vmatpush1.msra.mxu0 0.0
  %3126 = vmatprep.subr.mxu0 0.0
  %3127 = vmatpush1.msra.mxu0 0.0
  %3128 = vmatprep.subr.mxu0 0.0
  %3129 = vmatpush1.msra.mxu0 0.0
  %3130 = vmatprep.subr.mxu0 0.0
  %3131 = vmatpush1.msra.mxu0 0.0
  %3132 = vmatprep.subr.mxu0 0.0
  %3133 = vmatpush1.msra.mxu0 0.0
  %3134 = vmatprep.subr.mxu0 0.0
  %3135 = vmatpush1.msra.mxu0 0.0
  %3136 = vmatprep.subr.mxu0 0.0
  %3137 = vmatpush1.msra.mxu0 0.0
  %3138 = vmatprep.subr.mxu0 0.0
  %3139 = vmatpush1.msra.mxu0 0.0
  %3140 = vmatprep.subr.mxu0 0.0
  %3141 = vmatpush1.msra.mxu0 0.0
  %3142 = vmatprep.subr.mxu0 0.0
  %3143 = vmatpush1.msra.mxu0 0.0
  %3144 = vmatprep.subr.mxu0 0.0
  %3145 = vmatpush1.msra.mxu0 0.0
  %3146 = vmatprep.mubr.f32.mxu0 0.0
  %3147 = vmatmul.mubr.f32.gmra.mrb[0].mxu0 %v1072
  %v3148 = vpop.f32.mrb[0].mxu0
  %v3149 = vadd.f32 0.0, %v3148
  %v3150 = vpop.f32.mrb[0].mxu0
  %3151 = vmatprep.mubr.f32.mxu0 0.0
  %3152 = vmatmul.mubr.f32.gmra.mrb[0].mxu0 %v1073
  %v3153 = vpop.f32.mrb[0].mxu0
  %v3154 = vadd.f32 0.0, %v3153
  %v3155 = vpop.f32.mrb[0].mxu0
  %3156 = vmatprep.mubr.f32.mxu0 0.0
  %3157 = vmatmul.mubr.f32.gmra.mrb[0].mxu0 %v1074
  %v3158 = vpop.f32.mrb[0].mxu0
  %v3159 = vadd.f32 0.0, %v3158
  %v3160 = vpop.f32.mrb[0].mxu0
  %3161 = vmatprep.mubr.f32.mxu0 0.0
  %3162 = vmatmul.mubr.f32.gmra.mrb[0].mxu0 %v1075
  %v3163 = vpop.f32.mrb[0].mxu0
  %v3164 = vadd.f32 0.0, %v3163
  %v3165 = vpop.f32.mrb[0].mxu0
  %3166 = vmatprep.mubr.f32.mxu0 0.0
  %3167 = vmatmul.mubr.f32.gmra.mrb[0].mxu0 %v1076
  %v3168 = vpop.f32.mrb[0].mxu0
  %v3169 = vadd.f32 0.0, %v3168
  %v3170 = vpop.f32.mrb[0].mxu0
  %3171 = vmatprep.mubr.f32.mxu0 0.0
  %3172 = vmatmul.mubr.f32.gmra.mrb[0].mxu0 %v1077
  %v3173 = vpop.f32.mrb[0].mxu0
  %v3174 = vadd.f32 0.0, %v3173
  %v3175 = vpop.f32.mrb[0].mxu0
  %3176 = vmatprep.mubr.f32.mxu0 0.0
  %3177 = vmatmul.mubr.f32.gmra.mrb[0].mxu0 %v1078
  %v3178 = vpop.f32.mrb[0].mxu0
  %v3179 = vadd.f32 0.0, %v3178
  %v3180 = vpop.f32.mrb[0].mxu0
  %3181 = vmatprep.mubr.f32.mxu0 0.0
  %3182 = vmatmul.mubr.f32.gmra.mrb[0].mxu0 %v1079
  %v3183 = vpop.f32.mrb[0].mxu0
  %v3184 = vadd.f32 0.0, %v3183
  %v3185 = vpop.f32.mrb[0].mxu0
  %3186 = vmatprep.mubr.f32.mxu0 0.0
  %3187 = vmatmul.mubr.f32.gmra.mrb[0].mxu0 %v1080
  %v3188 = vpop.f32.mrb[0].mxu0
  %v3189 = vadd.f32 0.0, %v3188
  %v3190 = vpop.f32.mrb[0].mxu0
  %3191 = vmatprep.mubr.f32.mxu0 0.0
  %3192 = vmatmul.mubr.f32.gmra.mrb[0].mxu0 %v1081
  %v3193 = vpop.f32.mrb[0].mxu0
  %v3194 = vadd.f32 0.0, %v3193
  %v3195 = vpop.f32.mrb[0].mxu0
  %3196 = vmatprep.mubr.f32.mxu0 0.0
  %3197 = vmatmul.mubr.f32.gmra.mrb[0].mxu0 %v1082
  %v3198 = vpop.f32.mrb[0].mxu0
  %v3199 = vadd.f32 0.0, %v3198
  %v3200 = vpop.f32.mrb[0].mxu0
  %3201 = vmatprep.mubr.f32.mxu0 0.0
  %3202 = vmatmul.mubr.f32.gmra.mrb[0].mxu0 %v1083
  %v3203 = vpop.f32.mrb[0].mxu0
  %v3204 = vadd.f32 0.0, %v3203
  %v3205 = vpop.f32.mrb[0].mxu0
  %3206 = vmatprep.mubr.f32.mxu0 0.0
  %3207 = vmatmul.mubr.f32.gmra.mrb[0].mxu0 %v1084
  %v3208 = vpop.f32.mrb[0].mxu0
  %v3209 = vadd.f32 0.0, %v3208
  %v3210 = vpop.f32.mrb[0].mxu0
  %3211 = vmatprep.mubr.f32.mxu0 0.0
  %3212 = vmatmul.mubr.f32.gmra.mrb[0].mxu0 %v1085
  %v3213 = vpop.f32.mrb[0].mxu0
  %v3214 = vadd.f32 0.0, %v3213
  %v3215 = vpop.f32.mrb[0].mxu0
  %3216 = vmatprep.mubr.f32.mxu0 0.0
  %3217 = vmatmul.mubr.f32.gmra.mrb[0].mxu0 %v1086
  %v3218 = vpop.f32.mrb[0].mxu0
  %v3219 = vadd.f32 0.0, %v3218
  %v3220 = vpop.f32.mrb[0].mxu0
  %3221 = vmatprep.mubr.f32.mxu0 0.0
  %3222 = vmatmul.mubr.f32.gmra.mrb[0].mxu0 %v1087
  %v3223 = vpop.f32.mrb[0].mxu0
  %v3224 = vadd.f32 0.0, %v3223
  %v3225 = vpop.f32.mrb[0].mxu0
  %3226 = vdwg.mxu0
  %3228 = vset.pattern.permute.xlu0 0
  %3229 = vperm.xlu0 %3228, %v3149
  %v3230 = vpop.permute.xlu0 %3229
  %3233 = vset.pattern.permute.xlu0 0
  %3234 = vperm.xlu0 %3233, %v3154
  %v3235 = vpop.permute.xlu0 %3234
  %3238 = vset.pattern.permute.xlu0 0
  %3239 = vperm.xlu0 %3238, %v3159
  %v3240 = vpop.permute.xlu0 %3239
  %3243 = vset.pattern.permute.xlu0 0
  %3244 = vperm.xlu0 %3243, %v3164
  %v3245 = vpop.permute.xlu0 %3244
  %3248 = vset.pattern.permute.xlu0 0
  %3249 = vperm.xlu0 %3248, %v3169
  %v3250 = vpop.permute.xlu0 %3249
  %3253 = vset.pattern.permute.xlu0 0
  %3254 = vperm.xlu0 %3253, %v3174
  %v3255 = vpop.permute.xlu0 %3254
  %3258 = vset.pattern.permute.xlu0 0
  %3259 = vperm.xlu0 %3258, %v3179
  %v3260 = vpop.permute.xlu0 %3259
  %3263 = vset.pattern.permute.xlu0 0
  %3264 = vperm.xlu0 %3263, %v3184
  %v3265 = vpop.permute.xlu0 %3264
  %3268 = vset.pattern.permute.xlu0 0
  %3269 = vperm.xlu0 %3268, %v3189
  %v3270 = vpop.permute.xlu0 %3269
  %3273 = vset.pattern.permute.xlu0 0
  %3274 = vperm.xlu0 %3273, %v3194
  %v3275 = vpop.permute.xlu0 %3274
  %3278 = vset.pattern.permute.xlu0 0
  %3279 = vperm.xlu0 %3278, %v3199
  %v3280 = vpop.permute.xlu0 %3279
  %3283 = vset.pattern.permute.xlu0 0
  %3284 = vperm.xlu0 %3283, %v3204
  %v3285 = vpop.permute.xlu0 %3284
  %3288 = vset.pattern.permute.xlu0 0
  %3289 = vperm.xlu0 %3288, %v3209
  %v3290 = vpop.permute.xlu0 %3289
  %3293 = vset.pattern.permute.xlu0 0
  %3294 = vperm.xlu0 %3293, %v3214
  %v3295 = vpop.permute.xlu0 %3294
  %3298 = vset.pattern.permute.xlu0 0
  %3299 = vperm.xlu0 %3298, %v3219
  %v3300 = vpop.permute.xlu0 %3299
  %3303 = vset.pattern.permute.xlu0 0
  %3304 = vperm.xlu0 %3303, %v3224
  %v3305 = vpop.permute.xlu0 %3304
  %v3307 = vlaneseq
  %v3308 = vshrl.u32 %v3307, 7
  %v3309 = vsub.s32 0, %v3308
  %v3310 = vrot.slane %v43, %v3309
  %v3311 = vmul.f32 %v3230, %v3310
  %v3312 = vmul.f32 %v3235, %v3310
  %v3313 = vmul.f32 %v3240, %v3310
  %v3314 = vmul.f32 %v3245, %v3310
  %v3315 = vmul.f32 %v3250, %v3310
  %v3316 = vmul.f32 %v3255, %v3310
  %v3317 = vmul.f32 %v3260, %v3310
  %v3318 = vmul.f32 %v3265, %v3310
  %v3319 = vmul.f32 %v3270, %v3310
  %v3320 = vmul.f32 %v3275, %v3310
  %v3321 = vmul.f32 %v3280, %v3310
  %v3322 = vmul.f32 %v3285, %v3310
  %v3323 = vmul.f32 %v3290, %v3310
  %v3324 = vmul.f32 %v3295, %v3310
  %v3325 = vmul.f32 %v3300, %v3310
  %v3326 = vmul.f32 %v3305, %v3310
  %v3328 = vsel %vm190, %v1734, 0
  %v3331 = vsel %vm190, %v1739, 0
  %v3334 = vsel %vm190, %v1744, 0
  %v3337 = vsel %vm190, %v1749, 0
  %v3340 = vsel %vm190, %v1754, 0
  %v3343 = vsel %vm190, %v1759, 0
  %v3346 = vsel %vm190, %v1764, 0
  %v3349 = vsel %vm190, %v1769, 0
  %v3352 = vsel %vm190, %v1774, 0
  %v3355 = vsel %vm190, %v1779, 0
  %v3358 = vsel %vm190, %v1784, 0
  %v3361 = vsel %vm190, %v1789, 0
  %v3364 = vsel %vm190, %v1794, 0
  %v3367 = vsel %vm190, %v1799, 0
  %v3370 = vsel %vm190, %v1804, 0
  %v3373 = vsel %vm190, %v1809, 0
  %3375 = vmatprep.subr.mxu0 0.0
  %3376 = vmatpush1.msra.mxu0 %v44
  %3377 = vmatprep.subr.mxu0 0.0
  %3378 = vmatpush1.msra.mxu0 0.0
  %3379 = vmatprep.subr.mxu0 0.0
  %3380 = vmatpush1.msra.mxu0 0.0
  %3381 = vmatprep.subr.mxu0 0.0
  %3382 = vmatpush1.msra.mxu0 0.0
  %3383 = vmatprep.subr.mxu0 0.0
  %3384 = vmatpush1.msra.mxu0 0.0
  %3385 = vmatprep.subr.mxu0 0.0
  %3386 = vmatpush1.msra.mxu0 0.0
  %3387 = vmatprep.subr.mxu0 0.0
  %3388 = vmatpush1.msra.mxu0 0.0
  %3389 = vmatprep.subr.mxu0 0.0
  %3390 = vmatpush1.msra.mxu0 0.0
  %3391 = vmatprep.subr.mxu0 0.0
  %3392 = vmatpush1.msra.mxu0 0.0
  %3393 = vmatprep.subr.mxu0 0.0
  %3394 = vmatpush1.msra.mxu0 0.0
  %3395 = vmatprep.subr.mxu0 0.0
  %3396 = vmatpush1.msra.mxu0 0.0
  %3397 = vmatprep.subr.mxu0 0.0
  %3398 = vmatpush1.msra.mxu0 0.0
  %3399 = vmatprep.subr.mxu0 0.0
  %3400 = vmatpush1.msra.mxu0 0.0
  %3401 = vmatprep.subr.mxu0 0.0
  %3402 = vmatpush1.msra.mxu0 0.0
  %3403 = vmatprep.subr.mxu0 0.0
  %3404 = vmatpush1.msra.mxu0 0.0
  %3405 = vmatprep.subr.mxu0 0.0
  %3406 = vmatpush1.msra.mxu0 0.0
  %3407 = vmatprep.subr.mxu0 0.0
  %3408 = vmatpush1.msra.mxu0 0.0
  %3409 = vmatprep.subr.mxu0 0.0
  %3410 = vmatpush1.msra.mxu0 0.0
  %3411 = vmatprep.subr.mxu0 0.0
  %3412 = vmatpush1.msra.mxu0 0.0
  %3413 = vmatprep.subr.mxu0 0.0
  %3414 = vmatpush1.msra.mxu0 0.0
  %3415 = vmatprep.subr.mxu0 0.0
  %3416 = vmatpush1.msra.mxu0 0.0
  %3417 = vmatprep.subr.mxu0 0.0
  %3418 = vmatpush1.msra.mxu0 0.0
  %3419 = vmatprep.subr.mxu0 0.0
  %3420 = vmatpush1.msra.mxu0 0.0
  %3421 = vmatprep.subr.mxu0 0.0
  %3422 = vmatpush1.msra.mxu0 0.0
  %3423 = vmatprep.subr.mxu0 0.0
  %3424 = vmatpush1.msra.mxu0 0.0
  %3425 = vmatprep.subr.mxu0 0.0
  %3426 = vmatpush1.msra.mxu0 0.0
  %3427 = vmatprep.subr.mxu0 0.0
  %3428 = vmatpush1.msra.mxu0 0.0
  %3429 = vmatprep.subr.mxu0 0.0
  %3430 = vmatpush1.msra.mxu0 0.0
  %3431 = vmatprep.subr.mxu0 0.0
  %3432 = vmatpush1.msra.mxu0 0.0
  %3433 = vmatprep.subr.mxu0 0.0
  %3434 = vmatpush1.msra.mxu0 0.0
  %3435 = vmatprep.subr.mxu0 0.0
  %3436 = vmatpush1.msra.mxu0 0.0
  %3437 = vmatprep.subr.mxu0 0.0
  %3438 = vmatpush1.msra.mxu0 0.0
  %3439 = vmatprep.mubr.f32.mxu0 0.0
  %3440 = vmatmul.mubr.f32.gmra.mrb[0].mxu0 %v3328
  %v3441 = vpop.f32.mrb[0].mxu0
  %v3442 = vadd.f32 0.0, %v3441
  %v3443 = vpop.f32.mrb[0].mxu0
  %3444 = vmatprep.mubr.f32.mxu0 0.0
  %3445 = vmatmul.mubr.f32.gmra.mrb[0].mxu0 %v3331
  %v3446 = vpop.f32.mrb[0].mxu0
  %v3447 = vadd.f32 0.0, %v3446
  %v3448 = vpop.f32.mrb[0].mxu0
  %3449 = vmatprep.mubr.f32.mxu0 0.0
  %3450 = vmatmul.mubr.f32.gmra.mrb[0].mxu0 %v3334
  %v3451 = vpop.f32.mrb[0].mxu0
  %v3452 = vadd.f32 0.0, %v3451
  %v3453 = vpop.f32.mrb[0].mxu0
  %3454 = vmatprep.mubr.f32.mxu0 0.0
  %3455 = vmatmul.mubr.f32.gmra.mrb[0].mxu0 %v3337
  %v3456 = vpop.f32.mrb[0].mxu0
  %v3457 = vadd.f32 0.0, %v3456
  %v3458 = vpop.f32.mrb[0].mxu0
  %3459 = vmatprep.mubr.f32.mxu0 0.0
  %3460 = vmatmul.mubr.f32.gmra.mrb[0].mxu0 %v3340
  %v3461 = vpop.f32.mrb[0].mxu0
  %v3462 = vadd.f32 0.0, %v3461
  %v3463 = vpop.f32.mrb[0].mxu0
  %3464 = vmatprep.mubr.f32.mxu0 0.0
  %3465 = vmatmul.mubr.f32.gmra.mrb[0].mxu0 %v3343
  %v3466 = vpop.f32.mrb[0].mxu0
  %v3467 = vadd.f32 0.0, %v3466
  %v3468 = vpop.f32.mrb[0].mxu0
  %3469 = vmatprep.mubr.f32.mxu0 0.0
  %3470 = vmatmul.mubr.f32.gmra.mrb[0].mxu0 %v3346
  %v3471 = vpop.f32.mrb[0].mxu0
  %v3472 = vadd.f32 0.0, %v3471
  %v3473 = vpop.f32.mrb[0].mxu0
  %3474 = vmatprep.mubr.f32.mxu0 0.0
  %3475 = vmatmul.mubr.f32.gmra.mrb[0].mxu0 %v3349
  %v3476 = vpop.f32.mrb[0].mxu0
  %v3477 = vadd.f32 0.0, %v3476
  %v3478 = vpop.f32.mrb[0].mxu0
  %3479 = vmatprep.mubr.f32.mxu0 0.0
  %3480 = vmatmul.mubr.f32.gmra.mrb[0].mxu0 %v3352
  %v3481 = vpop.f32.mrb[0].mxu0
  %v3482 = vadd.f32 0.0, %v3481
  %v3483 = vpop.f32.mrb[0].mxu0
  %3484 = vmatprep.mubr.f32.mxu0 0.0
  %3485 = vmatmul.mubr.f32.gmra.mrb[0].mxu0 %v3355
  %v3486 = vpop.f32.mrb[0].mxu0
  %v3487 = vadd.f32 0.0, %v3486
  %v3488 = vpop.f32.mrb[0].mxu0
  %3489 = vmatprep.mubr.f32.mxu0 0.0
  %3490 = vmatmul.mubr.f32.gmra.mrb[0].mxu0 %v3358
  %v3491 = vpop.f32.mrb[0].mxu0
  %v3492 = vadd.f32 0.0, %v3491
  %v3493 = vpop.f32.mrb[0].mxu0
  %3494 = vmatprep.mubr.f32.mxu0 0.0
  %3495 = vmatmul.mubr.f32.gmra.mrb[0].mxu0 %v3361
  %v3496 = vpop.f32.mrb[0].mxu0
  %v3497 = vadd.f32 0.0, %v3496
  %v3498 = vpop.f32.mrb[0].mxu0
  %3499 = vmatprep.mubr.f32.mxu0 0.0
  %3500 = vmatmul.mubr.f32.gmra.mrb[0].mxu0 %v3364
  %v3501 = vpop.f32.mrb[0].mxu0
  %v3502 = vadd.f32 0.0, %v3501
  %v3503 = vpop.f32.mrb[0].mxu0
  %3504 = vmatprep.mubr.f32.mxu0 0.0
  %3505 = vmatmul.mubr.f32.gmra.mrb[0].mxu0 %v3367
  %v3506 = vpop.f32.mrb[0].mxu0
  %v3507 = vadd.f32 0.0, %v3506
  %v3508 = vpop.f32.mrb[0].mxu0
  %3509 = vmatprep.mubr.f32.mxu0 0.0
  %3510 = vmatmul.mubr.f32.gmra.mrb[0].mxu0 %v3370
  %v3511 = vpop.f32.mrb[0].mxu0
  %v3512 = vadd.f32 0.0, %v3511
  %v3513 = vpop.f32.mrb[0].mxu0
  %3514 = vmatprep.mubr.f32.mxu0 0.0
  %3515 = vmatmul.mubr.f32.gmra.mrb[0].mxu0 %v3373
  %v3516 = vpop.f32.mrb[0].mxu0
  %v3517 = vadd.f32 0.0, %v3516
  %v3518 = vpop.f32.mrb[0].mxu0
  %3519 = vdwg.mxu0
  %v3520 = vadd.f32 %v3311, %v3442
  %v3521 = vadd.f32 %v3312, %v3447
  %v3522 = vadd.f32 %v3313, %v3452
  %v3523 = vadd.f32 %v3314, %v3457
  %v3524 = vadd.f32 %v3315, %v3462
  %v3525 = vadd.f32 %v3316, %v3467
  %v3526 = vadd.f32 %v3317, %v3472
  %v3527 = vadd.f32 %v3318, %v3477
  %v3528 = vadd.f32 %v3319, %v3482
  %v3529 = vadd.f32 %v3320, %v3487
  %v3530 = vadd.f32 %v3321, %v3492
  %v3531 = vadd.f32 %v3322, %v3497
  %v3532 = vadd.f32 %v3323, %v3502
  %v3533 = vadd.f32 %v3324, %v3507
  %v3534 = vadd.f32 %v3325, %v3512
  %v3535 = vadd.f32 %v3326, %v3517
  %v3536 = vlaneseq
  %v3537 = vshrl.u32 %v3536, 7
  %v3538 = vsub.s32 0, %v3537
  %v3539 = vrot.slane %v45, %v3538
  %v3540 = vadd.f32 %v3520, %v3539
  %v3541 = vadd.f32 %v3521, %v3539
  %v3542 = vadd.f32 %v3522, %v3539
  %v3543 = vadd.f32 %v3523, %v3539
  %v3544 = vadd.f32 %v3524, %v3539
  %v3545 = vadd.f32 %v3525, %v3539
  %v3546 = vadd.f32 %v3526, %v3539
  %v3547 = vadd.f32 %v3527, %v3539
  %v3548 = vadd.f32 %v3528, %v3539
  %v3549 = vadd.f32 %v3529, %v3539
  %v3550 = vadd.f32 %v3530, %v3539
  %v3551 = vadd.f32 %v3531, %v3539
  %v3552 = vadd.f32 %v3532, %v3539
  %v3553 = vadd.f32 %v3533, %v3539
  %v3554 = vadd.f32 %v3534, %v3539
  %v3555 = vadd.f32 %v3535, %v3539
  %v3556 = vmax.f32 %v3540, 0.0
  %v3557 = vmax.f32 %v3541, 0.0
  %v3558 = vmax.f32 %v3542, 0.0
  %v3559 = vmax.f32 %v3543, 0.0
  %v3560 = vmax.f32 %v3544, 0.0
  %v3561 = vmax.f32 %v3545, 0.0
  %v3562 = vmax.f32 %v3546, 0.0
  %v3563 = vmax.f32 %v3547, 0.0
  %v3564 = vmax.f32 %v3548, 0.0
  %v3565 = vmax.f32 %v3549, 0.0
  %v3566 = vmax.f32 %v3550, 0.0
  %v3567 = vmax.f32 %v3551, 0.0
  %v3568 = vmax.f32 %v3552, 0.0
  %v3569 = vmax.f32 %v3553, 0.0
  %v3570 = vmax.f32 %v3554, 0.0
  %v3571 = vmax.f32 %v3555, 0.0
  %v3572 = vlaneseq
  %v3573 = vshrl.u32 %v3572, 7
  %v3574 = vsub.s32 0, %v3573
  %v3575 = vrot.slane %v54, %v3574
  %v3577 = vsel %vm404, %v3556, 0
  %v3580 = vsel %vm404, %v3557, 0
  %v3583 = vsel %vm404, %v3558, 0
  %v3586 = vsel %vm404, %v3559, 0
  %v3589 = vsel %vm404, %v3560, 0
  %v3592 = vsel %vm404, %v3561, 0
  %v3595 = vsel %vm404, %v3562, 0
  %v3598 = vsel %vm404, %v3563, 0
  %v3601 = vsel %vm404, %v3564, 0
  %v3604 = vsel %vm404, %v3565, 0
  %v3607 = vsel %vm404, %v3566, 0
  %v3610 = vsel %vm404, %v3567, 0
  %v3613 = vsel %vm404, %v3568, 0
  %v3616 = vsel %vm404, %v3569, 0
  %v3619 = vsel %vm404, %v3570, 0
  %v3622 = vsel %vm404, %v3571, 0
  %3624 = vmatprep.subr.mxu0 0.0
  %3625 = vmatpush1.msra.mxu0 %v46
  %3626 = vmatprep.subr.mxu0 0.0
  %3627 = vmatpush1.msra.mxu0 %v47
  %3628 = vmatprep.subr.mxu0 0.0
  %3629 = vmatpush1.msra.mxu0 %v48
  %3630 = vmatprep.subr.mxu0 0.0
  %3631 = vmatpush1.msra.mxu0 %v49
  %3632 = vmatprep.subr.mxu0 0.0
  %3633 = vmatpush1.msra.mxu0 %v50
  %3634 = vmatprep.subr.mxu0 0.0
  %3635 = vmatpush1.msra.mxu0 %v51
  %3636 = vmatprep.subr.mxu0 0.0
  %3637 = vmatpush1.msra.mxu0 %v52
  %3638 = vmatprep.subr.mxu0 0.0
  %3639 = vmatpush1.msra.mxu0 %v53
  %3640 = vmatprep.subr.mxu0 0.0
  %3641 = vmatpush1.msra.mxu0 0.0
  %3642 = vmatprep.subr.mxu0 0.0
  %3643 = vmatpush1.msra.mxu0 0.0
  %3644 = vmatprep.subr.mxu0 0.0
  %3645 = vmatpush1.msra.mxu0 0.0
  %3646 = vmatprep.subr.mxu0 0.0
  %3647 = vmatpush1.msra.mxu0 0.0
  %3648 = vmatprep.subr.mxu0 0.0
  %3649 = vmatpush1.msra.mxu0 0.0
  %3650 = vmatprep.subr.mxu0 0.0
  %3651 = vmatpush1.msra.mxu0 0.0
  %3652 = vmatprep.subr.mxu0 0.0
  %3653 = vmatpush1.msra.mxu0 0.0
  %3654 = vmatprep.subr.mxu0 0.0
  %3655 = vmatpush1.msra.mxu0 0.0
  %3656 = vmatprep.subr.mxu0 0.0
  %3657 = vmatpush1.msra.mxu0 0.0
  %3658 = vmatprep.subr.mxu0 0.0
  %3659 = vmatpush1.msra.mxu0 0.0
  %3660 = vmatprep.subr.mxu0 0.0
  %3661 = vmatpush1.msra.mxu0 0.0
  %3662 = vmatprep.subr.mxu0 0.0
  %3663 = vmatpush1.msra.mxu0 0.0
  %3664 = vmatprep.subr.mxu0 0.0
  %3665 = vmatpush1.msra.mxu0 0.0
  %3666 = vmatprep.subr.mxu0 0.0
  %3667 = vmatpush1.msra.mxu0 0.0
  %3668 = vmatprep.subr.mxu0 0.0
  %3669 = vmatpush1.msra.mxu0 0.0
  %3670 = vmatprep.subr.mxu0 0.0
  %3671 = vmatpush1.msra.mxu0 0.0
  %3672 = vmatprep.subr.mxu0 0.0
  %3673 = vmatpush1.msra.mxu0 0.0
  %3674 = vmatprep.subr.mxu0 0.0
  %3675 = vmatpush1.msra.mxu0 0.0
  %3676 = vmatprep.subr.mxu0 0.0
  %3677 = vmatpush1.msra.mxu0 0.0
  %3678 = vmatprep.subr.mxu0 0.0
  %3679 = vmatpush1.msra.mxu0 0.0
  %3680 = vmatprep.subr.mxu0 0.0
  %3681 = vmatpush1.msra.mxu0 0.0
  %3682 = vmatprep.subr.mxu0 0.0
  %3683 = vmatpush1.msra.mxu0 0.0
  %3684 = vmatprep.subr.mxu0 0.0
  %3685 = vmatpush1.msra.mxu0 0.0
  %3686 = vmatprep.subr.mxu0 0.0
  %3687 = vmatpush1.msra.mxu0 0.0
  %3688 = vmatprep.mubr.f32.mxu0 0.0
  %3689 = vmatmul.mubr.f32.gmra.mrb[0].mxu0 %v3577
  %v3690 = vpop.f32.mrb[0].mxu0
  %v3691 = vadd.f32 %v3575, %v3690
  %v3692 = vpop.f32.mrb[0].mxu0
  %3693 = vmatprep.mubr.f32.mxu0 0.0
  %3694 = vmatmul.mubr.f32.gmra.mrb[0].mxu0 %v3580
  %v3695 = vpop.f32.mrb[0].mxu0
  %v3696 = vadd.f32 %v3575, %v3695
  %v3697 = vpop.f32.mrb[0].mxu0
  %3698 = vmatprep.mubr.f32.mxu0 0.0
  %3699 = vmatmul.mubr.f32.gmra.mrb[0].mxu0 %v3583
  %v3700 = vpop.f32.mrb[0].mxu0
  %v3701 = vadd.f32 %v3575, %v3700
  %v3702 = vpop.f32.mrb[0].mxu0
  %3703 = vmatprep.mubr.f32.mxu0 0.0
  %3704 = vmatmul.mubr.f32.gmra.mrb[0].mxu0 %v3586
  %v3705 = vpop.f32.mrb[0].mxu0
  %v3706 = vadd.f32 %v3575, %v3705
  %v3707 = vpop.f32.mrb[0].mxu0
  %3708 = vmatprep.mubr.f32.mxu0 0.0
  %3709 = vmatmul.mubr.f32.gmra.mrb[0].mxu0 %v3589
  %v3710 = vpop.f32.mrb[0].mxu0
  %v3711 = vadd.f32 %v3575, %v3710
  %v3712 = vpop.f32.mrb[0].mxu0
  %3713 = vmatprep.mubr.f32.mxu0 0.0
  %3714 = vmatmul.mubr.f32.gmra.mrb[0].mxu0 %v3592
  %v3715 = vpop.f32.mrb[0].mxu0
  %v3716 = vadd.f32 %v3575, %v3715
  %v3717 = vpop.f32.mrb[0].mxu0
  %3718 = vmatprep.mubr.f32.mxu0 0.0
  %3719 = vmatmul.mubr.f32.gmra.mrb[0].mxu0 %v3595
  %v3720 = vpop.f32.mrb[0].mxu0
  %v3721 = vadd.f32 %v3575, %v3720
  %v3722 = vpop.f32.mrb[0].mxu0
  %3723 = vmatprep.mubr.f32.mxu0 0.0
  %3724 = vmatmul.mubr.f32.gmra.mrb[0].mxu0 %v3598
  %v3725 = vpop.f32.mrb[0].mxu0
  %v3726 = vadd.f32 %v3575, %v3725
  %v3727 = vpop.f32.mrb[0].mxu0
  %3728 = vmatprep.mubr.f32.mxu0 0.0
  %3729 = vmatmul.mubr.f32.gmra.mrb[0].mxu0 %v3601
  %v3730 = vpop.f32.mrb[0].mxu0
  %v3731 = vadd.f32 %v3575, %v3730
  %v3732 = vpop.f32.mrb[0].mxu0
  %3733 = vmatprep.mubr.f32.mxu0 0.0
  %3734 = vmatmul.mubr.f32.gmra.mrb[0].mxu0 %v3604
  %v3735 = vpop.f32.mrb[0].mxu0
  %v3736 = vadd.f32 %v3575, %v3735
  %v3737 = vpop.f32.mrb[0].mxu0
  %3738 = vmatprep.mubr.f32.mxu0 0.0
  %3739 = vmatmul.mubr.f32.gmra.mrb[0].mxu0 %v3607
  %v3740 = vpop.f32.mrb[0].mxu0
  %v3741 = vadd.f32 %v3575, %v3740
  %v3742 = vpop.f32.mrb[0].mxu0
  %3743 = vmatprep.mubr.f32.mxu0 0.0
  %3744 = vmatmul.mubr.f32.gmra.mrb[0].mxu0 %v3610
  %v3745 = vpop.f32.mrb[0].mxu0
  %v3746 = vadd.f32 %v3575, %v3745
  %v3747 = vpop.f32.mrb[0].mxu0
  %3748 = vmatprep.mubr.f32.mxu0 0.0
  %3749 = vmatmul.mubr.f32.gmra.mrb[0].mxu0 %v3613
  %v3750 = vpop.f32.mrb[0].mxu0
  %v3751 = vadd.f32 %v3575, %v3750
  %v3752 = vpop.f32.mrb[0].mxu0
  %3753 = vmatprep.mubr.f32.mxu0 0.0
  %3754 = vmatmul.mubr.f32.gmra.mrb[0].mxu0 %v3616
  %v3755 = vpop.f32.mrb[0].mxu0
  %v3756 = vadd.f32 %v3575, %v3755
  %v3757 = vpop.f32.mrb[0].mxu0
  %3758 = vmatprep.mubr.f32.mxu0 0.0
  %3759 = vmatmul.mubr.f32.gmra.mrb[0].mxu0 %v3619
  %v3760 = vpop.f32.mrb[0].mxu0
  %v3761 = vadd.f32 %v3575, %v3760
  %v3762 = vpop.f32.mrb[0].mxu0
  %3763 = vmatprep.mubr.f32.mxu0 0.0
  %3764 = vmatmul.mubr.f32.gmra.mrb[0].mxu0 %v3622
  %v3765 = vpop.f32.mrb[0].mxu0
  %v3766 = vadd.f32 %v3575, %v3765
  %v3767 = vpop.f32.mrb[0].mxu0
  %3768 = vdwg.mxu0
  %v3769 = vmax.f32 %v3691, 0.0
  %v3770 = vmax.f32 %v3696, 0.0
  %v3771 = vmax.f32 %v3701, 0.0
  %v3772 = vmax.f32 %v3706, 0.0
  %v3773 = vmax.f32 %v3711, 0.0
  %v3774 = vmax.f32 %v3716, 0.0
  %v3775 = vmax.f32 %v3721, 0.0
  %v3776 = vmax.f32 %v3726, 0.0
  %v3777 = vmax.f32 %v3731, 0.0
  %v3778 = vmax.f32 %v3736, 0.0
  %v3779 = vmax.f32 %v3741, 0.0
  %v3780 = vmax.f32 %v3746, 0.0
  %v3781 = vmax.f32 %v3751, 0.0
  %v3782 = vmax.f32 %v3756, 0.0
  %v3783 = vmax.f32 %v3761, 0.0
  %v3784 = vmax.f32 %v3766, 0.0
  %v3785 = vlaneseq
  %v3786 = vshrl.u32 %v3785, 7
  %v3787 = vsub.s32 0, %v3786
  %v3788 = vrot.slane %v63, %v3787
  %v3790 = vsel %vm404, %v3769, 0
  %v3793 = vsel %vm404, %v3770, 0
  %v3796 = vsel %vm404, %v3771, 0
  %v3799 = vsel %vm404, %v3772, 0
  %v3802 = vsel %vm404, %v3773, 0
  %v3805 = vsel %vm404, %v3774, 0
  %v3808 = vsel %vm404, %v3775, 0
  %v3811 = vsel %vm404, %v3776, 0
  %v3814 = vsel %vm404, %v3777, 0
  %v3817 = vsel %vm404, %v3778, 0
  %v3820 = vsel %vm404, %v3779, 0
  %v3823 = vsel %vm404, %v3780, 0
  %v3826 = vsel %vm404, %v3781, 0
  %v3829 = vsel %vm404, %v3782, 0
  %v3832 = vsel %vm404, %v3783, 0
  %v3835 = vsel %vm404, %v3784, 0
  %3837 = vmatprep.subr.mxu0 0.0
  %3838 = vmatpush1.msra.mxu0 %v55
  %3839 = vmatprep.subr.mxu0 0.0
  %3840 = vmatpush1.msra.mxu0 %v56
  %3841 = vmatprep.subr.mxu0 0.0
  %3842 = vmatpush1.msra.mxu0 %v57
  %3843 = vmatprep.subr.mxu0 0.0
  %3844 = vmatpush1.msra.mxu0 %v58
  %3845 = vmatprep.subr.mxu0 0.0
  %3846 = vmatpush1.msra.mxu0 %v59
  %3847 = vmatprep.subr.mxu0 0.0
  %3848 = vmatpush1.msra.mxu0 %v60
  %3849 = vmatprep.subr.mxu0 0.0
  %3850 = vmatpush1.msra.mxu0 %v61
  %3851 = vmatprep.subr.mxu0 0.0
  %3852 = vmatpush1.msra.mxu0 %v62
  %3853 = vmatprep.subr.mxu0 0.0
  %3854 = vmatpush1.msra.mxu0 0.0
  %3855 = vmatprep.subr.mxu0 0.0
  %3856 = vmatpush1.msra.mxu0 0.0
  %3857 = vmatprep.subr.mxu0 0.0
  %3858 = vmatpush1.msra.mxu0 0.0
  %3859 = vmatprep.subr.mxu0 0.0
  %3860 = vmatpush1.msra.mxu0 0.0
  %3861 = vmatprep.subr.mxu0 0.0
  %3862 = vmatpush1.msra.mxu0 0.0
  %3863 = vmatprep.subr.mxu0 0.0
  %3864 = vmatpush1.msra.mxu0 0.0
  %3865 = vmatprep.subr.mxu0 0.0
  %3866 = vmatpush1.msra.mxu0 0.0
  %3867 = vmatprep.subr.mxu0 0.0
  %3868 = vmatpush1.msra.mxu0 0.0
  %3869 = vmatprep.subr.mxu0 0.0
  %3870 = vmatpush1.msra.mxu0 0.0
  %3871 = vmatprep.subr.mxu0 0.0
  %3872 = vmatpush1.msra.mxu0 0.0
  %3873 = vmatprep.subr.mxu0 0.0
  %3874 = vmatpush1.msra.mxu0 0.0
  %3875 = vmatprep.subr.mxu0 0.0
  %3876 = vmatpush1.msra.mxu0 0.0
  %3877 = vmatprep.subr.mxu0 0.0
  %3878 = vmatpush1.msra.mxu0 0.0
  %3879 = vmatprep.subr.mxu0 0.0
  %3880 = vmatpush1.msra.mxu0 0.0
  %3881 = vmatprep.subr.mxu0 0.0
  %3882 = vmatpush1.msra.mxu0 0.0
  %3883 = vmatprep.subr.mxu0 0.0
  %3884 = vmatpush1.msra.mxu0 0.0
  %3885 = vmatprep.subr.mxu0 0.0
  %3886 = vmatpush1.msra.mxu0 0.0
  %3887 = vmatprep.subr.mxu0 0.0
  %3888 = vmatpush1.msra.mxu0 0.0
  %3889 = vmatprep.subr.mxu0 0.0
  %3890 = vmatpush1.msra.mxu0 0.0
  %3891 = vmatprep.subr.mxu0 0.0
  %3892 = vmatpush1.msra.mxu0 0.0
  %3893 = vmatprep.subr.mxu0 0.0
  %3894 = vmatpush1.msra.mxu0 0.0
  %3895 = vmatprep.subr.mxu0 0.0
  %3896 = vmatpush1.msra.mxu0 0.0
  %3897 = vmatprep.subr.mxu0 0.0
  %3898 = vmatpush1.msra.mxu0 0.0
  %3899 = vmatprep.subr.mxu0 0.0
  %3900 = vmatpush1.msra.mxu0 0.0
  %3901 = vmatprep.mubr.f32.mxu0 0.0
  %3902 = vmatmul.mubr.f32.gmra.mrb[0].mxu0 %v3790
  %v3903 = vpop.f32.mrb[0].mxu0
  %v3904 = vadd.f32 %v3788, %v3903
  %v3905 = vpop.f32.mrb[0].mxu0
  %3906 = vmatprep.mubr.f32.mxu0 0.0
  %3907 = vmatmul.mubr.f32.gmra.mrb[0].mxu0 %v3793
  %v3908 = vpop.f32.mrb[0].mxu0
  %v3909 = vadd.f32 %v3788, %v3908
  %v3910 = vpop.f32.mrb[0].mxu0
  %3911 = vmatprep.mubr.f32.mxu0 0.0
  %3912 = vmatmul.mubr.f32.gmra.mrb[0].mxu0 %v3796
  %v3913 = vpop.f32.mrb[0].mxu0
  %v3914 = vadd.f32 %v3788, %v3913
  %v3915 = vpop.f32.mrb[0].mxu0
  %3916 = vmatprep.mubr.f32.mxu0 0.0
  %3917 = vmatmul.mubr.f32.gmra.mrb[0].mxu0 %v3799
  %v3918 = vpop.f32.mrb[0].mxu0
  %v3919 = vadd.f32 %v3788, %v3918
  %v3920 = vpop.f32.mrb[0].mxu0
  %3921 = vmatprep.mubr.f32.mxu0 0.0
  %3922 = vmatmul.mubr.f32.gmra.mrb[0].mxu0 %v3802
  %v3923 = vpop.f32.mrb[0].mxu0
  %v3924 = vadd.f32 %v3788, %v3923
  %v3925 = vpop.f32.mrb[0].mxu0
  %3926 = vmatprep.mubr.f32.mxu0 0.0
  %3927 = vmatmul.mubr.f32.gmra.mrb[0].mxu0 %v3805
  %v3928 = vpop.f32.mrb[0].mxu0
  %v3929 = vadd.f32 %v3788, %v3928
  %v3930 = vpop.f32.mrb[0].mxu0
  %3931 = vmatprep.mubr.f32.mxu0 0.0
  %3932 = vmatmul.mubr.f32.gmra.mrb[0].mxu0 %v3808
  %v3933 = vpop.f32.mrb[0].mxu0
  %v3934 = vadd.f32 %v3788, %v3933
  %v3935 = vpop.f32.mrb[0].mxu0
  %3936 = vmatprep.mubr.f32.mxu0 0.0
  %3937 = vmatmul.mubr.f32.gmra.mrb[0].mxu0 %v3811
  %v3938 = vpop.f32.mrb[0].mxu0
  %v3939 = vadd.f32 %v3788, %v3938
  %v3940 = vpop.f32.mrb[0].mxu0
  %3941 = vmatprep.mubr.f32.mxu0 0.0
  %3942 = vmatmul.mubr.f32.gmra.mrb[0].mxu0 %v3814
  %v3943 = vpop.f32.mrb[0].mxu0
  %v3944 = vadd.f32 %v3788, %v3943
  %v3945 = vpop.f32.mrb[0].mxu0
  %3946 = vmatprep.mubr.f32.mxu0 0.0
  %3947 = vmatmul.mubr.f32.gmra.mrb[0].mxu0 %v3817
  %v3948 = vpop.f32.mrb[0].mxu0
  %v3949 = vadd.f32 %v3788, %v3948
  %v3950 = vpop.f32.mrb[0].mxu0
  %3951 = vmatprep.mubr.f32.mxu0 0.0
  %3952 = vmatmul.mubr.f32.gmra.mrb[0].mxu0 %v3820
  %v3953 = vpop.f32.mrb[0].mxu0
  %v3954 = vadd.f32 %v3788, %v3953
  %v3955 = vpop.f32.mrb[0].mxu0
  %3956 = vmatprep.mubr.f32.mxu0 0.0
  %3957 = vmatmul.mubr.f32.gmra.mrb[0].mxu0 %v3823
  %v3958 = vpop.f32.mrb[0].mxu0
  %v3959 = vadd.f32 %v3788, %v3958
  %v3960 = vpop.f32.mrb[0].mxu0
  %3961 = vmatprep.mubr.f32.mxu0 0.0
  %3962 = vmatmul.mubr.f32.gmra.mrb[0].mxu0 %v3826
  %v3963 = vpop.f32.mrb[0].mxu0
  %v3964 = vadd.f32 %v3788, %v3963
  %v3965 = vpop.f32.mrb[0].mxu0
  %3966 = vmatprep.mubr.f32.mxu0 0.0
  %3967 = vmatmul.mubr.f32.gmra.mrb[0].mxu0 %v3829
  %v3968 = vpop.f32.mrb[0].mxu0
  %v3969 = vadd.f32 %v3788, %v3968
  %v3970 = vpop.f32.mrb[0].mxu0
  %3971 = vmatprep.mubr.f32.mxu0 0.0
  %3972 = vmatmul.mubr.f32.gmra.mrb[0].mxu0 %v3832
  %v3973 = vpop.f32.mrb[0].mxu0
  %v3974 = vadd.f32 %v3788, %v3973
  %v3975 = vpop.f32.mrb[0].mxu0
  %3976 = vmatprep.mubr.f32.mxu0 0.0
  %3977 = vmatmul.mubr.f32.gmra.mrb[0].mxu0 %v3835
  %v3978 = vpop.f32.mrb[0].mxu0
  %v3979 = vadd.f32 %v3788, %v3978
  %v3980 = vpop.f32.mrb[0].mxu0
  %3981 = vdwg.mxu0
  %v3982 = vmax.f32 %v3904, 0.0
  %v3983 = vmax.f32 %v3909, 0.0
  %v3984 = vmax.f32 %v3914, 0.0
  %v3985 = vmax.f32 %v3919, 0.0
  %v3986 = vmax.f32 %v3924, 0.0
  %v3987 = vmax.f32 %v3929, 0.0
  %v3988 = vmax.f32 %v3934, 0.0
  %v3989 = vmax.f32 %v3939, 0.0
  %v3990 = vmax.f32 %v3944, 0.0
  %v3991 = vmax.f32 %v3949, 0.0
  %v3992 = vmax.f32 %v3954, 0.0
  %v3993 = vmax.f32 %v3959, 0.0
  %v3994 = vmax.f32 %v3964, 0.0
  %v3995 = vmax.f32 %v3969, 0.0
  %v3996 = vmax.f32 %v3974, 0.0
  %v3997 = vmax.f32 %v3979, 0.0
  %3998 = vmatprep.subr.mxu0 0.0
  %3999 = vmatpush1.msra.mxu0 %v3982
  %4000 = vmatprep.subr.mxu0 0.0
  %4001 = vmatpush1.msra.mxu0 %v3983
  %4002 = vmatprep.subr.mxu0 0.0
  %4003 = vmatpush1.msra.mxu0 %v3984
  %4004 = vmatprep.subr.mxu0 0.0
  %4005 = vmatpush1.msra.mxu0 %v3985
  %4006 = vmatprep.subr.mxu0 0.0
  %4007 = vmatpush1.msra.mxu0 %v3986
  %4008 = vmatprep.subr.mxu0 0.0
  %4009 = vmatpush1.msra.mxu0 %v3987
  %4010 = vmatprep.subr.mxu0 0.0
  %4011 = vmatpush1.msra.mxu0 %v3988
  %4012 = vmatprep.subr.mxu0 0.0
  %4013 = vmatpush1.msra.mxu0 %v3989
  %4014 = vmatprep.subr.mxu0 0.0
  %4015 = vmatpush1.msra.mxu0 %v3990
  %4016 = vmatprep.subr.mxu0 0.0
  %4017 = vmatpush1.msra.mxu0 %v3991
  %4018 = vmatprep.subr.mxu0 0.0
  %4019 = vmatpush1.msra.mxu0 %v3992
  %4020 = vmatprep.subr.mxu0 0.0
  %4021 = vmatpush1.msra.mxu0 %v3993
  %4022 = vmatprep.subr.mxu0 0.0
  %4023 = vmatpush1.msra.mxu0 %v3994
  %4024 = vmatprep.subr.mxu0 0.0
  %4025 = vmatpush1.msra.mxu0 %v3995
  %4026 = vmatprep.subr.mxu0 0.0
  %4027 = vmatpush1.msra.mxu0 %v3996
  %4028 = vmatprep.subr.mxu0 0.0
  %4029 = vmatpush1.msra.mxu0 %v3997
  %4030 = vmatprep.subr.mxu0 0.0
  %4031 = vmatpush1.msra.mxu0 0.0
  %4032 = vmatprep.subr.mxu0 0.0
  %4033 = vmatpush1.msra.mxu0 0.0
  %4034 = vmatprep.subr.mxu0 0.0
  %4035 = vmatpush1.msra.mxu0 0.0
  %4036 = vmatprep.subr.mxu0 0.0
  %4037 = vmatpush1.msra.mxu0 0.0
  %4038 = vmatprep.subr.mxu0 0.0
  %4039 = vmatpush1.msra.mxu0 0.0
  %4040 = vmatprep.subr.mxu0 0.0
  %4041 = vmatpush1.msra.mxu0 0.0
  %4042 = vmatprep.subr.mxu0 0.0
  %4043 = vmatpush1.msra.mxu0 0.0
  %4044 = vmatprep.subr.mxu0 0.0
  %4045 = vmatpush1.msra.mxu0 0.0
  %4046 = vmatprep.subr.mxu0 0.0
  %4047 = vmatpush1.msra.mxu0 0.0
  %4048 = vmatprep.subr.mxu0 0.0
  %4049 = vmatpush1.msra.mxu0 0.0
  %4050 = vmatprep.subr.mxu0 0.0
  %4051 = vmatpush1.msra.mxu0 0.0
  %4052 = vmatprep.subr.mxu0 0.0
  %4053 = vmatpush1.msra.mxu0 0.0
  %4054 = vmatprep.subr.mxu0 0.0
  %4055 = vmatpush1.msra.mxu0 0.0
  %4056 = vmatprep.subr.mxu0 0.0
  %4057 = vmatpush1.msra.mxu0 0.0
  %4058 = vmatprep.subr.mxu0 0.0
  %4059 = vmatpush1.msra.mxu0 0.0
  %4060 = vmatprep.subr.mxu0 0.0
  %4061 = vmatpush1.msra.mxu0 0.0
  %4062 = vmatprep.mubr.f32.mxu0 0.0
  %4063 = vmatmul.mubr.f32.gmra.mrb[0].mxu0 %v154
  %v4064 = vpop.f32.mrb[0].mxu0
  %v4065 = vadd.f32 0.0, %v4064
  %v4066 = vpop.f32.mrb[0].mxu0
  %4067 = vmatprep.mubr.f32.mxu0 0.0
  %4068 = vmatmul.mubr.f32.gmra.mrb[0].mxu0 %v155
  %v4069 = vpop.f32.mrb[0].mxu0
  %v4070 = vadd.f32 0.0, %v4069
  %v4071 = vpop.f32.mrb[0].mxu0
  %4072 = vmatprep.mubr.f32.mxu0 0.0
  %4073 = vmatmul.mubr.f32.gmra.mrb[0].mxu0 %v156
  %v4074 = vpop.f32.mrb[0].mxu0
  %v4075 = vadd.f32 0.0, %v4074
  %v4076 = vpop.f32.mrb[0].mxu0
  %4077 = vmatprep.mubr.f32.mxu0 0.0
  %4078 = vmatmul.mubr.f32.gmra.mrb[0].mxu0 %v157
  %v4079 = vpop.f32.mrb[0].mxu0
  %v4080 = vadd.f32 0.0, %v4079
  %v4081 = vpop.f32.mrb[0].mxu0
  %4082 = vmatprep.mubr.f32.mxu0 0.0
  %4083 = vmatmul.mubr.f32.gmra.mrb[0].mxu0 %v158
  %v4084 = vpop.f32.mrb[0].mxu0
  %v4085 = vadd.f32 0.0, %v4084
  %v4086 = vpop.f32.mrb[0].mxu0
  %4087 = vmatprep.mubr.f32.mxu0 0.0
  %4088 = vmatmul.mubr.f32.gmra.mrb[0].mxu0 %v159
  %v4089 = vpop.f32.mrb[0].mxu0
  %v4090 = vadd.f32 0.0, %v4089
  %v4091 = vpop.f32.mrb[0].mxu0
  %4092 = vmatprep.mubr.f32.mxu0 0.0
  %4093 = vmatmul.mubr.f32.gmra.mrb[0].mxu0 %v160
  %v4094 = vpop.f32.mrb[0].mxu0
  %v4095 = vadd.f32 0.0, %v4094
  %v4096 = vpop.f32.mrb[0].mxu0
  %4097 = vmatprep.mubr.f32.mxu0 0.0
  %4098 = vmatmul.mubr.f32.gmra.mrb[0].mxu0 %v161
  %v4099 = vpop.f32.mrb[0].mxu0
  %v4100 = vadd.f32 0.0, %v4099
  %v4101 = vpop.f32.mrb[0].mxu0
  %4102 = vmatprep.mubr.f32.mxu0 0.0
  %4103 = vmatmul.mubr.f32.gmra.mrb[0].mxu0 %v162
  %v4104 = vpop.f32.mrb[0].mxu0
  %v4105 = vadd.f32 0.0, %v4104
  %v4106 = vpop.f32.mrb[0].mxu0
  %4107 = vmatprep.mubr.f32.mxu0 0.0
  %4108 = vmatmul.mubr.f32.gmra.mrb[0].mxu0 %v163
  %v4109 = vpop.f32.mrb[0].mxu0
  %v4110 = vadd.f32 0.0, %v4109
  %v4111 = vpop.f32.mrb[0].mxu0
  %4112 = vmatprep.mubr.f32.mxu0 0.0
  %4113 = vmatmul.mubr.f32.gmra.mrb[0].mxu0 %v164
  %v4114 = vpop.f32.mrb[0].mxu0
  %v4115 = vadd.f32 0.0, %v4114
  %v4116 = vpop.f32.mrb[0].mxu0
  %4117 = vmatprep.mubr.f32.mxu0 0.0
  %4118 = vmatmul.mubr.f32.gmra.mrb[0].mxu0 %v165
  %v4119 = vpop.f32.mrb[0].mxu0
  %v4120 = vadd.f32 0.0, %v4119
  %v4121 = vpop.f32.mrb[0].mxu0
  %4122 = vmatprep.mubr.f32.mxu0 0.0
  %4123 = vmatmul.mubr.f32.gmra.mrb[0].mxu0 %v166
  %v4124 = vpop.f32.mrb[0].mxu0
  %v4125 = vadd.f32 0.0, %v4124
  %v4126 = vpop.f32.mrb[0].mxu0
  %4127 = vmatprep.mubr.f32.mxu0 0.0
  %4128 = vmatmul.mubr.f32.gmra.mrb[0].mxu0 %v167
  %v4129 = vpop.f32.mrb[0].mxu0
  %v4130 = vadd.f32 0.0, %v4129
  %v4131 = vpop.f32.mrb[0].mxu0
  %4132 = vmatprep.mubr.f32.mxu0 0.0
  %4133 = vmatmul.mubr.f32.gmra.mrb[0].mxu0 %v168
  %v4134 = vpop.f32.mrb[0].mxu0
  %v4135 = vadd.f32 0.0, %v4134
  %v4136 = vpop.f32.mrb[0].mxu0
  %4137 = vmatprep.mubr.f32.mxu0 0.0
  %4138 = vmatmul.mubr.f32.gmra.mrb[0].mxu0 %v169
  %v4139 = vpop.f32.mrb[0].mxu0
  %v4140 = vadd.f32 0.0, %v4139
  %v4141 = vpop.f32.mrb[0].mxu0
  %4142 = vdwg.mxu0
  %4143 = vmatprep.subr.mxu0 0.0
  %4144 = vmatpush1.msra.mxu0 %v3982
  %4145 = vmatprep.subr.mxu0 0.0
  %4146 = vmatpush1.msra.mxu0 %v3983
  %4147 = vmatprep.subr.mxu0 0.0
  %4148 = vmatpush1.msra.mxu0 %v3984
  %4149 = vmatprep.subr.mxu0 0.0
  %4150 = vmatpush1.msra.mxu0 %v3985
  %4151 = vmatprep.subr.mxu0 0.0
  %4152 = vmatpush1.msra.mxu0 %v3986
  %4153 = vmatprep.subr.mxu0 0.0
  %4154 = vmatpush1.msra.mxu0 %v3987
  %4155 = vmatprep.subr.mxu0 0.0
  %4156 = vmatpush1.msra.mxu0 %v3988
  %4157 = vmatprep.subr.mxu0 0.0
  %4158 = vmatpush1.msra.mxu0 %v3989
  %4159 = vmatprep.subr.mxu0 0.0
  %4160 = vmatpush1.msra.mxu0 %v3990
  %4161 = vmatprep.subr.mxu0 0.0
  %4162 = vmatpush1.msra.mxu0 %v3991
  %4163 = vmatprep.subr.mxu0 0.0
  %4164 = vmatpush1.msra.mxu0 %v3992
  %4165 = vmatprep.subr.mxu0 0.0
  %4166 = vmatpush1.msra.mxu0 %v3993
  %4167 = vmatprep.subr.mxu0 0.0
  %4168 = vmatpush1.msra.mxu0 %v3994
  %4169 = vmatprep.subr.mxu0 0.0
  %4170 = vmatpush1.msra.mxu0 %v3995
  %4171 = vmatprep.subr.mxu0 0.0
  %4172 = vmatpush1.msra.mxu0 %v3996
  %4173 = vmatprep.subr.mxu0 0.0
  %4174 = vmatpush1.msra.mxu0 %v3997
  %4175 = vmatprep.subr.mxu0 0.0
  %4176 = vmatpush1.msra.mxu0 0.0
  %4177 = vmatprep.subr.mxu0 0.0
  %4178 = vmatpush1.msra.mxu0 0.0
  %4179 = vmatprep.subr.mxu0 0.0
  %4180 = vmatpush1.msra.mxu0 0.0
  %4181 = vmatprep.subr.mxu0 0.0
  %4182 = vmatpush1.msra.mxu0 0.0
  %4183 = vmatprep.subr.mxu0 0.0
  %4184 = vmatpush1.msra.mxu0 0.0
  %4185 = vmatprep.subr.mxu0 0.0
  %4186 = vmatpush1.msra.mxu0 0.0
  %4187 = vmatprep.subr.mxu0 0.0
  %4188 = vmatpush1.msra.mxu0 0.0
  %4189 = vmatprep.subr.mxu0 0.0
  %4190 = vmatpush1.msra.mxu0 0.0
  %4191 = vmatprep.subr.mxu0 0.0
  %4192 = vmatpush1.msra.mxu0 0.0
  %4193 = vmatprep.subr.mxu0 0.0
  %4194 = vmatpush1.msra.mxu0 0.0
  %4195 = vmatprep.subr.mxu0 0.0
  %4196 = vmatpush1.msra.mxu0 0.0
  %4197 = vmatprep.subr.mxu0 0.0
  %4198 = vmatpush1.msra.mxu0 0.0
  %4199 = vmatprep.subr.mxu0 0.0
  %4200 = vmatpush1.msra.mxu0 0.0
  %4201 = vmatprep.subr.mxu0 0.0
  %4202 = vmatpush1.msra.mxu0 0.0
  %4203 = vmatprep.subr.mxu0 0.0
  %4204 = vmatpush1.msra.mxu0 0.0
  %4205 = vmatprep.subr.mxu0 0.0
  %4206 = vmatpush1.msra.mxu0 0.0
  %4207 = vmatprep.mubr.f32.mxu0 0.0
  %4208 = vmatmul.mubr.f32.gmra.mrb[0].mxu0 %v170
  %v4209 = vpop.f32.mrb[0].mxu0
  %v4210 = vadd.f32 0.0, %v4209
  %v4211 = vpop.f32.mrb[0].mxu0
  %4212 = vmatprep.mubr.f32.mxu0 0.0
  %4213 = vmatmul.mubr.f32.gmra.mrb[0].mxu0 %v171
  %v4214 = vpop.f32.mrb[0].mxu0
  %v4215 = vadd.f32 0.0, %v4214
  %v4216 = vpop.f32.mrb[0].mxu0
  %4217 = vmatprep.mubr.f32.mxu0 0.0
  %4218 = vmatmul.mubr.f32.gmra.mrb[0].mxu0 %v172
  %v4219 = vpop.f32.mrb[0].mxu0
  %v4220 = vadd.f32 0.0, %v4219
  %v4221 = vpop.f32.mrb[0].mxu0
  %4222 = vmatprep.mubr.f32.mxu0 0.0
  %4223 = vmatmul.mubr.f32.gmra.mrb[0].mxu0 %v173
  %v4224 = vpop.f32.mrb[0].mxu0
  %v4225 = vadd.f32 0.0, %v4224
  %v4226 = vpop.f32.mrb[0].mxu0
  %4227 = vmatprep.mubr.f32.mxu0 0.0
  %4228 = vmatmul.mubr.f32.gmra.mrb[0].mxu0 %v174
  %v4229 = vpop.f32.mrb[0].mxu0
  %v4230 = vadd.f32 0.0, %v4229
  %v4231 = vpop.f32.mrb[0].mxu0
  %4232 = vmatprep.mubr.f32.mxu0 0.0
  %4233 = vmatmul.mubr.f32.gmra.mrb[0].mxu0 %v175
  %v4234 = vpop.f32.mrb[0].mxu0
  %v4235 = vadd.f32 0.0, %v4234
  %v4236 = vpop.f32.mrb[0].mxu0
  %4237 = vmatprep.mubr.f32.mxu0 0.0
  %4238 = vmatmul.mubr.f32.gmra.mrb[0].mxu0 %v176
  %v4239 = vpop.f32.mrb[0].mxu0
  %v4240 = vadd.f32 0.0, %v4239
  %v4241 = vpop.f32.mrb[0].mxu0
  %4242 = vmatprep.mubr.f32.mxu0 0.0
  %4243 = vmatmul.mubr.f32.gmra.mrb[0].mxu0 %v177
  %v4244 = vpop.f32.mrb[0].mxu0
  %v4245 = vadd.f32 0.0, %v4244
  %v4246 = vpop.f32.mrb[0].mxu0
  %4247 = vmatprep.mubr.f32.mxu0 0.0
  %4248 = vmatmul.mubr.f32.gmra.mrb[0].mxu0 %v178
  %v4249 = vpop.f32.mrb[0].mxu0
  %v4250 = vadd.f32 0.0, %v4249
  %v4251 = vpop.f32.mrb[0].mxu0
  %4252 = vmatprep.mubr.f32.mxu0 0.0
  %4253 = vmatmul.mubr.f32.gmra.mrb[0].mxu0 %v179
  %v4254 = vpop.f32.mrb[0].mxu0
  %v4255 = vadd.f32 0.0, %v4254
  %v4256 = vpop.f32.mrb[0].mxu0
  %4257 = vmatprep.mubr.f32.mxu0 0.0
  %4258 = vmatmul.mubr.f32.gmra.mrb[0].mxu0 %v180
  %v4259 = vpop.f32.mrb[0].mxu0
  %v4260 = vadd.f32 0.0, %v4259
  %v4261 = vpop.f32.mrb[0].mxu0
  %4262 = vmatprep.mubr.f32.mxu0 0.0
  %4263 = vmatmul.mubr.f32.gmra.mrb[0].mxu0 %v181
  %v4264 = vpop.f32.mrb[0].mxu0
  %v4265 = vadd.f32 0.0, %v4264
  %v4266 = vpop.f32.mrb[0].mxu0
  %4267 = vmatprep.mubr.f32.mxu0 0.0
  %4268 = vmatmul.mubr.f32.gmra.mrb[0].mxu0 %v182
  %v4269 = vpop.f32.mrb[0].mxu0
  %v4270 = vadd.f32 0.0, %v4269
  %v4271 = vpop.f32.mrb[0].mxu0
  %4272 = vmatprep.mubr.f32.mxu0 0.0
  %4273 = vmatmul.mubr.f32.gmra.mrb[0].mxu0 %v183
  %v4274 = vpop.f32.mrb[0].mxu0
  %v4275 = vadd.f32 0.0, %v4274
  %v4276 = vpop.f32.mrb[0].mxu0
  %4277 = vmatprep.mubr.f32.mxu0 0.0
  %4278 = vmatmul.mubr.f32.gmra.mrb[0].mxu0 %v184
  %v4279 = vpop.f32.mrb[0].mxu0
  %v4280 = vadd.f32 0.0, %v4279
  %v4281 = vpop.f32.mrb[0].mxu0
  %4282 = vmatprep.mubr.f32.mxu0 0.0
  %4283 = vmatmul.mubr.f32.gmra.mrb[0].mxu0 %v185
  %v4284 = vpop.f32.mrb[0].mxu0
  %v4285 = vadd.f32 0.0, %v4284
  %v4286 = vpop.f32.mrb[0].mxu0
  %4287 = vdwg.mxu0
  %4289 = vset.pattern.permute.xlu0 0
  %4290 = vperm.xlu0 %4289, %v3066
  %v4291 = vpop.permute.xlu0 %4290
  %4294 = vset.pattern.permute.xlu0 0
  %4295 = vperm.xlu0 %4294, %v3067
  %v4296 = vpop.permute.xlu0 %4295
  %4299 = vset.pattern.permute.xlu0 0
  %4300 = vperm.xlu0 %4299, %v3068
  %v4301 = vpop.permute.xlu0 %4300
  %4304 = vset.pattern.permute.xlu0 0
  %4305 = vperm.xlu0 %4304, %v3069
  %v4306 = vpop.permute.xlu0 %4305
  %4309 = vset.pattern.permute.xlu0 0
  %4310 = vperm.xlu0 %4309, %v3070
  %v4311 = vpop.permute.xlu0 %4310
  %4314 = vset.pattern.permute.xlu0 0
  %4315 = vperm.xlu0 %4314, %v3071
  %v4316 = vpop.permute.xlu0 %4315
  %4319 = vset.pattern.permute.xlu0 0
  %4320 = vperm.xlu0 %4319, %v3072
  %v4321 = vpop.permute.xlu0 %4320
  %4324 = vset.pattern.permute.xlu0 0
  %4325 = vperm.xlu0 %4324, %v3073
  %v4326 = vpop.permute.xlu0 %4325
  %4329 = vset.pattern.permute.xlu0 0
  %4330 = vperm.xlu0 %4329, %v3074
  %v4331 = vpop.permute.xlu0 %4330
  %4334 = vset.pattern.permute.xlu0 0
  %4335 = vperm.xlu0 %4334, %v3075
  %v4336 = vpop.permute.xlu0 %4335
  %4339 = vset.pattern.permute.xlu0 0
  %4340 = vperm.xlu0 %4339, %v3076
  %v4341 = vpop.permute.xlu0 %4340
  %4344 = vset.pattern.permute.xlu0 0
  %4345 = vperm.xlu0 %4344, %v3077
  %v4346 = vpop.permute.xlu0 %4345
  %4349 = vset.pattern.permute.xlu0 0
  %4350 = vperm.xlu0 %4349, %v3078
  %v4351 = vpop.permute.xlu0 %4350
  %4354 = vset.pattern.permute.xlu0 0
  %4355 = vperm.xlu0 %4354, %v3079
  %v4356 = vpop.permute.xlu0 %4355
  %4359 = vset.pattern.permute.xlu0 0
  %4360 = vperm.xlu0 %4359, %v3080
  %v4361 = vpop.permute.xlu0 %4360
  %4364 = vset.pattern.permute.xlu0 0
  %4365 = vperm.xlu0 %4364, %v3081
  %v4366 = vpop.permute.xlu0 %4365
  %v4368 = vmul.f32 %v4291, %v2185
  %v4369 = vmul.f32 %v4296, %v2185
  %v4370 = vmul.f32 %v4301, %v2185
  %v4371 = vmul.f32 %v4306, %v2185
  %v4372 = vmul.f32 %v4311, %v2185
  %v4373 = vmul.f32 %v4316, %v2185
  %v4374 = vmul.f32 %v4321, %v2185
  %v4375 = vmul.f32 %v4326, %v2185
  %v4376 = vmul.f32 %v4331, %v2185
  %v4377 = vmul.f32 %v4336, %v2185
  %v4378 = vmul.f32 %v4341, %v2185
  %v4379 = vmul.f32 %v4346, %v2185
  %v4380 = vmul.f32 %v4351, %v2185
  %v4381 = vmul.f32 %v4356, %v2185
  %v4382 = vmul.f32 %v4361, %v2185
  %v4383 = vmul.f32 %v4366, %v2185
  %v4385 = vsel %vm190, %v4065, 0
  %v4388 = vsel %vm190, %v4070, 0
  %v4391 = vsel %vm190, %v4075, 0
  %v4394 = vsel %vm190, %v4080, 0
  %v4397 = vsel %vm190, %v4085, 0
  %v4400 = vsel %vm190, %v4090, 0
  %v4403 = vsel %vm190, %v4095, 0
  %v4406 = vsel %vm190, %v4100, 0
  %v4409 = vsel %vm190, %v4105, 0
  %v4412 = vsel %vm190, %v4110, 0
  %v4415 = vsel %vm190, %v4115, 0
  %v4418 = vsel %vm190, %v4120, 0
  %v4421 = vsel %vm190, %v4125, 0
  %v4424 = vsel %vm190, %v4130, 0
  %v4427 = vsel %vm190, %v4135, 0
  %v4430 = vsel %vm190, %v4140, 0
  %4432 = vmatprep.subr.mxu0 0.0
  %4433 = vmatpush1.msra.mxu0 %v65
  %4434 = vmatprep.subr.mxu0 0.0
  %4435 = vmatpush1.msra.mxu0 0.0
  %4436 = vmatprep.subr.mxu0 0.0
  %4437 = vmatpush1.msra.mxu0 0.0
  %4438 = vmatprep.subr.mxu0 0.0
  %4439 = vmatpush1.msra.mxu0 0.0
  %4440 = vmatprep.subr.mxu0 0.0
  %4441 = vmatpush1.msra.mxu0 0.0
  %4442 = vmatprep.subr.mxu0 0.0
  %4443 = vmatpush1.msra.mxu0 0.0
  %4444 = vmatprep.subr.mxu0 0.0
  %4445 = vmatpush1.msra.mxu0 0.0
  %4446 = vmatprep.subr.mxu0 0.0
  %4447 = vmatpush1.msra.mxu0 0.0
  %4448 = vmatprep.subr.mxu0 0.0
  %4449 = vmatpush1.msra.mxu0 0.0
  %4450 = vmatprep.subr.mxu0 0.0
  %4451 = vmatpush1.msra.mxu0 0.0
  %4452 = vmatprep.subr.mxu0 0.0
  %4453 = vmatpush1.msra.mxu0 0.0
  %4454 = vmatprep.subr.mxu0 0.0
  %4455 = vmatpush1.msra.mxu0 0.0
  %4456 = vmatprep.subr.mxu0 0.0
  %4457 = vmatpush1.msra.mxu0 0.0
  %4458 = vmatprep.subr.mxu0 0.0
  %4459 = vmatpush1.msra.mxu0 0.0
  %4460 = vmatprep.subr.mxu0 0.0
  %4461 = vmatpush1.msra.mxu0 0.0
  %4462 = vmatprep.subr.mxu0 0.0
  %4463 = vmatpush1.msra.mxu0 0.0
  %4464 = vmatprep.subr.mxu0 0.0
  %4465 = vmatpush1.msra.mxu0 0.0
  %4466 = vmatprep.subr.mxu0 0.0
  %4467 = vmatpush1.msra.mxu0 0.0
  %4468 = vmatprep.subr.mxu0 0.0
  %4469 = vmatpush1.msra.mxu0 0.0
  %4470 = vmatprep.subr.mxu0 0.0
  %4471 = vmatpush1.msra.mxu0 0.0
  %4472 = vmatprep.subr.mxu0 0.0
  %4473 = vmatpush1.msra.mxu0 0.0
  %4474 = vmatprep.subr.mxu0 0.0
  %4475 = vmatpush1.msra.mxu0 0.0
  %4476 = vmatprep.subr.mxu0 0.0
  %4477 = vmatpush1.msra.mxu0 0.0
  %4478 = vmatprep.subr.mxu0 0.0
  %4479 = vmatpush1.msra.mxu0 0.0
  %4480 = vmatprep.subr.mxu0 0.0
  %4481 = vmatpush1.msra.mxu0 0.0
  %4482 = vmatprep.subr.mxu0 0.0
  %4483 = vmatpush1.msra.mxu0 0.0
  %4484 = vmatprep.subr.mxu0 0.0
  %4485 = vmatpush1.msra.mxu0 0.0
  %4486 = vmatprep.subr.mxu0 0.0
  %4487 = vmatpush1.msra.mxu0 0.0
  %4488 = vmatprep.subr.mxu0 0.0
  %4489 = vmatpush1.msra.mxu0 0.0
  %4490 = vmatprep.subr.mxu0 0.0
  %4491 = vmatpush1.msra.mxu0 0.0
  %4492 = vmatprep.subr.mxu0 0.0
  %4493 = vmatpush1.msra.mxu0 0.0
  %4494 = vmatprep.subr.mxu0 0.0
  %4495 = vmatpush1.msra.mxu0 0.0
  %4496 = vmatprep.mubr.f32.mxu0 0.0
  %4497 = vmatmul.mubr.f32.gmra.mrb[0].mxu0 %v4385
  %v4498 = vpop.f32.mrb[0].mxu0
  %v4499 = vadd.f32 0.0, %v4498
  %v4500 = vpop.f32.mrb[0].mxu0
  %4501 = vmatprep.mubr.f32.mxu0 0.0
  %4502 = vmatmul.mubr.f32.gmra.mrb[0].mxu0 %v4388
  %v4503 = vpop.f32.mrb[0].mxu0
  %v4504 = vadd.f32 0.0, %v4503
  %v4505 = vpop.f32.mrb[0].mxu0
  %4506 = vmatprep.mubr.f32.mxu0 0.0
  %4507 = vmatmul.mubr.f32.gmra.mrb[0].mxu0 %v4391
  %v4508 = vpop.f32.mrb[0].mxu0
  %v4509 = vadd.f32 0.0, %v4508
  %v4510 = vpop.f32.mrb[0].mxu0
  %4511 = vmatprep.mubr.f32.mxu0 0.0
  %4512 = vmatmul.mubr.f32.gmra.mrb[0].mxu0 %v4394
  %v4513 = vpop.f32.mrb[0].mxu0
  %v4514 = vadd.f32 0.0, %v4513
  %v4515 = vpop.f32.mrb[0].mxu0
  %4516 = vmatprep.mubr.f32.mxu0 0.0
  %4517 = vmatmul.mubr.f32.gmra.mrb[0].mxu0 %v4397
  %v4518 = vpop.f32.mrb[0].mxu0
  %v4519 = vadd.f32 0.0, %v4518
  %v4520 = vpop.f32.mrb[0].mxu0
  %4521 = vmatprep.mubr.f32.mxu0 0.0
  %4522 = vmatmul.mubr.f32.gmra.mrb[0].mxu0 %v4400
  %v4523 = vpop.f32.mrb[0].mxu0
  %v4524 = vadd.f32 0.0, %v4523
  %v4525 = vpop.f32.mrb[0].mxu0
  %4526 = vmatprep.mubr.f32.mxu0 0.0
  %4527 = vmatmul.mubr.f32.gmra.mrb[0].mxu0 %v4403
  %v4528 = vpop.f32.mrb[0].mxu0
  %v4529 = vadd.f32 0.0, %v4528
  %v4530 = vpop.f32.mrb[0].mxu0
  %4531 = vmatprep.mubr.f32.mxu0 0.0
  %4532 = vmatmul.mubr.f32.gmra.mrb[0].mxu0 %v4406
  %v4533 = vpop.f32.mrb[0].mxu0
  %v4534 = vadd.f32 0.0, %v4533
  %v4535 = vpop.f32.mrb[0].mxu0
  %4536 = vmatprep.mubr.f32.mxu0 0.0
  %4537 = vmatmul.mubr.f32.gmra.mrb[0].mxu0 %v4409
  %v4538 = vpop.f32.mrb[0].mxu0
  %v4539 = vadd.f32 0.0, %v4538
  %v4540 = vpop.f32.mrb[0].mxu0
  %4541 = vmatprep.mubr.f32.mxu0 0.0
  %4542 = vmatmul.mubr.f32.gmra.mrb[0].mxu0 %v4412
  %v4543 = vpop.f32.mrb[0].mxu0
  %v4544 = vadd.f32 0.0, %v4543
  %v4545 = vpop.f32.mrb[0].mxu0
  %4546 = vmatprep.mubr.f32.mxu0 0.0
  %4547 = vmatmul.mubr.f32.gmra.mrb[0].mxu0 %v4415
  %v4548 = vpop.f32.mrb[0].mxu0
  %v4549 = vadd.f32 0.0, %v4548
  %v4550 = vpop.f32.mrb[0].mxu0
  %4551 = vmatprep.mubr.f32.mxu0 0.0
  %4552 = vmatmul.mubr.f32.gmra.mrb[0].mxu0 %v4418
  %v4553 = vpop.f32.mrb[0].mxu0
  %v4554 = vadd.f32 0.0, %v4553
  %v4555 = vpop.f32.mrb[0].mxu0
  %4556 = vmatprep.mubr.f32.mxu0 0.0
  %4557 = vmatmul.mubr.f32.gmra.mrb[0].mxu0 %v4421
  %v4558 = vpop.f32.mrb[0].mxu0
  %v4559 = vadd.f32 0.0, %v4558
  %v4560 = vpop.f32.mrb[0].mxu0
  %4561 = vmatprep.mubr.f32.mxu0 0.0
  %4562 = vmatmul.mubr.f32.gmra.mrb[0].mxu0 %v4424
  %v4563 = vpop.f32.mrb[0].mxu0
  %v4564 = vadd.f32 0.0, %v4563
  %v4565 = vpop.f32.mrb[0].mxu0
  %4566 = vmatprep.mubr.f32.mxu0 0.0
  %4567 = vmatmul.mubr.f32.gmra.mrb[0].mxu0 %v4427
  %v4568 = vpop.f32.mrb[0].mxu0
  %v4569 = vadd.f32 0.0, %v4568
  %v4570 = vpop.f32.mrb[0].mxu0
  %4571 = vmatprep.mubr.f32.mxu0 0.0
  %4572 = vmatmul.mubr.f32.gmra.mrb[0].mxu0 %v4430
  %v4573 = vpop.f32.mrb[0].mxu0
  %v4574 = vadd.f32 0.0, %v4573
  %v4575 = vpop.f32.mrb[0].mxu0
  %4576 = vdwg.mxu0
  %v4577 = vadd.f32 %v4368, %v4499
  %v4578 = vadd.f32 %v4369, %v4504
  %v4579 = vadd.f32 %v4370, %v4509
  %v4580 = vadd.f32 %v4371, %v4514
  %v4581 = vadd.f32 %v4372, %v4519
  %v4582 = vadd.f32 %v4373, %v4524
  %v4583 = vadd.f32 %v4374, %v4529
  %v4584 = vadd.f32 %v4375, %v4534
  %v4585 = vadd.f32 %v4376, %v4539
  %v4586 = vadd.f32 %v4377, %v4544
  %v4587 = vadd.f32 %v4378, %v4549
  %v4588 = vadd.f32 %v4379, %v4554
  %v4589 = vadd.f32 %v4380, %v4559
  %v4590 = vadd.f32 %v4381, %v4564
  %v4591 = vadd.f32 %v4382, %v4569
  %v4592 = vadd.f32 %v4383, %v4574
  %v4594 = vsel %vm190, %v4210, 0
  %v4597 = vsel %vm190, %v4215, 0
  %v4600 = vsel %vm190, %v4220, 0
  %v4603 = vsel %vm190, %v4225, 0
  %v4606 = vsel %vm190, %v4230, 0
  %v4609 = vsel %vm190, %v4235, 0
  %v4612 = vsel %vm190, %v4240, 0
  %v4615 = vsel %vm190, %v4245, 0
  %v4618 = vsel %vm190, %v4250, 0
  %v4621 = vsel %vm190, %v4255, 0
  %v4624 = vsel %vm190, %v4260, 0
  %v4627 = vsel %vm190, %v4265, 0
  %v4630 = vsel %vm190, %v4270, 0
  %v4633 = vsel %vm190, %v4275, 0
  %v4636 = vsel %vm190, %v4280, 0
  %v4639 = vsel %vm190, %v4285, 0
  %4641 = vmatprep.subr.mxu0 0.0
  %4642 = vmatpush1.msra.mxu0 %v66
  %4643 = vmatprep.subr.mxu0 0.0
  %4644 = vmatpush1.msra.mxu0 0.0
  %4645 = vmatprep.subr.mxu0 0.0
  %4646 = vmatpush1.msra.mxu0 0.0
  %4647 = vmatprep.subr.mxu0 0.0
  %4648 = vmatpush1.msra.mxu0 0.0
  %4649 = vmatprep.subr.mxu0 0.0
  %4650 = vmatpush1.msra.mxu0 0.0
  %4651 = vmatprep.subr.mxu0 0.0
  %4652 = vmatpush1.msra.mxu0 0.0
  %4653 = vmatprep.subr.mxu0 0.0
  %4654 = vmatpush1.msra.mxu0 0.0
  %4655 = vmatprep.subr.mxu0 0.0
  %4656 = vmatpush1.msra.mxu0 0.0
  %4657 = vmatprep.subr.mxu0 0.0
  %4658 = vmatpush1.msra.mxu0 0.0
  %4659 = vmatprep.subr.mxu0 0.0
  %4660 = vmatpush1.msra.mxu0 0.0
  %4661 = vmatprep.subr.mxu0 0.0
  %4662 = vmatpush1.msra.mxu0 0.0
  %4663 = vmatprep.subr.mxu0 0.0
  %4664 = vmatpush1.msra.mxu0 0.0
  %4665 = vmatprep.subr.mxu0 0.0
  %4666 = vmatpush1.msra.mxu0 0.0
  %4667 = vmatprep.subr.mxu0 0.0
  %4668 = vmatpush1.msra.mxu0 0.0
  %4669 = vmatprep.subr.mxu0 0.0
  %4670 = vmatpush1.msra.mxu0 0.0
  %4671 = vmatprep.subr.mxu0 0.0
  %4672 = vmatpush1.msra.mxu0 0.0
  %4673 = vmatprep.subr.mxu0 0.0
  %4674 = vmatpush1.msra.mxu0 0.0
  %4675 = vmatprep.subr.mxu0 0.0
  %4676 = vmatpush1.msra.mxu0 0.0
  %4677 = vmatprep.subr.mxu0 0.0
  %4678 = vmatpush1.msra.mxu0 0.0
  %4679 = vmatprep.subr.mxu0 0.0
  %4680 = vmatpush1.msra.mxu0 0.0
  %4681 = vmatprep.subr.mxu0 0.0
  %4682 = vmatpush1.msra.mxu0 0.0
  %4683 = vmatprep.subr.mxu0 0.0
  %4684 = vmatpush1.msra.mxu0 0.0
  %4685 = vmatprep.subr.mxu0 0.0
  %4686 = vmatpush1.msra.mxu0 0.0
  %4687 = vmatprep.subr.mxu0 0.0
  %4688 = vmatpush1.msra.mxu0 0.0
  %4689 = vmatprep.subr.mxu0 0.0
  %4690 = vmatpush1.msra.mxu0 0.0
  %4691 = vmatprep.subr.mxu0 0.0
  %4692 = vmatpush1.msra.mxu0 0.0
  %4693 = vmatprep.subr.mxu0 0.0
  %4694 = vmatpush1.msra.mxu0 0.0
  %4695 = vmatprep.subr.mxu0 0.0
  %4696 = vmatpush1.msra.mxu0 0.0
  %4697 = vmatprep.subr.mxu0 0.0
  %4698 = vmatpush1.msra.mxu0 0.0
  %4699 = vmatprep.subr.mxu0 0.0
  %4700 = vmatpush1.msra.mxu0 0.0
  %4701 = vmatprep.subr.mxu0 0.0
  %4702 = vmatpush1.msra.mxu0 0.0
  %4703 = vmatprep.subr.mxu0 0.0
  %4704 = vmatpush1.msra.mxu0 0.0
  %4705 = vmatprep.mubr.f32.mxu0 0.0
  %4706 = vmatmul.mubr.f32.gmra.mrb[0].mxu0 %v4594
  %v4707 = vpop.f32.mrb[0].mxu0
  %v4708 = vadd.f32 0.0, %v4707
  %v4709 = vpop.f32.mrb[0].mxu0
  %4710 = vmatprep.mubr.f32.mxu0 0.0
  %4711 = vmatmul.mubr.f32.gmra.mrb[0].mxu0 %v4597
  %v4712 = vpop.f32.mrb[0].mxu0
  %v4713 = vadd.f32 0.0, %v4712
  %v4714 = vpop.f32.mrb[0].mxu0
  %4715 = vmatprep.mubr.f32.mxu0 0.0
  %4716 = vmatmul.mubr.f32.gmra.mrb[0].mxu0 %v4600
  %v4717 = vpop.f32.mrb[0].mxu0
  %v4718 = vadd.f32 0.0, %v4717
  %v4719 = vpop.f32.mrb[0].mxu0
  %4720 = vmatprep.mubr.f32.mxu0 0.0
  %4721 = vmatmul.mubr.f32.gmra.mrb[0].mxu0 %v4603
  %v4722 = vpop.f32.mrb[0].mxu0
  %v4723 = vadd.f32 0.0, %v4722
  %v4724 = vpop.f32.mrb[0].mxu0
  %4725 = vmatprep.mubr.f32.mxu0 0.0
  %4726 = vmatmul.mubr.f32.gmra.mrb[0].mxu0 %v4606
  %v4727 = vpop.f32.mrb[0].mxu0
  %v4728 = vadd.f32 0.0, %v4727
  %v4729 = vpop.f32.mrb[0].mxu0
  %4730 = vmatprep.mubr.f32.mxu0 0.0
  %4731 = vmatmul.mubr.f32.gmra.mrb[0].mxu0 %v4609
  %v4732 = vpop.f32.mrb[0].mxu0
  %v4733 = vadd.f32 0.0, %v4732
  %v4734 = vpop.f32.mrb[0].mxu0
  %4735 = vmatprep.mubr.f32.mxu0 0.0
  %4736 = vmatmul.mubr.f32.gmra.mrb[0].mxu0 %v4612
  %v4737 = vpop.f32.mrb[0].mxu0
  %v4738 = vadd.f32 0.0, %v4737
  %v4739 = vpop.f32.mrb[0].mxu0
  %4740 = vmatprep.mubr.f32.mxu0 0.0
  %4741 = vmatmul.mubr.f32.gmra.mrb[0].mxu0 %v4615
  %v4742 = vpop.f32.mrb[0].mxu0
  %v4743 = vadd.f32 0.0, %v4742
  %v4744 = vpop.f32.mrb[0].mxu0
  %4745 = vmatprep.mubr.f32.mxu0 0.0
  %4746 = vmatmul.mubr.f32.gmra.mrb[0].mxu0 %v4618
  %v4747 = vpop.f32.mrb[0].mxu0
  %v4748 = vadd.f32 0.0, %v4747
  %v4749 = vpop.f32.mrb[0].mxu0
  %4750 = vmatprep.mubr.f32.mxu0 0.0
  %4751 = vmatmul.mubr.f32.gmra.mrb[0].mxu0 %v4621
  %v4752 = vpop.f32.mrb[0].mxu0
  %v4753 = vadd.f32 0.0, %v4752
  %v4754 = vpop.f32.mrb[0].mxu0
  %4755 = vmatprep.mubr.f32.mxu0 0.0
  %4756 = vmatmul.mubr.f32.gmra.mrb[0].mxu0 %v4624
  %v4757 = vpop.f32.mrb[0].mxu0
  %v4758 = vadd.f32 0.0, %v4757
  %v4759 = vpop.f32.mrb[0].mxu0
  %4760 = vmatprep.mubr.f32.mxu0 0.0
  %4761 = vmatmul.mubr.f32.gmra.mrb[0].mxu0 %v4627
  %v4762 = vpop.f32.mrb[0].mxu0
  %v4763 = vadd.f32 0.0, %v4762
  %v4764 = vpop.f32.mrb[0].mxu0
  %4765 = vmatprep.mubr.f32.mxu0 0.0
  %4766 = vmatmul.mubr.f32.gmra.mrb[0].mxu0 %v4630
  %v4767 = vpop.f32.mrb[0].mxu0
  %v4768 = vadd.f32 0.0, %v4767
  %v4769 = vpop.f32.mrb[0].mxu0
  %4770 = vmatprep.mubr.f32.mxu0 0.0
  %4771 = vmatmul.mubr.f32.gmra.mrb[0].mxu0 %v4633
  %v4772 = vpop.f32.mrb[0].mxu0
  %v4773 = vadd.f32 0.0, %v4772
  %v4774 = vpop.f32.mrb[0].mxu0
  %4775 = vmatprep.mubr.f32.mxu0 0.0
  %4776 = vmatmul.mubr.f32.gmra.mrb[0].mxu0 %v4636
  %v4777 = vpop.f32.mrb[0].mxu0
  %v4778 = vadd.f32 0.0, %v4777
  %v4779 = vpop.f32.mrb[0].mxu0
  %4780 = vmatprep.mubr.f32.mxu0 0.0
  %4781 = vmatmul.mubr.f32.gmra.mrb[0].mxu0 %v4639
  %v4782 = vpop.f32.mrb[0].mxu0
  %v4783 = vadd.f32 0.0, %v4782
  %v4784 = vpop.f32.mrb[0].mxu0
  %4785 = vdwg.mxu0
  %v4786 = vadd.f32 %v4577, %v4708
  %v4787 = vadd.f32 %v4578, %v4713
  %v4788 = vadd.f32 %v4579, %v4718
  %v4789 = vadd.f32 %v4580, %v4723
  %v4790 = vadd.f32 %v4581, %v4728
  %v4791 = vadd.f32 %v4582, %v4733
  %v4792 = vadd.f32 %v4583, %v4738
  %v4793 = vadd.f32 %v4584, %v4743
  %v4794 = vadd.f32 %v4585, %v4748
  %v4795 = vadd.f32 %v4586, %v4753
  %v4796 = vadd.f32 %v4587, %v4758
  %v4797 = vadd.f32 %v4588, %v4763
  %v4798 = vadd.f32 %v4589, %v4768
  %v4799 = vadd.f32 %v4590, %v4773
  %v4800 = vadd.f32 %v4591, %v4778
  %v4801 = vadd.f32 %v4592, %v4783
  %v4802 = vadd.f32 %v4786, %v2623
  %v4803 = vadd.f32 %v4787, %v2623
  %v4804 = vadd.f32 %v4788, %v2623
  %v4805 = vadd.f32 %v4789, %v2623
  %v4806 = vadd.f32 %v4790, %v2623
  %v4807 = vadd.f32 %v4791, %v2623
  %v4808 = vadd.f32 %v4792, %v2623
  %v4809 = vadd.f32 %v4793, %v2623
  %v4810 = vadd.f32 %v4794, %v2623
  %v4811 = vadd.f32 %v4795, %v2623
  %v4812 = vadd.f32 %v4796, %v2623
  %v4813 = vadd.f32 %v4797, %v2623
  %v4814 = vadd.f32 %v4798, %v2623
  %v4815 = vadd.f32 %v4799, %v2623
  %v4816 = vadd.f32 %v4800, %v2623
  %v4817 = vadd.f32 %v4801, %v2623
  %v4818 = vmax.f32 %v4802, 0.0
  %v4819 = vmax.f32 %v4803, 0.0
  %v4820 = vmax.f32 %v4804, 0.0
  %v4821 = vmax.f32 %v4805, 0.0
  %v4822 = vmax.f32 %v4806, 0.0
  %v4823 = vmax.f32 %v4807, 0.0
  %v4824 = vmax.f32 %v4808, 0.0
  %v4825 = vmax.f32 %v4809, 0.0
  %v4826 = vmax.f32 %v4810, 0.0
  %v4827 = vmax.f32 %v4811, 0.0
  %v4828 = vmax.f32 %v4812, 0.0
  %v4829 = vmax.f32 %v4813, 0.0
  %v4830 = vmax.f32 %v4814, 0.0
  %v4831 = vmax.f32 %v4815, 0.0
  %v4832 = vmax.f32 %v4816, 0.0
  %v4833 = vmax.f32 %v4817, 0.0
  %v4835 = vsel %vm404, %v4818, 0
  %v4838 = vsel %vm404, %v4819, 0
  %v4841 = vsel %vm404, %v4820, 0
  %v4844 = vsel %vm404, %v4821, 0
  %v4847 = vsel %vm404, %v4822, 0
  %v4850 = vsel %vm404, %v4823, 0
  %v4853 = vsel %vm404, %v4824, 0
  %v4856 = vsel %vm404, %v4825, 0
  %v4859 = vsel %vm404, %v4826, 0
  %v4862 = vsel %vm404, %v4827, 0
  %v4865 = vsel %vm404, %v4828, 0
  %v4868 = vsel %vm404, %v4829, 0
  %v4871 = vsel %vm404, %v4830, 0
  %v4874 = vsel %vm404, %v4831, 0
  %v4877 = vsel %vm404, %v4832, 0
  %v4880 = vsel %vm404, %v4833, 0
  %4882 = vmatprep.subr.mxu0 0.0
  %4883 = vmatpush1.msra.mxu0 %v68
  %4884 = vmatprep.subr.mxu0 0.0
  %4885 = vmatpush1.msra.mxu0 %v69
  %4886 = vmatprep.subr.mxu0 0.0
  %4887 = vmatpush1.msra.mxu0 %v70
  %4888 = vmatprep.subr.mxu0 0.0
  %4889 = vmatpush1.msra.mxu0 %v71
  %4890 = vmatprep.subr.mxu0 0.0
  %4891 = vmatpush1.msra.mxu0 %v72
  %4892 = vmatprep.subr.mxu0 0.0
  %4893 = vmatpush1.msra.mxu0 %v73
  %4894 = vmatprep.subr.mxu0 0.0
  %4895 = vmatpush1.msra.mxu0 %v74
  %4896 = vmatprep.subr.mxu0 0.0
  %4897 = vmatpush1.msra.mxu0 %v75
  %4898 = vmatprep.subr.mxu0 0.0
  %4899 = vmatpush1.msra.mxu0 0.0
  %4900 = vmatprep.subr.mxu0 0.0
  %4901 = vmatpush1.msra.mxu0 0.0
  %4902 = vmatprep.subr.mxu0 0.0
  %4903 = vmatpush1.msra.mxu0 0.0
  %4904 = vmatprep.subr.mxu0 0.0
  %4905 = vmatpush1.msra.mxu0 0.0
  %4906 = vmatprep.subr.mxu0 0.0
  %4907 = vmatpush1.msra.mxu0 0.0
  %4908 = vmatprep.subr.mxu0 0.0
  %4909 = vmatpush1.msra.mxu0 0.0
  %4910 = vmatprep.subr.mxu0 0.0
  %4911 = vmatpush1.msra.mxu0 0.0
  %4912 = vmatprep.subr.mxu0 0.0
  %4913 = vmatpush1.msra.mxu0 0.0
  %4914 = vmatprep.subr.mxu0 0.0
  %4915 = vmatpush1.msra.mxu0 0.0
  %4916 = vmatprep.subr.mxu0 0.0
  %4917 = vmatpush1.msra.mxu0 0.0
  %4918 = vmatprep.subr.mxu0 0.0
  %4919 = vmatpush1.msra.mxu0 0.0
  %4920 = vmatprep.subr.mxu0 0.0
  %4921 = vmatpush1.msra.mxu0 0.0
  %4922 = vmatprep.subr.mxu0 0.0
  %4923 = vmatpush1.msra.mxu0 0.0
  %4924 = vmatprep.subr.mxu0 0.0
  %4925 = vmatpush1.msra.mxu0 0.0
  %4926 = vmatprep.subr.mxu0 0.0
  %4927 = vmatpush1.msra.mxu0 0.0
  %4928 = vmatprep.subr.mxu0 0.0
  %4929 = vmatpush1.msra.mxu0 0.0
  %4930 = vmatprep.subr.mxu0 0.0
  %4931 = vmatpush1.msra.mxu0 0.0
  %4932 = vmatprep.subr.mxu0 0.0
  %4933 = vmatpush1.msra.mxu0 0.0
  %4934 = vmatprep.subr.mxu0 0.0
  %4935 = vmatpush1.msra.mxu0 0.0
  %4936 = vmatprep.subr.mxu0 0.0
  %4937 = vmatpush1.msra.mxu0 0.0
  %4938 = vmatprep.subr.mxu0 0.0
  %4939 = vmatpush1.msra.mxu0 0.0
  %4940 = vmatprep.subr.mxu0 0.0
  %4941 = vmatpush1.msra.mxu0 0.0
  %4942 = vmatprep.subr.mxu0 0.0
  %4943 = vmatpush1.msra.mxu0 0.0
  %4944 = vmatprep.subr.mxu0 0.0
  %4945 = vmatpush1.msra.mxu0 0.0
  %4946 = vmatprep.mubr.f32.mxu0 0.0
  %4947 = vmatmul.mubr.f32.gmra.mrb[0].mxu0 %v4835
  %v4948 = vpop.f32.mrb[0].mxu0
  %v4949 = vadd.f32 %v2659, %v4948
  %v4950 = vpop.f32.mrb[0].mxu0
  %4951 = vmatprep.mubr.f32.mxu0 0.0
  %4952 = vmatmul.mubr.f32.gmra.mrb[0].mxu0 %v4838
  %v4953 = vpop.f32.mrb[0].mxu0
  %v4954 = vadd.f32 %v2659, %v4953
  %v4955 = vpop.f32.mrb[0].mxu0
  %4956 = vmatprep.mubr.f32.mxu0 0.0
  %4957 = vmatmul.mubr.f32.gmra.mrb[0].mxu0 %v4841
  %v4958 = vpop.f32.mrb[0].mxu0
  %v4959 = vadd.f32 %v2659, %v4958
  %v4960 = vpop.f32.mrb[0].mxu0
  %4961 = vmatprep.mubr.f32.mxu0 0.0
  %4962 = vmatmul.mubr.f32.gmra.mrb[0].mxu0 %v4844
  %v4963 = vpop.f32.mrb[0].mxu0
  %v4964 = vadd.f32 %v2659, %v4963
  %v4965 = vpop.f32.mrb[0].mxu0
  %4966 = vmatprep.mubr.f32.mxu0 0.0
  %4967 = vmatmul.mubr.f32.gmra.mrb[0].mxu0 %v4847
  %v4968 = vpop.f32.mrb[0].mxu0
  %v4969 = vadd.f32 %v2659, %v4968
  %v4970 = vpop.f32.mrb[0].mxu0
  %4971 = vmatprep.mubr.f32.mxu0 0.0
  %4972 = vmatmul.mubr.f32.gmra.mrb[0].mxu0 %v4850
  %v4973 = vpop.f32.mrb[0].mxu0
  %v4974 = vadd.f32 %v2659, %v4973
  %v4975 = vpop.f32.mrb[0].mxu0
  %4976 = vmatprep.mubr.f32.mxu0 0.0
  %4977 = vmatmul.mubr.f32.gmra.mrb[0].mxu0 %v4853
  %v4978 = vpop.f32.mrb[0].mxu0
  %v4979 = vadd.f32 %v2659, %v4978
  %v4980 = vpop.f32.mrb[0].mxu0
  %4981 = vmatprep.mubr.f32.mxu0 0.0
  %4982 = vmatmul.mubr.f32.gmra.mrb[0].mxu0 %v4856
  %v4983 = vpop.f32.mrb[0].mxu0
  %v4984 = vadd.f32 %v2659, %v4983
  %v4985 = vpop.f32.mrb[0].mxu0
  %4986 = vmatprep.mubr.f32.mxu0 0.0
  %4987 = vmatmul.mubr.f32.gmra.mrb[0].mxu0 %v4859
  %v4988 = vpop.f32.mrb[0].mxu0
  %v4989 = vadd.f32 %v2659, %v4988
  %v4990 = vpop.f32.mrb[0].mxu0
  %4991 = vmatprep.mubr.f32.mxu0 0.0
  %4992 = vmatmul.mubr.f32.gmra.mrb[0].mxu0 %v4862
  %v4993 = vpop.f32.mrb[0].mxu0
  %v4994 = vadd.f32 %v2659, %v4993
  %v4995 = vpop.f32.mrb[0].mxu0
  %4996 = vmatprep.mubr.f32.mxu0 0.0
  %4997 = vmatmul.mubr.f32.gmra.mrb[0].mxu0 %v4865
  %v4998 = vpop.f32.mrb[0].mxu0
  %v4999 = vadd.f32 %v2659, %v4998
  %v5000 = vpop.f32.mrb[0].mxu0
  %5001 = vmatprep.mubr.f32.mxu0 0.0
  %5002 = vmatmul.mubr.f32.gmra.mrb[0].mxu0 %v4868
  %v5003 = vpop.f32.mrb[0].mxu0
  %v5004 = vadd.f32 %v2659, %v5003
  %v5005 = vpop.f32.mrb[0].mxu0
  %5006 = vmatprep.mubr.f32.mxu0 0.0
  %5007 = vmatmul.mubr.f32.gmra.mrb[0].mxu0 %v4871
  %v5008 = vpop.f32.mrb[0].mxu0
  %v5009 = vadd.f32 %v2659, %v5008
  %v5010 = vpop.f32.mrb[0].mxu0
  %5011 = vmatprep.mubr.f32.mxu0 0.0
  %5012 = vmatmul.mubr.f32.gmra.mrb[0].mxu0 %v4874
  %v5013 = vpop.f32.mrb[0].mxu0
  %v5014 = vadd.f32 %v2659, %v5013
  %v5015 = vpop.f32.mrb[0].mxu0
  %5016 = vmatprep.mubr.f32.mxu0 0.0
  %5017 = vmatmul.mubr.f32.gmra.mrb[0].mxu0 %v4877
  %v5018 = vpop.f32.mrb[0].mxu0
  %v5019 = vadd.f32 %v2659, %v5018
  %v5020 = vpop.f32.mrb[0].mxu0
  %5021 = vmatprep.mubr.f32.mxu0 0.0
  %5022 = vmatmul.mubr.f32.gmra.mrb[0].mxu0 %v4880
  %v5023 = vpop.f32.mrb[0].mxu0
  %v5024 = vadd.f32 %v2659, %v5023
  %v5025 = vpop.f32.mrb[0].mxu0
  %5026 = vdwg.mxu0
  %v5027 = vmax.f32 %v4949, 0.0
  %v5028 = vmax.f32 %v4954, 0.0
  %v5029 = vmax.f32 %v4959, 0.0
  %v5030 = vmax.f32 %v4964, 0.0
  %v5031 = vmax.f32 %v4969, 0.0
  %v5032 = vmax.f32 %v4974, 0.0
  %v5033 = vmax.f32 %v4979, 0.0
  %v5034 = vmax.f32 %v4984, 0.0
  %v5035 = vmax.f32 %v4989, 0.0
  %v5036 = vmax.f32 %v4994, 0.0
  %v5037 = vmax.f32 %v4999, 0.0
  %v5038 = vmax.f32 %v5004, 0.0
  %v5039 = vmax.f32 %v5009, 0.0
  %v5040 = vmax.f32 %v5014, 0.0
  %v5041 = vmax.f32 %v5019, 0.0
  %v5042 = vmax.f32 %v5024, 0.0
  %v5044 = vsel %vm404, %v5027, 0
  %v5047 = vsel %vm404, %v5028, 0
  %v5050 = vsel %vm404, %v5029, 0
  %v5053 = vsel %vm404, %v5030, 0
  %v5056 = vsel %vm404, %v5031, 0
  %v5059 = vsel %vm404, %v5032, 0
  %v5062 = vsel %vm404, %v5033, 0
  %v5065 = vsel %vm404, %v5034, 0
  %v5068 = vsel %vm404, %v5035, 0
  %v5071 = vsel %vm404, %v5036, 0
  %v5074 = vsel %vm404, %v5037, 0
  %v5077 = vsel %vm404, %v5038, 0
  %v5080 = vsel %vm404, %v5039, 0
  %v5083 = vsel %vm404, %v5040, 0
  %v5086 = vsel %vm404, %v5041, 0
  %v5089 = vsel %vm404, %v5042, 0
  %5091 = vmatprep.subr.mxu0 0.0
  %5092 = vmatpush1.msra.mxu0 %v77
  %5093 = vmatprep.subr.mxu0 0.0
  %5094 = vmatpush1.msra.mxu0 %v78
  %5095 = vmatprep.subr.mxu0 0.0
  %5096 = vmatpush1.msra.mxu0 %v79
  %5097 = vmatprep.subr.mxu0 0.0
  %5098 = vmatpush1.msra.mxu0 %v80
  %5099 = vmatprep.subr.mxu0 0.0
  %5100 = vmatpush1.msra.mxu0 %v81
  %5101 = vmatprep.subr.mxu0 0.0
  %5102 = vmatpush1.msra.mxu0 %v82
  %5103 = vmatprep.subr.mxu0 0.0
  %5104 = vmatpush1.msra.mxu0 %v83
  %5105 = vmatprep.subr.mxu0 0.0
  %5106 = vmatpush1.msra.mxu0 %v84
  %5107 = vmatprep.subr.mxu0 0.0
  %5108 = vmatpush1.msra.mxu0 0.0
  %5109 = vmatprep.subr.mxu0 0.0
  %5110 = vmatpush1.msra.mxu0 0.0
  %5111 = vmatprep.subr.mxu0 0.0
  %5112 = vmatpush1.msra.mxu0 0.0
  %5113 = vmatprep.subr.mxu0 0.0
  %5114 = vmatpush1.msra.mxu0 0.0
  %5115 = vmatprep.subr.mxu0 0.0
  %5116 = vmatpush1.msra.mxu0 0.0
  %5117 = vmatprep.subr.mxu0 0.0
  %5118 = vmatpush1.msra.mxu0 0.0
  %5119 = vmatprep.subr.mxu0 0.0
  %5120 = vmatpush1.msra.mxu0 0.0
  %5121 = vmatprep.subr.mxu0 0.0
  %5122 = vmatpush1.msra.mxu0 0.0
  %5123 = vmatprep.subr.mxu0 0.0
  %5124 = vmatpush1.msra.mxu0 0.0
  %5125 = vmatprep.subr.mxu0 0.0
  %5126 = vmatpush1.msra.mxu0 0.0
  %5127 = vmatprep.subr.mxu0 0.0
  %5128 = vmatpush1.msra.mxu0 0.0
  %5129 = vmatprep.subr.mxu0 0.0
  %5130 = vmatpush1.msra.mxu0 0.0
  %5131 = vmatprep.subr.mxu0 0.0
  %5132 = vmatpush1.msra.mxu0 0.0
  %5133 = vmatprep.subr.mxu0 0.0
  %5134 = vmatpush1.msra.mxu0 0.0
  %5135 = vmatprep.subr.mxu0 0.0
  %5136 = vmatpush1.msra.mxu0 0.0
  %5137 = vmatprep.subr.mxu0 0.0
  %5138 = vmatpush1.msra.mxu0 0.0
  %5139 = vmatprep.subr.mxu0 0.0
  %5140 = vmatpush1.msra.mxu0 0.0
  %5141 = vmatprep.subr.mxu0 0.0
  %5142 = vmatpush1.msra.mxu0 0.0
  %5143 = vmatprep.subr.mxu0 0.0
  %5144 = vmatpush1.msra.mxu0 0.0
  %5145 = vmatprep.subr.mxu0 0.0
  %5146 = vmatpush1.msra.mxu0 0.0
  %5147 = vmatprep.subr.mxu0 0.0
  %5148 = vmatpush1.msra.mxu0 0.0
  %5149 = vmatprep.subr.mxu0 0.0
  %5150 = vmatpush1.msra.mxu0 0.0
  %5151 = vmatprep.subr.mxu0 0.0
  %5152 = vmatpush1.msra.mxu0 0.0
  %5153 = vmatprep.subr.mxu0 0.0
  %5154 = vmatpush1.msra.mxu0 0.0
  %5155 = vmatprep.mubr.f32.mxu0 0.0
  %5156 = vmatmul.mubr.f32.gmra.mrb[0].mxu0 %v5044
  %v5157 = vpop.f32.mrb[0].mxu0
  %v5158 = vadd.f32 %v2872, %v5157
  %v5159 = vpop.f32.mrb[0].mxu0
  %5160 = vmatprep.mubr.f32.mxu0 0.0
  %5161 = vmatmul.mubr.f32.gmra.mrb[0].mxu0 %v5047
  %v5162 = vpop.f32.mrb[0].mxu0
  %v5163 = vadd.f32 %v2872, %v5162
  %v5164 = vpop.f32.mrb[0].mxu0
  %5165 = vmatprep.mubr.f32.mxu0 0.0
  %5166 = vmatmul.mubr.f32.gmra.mrb[0].mxu0 %v5050
  %v5167 = vpop.f32.mrb[0].mxu0
  %v5168 = vadd.f32 %v2872, %v5167
  %v5169 = vpop.f32.mrb[0].mxu0
  %5170 = vmatprep.mubr.f32.mxu0 0.0
  %5171 = vmatmul.mubr.f32.gmra.mrb[0].mxu0 %v5053
  %v5172 = vpop.f32.mrb[0].mxu0
  %v5173 = vadd.f32 %v2872, %v5172
  %v5174 = vpop.f32.mrb[0].mxu0
  %5175 = vmatprep.mubr.f32.mxu0 0.0
  %5176 = vmatmul.mubr.f32.gmra.mrb[0].mxu0 %v5056
  %v5177 = vpop.f32.mrb[0].mxu0
  %v5178 = vadd.f32 %v2872, %v5177
  %v5179 = vpop.f32.mrb[0].mxu0
  %5180 = vmatprep.mubr.f32.mxu0 0.0
  %5181 = vmatmul.mubr.f32.gmra.mrb[0].mxu0 %v5059
  %v5182 = vpop.f32.mrb[0].mxu0
  %v5183 = vadd.f32 %v2872, %v5182
  %v5184 = vpop.f32.mrb[0].mxu0
  %5185 = vmatprep.mubr.f32.mxu0 0.0
  %5186 = vmatmul.mubr.f32.gmra.mrb[0].mxu0 %v5062
  %v5187 = vpop.f32.mrb[0].mxu0
  %v5188 = vadd.f32 %v2872, %v5187
  %v5189 = vpop.f32.mrb[0].mxu0
  %5190 = vmatprep.mubr.f32.mxu0 0.0
  %5191 = vmatmul.mubr.f32.gmra.mrb[0].mxu0 %v5065
  %v5192 = vpop.f32.mrb[0].mxu0
  %v5193 = vadd.f32 %v2872, %v5192
  %v5194 = vpop.f32.mrb[0].mxu0
  %5195 = vmatprep.mubr.f32.mxu0 0.0
  %5196 = vmatmul.mubr.f32.gmra.mrb[0].mxu0 %v5068
  %v5197 = vpop.f32.mrb[0].mxu0
  %v5198 = vadd.f32 %v2872, %v5197
  %v5199 = vpop.f32.mrb[0].mxu0
  %5200 = vmatprep.mubr.f32.mxu0 0.0
  %5201 = vmatmul.mubr.f32.gmra.mrb[0].mxu0 %v5071
  %v5202 = vpop.f32.mrb[0].mxu0
  %v5203 = vadd.f32 %v2872, %v5202
  %v5204 = vpop.f32.mrb[0].mxu0
  %5205 = vmatprep.mubr.f32.mxu0 0.0
  %5206 = vmatmul.mubr.f32.gmra.mrb[0].mxu0 %v5074
  %v5207 = vpop.f32.mrb[0].mxu0
  %v5208 = vadd.f32 %v2872, %v5207
  %v5209 = vpop.f32.mrb[0].mxu0
  %5210 = vmatprep.mubr.f32.mxu0 0.0
  %5211 = vmatmul.mubr.f32.gmra.mrb[0].mxu0 %v5077
  %v5212 = vpop.f32.mrb[0].mxu0
  %v5213 = vadd.f32 %v2872, %v5212
  %v5214 = vpop.f32.mrb[0].mxu0
  %5215 = vmatprep.mubr.f32.mxu0 0.0
  %5216 = vmatmul.mubr.f32.gmra.mrb[0].mxu0 %v5080
  %v5217 = vpop.f32.mrb[0].mxu0
  %v5218 = vadd.f32 %v2872, %v5217
  %v5219 = vpop.f32.mrb[0].mxu0
  %5220 = vmatprep.mubr.f32.mxu0 0.0
  %5221 = vmatmul.mubr.f32.gmra.mrb[0].mxu0 %v5083
  %v5222 = vpop.f32.mrb[0].mxu0
  %v5223 = vadd.f32 %v2872, %v5222
  %v5224 = vpop.f32.mrb[0].mxu0
  %5225 = vmatprep.mubr.f32.mxu0 0.0
  %5226 = vmatmul.mubr.f32.gmra.mrb[0].mxu0 %v5086
  %v5227 = vpop.f32.mrb[0].mxu0
  %v5228 = vadd.f32 %v2872, %v5227
  %v5229 = vpop.f32.mrb[0].mxu0
  %5230 = vmatprep.mubr.f32.mxu0 0.0
  %5231 = vmatmul.mubr.f32.gmra.mrb[0].mxu0 %v5089
  %v5232 = vpop.f32.mrb[0].mxu0
  %v5233 = vadd.f32 %v2872, %v5232
  %v5234 = vpop.f32.mrb[0].mxu0
  %5235 = vdwg.mxu0
  %v5236 = vmax.f32 %v5158, 0.0
  %v5237 = vmax.f32 %v5163, 0.0
  %v5238 = vmax.f32 %v5168, 0.0
  %v5239 = vmax.f32 %v5173, 0.0
  %v5240 = vmax.f32 %v5178, 0.0
  %v5241 = vmax.f32 %v5183, 0.0
  %v5242 = vmax.f32 %v5188, 0.0
  %v5243 = vmax.f32 %v5193, 0.0
  %v5244 = vmax.f32 %v5198, 0.0
  %v5245 = vmax.f32 %v5203, 0.0
  %v5246 = vmax.f32 %v5208, 0.0
  %v5247 = vmax.f32 %v5213, 0.0
  %v5248 = vmax.f32 %v5218, 0.0
  %v5249 = vmax.f32 %v5223, 0.0
  %v5250 = vmax.f32 %v5228, 0.0
  %v5251 = vmax.f32 %v5233, 0.0
  %5252 = vmatprep.subr.mxu0 0.0
  %5253 = vmatpush1.msra.mxu0 %v5236
  %5254 = vmatprep.subr.mxu0 0.0
  %5255 = vmatpush1.msra.mxu0 %v5237
  %5256 = vmatprep.subr.mxu0 0.0
  %5257 = vmatpush1.msra.mxu0 %v5238
  %5258 = vmatprep.subr.mxu0 0.0
  %5259 = vmatpush1.msra.mxu0 %v5239
  %5260 = vmatprep.subr.mxu0 0.0
  %5261 = vmatpush1.msra.mxu0 %v5240
  %5262 = vmatprep.subr.mxu0 0.0
  %5263 = vmatpush1.msra.mxu0 %v5241
  %5264 = vmatprep.subr.mxu0 0.0
  %5265 = vmatpush1.msra.mxu0 %v5242
  %5266 = vmatprep.subr.mxu0 0.0
  %5267 = vmatpush1.msra.mxu0 %v5243
  %5268 = vmatprep.subr.mxu0 0.0
  %5269 = vmatpush1.msra.mxu0 %v5244
  %5270 = vmatprep.subr.mxu0 0.0
  %5271 = vmatpush1.msra.mxu0 %v5245
  %5272 = vmatprep.subr.mxu0 0.0
  %5273 = vmatpush1.msra.mxu0 %v5246
  %5274 = vmatprep.subr.mxu0 0.0
  %5275 = vmatpush1.msra.mxu0 %v5247
  %5276 = vmatprep.subr.mxu0 0.0
  %5277 = vmatpush1.msra.mxu0 %v5248
  %5278 = vmatprep.subr.mxu0 0.0
  %5279 = vmatpush1.msra.mxu0 %v5249
  %5280 = vmatprep.subr.mxu0 0.0
  %5281 = vmatpush1.msra.mxu0 %v5250
  %5282 = vmatprep.subr.mxu0 0.0
  %5283 = vmatpush1.msra.mxu0 %v5251
  %5284 = vmatprep.subr.mxu0 0.0
  %5285 = vmatpush1.msra.mxu0 0.0
  %5286 = vmatprep.subr.mxu0 0.0
  %5287 = vmatpush1.msra.mxu0 0.0
  %5288 = vmatprep.subr.mxu0 0.0
  %5289 = vmatpush1.msra.mxu0 0.0
  %5290 = vmatprep.subr.mxu0 0.0
  %5291 = vmatpush1.msra.mxu0 0.0
  %5292 = vmatprep.subr.mxu0 0.0
  %5293 = vmatpush1.msra.mxu0 0.0
  %5294 = vmatprep.subr.mxu0 0.0
  %5295 = vmatpush1.msra.mxu0 0.0
  %5296 = vmatprep.subr.mxu0 0.0
  %5297 = vmatpush1.msra.mxu0 0.0
  %5298 = vmatprep.subr.mxu0 0.0
  %5299 = vmatpush1.msra.mxu0 0.0
  %5300 = vmatprep.subr.mxu0 0.0
  %5301 = vmatpush1.msra.mxu0 0.0
  %5302 = vmatprep.subr.mxu0 0.0
  %5303 = vmatpush1.msra.mxu0 0.0
  %5304 = vmatprep.subr.mxu0 0.0
  %5305 = vmatpush1.msra.mxu0 0.0
  %5306 = vmatprep.subr.mxu0 0.0
  %5307 = vmatpush1.msra.mxu0 0.0
  %5308 = vmatprep.subr.mxu0 0.0
  %5309 = vmatpush1.msra.mxu0 0.0
  %5310 = vmatprep.subr.mxu0 0.0
  %5311 = vmatpush1.msra.mxu0 0.0
  %5312 = vmatprep.subr.mxu0 0.0
  %5313 = vmatpush1.msra.mxu0 0.0
  %5314 = vmatprep.subr.mxu0 0.0
  %5315 = vmatpush1.msra.mxu0 0.0
  %5316 = vmatprep.mubr.f32.mxu0 0.0
  %5317 = vmatmul.mubr.f32.gmra.mrb[0].mxu0 %v1072
  %v5318 = vpop.f32.mrb[0].mxu0
  %v5319 = vadd.f32 0.0, %v5318
  %v5320 = vpop.f32.mrb[0].mxu0
  %5321 = vmatprep.mubr.f32.mxu0 0.0
  %5322 = vmatmul.mubr.f32.gmra.mrb[0].mxu0 %v1073
  %v5323 = vpop.f32.mrb[0].mxu0
  %v5324 = vadd.f32 0.0, %v5323
  %v5325 = vpop.f32.mrb[0].mxu0
  %5326 = vmatprep.mubr.f32.mxu0 0.0
  %5327 = vmatmul.mubr.f32.gmra.mrb[0].mxu0 %v1074
  %v5328 = vpop.f32.mrb[0].mxu0
  %v5329 = vadd.f32 0.0, %v5328
  %v5330 = vpop.f32.mrb[0].mxu0
  %5331 = vmatprep.mubr.f32.mxu0 0.0
  %5332 = vmatmul.mubr.f32.gmra.mrb[0].mxu0 %v1075
  %v5333 = vpop.f32.mrb[0].mxu0
  %v5334 = vadd.f32 0.0, %v5333
  %v5335 = vpop.f32.mrb[0].mxu0
  %5336 = vmatprep.mubr.f32.mxu0 0.0
  %5337 = vmatmul.mubr.f32.gmra.mrb[0].mxu0 %v1076
  %v5338 = vpop.f32.mrb[0].mxu0
  %v5339 = vadd.f32 0.0, %v5338
  %v5340 = vpop.f32.mrb[0].mxu0
  %5341 = vmatprep.mubr.f32.mxu0 0.0
  %5342 = vmatmul.mubr.f32.gmra.mrb[0].mxu0 %v1077
  %v5343 = vpop.f32.mrb[0].mxu0
  %v5344 = vadd.f32 0.0, %v5343
  %v5345 = vpop.f32.mrb[0].mxu0
  %5346 = vmatprep.mubr.f32.mxu0 0.0
  %5347 = vmatmul.mubr.f32.gmra.mrb[0].mxu0 %v1078
  %v5348 = vpop.f32.mrb[0].mxu0
  %v5349 = vadd.f32 0.0, %v5348
  %v5350 = vpop.f32.mrb[0].mxu0
  %5351 = vmatprep.mubr.f32.mxu0 0.0
  %5352 = vmatmul.mubr.f32.gmra.mrb[0].mxu0 %v1079
  %v5353 = vpop.f32.mrb[0].mxu0
  %v5354 = vadd.f32 0.0, %v5353
  %v5355 = vpop.f32.mrb[0].mxu0
  %5356 = vmatprep.mubr.f32.mxu0 0.0
  %5357 = vmatmul.mubr.f32.gmra.mrb[0].mxu0 %v1080
  %v5358 = vpop.f32.mrb[0].mxu0
  %v5359 = vadd.f32 0.0, %v5358
  %v5360 = vpop.f32.mrb[0].mxu0
  %5361 = vmatprep.mubr.f32.mxu0 0.0
  %5362 = vmatmul.mubr.f32.gmra.mrb[0].mxu0 %v1081
  %v5363 = vpop.f32.mrb[0].mxu0
  %v5364 = vadd.f32 0.0, %v5363
  %v5365 = vpop.f32.mrb[0].mxu0
  %5366 = vmatprep.mubr.f32.mxu0 0.0
  %5367 = vmatmul.mubr.f32.gmra.mrb[0].mxu0 %v1082
  %v5368 = vpop.f32.mrb[0].mxu0
  %v5369 = vadd.f32 0.0, %v5368
  %v5370 = vpop.f32.mrb[0].mxu0
  %5371 = vmatprep.mubr.f32.mxu0 0.0
  %5372 = vmatmul.mubr.f32.gmra.mrb[0].mxu0 %v1083
  %v5373 = vpop.f32.mrb[0].mxu0
  %v5374 = vadd.f32 0.0, %v5373
  %v5375 = vpop.f32.mrb[0].mxu0
  %5376 = vmatprep.mubr.f32.mxu0 0.0
  %5377 = vmatmul.mubr.f32.gmra.mrb[0].mxu0 %v1084
  %v5378 = vpop.f32.mrb[0].mxu0
  %v5379 = vadd.f32 0.0, %v5378
  %v5380 = vpop.f32.mrb[0].mxu0
  %5381 = vmatprep.mubr.f32.mxu0 0.0
  %5382 = vmatmul.mubr.f32.gmra.mrb[0].mxu0 %v1085
  %v5383 = vpop.f32.mrb[0].mxu0
  %v5384 = vadd.f32 0.0, %v5383
  %v5385 = vpop.f32.mrb[0].mxu0
  %5386 = vmatprep.mubr.f32.mxu0 0.0
  %5387 = vmatmul.mubr.f32.gmra.mrb[0].mxu0 %v1086
  %v5388 = vpop.f32.mrb[0].mxu0
  %v5389 = vadd.f32 0.0, %v5388
  %v5390 = vpop.f32.mrb[0].mxu0
  %5391 = vmatprep.mubr.f32.mxu0 0.0
  %5392 = vmatmul.mubr.f32.gmra.mrb[0].mxu0 %v1087
  %v5393 = vpop.f32.mrb[0].mxu0
  %v5394 = vadd.f32 0.0, %v5393
  %v5395 = vpop.f32.mrb[0].mxu0
  %5396 = vdwg.mxu0
  %5398 = vset.pattern.permute.xlu0 0
  %5399 = vperm.xlu0 %5398, %v5319
  %v5400 = vpop.permute.xlu0 %5399
  %5403 = vset.pattern.permute.xlu0 0
  %5404 = vperm.xlu0 %5403, %v5324
  %v5405 = vpop.permute.xlu0 %5404
  %5408 = vset.pattern.permute.xlu0 0
  %5409 = vperm.xlu0 %5408, %v5329
  %v5410 = vpop.permute.xlu0 %5409
  %5413 = vset.pattern.permute.xlu0 0
  %5414 = vperm.xlu0 %5413, %v5334
  %v5415 = vpop.permute.xlu0 %5414
  %5418 = vset.pattern.permute.xlu0 0
  %5419 = vperm.xlu0 %5418, %v5339
  %v5420 = vpop.permute.xlu0 %5419
  %5423 = vset.pattern.permute.xlu0 0
  %5424 = vperm.xlu0 %5423, %v5344
  %v5425 = vpop.permute.xlu0 %5424
  %5428 = vset.pattern.permute.xlu0 0
  %5429 = vperm.xlu0 %5428, %v5349
  %v5430 = vpop.permute.xlu0 %5429
  %5433 = vset.pattern.permute.xlu0 0
  %5434 = vperm.xlu0 %5433, %v5354
  %v5435 = vpop.permute.xlu0 %5434
  %5438 = vset.pattern.permute.xlu0 0
  %5439 = vperm.xlu0 %5438, %v5359
  %v5440 = vpop.permute.xlu0 %5439
  %5443 = vset.pattern.permute.xlu0 0
  %5444 = vperm.xlu0 %5443, %v5364
  %v5445 = vpop.permute.xlu0 %5444
  %5448 = vset.pattern.permute.xlu0 0
  %5449 = vperm.xlu0 %5448, %v5369
  %v5450 = vpop.permute.xlu0 %5449
  %5453 = vset.pattern.permute.xlu0 0
  %5454 = vperm.xlu0 %5453, %v5374
  %v5455 = vpop.permute.xlu0 %5454
  %5458 = vset.pattern.permute.xlu0 0
  %5459 = vperm.xlu0 %5458, %v5379
  %v5460 = vpop.permute.xlu0 %5459
  %5463 = vset.pattern.permute.xlu0 0
  %5464 = vperm.xlu0 %5463, %v5384
  %v5465 = vpop.permute.xlu0 %5464
  %5468 = vset.pattern.permute.xlu0 0
  %5469 = vperm.xlu0 %5468, %v5389
  %v5470 = vpop.permute.xlu0 %5469
  %5473 = vset.pattern.permute.xlu0 0
  %5474 = vperm.xlu0 %5473, %v5394
  %v5475 = vpop.permute.xlu0 %5474
  %v5477 = vmul.f32 %v5400, %v3310
  %v5478 = vmul.f32 %v5405, %v3310
  %v5479 = vmul.f32 %v5410, %v3310
  %v5480 = vmul.f32 %v5415, %v3310
  %v5481 = vmul.f32 %v5420, %v3310
  %v5482 = vmul.f32 %v5425, %v3310
  %v5483 = vmul.f32 %v5430, %v3310
  %v5484 = vmul.f32 %v5435, %v3310
  %v5485 = vmul.f32 %v5440, %v3310
  %v5486 = vmul.f32 %v5445, %v3310
  %v5487 = vmul.f32 %v5450, %v3310
  %v5488 = vmul.f32 %v5455, %v3310
  %v5489 = vmul.f32 %v5460, %v3310
  %v5490 = vmul.f32 %v5465, %v3310
  %v5491 = vmul.f32 %v5470, %v3310
  %v5492 = vmul.f32 %v5475, %v3310
  %v5494 = vsel %vm190, %v3982, 0
  %v5497 = vsel %vm190, %v3983, 0
  %v5500 = vsel %vm190, %v3984, 0
  %v5503 = vsel %vm190, %v3985, 0
  %v5506 = vsel %vm190, %v3986, 0
  %v5509 = vsel %vm190, %v3987, 0
  %v5512 = vsel %vm190, %v3988, 0
  %v5515 = vsel %vm190, %v3989, 0
  %v5518 = vsel %vm190, %v3990, 0
  %v5521 = vsel %vm190, %v3991, 0
  %v5524 = vsel %vm190, %v3992, 0
  %v5527 = vsel %vm190, %v3993, 0
  %v5530 = vsel %vm190, %v3994, 0
  %v5533 = vsel %vm190, %v3995, 0
  %v5536 = vsel %vm190, %v3996, 0
  %v5539 = vsel %vm190, %v3997, 0
  %5541 = vmatprep.subr.mxu0 0.0
  %5542 = vmatpush1.msra.mxu0 %v44
  %5543 = vmatprep.subr.mxu0 0.0
  %5544 = vmatpush1.msra.mxu0 0.0
  %5545 = vmatprep.subr.mxu0 0.0
  %5546 = vmatpush1.msra.mxu0 0.0
  %5547 = vmatprep.subr.mxu0 0.0
  %5548 = vmatpush1.msra.mxu0 0.0
  %5549 = vmatprep.subr.mxu0 0.0
  %5550 = vmatpush1.msra.mxu0 0.0
  %5551 = vmatprep.subr.mxu0 0.0
  %5552 = vmatpush1.msra.mxu0 0.0
  %5553 = vmatprep.subr.mxu0 0.0
  %5554 = vmatpush1.msra.mxu0 0.0
  %5555 = vmatprep.subr.mxu0 0.0
  %5556 = vmatpush1.msra.mxu0 0.0
  %5557 = vmatprep.subr.mxu0 0.0
  %5558 = vmatpush1.msra.mxu0 0.0
  %5559 = vmatprep.subr.mxu0 0.0
  %5560 = vmatpush1.msra.mxu0 0.0
  %5561 = vmatprep.subr.mxu0 0.0
  %5562 = vmatpush1.msra.mxu0 0.0
  %5563 = vmatprep.subr.mxu0 0.0
  %5564 = vmatpush1.msra.mxu0 0.0
  %5565 = vmatprep.subr.mxu0 0.0
  %5566 = vmatpush1.msra.mxu0 0.0
  %5567 = vmatprep.subr.mxu0 0.0
  %5568 = vmatpush1.msra.mxu0 0.0
  %5569 = vmatprep.subr.mxu0 0.0
  %5570 = vmatpush1.msra.mxu0 0.0
  %5571 = vmatprep.subr.mxu0 0.0
  %5572 = vmatpush1.msra.mxu0 0.0
  %5573 = vmatprep.subr.mxu0 0.0
  %5574 = vmatpush1.msra.mxu0 0.0
  %5575 = vmatprep.subr.mxu0 0.0
  %5576 = vmatpush1.msra.mxu0 0.0
  %5577 = vmatprep.subr.mxu0 0.0
  %5578 = vmatpush1.msra.mxu0 0.0
  %5579 = vmatprep.subr.mxu0 0.0
  %5580 = vmatpush1.msra.mxu0 0.0
  %5581 = vmatprep.subr.mxu0 0.0
  %5582 = vmatpush1.msra.mxu0 0.0
  %5583 = vmatprep.subr.mxu0 0.0
  %5584 = vmatpush1.msra.mxu0 0.0
  %5585 = vmatprep.subr.mxu0 0.0
  %5586 = vmatpush1.msra.mxu0 0.0
  %5587 = vmatprep.subr.mxu0 0.0
  %5588 = vmatpush1.msra.mxu0 0.0
  %5589 = vmatprep.subr.mxu0 0.0
  %5590 = vmatpush1.msra.mxu0 0.0
  %5591 = vmatprep.subr.mxu0 0.0
  %5592 = vmatpush1.msra.mxu0 0.0
  %5593 = vmatprep.subr.mxu0 0.0
  %5594 = vmatpush1.msra.mxu0 0.0
  %5595 = vmatprep.subr.mxu0 0.0
  %5596 = vmatpush1.msra.mxu0 0.0
  %5597 = vmatprep.subr.mxu0 0.0
  %5598 = vmatpush1.msra.mxu0 0.0
  %5599 = vmatprep.subr.mxu0 0.0
  %5600 = vmatpush1.msra.mxu0 0.0
  %5601 = vmatprep.subr.mxu0 0.0
  %5602 = vmatpush1.msra.mxu0 0.0
  %5603 = vmatprep.subr.mxu0 0.0
  %5604 = vmatpush1.msra.mxu0 0.0
  %5605 = vmatprep.mubr.f32.mxu0 0.0
  %5606 = vmatmul.mubr.f32.gmra.mrb[0].mxu0 %v5494
  %v5607 = vpop.f32.mrb[0].mxu0
  %v5608 = vadd.f32 0.0, %v5607
  %v5609 = vpop.f32.mrb[0].mxu0
  %5610 = vmatprep.mubr.f32.mxu0 0.0
  %5611 = vmatmul.mubr.f32.gmra.mrb[0].mxu0 %v5497
  %v5612 = vpop.f32.mrb[0].mxu0
  %v5613 = vadd.f32 0.0, %v5612
  %v5614 = vpop.f32.mrb[0].mxu0
  %5615 = vmatprep.mubr.f32.mxu0 0.0
  %5616 = vmatmul.mubr.f32.gmra.mrb[0].mxu0 %v5500
  %v5617 = vpop.f32.mrb[0].mxu0
  %v5618 = vadd.f32 0.0, %v5617
  %v5619 = vpop.f32.mrb[0].mxu0
  %5620 = vmatprep.mubr.f32.mxu0 0.0
  %5621 = vmatmul.mubr.f32.gmra.mrb[0].mxu0 %v5503
  %v5622 = vpop.f32.mrb[0].mxu0
  %v5623 = vadd.f32 0.0, %v5622
  %v5624 = vpop.f32.mrb[0].mxu0
  %5625 = vmatprep.mubr.f32.mxu0 0.0
  %5626 = vmatmul.mubr.f32.gmra.mrb[0].mxu0 %v5506
  %v5627 = vpop.f32.mrb[0].mxu0
  %v5628 = vadd.f32 0.0, %v5627
  %v5629 = vpop.f32.mrb[0].mxu0
  %5630 = vmatprep.mubr.f32.mxu0 0.0
  %5631 = vmatmul.mubr.f32.gmra.mrb[0].mxu0 %v5509
  %v5632 = vpop.f32.mrb[0].mxu0
  %v5633 = vadd.f32 0.0, %v5632
  %v5634 = vpop.f32.mrb[0].mxu0
  %5635 = vmatprep.mubr.f32.mxu0 0.0
  %5636 = vmatmul.mubr.f32.gmra.mrb[0].mxu0 %v5512
  %v5637 = vpop.f32.mrb[0].mxu0
  %v5638 = vadd.f32 0.0, %v5637
  %v5639 = vpop.f32.mrb[0].mxu0
  %5640 = vmatprep.mubr.f32.mxu0 0.0
  %5641 = vmatmul.mubr.f32.gmra.mrb[0].mxu0 %v5515
  %v5642 = vpop.f32.mrb[0].mxu0
  %v5643 = vadd.f32 0.0, %v5642
  %v5644 = vpop.f32.mrb[0].mxu0
  %5645 = vmatprep.mubr.f32.mxu0 0.0
  %5646 = vmatmul.mubr.f32.gmra.mrb[0].mxu0 %v5518
  %v5647 = vpop.f32.mrb[0].mxu0
  %v5648 = vadd.f32 0.0, %v5647
  %v5649 = vpop.f32.mrb[0].mxu0
  %5650 = vmatprep.mubr.f32.mxu0 0.0
  %5651 = vmatmul.mubr.f32.gmra.mrb[0].mxu0 %v5521
  %v5652 = vpop.f32.mrb[0].mxu0
  %v5653 = vadd.f32 0.0, %v5652
  %v5654 = vpop.f32.mrb[0].mxu0
  %5655 = vmatprep.mubr.f32.mxu0 0.0
  %5656 = vmatmul.mubr.f32.gmra.mrb[0].mxu0 %v5524
  %v5657 = vpop.f32.mrb[0].mxu0
  %v5658 = vadd.f32 0.0, %v5657
  %v5659 = vpop.f32.mrb[0].mxu0
  %5660 = vmatprep.mubr.f32.mxu0 0.0
  %5661 = vmatmul.mubr.f32.gmra.mrb[0].mxu0 %v5527
  %v5662 = vpop.f32.mrb[0].mxu0
  %v5663 = vadd.f32 0.0, %v5662
  %v5664 = vpop.f32.mrb[0].mxu0
  %5665 = vmatprep.mubr.f32.mxu0 0.0
  %5666 = vmatmul.mubr.f32.gmra.mrb[0].mxu0 %v5530
  %v5667 = vpop.f32.mrb[0].mxu0
  %v5668 = vadd.f32 0.0, %v5667
  %v5669 = vpop.f32.mrb[0].mxu0
  %5670 = vmatprep.mubr.f32.mxu0 0.0
  %5671 = vmatmul.mubr.f32.gmra.mrb[0].mxu0 %v5533
  %v5672 = vpop.f32.mrb[0].mxu0
  %v5673 = vadd.f32 0.0, %v5672
  %v5674 = vpop.f32.mrb[0].mxu0
  %5675 = vmatprep.mubr.f32.mxu0 0.0
  %5676 = vmatmul.mubr.f32.gmra.mrb[0].mxu0 %v5536
  %v5677 = vpop.f32.mrb[0].mxu0
  %v5678 = vadd.f32 0.0, %v5677
  %v5679 = vpop.f32.mrb[0].mxu0
  %5680 = vmatprep.mubr.f32.mxu0 0.0
  %5681 = vmatmul.mubr.f32.gmra.mrb[0].mxu0 %v5539
  %v5682 = vpop.f32.mrb[0].mxu0
  %v5683 = vadd.f32 0.0, %v5682
  %v5684 = vpop.f32.mrb[0].mxu0
  %5685 = vdwg.mxu0
  %v5686 = vadd.f32 %v5477, %v5608
  %v5687 = vadd.f32 %v5478, %v5613
  %v5688 = vadd.f32 %v5479, %v5618
  %v5689 = vadd.f32 %v5480, %v5623
  %v5690 = vadd.f32 %v5481, %v5628
  %v5691 = vadd.f32 %v5482, %v5633
  %v5692 = vadd.f32 %v5483, %v5638
  %v5693 = vadd.f32 %v5484, %v5643
  %v5694 = vadd.f32 %v5485, %v5648
  %v5695 = vadd.f32 %v5486, %v5653
  %v5696 = vadd.f32 %v5487, %v5658
  %v5697 = vadd.f32 %v5488, %v5663
  %v5698 = vadd.f32 %v5489, %v5668
  %v5699 = vadd.f32 %v5490, %v5673
  %v5700 = vadd.f32 %v5491, %v5678
  %v5701 = vadd.f32 %v5492, %v5683
  %v5702 = vadd.f32 %v5686, %v3539
  %v5703 = vadd.f32 %v5687, %v3539
  %v5704 = vadd.f32 %v5688, %v3539
  %v5705 = vadd.f32 %v5689, %v3539
  %v5706 = vadd.f32 %v5690, %v3539
  %v5707 = vadd.f32 %v5691, %v3539
  %v5708 = vadd.f32 %v5692, %v3539
  %v5709 = vadd.f32 %v5693, %v3539
  %v5710 = vadd.f32 %v5694, %v3539
  %v5711 = vadd.f32 %v5695, %v3539
  %v5712 = vadd.f32 %v5696, %v3539
  %v5713 = vadd.f32 %v5697, %v3539
  %v5714 = vadd.f32 %v5698, %v3539
  %v5715 = vadd.f32 %v5699, %v3539
  %v5716 = vadd.f32 %v5700, %v3539
  %v5717 = vadd.f32 %v5701, %v3539
  %v5718 = vmax.f32 %v5702, 0.0
  %v5719 = vmax.f32 %v5703, 0.0
  %v5720 = vmax.f32 %v5704, 0.0
  %v5721 = vmax.f32 %v5705, 0.0
  %v5722 = vmax.f32 %v5706, 0.0
  %v5723 = vmax.f32 %v5707, 0.0
  %v5724 = vmax.f32 %v5708, 0.0
  %v5725 = vmax.f32 %v5709, 0.0
  %v5726 = vmax.f32 %v5710, 0.0
  %v5727 = vmax.f32 %v5711, 0.0
  %v5728 = vmax.f32 %v5712, 0.0
  %v5729 = vmax.f32 %v5713, 0.0
  %v5730 = vmax.f32 %v5714, 0.0
  %v5731 = vmax.f32 %v5715, 0.0
  %v5732 = vmax.f32 %v5716, 0.0
  %v5733 = vmax.f32 %v5717, 0.0
  %v5735 = vsel %vm404, %v5718, 0
  %v5738 = vsel %vm404, %v5719, 0
  %v5741 = vsel %vm404, %v5720, 0
  %v5744 = vsel %vm404, %v5721, 0
  %v5747 = vsel %vm404, %v5722, 0
  %v5750 = vsel %vm404, %v5723, 0
  %v5753 = vsel %vm404, %v5724, 0
  %v5756 = vsel %vm404, %v5725, 0
  %v5759 = vsel %vm404, %v5726, 0
  %v5762 = vsel %vm404, %v5727, 0
  %v5765 = vsel %vm404, %v5728, 0
  %v5768 = vsel %vm404, %v5729, 0
  %v5771 = vsel %vm404, %v5730, 0
  %v5774 = vsel %vm404, %v5731, 0
  %v5777 = vsel %vm404, %v5732, 0
  %v5780 = vsel %vm404, %v5733, 0
  %5782 = vmatprep.subr.mxu0 0.0
  %5783 = vmatpush1.msra.mxu0 %v46
  %5784 = vmatprep.subr.mxu0 0.0
  %5785 = vmatpush1.msra.mxu0 %v47
  %5786 = vmatprep.subr.mxu0 0.0
  %5787 = vmatpush1.msra.mxu0 %v48
  %5788 = vmatprep.subr.mxu0 0.0
  %5789 = vmatpush1.msra.mxu0 %v49
  %5790 = vmatprep.subr.mxu0 0.0
  %5791 = vmatpush1.msra.mxu0 %v50
  %5792 = vmatprep.subr.mxu0 0.0
  %5793 = vmatpush1.msra.mxu0 %v51
  %5794 = vmatprep.subr.mxu0 0.0
  %5795 = vmatpush1.msra.mxu0 %v52
  %5796 = vmatprep.subr.mxu0 0.0
  %5797 = vmatpush1.msra.mxu0 %v53
  %5798 = vmatprep.subr.mxu0 0.0
  %5799 = vmatpush1.msra.mxu0 0.0
  %5800 = vmatprep.subr.mxu0 0.0
  %5801 = vmatpush1.msra.mxu0 0.0
  %5802 = vmatprep.subr.mxu0 0.0
  %5803 = vmatpush1.msra.mxu0 0.0
  %5804 = vmatprep.subr.mxu0 0.0
  %5805 = vmatpush1.msra.mxu0 0.0
  %5806 = vmatprep.subr.mxu0 0.0
  %5807 = vmatpush1.msra.mxu0 0.0
  %5808 = vmatprep.subr.mxu0 0.0
  %5809 = vmatpush1.msra.mxu0 0.0
  %5810 = vmatprep.subr.mxu0 0.0
  %5811 = vmatpush1.msra.mxu0 0.0
  %5812 = vmatprep.subr.mxu0 0.0
  %5813 = vmatpush1.msra.mxu0 0.0
  %5814 = vmatprep.subr.mxu0 0.0
  %5815 = vmatpush1.msra.mxu0 0.0
  %5816 = vmatprep.subr.mxu0 0.0
  %5817 = vmatpush1.msra.mxu0 0.0
  %5818 = vmatprep.subr.mxu0 0.0
  %5819 = vmatpush1.msra.mxu0 0.0
  %5820 = vmatprep.subr.mxu0 0.0
  %5821 = vmatpush1.msra.mxu0 0.0
  %5822 = vmatprep.subr.mxu0 0.0
  %5823 = vmatpush1.msra.mxu0 0.0
  %5824 = vmatprep.subr.mxu0 0.0
  %5825 = vmatpush1.msra.mxu0 0.0
  %5826 = vmatprep.subr.mxu0 0.0
  %5827 = vmatpush1.msra.mxu0 0.0
  %5828 = vmatprep.subr.mxu0 0.0
  %5829 = vmatpush1.msra.mxu0 0.0
  %5830 = vmatprep.subr.mxu0 0.0
  %5831 = vmatpush1.msra.mxu0 0.0
  %5832 = vmatprep.subr.mxu0 0.0
  %5833 = vmatpush1.msra.mxu0 0.0
  %5834 = vmatprep.subr.mxu0 0.0
  %5835 = vmatpush1.msra.mxu0 0.0
  %5836 = vmatprep.subr.mxu0 0.0
  %5837 = vmatpush1.msra.mxu0 0.0
  %5838 = vmatprep.subr.mxu0 0.0
  %5839 = vmatpush1.msra.mxu0 0.0
  %5840 = vmatprep.subr.mxu0 0.0
  %5841 = vmatpush1.msra.mxu0 0.0
  %5842 = vmatprep.subr.mxu0 0.0
  %5843 = vmatpush1.msra.mxu0 0.0
  %5844 = vmatprep.subr.mxu0 0.0
  %5845 = vmatpush1.msra.mxu0 0.0
  %5846 = vmatprep.mubr.f32.mxu0 0.0
  %5847 = vmatmul.mubr.f32.gmra.mrb[0].mxu0 %v5735
  %v5848 = vpop.f32.mrb[0].mxu0
  %v5849 = vadd.f32 %v3575, %v5848
  %v5850 = vpop.f32.mrb[0].mxu0
  %5851 = vmatprep.mubr.f32.mxu0 0.0
  %5852 = vmatmul.mubr.f32.gmra.mrb[0].mxu0 %v5738
  %v5853 = vpop.f32.mrb[0].mxu0
  %v5854 = vadd.f32 %v3575, %v5853
  %v5855 = vpop.f32.mrb[0].mxu0
  %5856 = vmatprep.mubr.f32.mxu0 0.0
  %5857 = vmatmul.mubr.f32.gmra.mrb[0].mxu0 %v5741
  %v5858 = vpop.f32.mrb[0].mxu0
  %v5859 = vadd.f32 %v3575, %v5858
  %v5860 = vpop.f32.mrb[0].mxu0
  %5861 = vmatprep.mubr.f32.mxu0 0.0
  %5862 = vmatmul.mubr.f32.gmra.mrb[0].mxu0 %v5744
  %v5863 = vpop.f32.mrb[0].mxu0
  %v5864 = vadd.f32 %v3575, %v5863
  %v5865 = vpop.f32.mrb[0].mxu0
  %5866 = vmatprep.mubr.f32.mxu0 0.0
  %5867 = vmatmul.mubr.f32.gmra.mrb[0].mxu0 %v5747
  %v5868 = vpop.f32.mrb[0].mxu0
  %v5869 = vadd.f32 %v3575, %v5868
  %v5870 = vpop.f32.mrb[0].mxu0
  %5871 = vmatprep.mubr.f32.mxu0 0.0
  %5872 = vmatmul.mubr.f32.gmra.mrb[0].mxu0 %v5750
  %v5873 = vpop.f32.mrb[0].mxu0
  %v5874 = vadd.f32 %v3575, %v5873
  %v5875 = vpop.f32.mrb[0].mxu0
  %5876 = vmatprep.mubr.f32.mxu0 0.0
  %5877 = vmatmul.mubr.f32.gmra.mrb[0].mxu0 %v5753
  %v5878 = vpop.f32.mrb[0].mxu0
  %v5879 = vadd.f32 %v3575, %v5878
  %v5880 = vpop.f32.mrb[0].mxu0
  %5881 = vmatprep.mubr.f32.mxu0 0.0
  %5882 = vmatmul.mubr.f32.gmra.mrb[0].mxu0 %v5756
  %v5883 = vpop.f32.mrb[0].mxu0
  %v5884 = vadd.f32 %v3575, %v5883
  %v5885 = vpop.f32.mrb[0].mxu0
  %5886 = vmatprep.mubr.f32.mxu0 0.0
  %5887 = vmatmul.mubr.f32.gmra.mrb[0].mxu0 %v5759
  %v5888 = vpop.f32.mrb[0].mxu0
  %v5889 = vadd.f32 %v3575, %v5888
  %v5890 = vpop.f32.mrb[0].mxu0
  %5891 = vmatprep.mubr.f32.mxu0 0.0
  %5892 = vmatmul.mubr.f32.gmra.mrb[0].mxu0 %v5762
  %v5893 = vpop.f32.mrb[0].mxu0
  %v5894 = vadd.f32 %v3575, %v5893
  %v5895 = vpop.f32.mrb[0].mxu0
  %5896 = vmatprep.mubr.f32.mxu0 0.0
  %5897 = vmatmul.mubr.f32.gmra.mrb[0].mxu0 %v5765
  %v5898 = vpop.f32.mrb[0].mxu0
  %v5899 = vadd.f32 %v3575, %v5898
  %v5900 = vpop.f32.mrb[0].mxu0
  %5901 = vmatprep.mubr.f32.mxu0 0.0
  %5902 = vmatmul.mubr.f32.gmra.mrb[0].mxu0 %v5768
  %v5903 = vpop.f32.mrb[0].mxu0
  %v5904 = vadd.f32 %v3575, %v5903
  %v5905 = vpop.f32.mrb[0].mxu0
  %5906 = vmatprep.mubr.f32.mxu0 0.0
  %5907 = vmatmul.mubr.f32.gmra.mrb[0].mxu0 %v5771
  %v5908 = vpop.f32.mrb[0].mxu0
  %v5909 = vadd.f32 %v3575, %v5908
  %v5910 = vpop.f32.mrb[0].mxu0
  %5911 = vmatprep.mubr.f32.mxu0 0.0
  %5912 = vmatmul.mubr.f32.gmra.mrb[0].mxu0 %v5774
  %v5913 = vpop.f32.mrb[0].mxu0
  %v5914 = vadd.f32 %v3575, %v5913
  %v5915 = vpop.f32.mrb[0].mxu0
  %5916 = vmatprep.mubr.f32.mxu0 0.0
  %5917 = vmatmul.mubr.f32.gmra.mrb[0].mxu0 %v5777
  %v5918 = vpop.f32.mrb[0].mxu0
  %v5919 = vadd.f32 %v3575, %v5918
  %v5920 = vpop.f32.mrb[0].mxu0
  %5921 = vmatprep.mubr.f32.mxu0 0.0
  %5922 = vmatmul.mubr.f32.gmra.mrb[0].mxu0 %v5780
  %v5923 = vpop.f32.mrb[0].mxu0
  %v5924 = vadd.f32 %v3575, %v5923
  %v5925 = vpop.f32.mrb[0].mxu0
  %5926 = vdwg.mxu0
  %v5927 = vmax.f32 %v5849, 0.0
  %v5928 = vmax.f32 %v5854, 0.0
  %v5929 = vmax.f32 %v5859, 0.0
  %v5930 = vmax.f32 %v5864, 0.0
  %v5931 = vmax.f32 %v5869, 0.0
  %v5932 = vmax.f32 %v5874, 0.0
  %v5933 = vmax.f32 %v5879, 0.0
  %v5934 = vmax.f32 %v5884, 0.0
  %v5935 = vmax.f32 %v5889, 0.0
  %v5936 = vmax.f32 %v5894, 0.0
  %v5937 = vmax.f32 %v5899, 0.0
  %v5938 = vmax.f32 %v5904, 0.0
  %v5939 = vmax.f32 %v5909, 0.0
  %v5940 = vmax.f32 %v5914, 0.0
  %v5941 = vmax.f32 %v5919, 0.0
  %v5942 = vmax.f32 %v5924, 0.0
  %v5944 = vsel %vm404, %v5927, 0
  %v5947 = vsel %vm404, %v5928, 0
  %v5950 = vsel %vm404, %v5929, 0
  %v5953 = vsel %vm404, %v5930, 0
  %v5956 = vsel %vm404, %v5931, 0
  %v5959 = vsel %vm404, %v5932, 0
  %v5962 = vsel %vm404, %v5933, 0
  %v5965 = vsel %vm404, %v5934, 0
  %v5968 = vsel %vm404, %v5935, 0
  %v5971 = vsel %vm404, %v5936, 0
  %v5974 = vsel %vm404, %v5937, 0
  %v5977 = vsel %vm404, %v5938, 0
  %v5980 = vsel %vm404, %v5939, 0
  %v5983 = vsel %vm404, %v5940, 0
  %v5986 = vsel %vm404, %v5941, 0
  %v5989 = vsel %vm404, %v5942, 0
  %5991 = vmatprep.subr.mxu0 0.0
  %5992 = vmatpush1.msra.mxu0 %v55
  %5993 = vmatprep.subr.mxu0 0.0
  %5994 = vmatpush1.msra.mxu0 %v56
  %5995 = vmatprep.subr.mxu0 0.0
  %5996 = vmatpush1.msra.mxu0 %v57
  %5997 = vmatprep.subr.mxu0 0.0
  %5998 = vmatpush1.msra.mxu0 %v58
  %5999 = vmatprep.subr.mxu0 0.0
  %6000 = vmatpush1.msra.mxu0 %v59
  %6001 = vmatprep.subr.mxu0 0.0
  %6002 = vmatpush1.msra.mxu0 %v60
  %6003 = vmatprep.subr.mxu0 0.0
  %6004 = vmatpush1.msra.mxu0 %v61
  %6005 = vmatprep.subr.mxu0 0.0
  %6006 = vmatpush1.msra.mxu0 %v62
  %6007 = vmatprep.subr.mxu0 0.0
  %6008 = vmatpush1.msra.mxu0 0.0
  %6009 = vmatprep.subr.mxu0 0.0
  %6010 = vmatpush1.msra.mxu0 0.0
  %6011 = vmatprep.subr.mxu0 0.0
  %6012 = vmatpush1.msra.mxu0 0.0
  %6013 = vmatprep.subr.mxu0 0.0
  %6014 = vmatpush1.msra.mxu0 0.0
  %6015 = vmatprep.subr.mxu0 0.0
  %6016 = vmatpush1.msra.mxu0 0.0
  %6017 = vmatprep.subr.mxu0 0.0
  %6018 = vmatpush1.msra.mxu0 0.0
  %6019 = vmatprep.subr.mxu0 0.0
  %6020 = vmatpush1.msra.mxu0 0.0
  %6021 = vmatprep.subr.mxu0 0.0
  %6022 = vmatpush1.msra.mxu0 0.0
  %6023 = vmatprep.subr.mxu0 0.0
  %6024 = vmatpush1.msra.mxu0 0.0
  %6025 = vmatprep.subr.mxu0 0.0
  %6026 = vmatpush1.msra.mxu0 0.0
  %6027 = vmatprep.subr.mxu0 0.0
  %6028 = vmatpush1.msra.mxu0 0.0
  %6029 = vmatprep.subr.mxu0 0.0
  %6030 = vmatpush1.msra.mxu0 0.0
  %6031 = vmatprep.subr.mxu0 0.0
  %6032 = vmatpush1.msra.mxu0 0.0
  %6033 = vmatprep.subr.mxu0 0.0
  %6034 = vmatpush1.msra.mxu0 0.0
  %6035 = vmatprep.subr.mxu0 0.0
  %6036 = vmatpush1.msra.mxu0 0.0
  %6037 = vmatprep.subr.mxu0 0.0
  %6038 = vmatpush1.msra.mxu0 0.0
  %6039 = vmatprep.subr.mxu0 0.0
  %6040 = vmatpush1.msra.mxu0 0.0
  %6041 = vmatprep.subr.mxu0 0.0
  %6042 = vmatpush1.msra.mxu0 0.0
  %6043 = vmatprep.subr.mxu0 0.0
  %6044 = vmatpush1.msra.mxu0 0.0
  %6045 = vmatprep.subr.mxu0 0.0
  %6046 = vmatpush1.msra.mxu0 0.0
  %6047 = vmatprep.subr.mxu0 0.0
  %6048 = vmatpush1.msra.mxu0 0.0
  %6049 = vmatprep.subr.mxu0 0.0
  %6050 = vmatpush1.msra.mxu0 0.0
  %6051 = vmatprep.subr.mxu0 0.0
  %6052 = vmatpush1.msra.mxu0 0.0
  %6053 = vmatprep.subr.mxu0 0.0
  %6054 = vmatpush1.msra.mxu0 0.0
  %6055 = vmatprep.mubr.f32.mxu0 0.0
  %6056 = vmatmul.mubr.f32.gmra.mrb[0].mxu0 %v5944
  %v6057 = vpop.f32.mrb[0].mxu0
  %v6058 = vadd.f32 %v3788, %v6057
  %v6059 = vpop.f32.mrb[0].mxu0
  %6060 = vmatprep.mubr.f32.mxu0 0.0
  %6061 = vmatmul.mubr.f32.gmra.mrb[0].mxu0 %v5947
  %v6062 = vpop.f32.mrb[0].mxu0
  %v6063 = vadd.f32 %v3788, %v6062
  %v6064 = vpop.f32.mrb[0].mxu0
  %6065 = vmatprep.mubr.f32.mxu0 0.0
  %6066 = vmatmul.mubr.f32.gmra.mrb[0].mxu0 %v5950
  %v6067 = vpop.f32.mrb[0].mxu0
  %v6068 = vadd.f32 %v3788, %v6067
  %v6069 = vpop.f32.mrb[0].mxu0
  %6070 = vmatprep.mubr.f32.mxu0 0.0
  %6071 = vmatmul.mubr.f32.gmra.mrb[0].mxu0 %v5953
  %v6072 = vpop.f32.mrb[0].mxu0
  %v6073 = vadd.f32 %v3788, %v6072
  %v6074 = vpop.f32.mrb[0].mxu0
  %6075 = vmatprep.mubr.f32.mxu0 0.0
  %6076 = vmatmul.mubr.f32.gmra.mrb[0].mxu0 %v5956
  %v6077 = vpop.f32.mrb[0].mxu0
  %v6078 = vadd.f32 %v3788, %v6077
  %v6079 = vpop.f32.mrb[0].mxu0
  %6080 = vmatprep.mubr.f32.mxu0 0.0
  %6081 = vmatmul.mubr.f32.gmra.mrb[0].mxu0 %v5959
  %v6082 = vpop.f32.mrb[0].mxu0
  %v6083 = vadd.f32 %v3788, %v6082
  %v6084 = vpop.f32.mrb[0].mxu0
  %6085 = vmatprep.mubr.f32.mxu0 0.0
  %6086 = vmatmul.mubr.f32.gmra.mrb[0].mxu0 %v5962
  %v6087 = vpop.f32.mrb[0].mxu0
  %v6088 = vadd.f32 %v3788, %v6087
  %v6089 = vpop.f32.mrb[0].mxu0
  %6090 = vmatprep.mubr.f32.mxu0 0.0
  %6091 = vmatmul.mubr.f32.gmra.mrb[0].mxu0 %v5965
  %v6092 = vpop.f32.mrb[0].mxu0
  %v6093 = vadd.f32 %v3788, %v6092
  %v6094 = vpop.f32.mrb[0].mxu0
  %6095 = vmatprep.mubr.f32.mxu0 0.0
  %6096 = vmatmul.mubr.f32.gmra.mrb[0].mxu0 %v5968
  %v6097 = vpop.f32.mrb[0].mxu0
  %v6098 = vadd.f32 %v3788, %v6097
  %v6099 = vpop.f32.mrb[0].mxu0
  %6100 = vmatprep.mubr.f32.mxu0 0.0
  %6101 = vmatmul.mubr.f32.gmra.mrb[0].mxu0 %v5971
  %v6102 = vpop.f32.mrb[0].mxu0
  %v6103 = vadd.f32 %v3788, %v6102
  %v6104 = vpop.f32.mrb[0].mxu0
  %6105 = vmatprep.mubr.f32.mxu0 0.0
  %6106 = vmatmul.mubr.f32.gmra.mrb[0].mxu0 %v5974
  %v6107 = vpop.f32.mrb[0].mxu0
  %v6108 = vadd.f32 %v3788, %v6107
  %v6109 = vpop.f32.mrb[0].mxu0
  %6110 = vmatprep.mubr.f32.mxu0 0.0
  %6111 = vmatmul.mubr.f32.gmra.mrb[0].mxu0 %v5977
  %v6112 = vpop.f32.mrb[0].mxu0
  %v6113 = vadd.f32 %v3788, %v6112
  %v6114 = vpop.f32.mrb[0].mxu0
  %6115 = vmatprep.mubr.f32.mxu0 0.0
  %6116 = vmatmul.mubr.f32.gmra.mrb[0].mxu0 %v5980
  %v6117 = vpop.f32.mrb[0].mxu0
  %v6118 = vadd.f32 %v3788, %v6117
  %v6119 = vpop.f32.mrb[0].mxu0
  %6120 = vmatprep.mubr.f32.mxu0 0.0
  %6121 = vmatmul.mubr.f32.gmra.mrb[0].mxu0 %v5983
  %v6122 = vpop.f32.mrb[0].mxu0
  %v6123 = vadd.f32 %v3788, %v6122
  %v6124 = vpop.f32.mrb[0].mxu0
  %6125 = vmatprep.mubr.f32.mxu0 0.0
  %6126 = vmatmul.mubr.f32.gmra.mrb[0].mxu0 %v5986
  %v6127 = vpop.f32.mrb[0].mxu0
  %v6128 = vadd.f32 %v3788, %v6127
  %v6129 = vpop.f32.mrb[0].mxu0
  %6130 = vmatprep.mubr.f32.mxu0 0.0
  %6131 = vmatmul.mubr.f32.gmra.mrb[0].mxu0 %v5989
  %v6132 = vpop.f32.mrb[0].mxu0
  %v6133 = vadd.f32 %v3788, %v6132
  %v6134 = vpop.f32.mrb[0].mxu0
  %6135 = vdwg.mxu0
  %v6136 = vmax.f32 %v6058, 0.0
  %v6137 = vmax.f32 %v6063, 0.0
  %v6138 = vmax.f32 %v6068, 0.0
  %v6139 = vmax.f32 %v6073, 0.0
  %v6140 = vmax.f32 %v6078, 0.0
  %v6141 = vmax.f32 %v6083, 0.0
  %v6142 = vmax.f32 %v6088, 0.0
  %v6143 = vmax.f32 %v6093, 0.0
  %v6144 = vmax.f32 %v6098, 0.0
  %v6145 = vmax.f32 %v6103, 0.0
  %v6146 = vmax.f32 %v6108, 0.0
  %v6147 = vmax.f32 %v6113, 0.0
  %v6148 = vmax.f32 %v6118, 0.0
  %v6149 = vmax.f32 %v6123, 0.0
  %v6150 = vmax.f32 %v6128, 0.0
  %v6151 = vmax.f32 %v6133, 0.0
  %6152 = vmatprep.subr.mxu0 0.0
  %6153 = vmatpush1.msra.mxu0 %v6136
  %6154 = vmatprep.subr.mxu0 0.0
  %6155 = vmatpush1.msra.mxu0 %v6137
  %6156 = vmatprep.subr.mxu0 0.0
  %6157 = vmatpush1.msra.mxu0 %v6138
  %6158 = vmatprep.subr.mxu0 0.0
  %6159 = vmatpush1.msra.mxu0 %v6139
  %6160 = vmatprep.subr.mxu0 0.0
  %6161 = vmatpush1.msra.mxu0 %v6140
  %6162 = vmatprep.subr.mxu0 0.0
  %6163 = vmatpush1.msra.mxu0 %v6141
  %6164 = vmatprep.subr.mxu0 0.0
  %6165 = vmatpush1.msra.mxu0 %v6142
  %6166 = vmatprep.subr.mxu0 0.0
  %6167 = vmatpush1.msra.mxu0 %v6143
  %6168 = vmatprep.subr.mxu0 0.0
  %6169 = vmatpush1.msra.mxu0 %v6144
  %6170 = vmatprep.subr.mxu0 0.0
  %6171 = vmatpush1.msra.mxu0 %v6145
  %6172 = vmatprep.subr.mxu0 0.0
  %6173 = vmatpush1.msra.mxu0 %v6146
  %6174 = vmatprep.subr.mxu0 0.0
  %6175 = vmatpush1.msra.mxu0 %v6147
  %6176 = vmatprep.subr.mxu0 0.0
  %6177 = vmatpush1.msra.mxu0 %v6148
  %6178 = vmatprep.subr.mxu0 0.0
  %6179 = vmatpush1.msra.mxu0 %v6149
  %6180 = vmatprep.subr.mxu0 0.0
  %6181 = vmatpush1.msra.mxu0 %v6150
  %6182 = vmatprep.subr.mxu0 0.0
  %6183 = vmatpush1.msra.mxu0 %v6151
  %6184 = vmatprep.subr.mxu0 0.0
  %6185 = vmatpush1.msra.mxu0 0.0
  %6186 = vmatprep.subr.mxu0 0.0
  %6187 = vmatpush1.msra.mxu0 0.0
  %6188 = vmatprep.subr.mxu0 0.0
  %6189 = vmatpush1.msra.mxu0 0.0
  %6190 = vmatprep.subr.mxu0 0.0
  %6191 = vmatpush1.msra.mxu0 0.0
  %6192 = vmatprep.subr.mxu0 0.0
  %6193 = vmatpush1.msra.mxu0 0.0
  %6194 = vmatprep.subr.mxu0 0.0
  %6195 = vmatpush1.msra.mxu0 0.0
  %6196 = vmatprep.subr.mxu0 0.0
  %6197 = vmatpush1.msra.mxu0 0.0
  %6198 = vmatprep.subr.mxu0 0.0
  %6199 = vmatpush1.msra.mxu0 0.0
  %6200 = vmatprep.subr.mxu0 0.0
  %6201 = vmatpush1.msra.mxu0 0.0
  %6202 = vmatprep.subr.mxu0 0.0
  %6203 = vmatpush1.msra.mxu0 0.0
  %6204 = vmatprep.subr.mxu0 0.0
  %6205 = vmatpush1.msra.mxu0 0.0
  %6206 = vmatprep.subr.mxu0 0.0
  %6207 = vmatpush1.msra.mxu0 0.0
  %6208 = vmatprep.subr.mxu0 0.0
  %6209 = vmatpush1.msra.mxu0 0.0
  %6210 = vmatprep.subr.mxu0 0.0
  %6211 = vmatpush1.msra.mxu0 0.0
  %6212 = vmatprep.subr.mxu0 0.0
  %6213 = vmatpush1.msra.mxu0 0.0
  %6214 = vmatprep.subr.mxu0 0.0
  %6215 = vmatpush1.msra.mxu0 0.0
  %6216 = vmatprep.mubr.f32.mxu0 0.0
  %6217 = vmatmul.mubr.f32.gmra.mrb[0].mxu0 %v154
  %v6218 = vpop.f32.mrb[0].mxu0
  %v6219 = vadd.f32 0.0, %v6218
  %v6220 = vpop.f32.mrb[0].mxu0
  %6221 = vmatprep.mubr.f32.mxu0 0.0
  %6222 = vmatmul.mubr.f32.gmra.mrb[0].mxu0 %v155
  %v6223 = vpop.f32.mrb[0].mxu0
  %v6224 = vadd.f32 0.0, %v6223
  %v6225 = vpop.f32.mrb[0].mxu0
  %6226 = vmatprep.mubr.f32.mxu0 0.0
  %6227 = vmatmul.mubr.f32.gmra.mrb[0].mxu0 %v156
  %v6228 = vpop.f32.mrb[0].mxu0
  %v6229 = vadd.f32 0.0, %v6228
  %v6230 = vpop.f32.mrb[0].mxu0
  %6231 = vmatprep.mubr.f32.mxu0 0.0
  %6232 = vmatmul.mubr.f32.gmra.mrb[0].mxu0 %v157
  %v6233 = vpop.f32.mrb[0].mxu0
  %v6234 = vadd.f32 0.0, %v6233
  %v6235 = vpop.f32.mrb[0].mxu0
  %6236 = vmatprep.mubr.f32.mxu0 0.0
  %6237 = vmatmul.mubr.f32.gmra.mrb[0].mxu0 %v158
  %v6238 = vpop.f32.mrb[0].mxu0
  %v6239 = vadd.f32 0.0, %v6238
  %v6240 = vpop.f32.mrb[0].mxu0
  %6241 = vmatprep.mubr.f32.mxu0 0.0
  %6242 = vmatmul.mubr.f32.gmra.mrb[0].mxu0 %v159
  %v6243 = vpop.f32.mrb[0].mxu0
  %v6244 = vadd.f32 0.0, %v6243
  %v6245 = vpop.f32.mrb[0].mxu0
  %6246 = vmatprep.mubr.f32.mxu0 0.0
  %6247 = vmatmul.mubr.f32.gmra.mrb[0].mxu0 %v160
  %v6248 = vpop.f32.mrb[0].mxu0
  %v6249 = vadd.f32 0.0, %v6248
  %v6250 = vpop.f32.mrb[0].mxu0
  %6251 = vmatprep.mubr.f32.mxu0 0.0
  %6252 = vmatmul.mubr.f32.gmra.mrb[0].mxu0 %v161
  %v6253 = vpop.f32.mrb[0].mxu0
  %v6254 = vadd.f32 0.0, %v6253
  %v6255 = vpop.f32.mrb[0].mxu0
  %6256 = vmatprep.mubr.f32.mxu0 0.0
  %6257 = vmatmul.mubr.f32.gmra.mrb[0].mxu0 %v162
  %v6258 = vpop.f32.mrb[0].mxu0
  %v6259 = vadd.f32 0.0, %v6258
  %v6260 = vpop.f32.mrb[0].mxu0
  %6261 = vmatprep.mubr.f32.mxu0 0.0
  %6262 = vmatmul.mubr.f32.gmra.mrb[0].mxu0 %v163
  %v6263 = vpop.f32.mrb[0].mxu0
  %v6264 = vadd.f32 0.0, %v6263
  %v6265 = vpop.f32.mrb[0].mxu0
  %6266 = vmatprep.mubr.f32.mxu0 0.0
  %6267 = vmatmul.mubr.f32.gmra.mrb[0].mxu0 %v164
  %v6268 = vpop.f32.mrb[0].mxu0
  %v6269 = vadd.f32 0.0, %v6268
  %v6270 = vpop.f32.mrb[0].mxu0
  %6271 = vmatprep.mubr.f32.mxu0 0.0
  %6272 = vmatmul.mubr.f32.gmra.mrb[0].mxu0 %v165
  %v6273 = vpop.f32.mrb[0].mxu0
  %v6274 = vadd.f32 0.0, %v6273
  %v6275 = vpop.f32.mrb[0].mxu0
  %6276 = vmatprep.mubr.f32.mxu0 0.0
  %6277 = vmatmul.mubr.f32.gmra.mrb[0].mxu0 %v166
  %v6278 = vpop.f32.mrb[0].mxu0
  %v6279 = vadd.f32 0.0, %v6278
  %v6280 = vpop.f32.mrb[0].mxu0
  %6281 = vmatprep.mubr.f32.mxu0 0.0
  %6282 = vmatmul.mubr.f32.gmra.mrb[0].mxu0 %v167
  %v6283 = vpop.f32.mrb[0].mxu0
  %v6284 = vadd.f32 0.0, %v6283
  %v6285 = vpop.f32.mrb[0].mxu0
  %6286 = vmatprep.mubr.f32.mxu0 0.0
  %6287 = vmatmul.mubr.f32.gmra.mrb[0].mxu0 %v168
  %v6288 = vpop.f32.mrb[0].mxu0
  %v6289 = vadd.f32 0.0, %v6288
  %v6290 = vpop.f32.mrb[0].mxu0
  %6291 = vmatprep.mubr.f32.mxu0 0.0
  %6292 = vmatmul.mubr.f32.gmra.mrb[0].mxu0 %v169
  %v6293 = vpop.f32.mrb[0].mxu0
  %v6294 = vadd.f32 0.0, %v6293
  %v6295 = vpop.f32.mrb[0].mxu0
  %6296 = vdwg.mxu0
  %v6297 = vmul.f32 %v1574, %v6219
  %v6298 = vmul.f32 %v1579, %v6224
  %v6299 = vmul.f32 %v1584, %v6229
  %v6300 = vmul.f32 %v1589, %v6234
  %v6301 = vmul.f32 %v1594, %v6239
  %v6302 = vmul.f32 %v1599, %v6244
  %v6303 = vmul.f32 %v1604, %v6249
  %v6304 = vmul.f32 %v1609, %v6254
  %v6305 = vmul.f32 %v1614, %v6259
  %v6306 = vmul.f32 %v1619, %v6264
  %v6307 = vmul.f32 %v1624, %v6269
  %v6308 = vmul.f32 %v1629, %v6274
  %v6309 = vmul.f32 %v1634, %v6279
  %v6310 = vmul.f32 %v1639, %v6284
  %v6311 = vmul.f32 %v1644, %v6289
  %v6312 = vmul.f32 %v1649, %v6294
  %6313 = vmatprep.subr.mxu0 0.0
  %6314 = vmatpush1.msra.mxu0 %v6297
  %6315 = vmatprep.subr.mxu0 0.0
  %6316 = vmatpush1.msra.mxu0 %v6298
  %6317 = vmatprep.subr.mxu0 0.0
  %6318 = vmatpush1.msra.mxu0 %v6299
  %6319 = vmatprep.subr.mxu0 0.0
  %6320 = vmatpush1.msra.mxu0 %v6300
  %6321 = vmatprep.subr.mxu0 0.0
  %6322 = vmatpush1.msra.mxu0 %v6301
  %6323 = vmatprep.subr.mxu0 0.0
  %6324 = vmatpush1.msra.mxu0 %v6302
  %6325 = vmatprep.subr.mxu0 0.0
  %6326 = vmatpush1.msra.mxu0 %v6303
  %6327 = vmatprep.subr.mxu0 0.0
  %6328 = vmatpush1.msra.mxu0 %v6304
  %6329 = vmatprep.subr.mxu0 0.0
  %6330 = vmatpush1.msra.mxu0 %v6305
  %6331 = vmatprep.subr.mxu0 0.0
  %6332 = vmatpush1.msra.mxu0 %v6306
  %6333 = vmatprep.subr.mxu0 0.0
  %6334 = vmatpush1.msra.mxu0 %v6307
  %6335 = vmatprep.subr.mxu0 0.0
  %6336 = vmatpush1.msra.mxu0 %v6308
  %6337 = vmatprep.subr.mxu0 0.0
  %6338 = vmatpush1.msra.mxu0 %v6309
  %6339 = vmatprep.subr.mxu0 0.0
  %6340 = vmatpush1.msra.mxu0 %v6310
  %6341 = vmatprep.subr.mxu0 0.0
  %6342 = vmatpush1.msra.mxu0 %v6311
  %6343 = vmatprep.subr.mxu0 0.0
  %6344 = vmatpush1.msra.mxu0 %v6312
  %6345 = vmatprep.subr.mxu0 0.0
  %6346 = vmatpush1.msra.mxu0 0.0
  %6347 = vmatprep.subr.mxu0 0.0
  %6348 = vmatpush1.msra.mxu0 0.0
  %6349 = vmatprep.subr.mxu0 0.0
  %6350 = vmatpush1.msra.mxu0 0.0
  %6351 = vmatprep.subr.mxu0 0.0
  %6352 = vmatpush1.msra.mxu0 0.0
  %6353 = vmatprep.subr.mxu0 0.0
  %6354 = vmatpush1.msra.mxu0 0.0
  %6355 = vmatprep.subr.mxu0 0.0
  %6356 = vmatpush1.msra.mxu0 0.0
  %6357 = vmatprep.subr.mxu0 0.0
  %6358 = vmatpush1.msra.mxu0 0.0
  %6359 = vmatprep.subr.mxu0 0.0
  %6360 = vmatpush1.msra.mxu0 0.0
  %6361 = vmatprep.subr.mxu0 0.0
  %6362 = vmatpush1.msra.mxu0 0.0
  %6363 = vmatprep.subr.mxu0 0.0
  %6364 = vmatpush1.msra.mxu0 0.0
  %6365 = vmatprep.subr.mxu0 0.0
  %6366 = vmatpush1.msra.mxu0 0.0
  %6367 = vmatprep.subr.mxu0 0.0
  %6368 = vmatpush1.msra.mxu0 0.0
  %6369 = vmatprep.subr.mxu0 0.0
  %6370 = vmatpush1.msra.mxu0 0.0
  %6371 = vmatprep.subr.mxu0 0.0
  %6372 = vmatpush1.msra.mxu0 0.0
  %6373 = vmatprep.subr.mxu0 0.0
  %6374 = vmatpush1.msra.mxu0 0.0
  %6375 = vmatprep.subr.mxu0 0.0
  %6376 = vmatpush1.msra.mxu0 0.0
  %6377 = vmatprep.mubr.f32.mxu0 0.0
  %6378 = vmatmul.mubr.f32.gmra.mrb[0].mxu0 %v1072
  %v6379 = vpop.f32.mrb[0].mxu0
  %v6380 = vadd.f32 0.0, %v6379
  %v6381 = vpop.f32.mrb[0].mxu0
  %6382 = vmatprep.mubr.f32.mxu0 0.0
  %6383 = vmatmul.mubr.f32.gmra.mrb[0].mxu0 %v1073
  %v6384 = vpop.f32.mrb[0].mxu0
  %v6385 = vadd.f32 0.0, %v6384
  %v6386 = vpop.f32.mrb[0].mxu0
  %6387 = vmatprep.mubr.f32.mxu0 0.0
  %6388 = vmatmul.mubr.f32.gmra.mrb[0].mxu0 %v1074
  %v6389 = vpop.f32.mrb[0].mxu0
  %v6390 = vadd.f32 0.0, %v6389
  %v6391 = vpop.f32.mrb[0].mxu0
  %6392 = vmatprep.mubr.f32.mxu0 0.0
  %6393 = vmatmul.mubr.f32.gmra.mrb[0].mxu0 %v1075
  %v6394 = vpop.f32.mrb[0].mxu0
  %v6395 = vadd.f32 0.0, %v6394
  %v6396 = vpop.f32.mrb[0].mxu0
  %6397 = vmatprep.mubr.f32.mxu0 0.0
  %6398 = vmatmul.mubr.f32.gmra.mrb[0].mxu0 %v1076
  %v6399 = vpop.f32.mrb[0].mxu0
  %v6400 = vadd.f32 0.0, %v6399
  %v6401 = vpop.f32.mrb[0].mxu0
  %6402 = vmatprep.mubr.f32.mxu0 0.0
  %6403 = vmatmul.mubr.f32.gmra.mrb[0].mxu0 %v1077
  %v6404 = vpop.f32.mrb[0].mxu0
  %v6405 = vadd.f32 0.0, %v6404
  %v6406 = vpop.f32.mrb[0].mxu0
  %6407 = vmatprep.mubr.f32.mxu0 0.0
  %6408 = vmatmul.mubr.f32.gmra.mrb[0].mxu0 %v1078
  %v6409 = vpop.f32.mrb[0].mxu0
  %v6410 = vadd.f32 0.0, %v6409
  %v6411 = vpop.f32.mrb[0].mxu0
  %6412 = vmatprep.mubr.f32.mxu0 0.0
  %6413 = vmatmul.mubr.f32.gmra.mrb[0].mxu0 %v1079
  %v6414 = vpop.f32.mrb[0].mxu0
  %v6415 = vadd.f32 0.0, %v6414
  %v6416 = vpop.f32.mrb[0].mxu0
  %6417 = vmatprep.mubr.f32.mxu0 0.0
  %6418 = vmatmul.mubr.f32.gmra.mrb[0].mxu0 %v1080
  %v6419 = vpop.f32.mrb[0].mxu0
  %v6420 = vadd.f32 0.0, %v6419
  %v6421 = vpop.f32.mrb[0].mxu0
  %6422 = vmatprep.mubr.f32.mxu0 0.0
  %6423 = vmatmul.mubr.f32.gmra.mrb[0].mxu0 %v1081
  %v6424 = vpop.f32.mrb[0].mxu0
  %v6425 = vadd.f32 0.0, %v6424
  %v6426 = vpop.f32.mrb[0].mxu0
  %6427 = vmatprep.mubr.f32.mxu0 0.0
  %6428 = vmatmul.mubr.f32.gmra.mrb[0].mxu0 %v1082
  %v6429 = vpop.f32.mrb[0].mxu0
  %v6430 = vadd.f32 0.0, %v6429
  %v6431 = vpop.f32.mrb[0].mxu0
  %6432 = vmatprep.mubr.f32.mxu0 0.0
  %6433 = vmatmul.mubr.f32.gmra.mrb[0].mxu0 %v1083
  %v6434 = vpop.f32.mrb[0].mxu0
  %v6435 = vadd.f32 0.0, %v6434
  %v6436 = vpop.f32.mrb[0].mxu0
  %6437 = vmatprep.mubr.f32.mxu0 0.0
  %6438 = vmatmul.mubr.f32.gmra.mrb[0].mxu0 %v1084
  %v6439 = vpop.f32.mrb[0].mxu0
  %v6440 = vadd.f32 0.0, %v6439
  %v6441 = vpop.f32.mrb[0].mxu0
  %6442 = vmatprep.mubr.f32.mxu0 0.0
  %6443 = vmatmul.mubr.f32.gmra.mrb[0].mxu0 %v1085
  %v6444 = vpop.f32.mrb[0].mxu0
  %v6445 = vadd.f32 0.0, %v6444
  %v6446 = vpop.f32.mrb[0].mxu0
  %6447 = vmatprep.mubr.f32.mxu0 0.0
  %6448 = vmatmul.mubr.f32.gmra.mrb[0].mxu0 %v1086
  %v6449 = vpop.f32.mrb[0].mxu0
  %v6450 = vadd.f32 0.0, %v6449
  %v6451 = vpop.f32.mrb[0].mxu0
  %6452 = vmatprep.mubr.f32.mxu0 0.0
  %6453 = vmatmul.mubr.f32.gmra.mrb[0].mxu0 %v1087
  %v6454 = vpop.f32.mrb[0].mxu0
  %v6455 = vadd.f32 0.0, %v6454
  %v6456 = vpop.f32.mrb[0].mxu0
  %6457 = vdwg.mxu0
  %v6458 = vlaneseq
  %v6459 = vshrl.u32 %v6458, 7
  %v6460 = vsub.s32 0, %v6459
  %v6461 = vrot.slane %v87, %v6460
  %v6463 = vsel %vm190, %v6380, 0
  %v6466 = vsel %vm190, %v6385, 0
  %v6469 = vsel %vm190, %v6390, 0
  %v6472 = vsel %vm190, %v6395, 0
  %v6475 = vsel %vm190, %v6400, 0
  %v6478 = vsel %vm190, %v6405, 0
  %v6481 = vsel %vm190, %v6410, 0
  %v6484 = vsel %vm190, %v6415, 0
  %v6487 = vsel %vm190, %v6420, 0
  %v6490 = vsel %vm190, %v6425, 0
  %v6493 = vsel %vm190, %v6430, 0
  %v6496 = vsel %vm190, %v6435, 0
  %v6499 = vsel %vm190, %v6440, 0
  %v6502 = vsel %vm190, %v6445, 0
  %v6505 = vsel %vm190, %v6450, 0
  %v6508 = vsel %vm190, %v6455, 0
  %6510 = vmatprep.subr.mxu0 0.0
  %6511 = vmatpush1.msra.mxu0 %v86
  %6512 = vmatprep.subr.mxu0 0.0
  %6513 = vmatpush1.msra.mxu0 0.0
  %6514 = vmatprep.subr.mxu0 0.0
  %6515 = vmatpush1.msra.mxu0 0.0
  %6516 = vmatprep.subr.mxu0 0.0
  %6517 = vmatpush1.msra.mxu0 0.0
  %6518 = vmatprep.subr.mxu0 0.0
  %6519 = vmatpush1.msra.mxu0 0.0
  %6520 = vmatprep.subr.mxu0 0.0
  %6521 = vmatpush1.msra.mxu0 0.0
  %6522 = vmatprep.subr.mxu0 0.0
  %6523 = vmatpush1.msra.mxu0 0.0
  %6524 = vmatprep.subr.mxu0 0.0
  %6525 = vmatpush1.msra.mxu0 0.0
  %6526 = vmatprep.subr.mxu0 0.0
  %6527 = vmatpush1.msra.mxu0 0.0
  %6528 = vmatprep.subr.mxu0 0.0
  %6529 = vmatpush1.msra.mxu0 0.0
  %6530 = vmatprep.subr.mxu0 0.0
  %6531 = vmatpush1.msra.mxu0 0.0
  %6532 = vmatprep.subr.mxu0 0.0
  %6533 = vmatpush1.msra.mxu0 0.0
  %6534 = vmatprep.subr.mxu0 0.0
  %6535 = vmatpush1.msra.mxu0 0.0
  %6536 = vmatprep.subr.mxu0 0.0
  %6537 = vmatpush1.msra.mxu0 0.0
  %6538 = vmatprep.subr.mxu0 0.0
  %6539 = vmatpush1.msra.mxu0 0.0
  %6540 = vmatprep.subr.mxu0 0.0
  %6541 = vmatpush1.msra.mxu0 0.0
  %6542 = vmatprep.subr.mxu0 0.0
  %6543 = vmatpush1.msra.mxu0 0.0
  %6544 = vmatprep.subr.mxu0 0.0
  %6545 = vmatpush1.msra.mxu0 0.0
  %6546 = vmatprep.subr.mxu0 0.0
  %6547 = vmatpush1.msra.mxu0 0.0
  %6548 = vmatprep.subr.mxu0 0.0
  %6549 = vmatpush1.msra.mxu0 0.0
  %6550 = vmatprep.subr.mxu0 0.0
  %6551 = vmatpush1.msra.mxu0 0.0
  %6552 = vmatprep.subr.mxu0 0.0
  %6553 = vmatpush1.msra.mxu0 0.0
  %6554 = vmatprep.subr.mxu0 0.0
  %6555 = vmatpush1.msra.mxu0 0.0
  %6556 = vmatprep.subr.mxu0 0.0
  %6557 = vmatpush1.msra.mxu0 0.0
  %6558 = vmatprep.subr.mxu0 0.0
  %6559 = vmatpush1.msra.mxu0 0.0
  %6560 = vmatprep.subr.mxu0 0.0
  %6561 = vmatpush1.msra.mxu0 0.0
  %6562 = vmatprep.subr.mxu0 0.0
  %6563 = vmatpush1.msra.mxu0 0.0
  %6564 = vmatprep.subr.mxu0 0.0
  %6565 = vmatpush1.msra.mxu0 0.0
  %6566 = vmatprep.subr.mxu0 0.0
  %6567 = vmatpush1.msra.mxu0 0.0
  %6568 = vmatprep.subr.mxu0 0.0
  %6569 = vmatpush1.msra.mxu0 0.0
  %6570 = vmatprep.subr.mxu0 0.0
  %6571 = vmatpush1.msra.mxu0 0.0
  %6572 = vmatprep.subr.mxu0 0.0
  %6573 = vmatpush1.msra.mxu0 0.0
  %6574 = vmatprep.mubr.f32.mxu0 0.0
  %6575 = vmatmul.mubr.f32.gmra.mrb[0].mxu0 %v6463
  %v6576 = vpop.f32.mrb[0].mxu0
  %v6577 = vadd.f32 %v6461, %v6576
  %v6578 = vpop.f32.mrb[0].mxu0
  %6579 = vmatprep.mubr.f32.mxu0 0.0
  %6580 = vmatmul.mubr.f32.gmra.mrb[0].mxu0 %v6466
  %v6581 = vpop.f32.mrb[0].mxu0
  %v6582 = vadd.f32 %v6461, %v6581
  %v6583 = vpop.f32.mrb[0].mxu0
  %6584 = vmatprep.mubr.f32.mxu0 0.0
  %6585 = vmatmul.mubr.f32.gmra.mrb[0].mxu0 %v6469
  %v6586 = vpop.f32.mrb[0].mxu0
  %v6587 = vadd.f32 %v6461, %v6586
  %v6588 = vpop.f32.mrb[0].mxu0
  %6589 = vmatprep.mubr.f32.mxu0 0.0
  %6590 = vmatmul.mubr.f32.gmra.mrb[0].mxu0 %v6472
  %v6591 = vpop.f32.mrb[0].mxu0
  %v6592 = vadd.f32 %v6461, %v6591
  %v6593 = vpop.f32.mrb[0].mxu0
  %6594 = vmatprep.mubr.f32.mxu0 0.0
  %6595 = vmatmul.mubr.f32.gmra.mrb[0].mxu0 %v6475
  %v6596 = vpop.f32.mrb[0].mxu0
  %v6597 = vadd.f32 %v6461, %v6596
  %v6598 = vpop.f32.mrb[0].mxu0
  %6599 = vmatprep.mubr.f32.mxu0 0.0
  %6600 = vmatmul.mubr.f32.gmra.mrb[0].mxu0 %v6478
  %v6601 = vpop.f32.mrb[0].mxu0
  %v6602 = vadd.f32 %v6461, %v6601
  %v6603 = vpop.f32.mrb[0].mxu0
  %6604 = vmatprep.mubr.f32.mxu0 0.0
  %6605 = vmatmul.mubr.f32.gmra.mrb[0].mxu0 %v6481
  %v6606 = vpop.f32.mrb[0].mxu0
  %v6607 = vadd.f32 %v6461, %v6606
  %v6608 = vpop.f32.mrb[0].mxu0
  %6609 = vmatprep.mubr.f32.mxu0 0.0
  %6610 = vmatmul.mubr.f32.gmra.mrb[0].mxu0 %v6484
  %v6611 = vpop.f32.mrb[0].mxu0
  %v6612 = vadd.f32 %v6461, %v6611
  %v6613 = vpop.f32.mrb[0].mxu0
  %6614 = vmatprep.mubr.f32.mxu0 0.0
  %6615 = vmatmul.mubr.f32.gmra.mrb[0].mxu0 %v6487
  %v6616 = vpop.f32.mrb[0].mxu0
  %v6617 = vadd.f32 %v6461, %v6616
  %v6618 = vpop.f32.mrb[0].mxu0
  %6619 = vmatprep.mubr.f32.mxu0 0.0
  %6620 = vmatmul.mubr.f32.gmra.mrb[0].mxu0 %v6490
  %v6621 = vpop.f32.mrb[0].mxu0
  %v6622 = vadd.f32 %v6461, %v6621
  %v6623 = vpop.f32.mrb[0].mxu0
  %6624 = vmatprep.mubr.f32.mxu0 0.0
  %6625 = vmatmul.mubr.f32.gmra.mrb[0].mxu0 %v6493
  %v6626 = vpop.f32.mrb[0].mxu0
  %v6627 = vadd.f32 %v6461, %v6626
  %v6628 = vpop.f32.mrb[0].mxu0
  %6629 = vmatprep.mubr.f32.mxu0 0.0
  %6630 = vmatmul.mubr.f32.gmra.mrb[0].mxu0 %v6496
  %v6631 = vpop.f32.mrb[0].mxu0
  %v6632 = vadd.f32 %v6461, %v6631
  %v6633 = vpop.f32.mrb[0].mxu0
  %6634 = vmatprep.mubr.f32.mxu0 0.0
  %6635 = vmatmul.mubr.f32.gmra.mrb[0].mxu0 %v6499
  %v6636 = vpop.f32.mrb[0].mxu0
  %v6637 = vadd.f32 %v6461, %v6636
  %v6638 = vpop.f32.mrb[0].mxu0
  %6639 = vmatprep.mubr.f32.mxu0 0.0
  %6640 = vmatmul.mubr.f32.gmra.mrb[0].mxu0 %v6502
  %v6641 = vpop.f32.mrb[0].mxu0
  %v6642 = vadd.f32 %v6461, %v6641
  %v6643 = vpop.f32.mrb[0].mxu0
  %6644 = vmatprep.mubr.f32.mxu0 0.0
  %6645 = vmatmul.mubr.f32.gmra.mrb[0].mxu0 %v6505
  %v6646 = vpop.f32.mrb[0].mxu0
  %v6647 = vadd.f32 %v6461, %v6646
  %v6648 = vpop.f32.mrb[0].mxu0
  %6649 = vmatprep.mubr.f32.mxu0 0.0
  %6650 = vmatmul.mubr.f32.gmra.mrb[0].mxu0 %v6508
  %v6651 = vpop.f32.mrb[0].mxu0
  %v6652 = vadd.f32 %v6461, %v6651
  %v6653 = vpop.f32.mrb[0].mxu0
  %6654 = vdwg.mxu0
  %v6655 = vmax.f32 %v6577, 0.0
  %v6656 = vmax.f32 %v6582, 0.0
  %v6657 = vmax.f32 %v6587, 0.0
  %v6658 = vmax.f32 %v6592, 0.0
  %v6659 = vmax.f32 %v6597, 0.0
  %v6660 = vmax.f32 %v6602, 0.0
  %v6661 = vmax.f32 %v6607, 0.0
  %v6662 = vmax.f32 %v6612, 0.0
  %v6663 = vmax.f32 %v6617, 0.0
  %v6664 = vmax.f32 %v6622, 0.0
  %v6665 = vmax.f32 %v6627, 0.0
  %v6666 = vmax.f32 %v6632, 0.0
  %v6667 = vmax.f32 %v6637, 0.0
  %v6668 = vmax.f32 %v6642, 0.0
  %v6669 = vmax.f32 %v6647, 0.0
  %v6670 = vmax.f32 %v6652, 0.0
  %v6671 = vlaneseq
  %v6672 = vshrl.u32 %v6671, 7
  %v6673 = vsub.s32 0, %v6672
  %v6674 = vrot.slane %v96, %v6673
  %v6676 = vsel %vm404, %v6655, 0
  %v6679 = vsel %vm404, %v6656, 0
  %v6682 = vsel %vm404, %v6657, 0
  %v6685 = vsel %vm404, %v6658, 0
  %v6688 = vsel %vm404, %v6659, 0
  %v6691 = vsel %vm404, %v6660, 0
  %v6694 = vsel %vm404, %v6661, 0
  %v6697 = vsel %vm404, %v6662, 0
  %v6700 = vsel %vm404, %v6663, 0
  %v6703 = vsel %vm404, %v6664, 0
  %v6706 = vsel %vm404, %v6665, 0
  %v6709 = vsel %vm404, %v6666, 0
  %v6712 = vsel %vm404, %v6667, 0
  %v6715 = vsel %vm404, %v6668, 0
  %v6718 = vsel %vm404, %v6669, 0
  %v6721 = vsel %vm404, %v6670, 0
  %6723 = vmatprep.subr.mxu0 0.0
  %6724 = vmatpush1.msra.mxu0 %v88
  %6725 = vmatprep.subr.mxu0 0.0
  %6726 = vmatpush1.msra.mxu0 %v89
  %6727 = vmatprep.subr.mxu0 0.0
  %6728 = vmatpush1.msra.mxu0 %v90
  %6729 = vmatprep.subr.mxu0 0.0
  %6730 = vmatpush1.msra.mxu0 %v91
  %6731 = vmatprep.subr.mxu0 0.0
  %6732 = vmatpush1.msra.mxu0 %v92
  %6733 = vmatprep.subr.mxu0 0.0
  %6734 = vmatpush1.msra.mxu0 %v93
  %6735 = vmatprep.subr.mxu0 0.0
  %6736 = vmatpush1.msra.mxu0 %v94
  %6737 = vmatprep.subr.mxu0 0.0
  %6738 = vmatpush1.msra.mxu0 %v95
  %6739 = vmatprep.subr.mxu0 0.0
  %6740 = vmatpush1.msra.mxu0 0.0
  %6741 = vmatprep.subr.mxu0 0.0
  %6742 = vmatpush1.msra.mxu0 0.0
  %6743 = vmatprep.subr.mxu0 0.0
  %6744 = vmatpush1.msra.mxu0 0.0
  %6745 = vmatprep.subr.mxu0 0.0
  %6746 = vmatpush1.msra.mxu0 0.0
  %6747 = vmatprep.subr.mxu0 0.0
  %6748 = vmatpush1.msra.mxu0 0.0
  %6749 = vmatprep.subr.mxu0 0.0
  %6750 = vmatpush1.msra.mxu0 0.0
  %6751 = vmatprep.subr.mxu0 0.0
  %6752 = vmatpush1.msra.mxu0 0.0
  %6753 = vmatprep.subr.mxu0 0.0
  %6754 = vmatpush1.msra.mxu0 0.0
  %6755 = vmatprep.subr.mxu0 0.0
  %6756 = vmatpush1.msra.mxu0 0.0
  %6757 = vmatprep.subr.mxu0 0.0
  %6758 = vmatpush1.msra.mxu0 0.0
  %6759 = vmatprep.subr.mxu0 0.0
  %6760 = vmatpush1.msra.mxu0 0.0
  %6761 = vmatprep.subr.mxu0 0.0
  %6762 = vmatpush1.msra.mxu0 0.0
  %6763 = vmatprep.subr.mxu0 0.0
  %6764 = vmatpush1.msra.mxu0 0.0
  %6765 = vmatprep.subr.mxu0 0.0
  %6766 = vmatpush1.msra.mxu0 0.0
  %6767 = vmatprep.subr.mxu0 0.0
  %6768 = vmatpush1.msra.mxu0 0.0
  %6769 = vmatprep.subr.mxu0 0.0
  %6770 = vmatpush1.msra.mxu0 0.0
  %6771 = vmatprep.subr.mxu0 0.0
  %6772 = vmatpush1.msra.mxu0 0.0
  %6773 = vmatprep.subr.mxu0 0.0
  %6774 = vmatpush1.msra.mxu0 0.0
  %6775 = vmatprep.subr.mxu0 0.0
  %6776 = vmatpush1.msra.mxu0 0.0
  %6777 = vmatprep.subr.mxu0 0.0
  %6778 = vmatpush1.msra.mxu0 0.0
  %6779 = vmatprep.subr.mxu0 0.0
  %6780 = vmatpush1.msra.mxu0 0.0
  %6781 = vmatprep.subr.mxu0 0.0
  %6782 = vmatpush1.msra.mxu0 0.0
  %6783 = vmatprep.subr.mxu0 0.0
  %6784 = vmatpush1.msra.mxu0 0.0
  %6785 = vmatprep.subr.mxu0 0.0
  %6786 = vmatpush1.msra.mxu0 0.0
  %6787 = vmatprep.mubr.f32.mxu0 0.0
  %6788 = vmatmul.mubr.f32.gmra.mrb[0].mxu0 %v6676
  %v6789 = vpop.f32.mrb[0].mxu0
  %v6790 = vadd.f32 %v6674, %v6789
  %v6791 = vpop.f32.mrb[0].mxu0
  %6792 = vmatprep.mubr.f32.mxu0 0.0
  %6793 = vmatmul.mubr.f32.gmra.mrb[0].mxu0 %v6679
  %v6794 = vpop.f32.mrb[0].mxu0
  %v6795 = vadd.f32 %v6674, %v6794
  %v6796 = vpop.f32.mrb[0].mxu0
  %6797 = vmatprep.mubr.f32.mxu0 0.0
  %6798 = vmatmul.mubr.f32.gmra.mrb[0].mxu0 %v6682
  %v6799 = vpop.f32.mrb[0].mxu0
  %v6800 = vadd.f32 %v6674, %v6799
  %v6801 = vpop.f32.mrb[0].mxu0
  %6802 = vmatprep.mubr.f32.mxu0 0.0
  %6803 = vmatmul.mubr.f32.gmra.mrb[0].mxu0 %v6685
  %v6804 = vpop.f32.mrb[0].mxu0
  %v6805 = vadd.f32 %v6674, %v6804
  %v6806 = vpop.f32.mrb[0].mxu0
  %6807 = vmatprep.mubr.f32.mxu0 0.0
  %6808 = vmatmul.mubr.f32.gmra.mrb[0].mxu0 %v6688
  %v6809 = vpop.f32.mrb[0].mxu0
  %v6810 = vadd.f32 %v6674, %v6809
  %v6811 = vpop.f32.mrb[0].mxu0
  %6812 = vmatprep.mubr.f32.mxu0 0.0
  %6813 = vmatmul.mubr.f32.gmra.mrb[0].mxu0 %v6691
  %v6814 = vpop.f32.mrb[0].mxu0
  %v6815 = vadd.f32 %v6674, %v6814
  %v6816 = vpop.f32.mrb[0].mxu0
  %6817 = vmatprep.mubr.f32.mxu0 0.0
  %6818 = vmatmul.mubr.f32.gmra.mrb[0].mxu0 %v6694
  %v6819 = vpop.f32.mrb[0].mxu0
  %v6820 = vadd.f32 %v6674, %v6819
  %v6821 = vpop.f32.mrb[0].mxu0
  %6822 = vmatprep.mubr.f32.mxu0 0.0
  %6823 = vmatmul.mubr.f32.gmra.mrb[0].mxu0 %v6697
  %v6824 = vpop.f32.mrb[0].mxu0
  %v6825 = vadd.f32 %v6674, %v6824
  %v6826 = vpop.f32.mrb[0].mxu0
  %6827 = vmatprep.mubr.f32.mxu0 0.0
  %6828 = vmatmul.mubr.f32.gmra.mrb[0].mxu0 %v6700
  %v6829 = vpop.f32.mrb[0].mxu0
  %v6830 = vadd.f32 %v6674, %v6829
  %v6831 = vpop.f32.mrb[0].mxu0
  %6832 = vmatprep.mubr.f32.mxu0 0.0
  %6833 = vmatmul.mubr.f32.gmra.mrb[0].mxu0 %v6703
  %v6834 = vpop.f32.mrb[0].mxu0
  %v6835 = vadd.f32 %v6674, %v6834
  %v6836 = vpop.f32.mrb[0].mxu0
  %6837 = vmatprep.mubr.f32.mxu0 0.0
  %6838 = vmatmul.mubr.f32.gmra.mrb[0].mxu0 %v6706
  %v6839 = vpop.f32.mrb[0].mxu0
  %v6840 = vadd.f32 %v6674, %v6839
  %v6841 = vpop.f32.mrb[0].mxu0
  %6842 = vmatprep.mubr.f32.mxu0 0.0
  %6843 = vmatmul.mubr.f32.gmra.mrb[0].mxu0 %v6709
  %v6844 = vpop.f32.mrb[0].mxu0
  %v6845 = vadd.f32 %v6674, %v6844
  %v6846 = vpop.f32.mrb[0].mxu0
  %6847 = vmatprep.mubr.f32.mxu0 0.0
  %6848 = vmatmul.mubr.f32.gmra.mrb[0].mxu0 %v6712
  %v6849 = vpop.f32.mrb[0].mxu0
  %v6850 = vadd.f32 %v6674, %v6849
  %v6851 = vpop.f32.mrb[0].mxu0
  %6852 = vmatprep.mubr.f32.mxu0 0.0
  %6853 = vmatmul.mubr.f32.gmra.mrb[0].mxu0 %v6715
  %v6854 = vpop.f32.mrb[0].mxu0
  %v6855 = vadd.f32 %v6674, %v6854
  %v6856 = vpop.f32.mrb[0].mxu0
  %6857 = vmatprep.mubr.f32.mxu0 0.0
  %6858 = vmatmul.mubr.f32.gmra.mrb[0].mxu0 %v6718
  %v6859 = vpop.f32.mrb[0].mxu0
  %v6860 = vadd.f32 %v6674, %v6859
  %v6861 = vpop.f32.mrb[0].mxu0
  %6862 = vmatprep.mubr.f32.mxu0 0.0
  %6863 = vmatmul.mubr.f32.gmra.mrb[0].mxu0 %v6721
  %v6864 = vpop.f32.mrb[0].mxu0
  %v6865 = vadd.f32 %v6674, %v6864
  %v6866 = vpop.f32.mrb[0].mxu0
  %6867 = vdwg.mxu0
  %v6868 = vmax.f32 %v6790, 0.0
  %v6869 = vmax.f32 %v6795, 0.0
  %v6870 = vmax.f32 %v6800, 0.0
  %v6871 = vmax.f32 %v6805, 0.0
  %v6872 = vmax.f32 %v6810, 0.0
  %v6873 = vmax.f32 %v6815, 0.0
  %v6874 = vmax.f32 %v6820, 0.0
  %v6875 = vmax.f32 %v6825, 0.0
  %v6876 = vmax.f32 %v6830, 0.0
  %v6877 = vmax.f32 %v6835, 0.0
  %v6878 = vmax.f32 %v6840, 0.0
  %v6879 = vmax.f32 %v6845, 0.0
  %v6880 = vmax.f32 %v6850, 0.0
  %v6881 = vmax.f32 %v6855, 0.0
  %v6882 = vmax.f32 %v6860, 0.0
  %v6883 = vmax.f32 %v6865, 0.0
  %v6884 = vlaneseq
  %v6885 = vshrl.u32 %v6884, 7
  %v6886 = vsub.s32 0, %v6885
  %v6887 = vrot.slane %v105, %v6886
  %v6889 = vsel %vm404, %v6868, 0
  %v6892 = vsel %vm404, %v6869, 0
  %v6895 = vsel %vm404, %v6870, 0
  %v6898 = vsel %vm404, %v6871, 0
  %v6901 = vsel %vm404, %v6872, 0
  %v6904 = vsel %vm404, %v6873, 0
  %v6907 = vsel %vm404, %v6874, 0
  %v6910 = vsel %vm404, %v6875, 0
  %v6913 = vsel %vm404, %v6876, 0
  %v6916 = vsel %vm404, %v6877, 0
  %v6919 = vsel %vm404, %v6878, 0
  %v6922 = vsel %vm404, %v6879, 0
  %v6925 = vsel %vm404, %v6880, 0
  %v6928 = vsel %vm404, %v6881, 0
  %v6931 = vsel %vm404, %v6882, 0
  %v6934 = vsel %vm404, %v6883, 0
  %6936 = vmatprep.subr.mxu0 0.0
  %6937 = vmatpush1.msra.mxu0 %v97
  %6938 = vmatprep.subr.mxu0 0.0
  %6939 = vmatpush1.msra.mxu0 %v98
  %6940 = vmatprep.subr.mxu0 0.0
  %6941 = vmatpush1.msra.mxu0 %v99
  %6942 = vmatprep.subr.mxu0 0.0
  %6943 = vmatpush1.msra.mxu0 %v100
  %6944 = vmatprep.subr.mxu0 0.0
  %6945 = vmatpush1.msra.mxu0 %v101
  %6946 = vmatprep.subr.mxu0 0.0
  %6947 = vmatpush1.msra.mxu0 %v102
  %6948 = vmatprep.subr.mxu0 0.0
  %6949 = vmatpush1.msra.mxu0 %v103
  %6950 = vmatprep.subr.mxu0 0.0
  %6951 = vmatpush1.msra.mxu0 %v104
  %6952 = vmatprep.subr.mxu0 0.0
  %6953 = vmatpush1.msra.mxu0 0.0
  %6954 = vmatprep.subr.mxu0 0.0
  %6955 = vmatpush1.msra.mxu0 0.0
  %6956 = vmatprep.subr.mxu0 0.0
  %6957 = vmatpush1.msra.mxu0 0.0
  %6958 = vmatprep.subr.mxu0 0.0
  %6959 = vmatpush1.msra.mxu0 0.0
  %6960 = vmatprep.subr.mxu0 0.0
  %6961 = vmatpush1.msra.mxu0 0.0
  %6962 = vmatprep.subr.mxu0 0.0
  %6963 = vmatpush1.msra.mxu0 0.0
  %6964 = vmatprep.subr.mxu0 0.0
  %6965 = vmatpush1.msra.mxu0 0.0
  %6966 = vmatprep.subr.mxu0 0.0
  %6967 = vmatpush1.msra.mxu0 0.0
  %6968 = vmatprep.subr.mxu0 0.0
  %6969 = vmatpush1.msra.mxu0 0.0
  %6970 = vmatprep.subr.mxu0 0.0
  %6971 = vmatpush1.msra.mxu0 0.0
  %6972 = vmatprep.subr.mxu0 0.0
  %6973 = vmatpush1.msra.mxu0 0.0
  %6974 = vmatprep.subr.mxu0 0.0
  %6975 = vmatpush1.msra.mxu0 0.0
  %6976 = vmatprep.subr.mxu0 0.0
  %6977 = vmatpush1.msra.mxu0 0.0
  %6978 = vmatprep.subr.mxu0 0.0
  %6979 = vmatpush1.msra.mxu0 0.0
  %6980 = vmatprep.subr.mxu0 0.0
  %6981 = vmatpush1.msra.mxu0 0.0
  %6982 = vmatprep.subr.mxu0 0.0
  %6983 = vmatpush1.msra.mxu0 0.0
  %6984 = vmatprep.subr.mxu0 0.0
  %6985 = vmatpush1.msra.mxu0 0.0
  %6986 = vmatprep.subr.mxu0 0.0
  %6987 = vmatpush1.msra.mxu0 0.0
  %6988 = vmatprep.subr.mxu0 0.0
  %6989 = vmatpush1.msra.mxu0 0.0
  %6990 = vmatprep.subr.mxu0 0.0
  %6991 = vmatpush1.msra.mxu0 0.0
  %6992 = vmatprep.subr.mxu0 0.0
  %6993 = vmatpush1.msra.mxu0 0.0
  %6994 = vmatprep.subr.mxu0 0.0
  %6995 = vmatpush1.msra.mxu0 0.0
  %6996 = vmatprep.subr.mxu0 0.0
  %6997 = vmatpush1.msra.mxu0 0.0
  %6998 = vmatprep.subr.mxu0 0.0
  %6999 = vmatpush1.msra.mxu0 0.0
  %7000 = vmatprep.mubr.f32.mxu0 0.0
  %7001 = vmatmul.mubr.f32.gmra.mrb[0].mxu0 %v6889
  %v7002 = vpop.f32.mrb[0].mxu0
  %v7003 = vadd.f32 %v6887, %v7002
  %v7004 = vpop.f32.mrb[0].mxu0
  %7005 = vmatprep.mubr.f32.mxu0 0.0
  %7006 = vmatmul.mubr.f32.gmra.mrb[0].mxu0 %v6892
  %v7007 = vpop.f32.mrb[0].mxu0
  %v7008 = vadd.f32 %v6887, %v7007
  %v7009 = vpop.f32.mrb[0].mxu0
  %7010 = vmatprep.mubr.f32.mxu0 0.0
  %7011 = vmatmul.mubr.f32.gmra.mrb[0].mxu0 %v6895
  %v7012 = vpop.f32.mrb[0].mxu0
  %v7013 = vadd.f32 %v6887, %v7012
  %v7014 = vpop.f32.mrb[0].mxu0
  %7015 = vmatprep.mubr.f32.mxu0 0.0
  %7016 = vmatmul.mubr.f32.gmra.mrb[0].mxu0 %v6898
  %v7017 = vpop.f32.mrb[0].mxu0
  %v7018 = vadd.f32 %v6887, %v7017
  %v7019 = vpop.f32.mrb[0].mxu0
  %7020 = vmatprep.mubr.f32.mxu0 0.0
  %7021 = vmatmul.mubr.f32.gmra.mrb[0].mxu0 %v6901
  %v7022 = vpop.f32.mrb[0].mxu0
  %v7023 = vadd.f32 %v6887, %v7022
  %v7024 = vpop.f32.mrb[0].mxu0
  %7025 = vmatprep.mubr.f32.mxu0 0.0
  %7026 = vmatmul.mubr.f32.gmra.mrb[0].mxu0 %v6904
  %v7027 = vpop.f32.mrb[0].mxu0
  %v7028 = vadd.f32 %v6887, %v7027
  %v7029 = vpop.f32.mrb[0].mxu0
  %7030 = vmatprep.mubr.f32.mxu0 0.0
  %7031 = vmatmul.mubr.f32.gmra.mrb[0].mxu0 %v6907
  %v7032 = vpop.f32.mrb[0].mxu0
  %v7033 = vadd.f32 %v6887, %v7032
  %v7034 = vpop.f32.mrb[0].mxu0
  %7035 = vmatprep.mubr.f32.mxu0 0.0
  %7036 = vmatmul.mubr.f32.gmra.mrb[0].mxu0 %v6910
  %v7037 = vpop.f32.mrb[0].mxu0
  %v7038 = vadd.f32 %v6887, %v7037
  %v7039 = vpop.f32.mrb[0].mxu0
  %7040 = vmatprep.mubr.f32.mxu0 0.0
  %7041 = vmatmul.mubr.f32.gmra.mrb[0].mxu0 %v6913
  %v7042 = vpop.f32.mrb[0].mxu0
  %v7043 = vadd.f32 %v6887, %v7042
  %v7044 = vpop.f32.mrb[0].mxu0
  %7045 = vmatprep.mubr.f32.mxu0 0.0
  %7046 = vmatmul.mubr.f32.gmra.mrb[0].mxu0 %v6916
  %v7047 = vpop.f32.mrb[0].mxu0
  %v7048 = vadd.f32 %v6887, %v7047
  %v7049 = vpop.f32.mrb[0].mxu0
  %7050 = vmatprep.mubr.f32.mxu0 0.0
  %7051 = vmatmul.mubr.f32.gmra.mrb[0].mxu0 %v6919
  %v7052 = vpop.f32.mrb[0].mxu0
  %v7053 = vadd.f32 %v6887, %v7052
  %v7054 = vpop.f32.mrb[0].mxu0
  %7055 = vmatprep.mubr.f32.mxu0 0.0
  %7056 = vmatmul.mubr.f32.gmra.mrb[0].mxu0 %v6922
  %v7057 = vpop.f32.mrb[0].mxu0
  %v7058 = vadd.f32 %v6887, %v7057
  %v7059 = vpop.f32.mrb[0].mxu0
  %7060 = vmatprep.mubr.f32.mxu0 0.0
  %7061 = vmatmul.mubr.f32.gmra.mrb[0].mxu0 %v6925
  %v7062 = vpop.f32.mrb[0].mxu0
  %v7063 = vadd.f32 %v6887, %v7062
  %v7064 = vpop.f32.mrb[0].mxu0
  %7065 = vmatprep.mubr.f32.mxu0 0.0
  %7066 = vmatmul.mubr.f32.gmra.mrb[0].mxu0 %v6928
  %v7067 = vpop.f32.mrb[0].mxu0
  %v7068 = vadd.f32 %v6887, %v7067
  %v7069 = vpop.f32.mrb[0].mxu0
  %7070 = vmatprep.mubr.f32.mxu0 0.0
  %7071 = vmatmul.mubr.f32.gmra.mrb[0].mxu0 %v6931
  %v7072 = vpop.f32.mrb[0].mxu0
  %v7073 = vadd.f32 %v6887, %v7072
  %v7074 = vpop.f32.mrb[0].mxu0
  %7075 = vmatprep.mubr.f32.mxu0 0.0
  %7076 = vmatmul.mubr.f32.gmra.mrb[0].mxu0 %v6934
  %v7077 = vpop.f32.mrb[0].mxu0
  %v7078 = vadd.f32 %v6887, %v7077
  %v7079 = vpop.f32.mrb[0].mxu0
  %7080 = vdwg.mxu0
  %v7081 = vmax.f32 %v7003, 0.0
  %v7082 = vmax.f32 %v7008, 0.0
  %v7083 = vmax.f32 %v7013, 0.0
  %v7084 = vmax.f32 %v7018, 0.0
  %v7085 = vmax.f32 %v7023, 0.0
  %v7086 = vmax.f32 %v7028, 0.0
  %v7087 = vmax.f32 %v7033, 0.0
  %v7088 = vmax.f32 %v7038, 0.0
  %v7089 = vmax.f32 %v7043, 0.0
  %v7090 = vmax.f32 %v7048, 0.0
  %v7091 = vmax.f32 %v7053, 0.0
  %v7092 = vmax.f32 %v7058, 0.0
  %v7093 = vmax.f32 %v7063, 0.0
  %v7094 = vmax.f32 %v7068, 0.0
  %v7095 = vmax.f32 %v7073, 0.0
  %v7096 = vmax.f32 %v7078, 0.0
  %vm7097 = vcmask 7168
  %7098 = vst.msk [vmem:[%s6] sm:$0xff] %vm7097, %v7081
  %7099 = vst.msk [vmem:[%s6 + $0x8] sm:$0xff] %vm7097, %v7082
  %7100 = vst.msk [vmem:[%s6 + $0x10] sm:$0xff] %vm7097, %v7083
  %7101 = vst.msk [vmem:[%s6 + $0x18] sm:$0xff] %vm7097, %v7084
  %7102 = vst.msk [vmem:[%s6 + $0x20] sm:$0xff] %vm7097, %v7085
  %7103 = vst.msk [vmem:[%s6 + $0x28] sm:$0xff] %vm7097, %v7086
  %7104 = vst.msk [vmem:[%s6 + $0x30] sm:$0xff] %vm7097, %v7087
  %7105 = vst.msk [vmem:[%s6 + $0x38] sm:$0xff] %vm7097, %v7088
  %7106 = vst.msk [vmem:[%s6 + $0x40] sm:$0xff] %vm7097, %v7089
  %7107 = vst.msk [vmem:[%s6 + $0x48] sm:$0xff] %vm7097, %v7090
  %7108 = vst.msk [vmem:[%s6 + $0x50] sm:$0xff] %vm7097, %v7091
  %7109 = vst.msk [vmem:[%s6 + $0x58] sm:$0xff] %vm7097, %v7092
  %7110 = vst.msk [vmem:[%s6 + $0x60] sm:$0xff] %vm7097, %v7093
  %7111 = vst.msk [vmem:[%s6 + $0x68] sm:$0xff] %vm7097, %v7094
  %7112 = vst.msk [vmem:[%s6 + $0x70] sm:$0xff] %vm7097, %v7095
  %7113 = vst.msk [vmem:[%s6 + $0x78] sm:$0xff] %vm7097, %v7096
  // Predicated region
  $region26: #{tpu_custom_call.1} parent=0 // pred_check
    _
  $region27: #{tpu_custom_call.1} parent=0 // pred_check_branch
    %7115 = sbr.rel (0) target = $region29
  $region28: #{tpu_custom_call.1} parent=0 // pred_region
    _
  $region29: #{tpu_custom_call.1} parent=0 // pred_fallthru
    _
  // Predicated region
  $region30: #{tpu_custom_call.1} parent=0 // pred_check
    _
  $region31: #{tpu_custom_call.1} parent=0 // pred_check_branch
    %7117 = sbr.rel (0) target = $region33
  $region32: #{tpu_custom_call.1} parent=0 // pred_region
    _
  $region33: #{tpu_custom_call.1} parent=0 // pred_fallthru
    _

</llo_original>
